<compile_context>
chip_gen: v7x
topology: tpu7x:2x2x1
jax: 0.10.0
libtpu: 0.0.40
codegen_flags: <defaults>
</compile_context>

<pallas_src>
import numpy as np
import jax
import jax.numpy as jnp
from jax import lax
from jax.experimental import pallas as pl
from jax.experimental.pallas import tpu as pltpu


# ----------------------------------------------------------------------------- kernel
def _convlayers2_kernel(x_ref, w1_ref, w2_ref, b2_ref, w3_ref, b3_ref, sel_ref,
                        o_ref, planes_ref, col2_ref, col3_ref):
    bb = planes_ref.shape[0]            # batch block (static)

    # ---- layer 1: one GEMM for the whole batch block (bias folded into w1) --------
    a1 = jnp.dot(x_ref[...], w1_ref[...], preferred_element_type=jnp.float32)
    a1 = jnp.maximum(a1, 0.0).astype(jnp.bfloat16)          # (bb*512, 64)
    a1 = a1.reshape(bb, 4, 8, 16, 64)                        # (img, parity, r-1, s, c)

    # ---- scatter into layer-2 parity planes (data rows 1..8; row 0 is the guard) ---
    planes_ref[:, :, 0:1, :, :] = jnp.zeros((bb, 4, 1, 16, 64), jnp.bfloat16)
    for pq in range(4):
        planes_ref[:, pq, 1:9, :, :] = a1[:, pq]

    # ---- layer 2: im2col from 9 contiguous window slices + ONE GEMM ----------------
    for ky in range(3):
        for kx in range(3):
            t = 3 * ky + kx
            wy = 0 if ky == 0 else 1
            wx = 0 if kx == 0 else 1
            win = planes_ref[:, (ky % 2) * 2 + (kx % 2), wy:wy + 8, wx:wx + 8, :]
            col2_ref[:, t * 64:(t + 1) * 64] = win.reshape(bb * 64, 64)
    a2 = jnp.dot(col2_ref[...], w2_ref[...], preferred_element_type=jnp.float32)
    a2 = jnp.maximum(a2 + b2_ref[...], 0.0).astype(jnp.bfloat16)     # (bb*64, 128)
    a2 = a2.reshape(bb, 64, 128)

    # ---- layer 3: one batched selection matmul gathers all 9 taps, then ONE GEMM ---
    selb = jnp.broadcast_to(sel_ref[...], (bb, 144, 64))
    g = lax.dot_general(selb, a2, (((2,), (1,)), ((0,), (0,))),
                        preferred_element_type=jnp.float32)          # (bb, 144, 128)
    g = g.astype(jnp.bfloat16)
    for t in range(9):
        col3_ref[:, t * 128:(t + 1) * 128] = (
            g[:, t * 16:(t + 1) * 16, :].reshape(bb * 16, 128))
    a3 = jnp.dot(col3_ref[...], w3_ref[...], preferred_element_type=jnp.float32)
    o_ref[...] = jnp.maximum(a3 + b3_ref[...], 0.0)                  # (bb*16, 256)


# --------------------------------------------------------------------------- wrapper
def _choose_block_batch(batch):
    if batch >= 16:
        return 8
    if batch >= 2:
        return max(1, batch // 2)       # keep >=2 grid steps for megacore
    return 1


def _build_layer1_cols(x_nchw, k1p):
    """Layer-1 im2col with rows pre-ordered into the 4 stride-2 parity blocks of the
    layer-2 input.  Per image: 4 blocks x 8 rows x 16 cols (col 0 and cols 9..15 are
    zero rows -> padding/guards), each row = [9*Cin taps, 1.0 bias col, zero pad]."""
    B, cin, _, _ = x_nchw.shape
    x = jnp.transpose(x_nchw, (0, 2, 3, 1))                       # (B,32,32,C)
    xp = jnp.pad(x, ((0, 0), (1, 1), (1, 1), (0, 0)))             # (B,34,34,C)
    taps = [xp[:, ky:ky + 32:2, kx:kx + 32:2, :]
            for ky in range(3) for kx in range(3)]                # each (B,16,16,C)
    cols = jnp.concatenate(taps, axis=-1)                         # (B,16,16,9C)
    cols = jnp.concatenate(
        [cols, jnp.ones((B, 16, 16, 1), cols.dtype)], axis=-1)    # bias column
    if k1p > 9 * cin + 1:
        cols = jnp.pad(cols, ((0, 0), (0, 0), (0, 0), (0, k1p - 9 * cin - 1)))
    blocks = []
    for p in range(2):
        for q in range(2):
            ys = np.arange(1, 9) * 2 - 1 - p                      # (8,) in [0,16)
            xs = np.arange(1, 9) * 2 - 1 - q
            blk = jnp.take(jnp.take(cols, ys, axis=1), xs, axis=2)   # (B,8,8,k1p)
            blk = jnp.pad(blk, ((0, 0), (0, 0), (1, 7), (0, 0)))     # cols 1..8 data
            blocks.append(blk)
    xc = jnp.stack(blocks, axis=1)                                # (B,4,8,16,k1p)
    return xc.reshape(B, 4 * 8 * 16, k1p)                         # (B,512,k1p)


def conv_layers2_forward(x_nchw, params, block_batch=None):
    """Pallas implementation of ConvLayers2.forward (NCHW in / NCHW out)."""
    B, _, H, W = x_nchw.shape
    assert (H, W) == (32, 32), "ConvLayers2 expects 32x32 images (out_size=4)"
    k1p = params["k1p"]
    bblk = block_batch or _choose_block_batch(B)
    bpad = ((B + bblk - 1) // bblk) * bblk

    xc = _build_layer1_cols(x_nchw, k1p)                          # (B,512,k1p) f32
    if bpad > B:
        xc = jnp.concatenate(
            [xc, jnp.zeros((bpad - B, 512, k1p), xc.dtype)], axis=0)
    xc = xc.reshape(bpad * 512, k1p).astype(jnp.bfloat16)

    out = pl.pallas_call(
        _convlayers2_kernel,
        out_shape=jax.ShapeDtypeStruct((bpad * 16, 256), jnp.float32),
        grid_spec=pltpu.PrefetchScalarGridSpec(
            num_scalar_prefetch=0,
            grid=(bpad // bblk,),
            in_specs=[
                pl.BlockSpec((bblk * 512, k1p), lambda b: (b, 0)),   # layer-1 im2col
                pl.BlockSpec((k1p, 64), lambda b: (0, 0)),           # w1 (+bias row)
                pl.BlockSpec((576, 128), lambda b: (0, 0)),          # w2 flat
                pl.BlockSpec((1, 128), lambda b: (0, 0)),            # b2
                pl.BlockSpec((1152, 256), lambda b: (0, 0)),         # w3 flat
                pl.BlockSpec((1, 256), lambda b: (0, 0)),            # b3
                pl.BlockSpec((144, 64), lambda b: (0, 0)),           # layer-3 tap sel
            ],
            out_specs=pl.BlockSpec((bblk * 16, 256), lambda b: (b, 0)),
            scratch_shapes=[
                pltpu.VMEM((bblk, 4, 9, 16, 64), jnp.bfloat16),   # layer-2 parity planes
                pltpu.VMEM((bblk * 64, 576), jnp.bfloat16),       # layer-2 im2col
                pltpu.VMEM((bblk * 16, 1152), jnp.bfloat16),      # layer-3 im2col
            ],
        ),
        compiler_params=pltpu.CompilerParams(
            dimension_semantics=("parallel",),
            vmem_limit_bytes=32 * 1024 * 1024),
    )(xc, params["w1"], params["w2"], params["b2"],
      params["w3"], params["b3"], params["sel"])

    out = out.reshape(bpad, 16, 256)[:B].reshape(B, 4, 4, 256)
    return jnp.transpose(out, (0, 3, 1, 2))                       # (B,256,4,4)


# ------------------------------------------------------------------------ parameters
def init_params(key, image_channels):
    """PyTorch-layout parameters: [(w (Cout,Cin,3,3), b (Cout,)) x 3]."""
    specs = [(image_channels, 64), (64, 128), (128, 256)]
    pt_params = []
    for i, (cin, cout) in enumerate(specs):
        kw, kb = jax.random.split(jax.random.fold_in(key, i))
        bound = 1.0 / jnp.sqrt(jnp.float32(cin * 9))
        w = jax.random.uniform(kw, (cout, cin, 3, 3), jnp.float32, -bound, bound)
        b = jax.random.uniform(kb, (cout,), jnp.float32, -bound, bound)
        pt_params.append((w, b))
    return pt_params


def prepare_params(pt_params, image_channels):
    """Host-side, one-off conversion to the kernel formats (bf16 weights, flattened,
    layer-1 bias folded in, layer-3 tap-selection matrix precomputed)."""
    (w1, b1), (w2, b2), (w3, b3) = pt_params
    c9 = 9 * image_channels
    k1p = ((c9 + 1 + 7) // 8) * 8
    w1f = jnp.transpose(w1, (2, 3, 1, 0)).reshape(c9, 64)          # rows (ky,kx,cin)
    w1_aug = jnp.zeros((k1p, 64), jnp.float32).at[:c9].set(w1f).at[c9].set(b1)
    w2f = jnp.transpose(w2, (2, 3, 1, 0)).reshape(9 * 64, 128)
    w3f = jnp.transpose(w3, (2, 3, 1, 0)).reshape(9 * 128, 256)

    sel = np.zeros((144, 64), np.float32)        # (tap*16 + out_pos, in_pos) one-hot
    for ky in range(3):
        for kx in range(3):
            t = 3 * ky + kx
            for oy in range(4):
                for ox in range(4):
                    y2, x2 = 2 * oy + ky - 1, 2 * ox + kx - 1
                    if 0 <= y2 < 8 and 0 <= x2 < 8:
                        sel[t * 16 + oy * 4 + ox, y2 * 8 + x2] = 1.0

    return dict(
        k1p=k1p,
        w1=w1_aug.astype(jnp.bfloat16),
        w2=w2f.astype(jnp.bfloat16),
        b2=b2.reshape(1, 128).astype(jnp.float32),
        w3=w3f.astype(jnp.bfloat16),
        b3=b3.reshape(1, 256).astype(jnp.float32),
        sel=jnp.asarray(sel, jnp.bfloat16),
    )


def reference_forward(x_nchw, pt_params):
    """Pure-XLA reference: exact Conv2d(stride=2, pad=1) + ReLU chain."""
    out = x_nchw
    for w, b in pt_params:
        out = lax.conv_general_dilated(
            out, w, window_strides=(2, 2), padding=((1, 1), (1, 1)),
            dimension_numbers=("NCHW", "OIHW", "NCHW"))
        out = jax.nn.relu(out + b[None, :, None, None])
    return out


# ------------------------------------------------------------------------------ main
if __name__ == "__main__":
    key = jax.random.PRNGKey(0)
    image_channels = 3
    batch = 8                                    # -> 2 grid steps of 4 images each

    pt_params = init_params(jax.random.fold_in(key, 1), image_channels)
    k_params = prepare_params(pt_params, image_channels)

    x = jax.random.normal(jax.random.fold_in(key, 2),
                          (batch, image_channels, 32, 32), jnp.float32)

    fwd = jax.jit(lambda t: conv_layers2_forward(t, k_params))
    out = jax.block_until_ready(fwd(x))
    assert out.shape == (batch, 256, 4, 4), out.shape

    ref = reference_forward(x, pt_params)
    # Tolerance reflects explicit bf16 MXU inputs (f32 accumulation) on the kernel side
    # and XLA's default (bf16-pass) conv precision on the reference side.
    err = float(jnp.max(jnp.abs(out - ref)))
    assert jnp.allclose(out, ref, atol=3e-2, rtol=3e-2), err

    print("KERNEL_OK")
</pallas_src>

<mosaic_0001>
module attributes {stable_mosaic.version = 11 : i64} {
  func.func @_convlayers2_kernel(%arg0: i32, %arg1: memref<2048x32xbf16, #tpu.memory_space<vmem>>, %arg2: memref<32x64xbf16, #tpu.memory_space<vmem>>, %arg3: memref<576x128xbf16, #tpu.memory_space<vmem>>, %arg4: memref<1x128xf32, #tpu.memory_space<vmem>>, %arg5: memref<1152x256xbf16, #tpu.memory_space<vmem>>, %arg6: memref<1x256xf32, #tpu.memory_space<vmem>>, %arg7: memref<144x64xbf16, #tpu.memory_space<vmem>>, %arg8: memref<64x256xf32, #tpu.memory_space<vmem>>, %arg9: memref<4x4x9x16x64xbf16, #tpu.memory_space<vmem>>, %arg10: memref<256x576xbf16, #tpu.memory_space<vmem>>, %arg11: memref<64x1152xbf16, #tpu.memory_space<vmem>>) attributes {dimension_semantics = [#tpu.dimension_semantics<parallel>], iteration_bounds = array<i64: 2>, scalar_prefetch = 0 : i64, scratch_operands = 3 : i64, tpu.core_type = #tpu.core_type<tc>, window_params = [{transform_indices = @transform_0, window_bounds = array<i64: 2048, 32>}, {pipeline_mode = #tpu.pipeline_mode<synchronous>, transform_indices = @transform_1, window_bounds = array<i64: 32, 64>}, {pipeline_mode = #tpu.pipeline_mode<synchronous>, transform_indices = @transform_2, window_bounds = array<i64: 576, 128>}, {pipeline_mode = #tpu.pipeline_mode<synchronous>, transform_indices = @transform_3, window_bounds = array<i64: 1, 128>}, {pipeline_mode = #tpu.pipeline_mode<synchronous>, transform_indices = @transform_4, window_bounds = array<i64: 1152, 256>}, {pipeline_mode = #tpu.pipeline_mode<synchronous>, transform_indices = @transform_5, window_bounds = array<i64: 1, 256>}, {pipeline_mode = #tpu.pipeline_mode<synchronous>, transform_indices = @transform_6, window_bounds = array<i64: 144, 64>}, {transform_indices = @transform_7, window_bounds = array<i64: 64, 256>}]} {
    %c0 = arith.constant 0 : index
    %c0_0 = arith.constant 0 : index
    %0 = vector.load %arg1[%c0, %c0_0] : memref<2048x32xbf16, #tpu.memory_space<vmem>>, vector<2048x32xbf16>
    %c0_1 = arith.constant 0 : index
    %c0_2 = arith.constant 0 : index
    %1 = vector.load %arg2[%c0_1, %c0_2] : memref<32x64xbf16, #tpu.memory_space<vmem>>, vector<32x64xbf16>
    %cst = arith.constant dense<0.000000e+00> : vector<2048x64xf32>
    %2 = tpu.matmul %0, %1, %cst {dimension_numbers = #tpu.dot_dimension_numbers<[1], [0], [0], [1], [0, 0, 1, 1], [], []>} : vector<2048x32xbf16>, vector<32x64xbf16>, vector<2048x64xf32> -> vector<2048x64xf32>
    %cst_3 = arith.constant 0.000000e+00 : f32
    %3 = vector.broadcast %cst_3 : f32 to vector<2048x64xf32>
    %4 = arith.maximumf %2, %3 : vector<2048x64xf32>
    %5 = arith.truncf %4 : vector<2048x64xf32> to vector<2048x64xbf16>
    %6 = vector.shape_cast %5 : vector<2048x64xbf16> to vector<4x4x8x16x64xbf16>
    %cst_4 = arith.constant 0.000000e+00 : bf16
    %7 = vector.broadcast %cst_4 : bf16 to vector<4x4x1x16x64xbf16>
    %c0_5 = arith.constant 0 : index
    %c0_6 = arith.constant 0 : index
    %c0_7 = arith.constant 0 : index
    %c0_8 = arith.constant 0 : index
    %c0_9 = arith.constant 0 : index
    %8 = vector.load %arg9[%c0_5, %c0_6, %c0_7, %c0_8, %c0_9] : memref<4x4x9x16x64xbf16, #tpu.memory_space<vmem>>, vector<4x4x1x16x64xbf16>
    tpu.vector_store %arg9[%c0_5, %c0_6, %c0_7, %c0_8, %c0_9], %7 {strides = array<i32>} : memref<4x4x9x16x64xbf16, #tpu.memory_space<vmem>>, vector<4x4x1x16x64xbf16>,
    %9 = vector.extract_strided_slice %6 {offsets = [0, 0, 0, 0, 0], sizes = [4, 1, 8, 16, 64], strides = [1, 1, 1, 1, 1]} : vector<4x4x8x16x64xbf16> to vector<4x1x8x16x64xbf16>
    %10 = vector.shape_cast %9 : vector<4x1x8x16x64xbf16> to vector<4x8x16x64xbf16>
    %c0_10 = arith.constant 0 : index
    %c0_11 = arith.constant 0 : index
    %c1 = arith.constant 1 : index
    %c0_12 = arith.constant 0 : index
    %c0_13 = arith.constant 0 : index
    %11 = vector.load %arg9[%c0_10, %c0_11, %c1, %c0_12, %c0_13] : memref<4x4x9x16x64xbf16, #tpu.memory_space<vmem>>, vector<4x1x8x16x64xbf16>
    %12 = vector.shape_cast %11 : vector<4x1x8x16x64xbf16> to vector<4x8x16x64xbf16>
    %13 = vector.shape_cast %10 : vector<4x8x16x64xbf16> to vector<4x1x8x16x64xbf16>
    tpu.vector_store %arg9[%c0_10, %c0_11, %c1, %c0_12, %c0_13], %13 {strides = array<i32>} : memref<4x4x9x16x64xbf16, #tpu.memory_space<vmem>>, vector<4x1x8x16x64xbf16>,
    %14 = vector.extract_strided_slice %6 {offsets = [0, 1, 0, 0, 0], sizes = [4, 1, 8, 16, 64], strides = [1, 1, 1, 1, 1]} : vector<4x4x8x16x64xbf16> to vector<4x1x8x16x64xbf16>
    %15 = vector.shape_cast %14 : vector<4x1x8x16x64xbf16> to vector<4x8x16x64xbf16>
    %c0_14 = arith.constant 0 : index
    %c1_15 = arith.constant 1 : index
    %c1_16 = arith.constant 1 : index
    %c0_17 = arith.constant 0 : index
    %c0_18 = arith.constant 0 : index
    %16 = vector.load %arg9[%c0_14, %c1_15, %c1_16, %c0_17, %c0_18] : memref<4x4x9x16x64xbf16, #tpu.memory_space<vmem>>, vector<4x1x8x16x64xbf16>
    %17 = vector.shape_cast %16 : vector<4x1x8x16x64xbf16> to vector<4x8x16x64xbf16>
    %18 = vector.shape_cast %15 : vector<4x8x16x64xbf16> to vector<4x1x8x16x64xbf16>
    tpu.vector_store %arg9[%c0_14, %c1_15, %c1_16, %c0_17, %c0_18], %18 {strides = array<i32>} : memref<4x4x9x16x64xbf16, #tpu.memory_space<vmem>>, vector<4x1x8x16x64xbf16>,
    %19 = vector.extract_strided_slice %6 {offsets = [0, 2, 0, 0, 0], sizes = [4, 1, 8, 16, 64], strides = [1, 1, 1, 1, 1]} : vector<4x4x8x16x64xbf16> to vector<4x1x8x16x64xbf16>
    %20 = vector.shape_cast %19 : vector<4x1x8x16x64xbf16> to vector<4x8x16x64xbf16>
    %c0_19 = arith.constant 0 : index
    %c2 = arith.constant 2 : index
    %c1_20 = arith.constant 1 : index
    %c0_21 = arith.constant 0 : index
    %c0_22 = arith.constant 0 : index
    %21 = vector.load %arg9[%c0_19, %c2, %c1_20, %c0_21, %c0_22] : memref<4x4x9x16x64xbf16, #tpu.memory_space<vmem>>, vector<4x1x8x16x64xbf16>
    %22 = vector.shape_cast %21 : vector<4x1x8x16x64xbf16> to vector<4x8x16x64xbf16>
    %23 = vector.shape_cast %20 : vector<4x8x16x64xbf16> to vector<4x1x8x16x64xbf16>
    tpu.vector_store %arg9[%c0_19, %c2, %c1_20, %c0_21, %c0_22], %23 {strides = array<i32>} : memref<4x4x9x16x64xbf16, #tpu.memory_space<vmem>>, vector<4x1x8x16x64xbf16>,
    %24 = vector.extract_strided_slice %6 {offsets = [0, 3, 0, 0, 0], sizes = [4, 1, 8, 16, 64], strides = [1, 1, 1, 1, 1]} : vector<4x4x8x16x64xbf16> to vector<4x1x8x16x64xbf16>
    %25 = vector.shape_cast %24 : vector<4x1x8x16x64xbf16> to vector<4x8x16x64xbf16>
    %c0_23 = arith.constant 0 : index
    %c3 = arith.constant 3 : index
    %c1_24 = arith.constant 1 : index
    %c0_25 = arith.constant 0 : index
    %c0_26 = arith.constant 0 : index
    %26 = vector.load %arg9[%c0_23, %c3, %c1_24, %c0_25, %c0_26] : memref<4x4x9x16x64xbf16, #tpu.memory_space<vmem>>, vector<4x1x8x16x64xbf16>
    %27 = vector.shape_cast %26 : vector<4x1x8x16x64xbf16> to vector<4x8x16x64xbf16>
    %28 = vector.shape_cast %25 : vector<4x8x16x64xbf16> to vector<4x1x8x16x64xbf16>
    tpu.vector_store %arg9[%c0_23, %c3, %c1_24, %c0_25, %c0_26], %28 {strides = array<i32>} : memref<4x4x9x16x64xbf16, #tpu.memory_space<vmem>>, vector<4x1x8x16x64xbf16>,
    %c0_27 = arith.constant 0 : index
    %c0_28 = arith.constant 0 : index
    %c0_29 = arith.constant 0 : index
    %c0_30 = arith.constant 0 : index
    %c0_31 = arith.constant 0 : index
    %29 = vector.load %arg9[%c0_27, %c0_28, %c0_29, %c0_30, %c0_31] : memref<4x4x9x16x64xbf16, #tpu.memory_space<vmem>>, vector<4x1x8x8x64xbf16>
    %30 = vector.shape_cast %29 : vector<4x1x8x8x64xbf16> to vector<4x8x8x64xbf16>
    %31 = vector.shape_cast %30 : vector<4x8x8x64xbf16> to vector<256x64xbf16>
    %c0_32 = arith.constant 0 : index
    %c0_33 = arith.constant 0 : index
    %32 = vector.load %arg10[%c0_32, %c0_33] : memref<256x576xbf16, #tpu.memory_space<vmem>>, vector<256x64xbf16>
    tpu.vector_store %arg10[%c0_32, %c0_33], %31 {strides = array<i32>} : memref<256x576xbf16, #tpu.memory_space<vmem>>, vector<256x64xbf16>,
    %c0_34 = arith.constant 0 : index
    %c1_35 = arith.constant 1 : index
    %c0_36 = arith.constant 0 : index
    %c1_37 = arith.constant 1 : index
    %c0_38 = arith.constant 0 : index
    %33 = vector.load %arg9[%c0_34, %c1_35, %c0_36, %c1_37, %c0_38] : memref<4x4x9x16x64xbf16, #tpu.memory_space<vmem>>, vector<4x1x8x8x64xbf16>
    %34 = vector.shape_cast %33 : vector<4x1x8x8x64xbf16> to vector<4x8x8x64xbf16>
    %35 = vector.shape_cast %34 : vector<4x8x8x64xbf16> to vector<256x64xbf16>
    %c0_39 = arith.constant 0 : index
    %c64 = arith.constant 64 : index
    %36 = vector.load %arg10[%c0_39, %c64] : memref<256x576xbf16, #tpu.memory_space<vmem>>, vector<256x64xbf16>
    tpu.vector_store %arg10[%c0_39, %c64], %35 {strides = array<i32>} : memref<256x576xbf16, #tpu.memory_space<vmem>>, vector<256x64xbf16>,
    %c0_40 = arith.constant 0 : index
    %c0_41 = arith.constant 0 : index
    %c0_42 = arith.constant 0 : index
    %c1_43 = arith.constant 1 : index
    %c0_44 = arith.constant 0 : index
    %37 = vector.load %arg9[%c0_40, %c0_41, %c0_42, %c1_43, %c0_44] : memref<4x4x9x16x64xbf16, #tpu.memory_space<vmem>>, vector<4x1x8x8x64xbf16>
    %38 = vector.shape_cast %37 : vector<4x1x8x8x64xbf16> to vector<4x8x8x64xbf16>
    %39 = vector.shape_cast %38 : vector<4x8x8x64xbf16> to vector<256x64xbf16>
    %c0_45 = arith.constant 0 : index
    %c128 = arith.constant 128 : index
    %40 = vector.load %arg10[%c0_45, %c128] : memref<256x576xbf16, #tpu.memory_space<vmem>>, vector<256x64xbf16>
    tpu.vector_store %arg10[%c0_45, %c128], %39 {strides = array<i32>} : memref<256x576xbf16, #tpu.memory_space<vmem>>, vector<256x64xbf16>,
    %c0_46 = arith.constant 0 : index
    %c2_47 = arith.constant 2 : index
    %c1_48 = arith.constant 1 : index
    %c0_49 = arith.constant 0 : index
    %c0_50 = arith.constant 0 : index
    %41 = vector.load %arg9[%c0_46, %c2_47, %c1_48, %c0_49, %c0_50] : memref<4x4x9x16x64xbf16, #tpu.memory_space<vmem>>, vector<4x1x8x8x64xbf16>
    %42 = vector.shape_cast %41 : vector<4x1x8x8x64xbf16> to vector<4x8x8x64xbf16>
    %43 = vector.shape_cast %42 : vector<4x8x8x64xbf16> to vector<256x64xbf16>
    %c0_51 = arith.constant 0 : index
    %c192 = arith.constant 192 : index
    %44 = vector.load %arg10[%c0_51, %c192] : memref<256x576xbf16, #tpu.memory_space<vmem>>, vector<256x64xbf16>
    tpu.vector_store %arg10[%c0_51, %c192], %43 {strides = array<i32>} : memref<256x576xbf16, #tpu.memory_space<vmem>>, vector<256x64xbf16>,
    %c0_52 = arith.constant 0 : index
    %c3_53 = arith.constant 3 : index
    %c1_54 = arith.constant 1 : index
    %c1_55 = arith.constant 1 : index
    %c0_56 = arith.constant 0 : index
    %45 = vector.load %arg9[%c0_52, %c3_53, %c1_54, %c1_55, %c0_56] : memref<4x4x9x16x64xbf16, #tpu.memory_space<vmem>>, vector<4x1x8x8x64xbf16>
    %46 = vector.shape_cast %45 : vector<4x1x8x8x64xbf16> to vector<4x8x8x64xbf16>
    %47 = vector.shape_cast %46 : vector<4x8x8x64xbf16> to vector<256x64xbf16>
    %c0_57 = arith.constant 0 : index
    %c256 = arith.constant 256 : index
    %48 = vector.load %arg10[%c0_57, %c256] : memref<256x576xbf16, #tpu.memory_space<vmem>>, vector<256x64xbf16>
    tpu.vector_store %arg10[%c0_57, %c256], %47 {strides = array<i32>} : memref<256x576xbf16, #tpu.memory_space<vmem>>, vector<256x64xbf16>,
    %c0_58 = arith.constant 0 : index
    %c2_59 = arith.constant 2 : index
    %c1_60 = arith.constant 1 : index
    %c1_61 = arith.constant 1 : index
    %c0_62 = arith.constant 0 : index
    %49 = vector.load %arg9[%c0_58, %c2_59, %c1_60, %c1_61, %c0_62] : memref<4x4x9x16x64xbf16, #tpu.memory_space<vmem>>, vector<4x1x8x8x64xbf16>
    %50 = vector.shape_cast %49 : vector<4x1x8x8x64xbf16> to vector<4x8x8x64xbf16>
    %51 = vector.shape_cast %50 : vector<4x8x8x64xbf16> to vector<256x64xbf16>
    %c0_63 = arith.constant 0 : index
    %c320 = arith.constant 320 : index
    %52 = vector.load %arg10[%c0_63, %c320] : memref<256x576xbf16, #tpu.memory_space<vmem>>, vector<256x64xbf16>
    tpu.vector_store %arg10[%c0_63, %c320], %51 {strides = array<i32>} : memref<256x576xbf16, #tpu.memory_space<vmem>>, vector<256x64xbf16>,
    %c0_64 = arith.constant 0 : index
    %c0_65 = arith.constant 0 : index
    %c1_66 = arith.constant 1 : index
    %c0_67 = arith.constant 0 : index
    %c0_68 = arith.constant 0 : index
    %53 = vector.load %arg9[%c0_64, %c0_65, %c1_66, %c0_67, %c0_68] : memref<4x4x9x16x64xbf16, #tpu.memory_space<vmem>>, vector<4x1x8x8x64xbf16>
    %54 = vector.shape_cast %53 : vector<4x1x8x8x64xbf16> to vector<4x8x8x64xbf16>
    %55 = vector.shape_cast %54 : vector<4x8x8x64xbf16> to vector<256x64xbf16>
    %c0_69 = arith.constant 0 : index
    %c384 = arith.constant 384 : index
    %56 = vector.load %arg10[%c0_69, %c384] : memref<256x576xbf16, #tpu.memory_space<vmem>>, vector<256x64xbf16>
    tpu.vector_store %arg10[%c0_69, %c384], %55 {strides = array<i32>} : memref<256x576xbf16, #tpu.memory_space<vmem>>, vector<256x64xbf16>,
    %c0_70 = arith.constant 0 : index
    %c1_71 = arith.constant 1 : index
    %c1_72 = arith.constant 1 : index
    %c1_73 = arith.constant 1 : index
    %c0_74 = arith.constant 0 : index
    %57 = vector.load %arg9[%c0_70, %c1_71, %c1_72, %c1_73, %c0_74] : memref<4x4x9x16x64xbf16, #tpu.memory_space<vmem>>, vector<4x1x8x8x64xbf16>
    %58 = vector.shape_cast %57 : vector<4x1x8x8x64xbf16> to vector<4x8x8x64xbf16>
    %59 = vector.shape_cast %58 : vector<4x8x8x64xbf16> to vector<256x64xbf16>
    %c0_75 = arith.constant 0 : index
    %c448 = arith.constant 448 : index
    %60 = vector.load %arg10[%c0_75, %c448] : memref<256x576xbf16, #tpu.memory_space<vmem>>, vector<256x64xbf16>
    tpu.vector_store %arg10[%c0_75, %c448], %59 {strides = array<i32>} : memref<256x576xbf16, #tpu.memory_space<vmem>>, vector<256x64xbf16>,
    %c0_76 = arith.constant 0 : index
    %c0_77 = arith.constant 0 : index
    %c1_78 = arith.constant 1 : index
    %c1_79 = arith.constant 1 : index
    %c0_80 = arith.constant 0 : index
    %61 = vector.load %arg9[%c0_76, %c0_77, %c1_78, %c1_79, %c0_80] : memref<4x4x9x16x64xbf16, #tpu.memory_space<vmem>>, vector<4x1x8x8x64xbf16>
    %62 = vector.shape_cast %61 : vector<4x1x8x8x64xbf16> to vector<4x8x8x64xbf16>
    %63 = vector.shape_cast %62 : vector<4x8x8x64xbf16> to vector<256x64xbf16>
    %c0_81 = arith.constant 0 : index
    %c512 = arith.constant 512 : index
    %64 = vector.load %arg10[%c0_81, %c512] : memref<256x576xbf16, #tpu.memory_space<vmem>>, vector<256x64xbf16>
    tpu.vector_store %arg10[%c0_81, %c512], %63 {strides = array<i32>} : memref<256x576xbf16, #tpu.memory_space<vmem>>, vector<256x64xbf16>,
    %c0_82 = arith.constant 0 : index
    %c0_83 = arith.constant 0 : index
    %65 = vector.load %arg10[%c0_82, %c0_83] : memref<256x576xbf16, #tpu.memory_space<vmem>>, vector<256x576xbf16>
    %c0_84 = arith.constant 0 : index
    %c0_85 = arith.constant 0 : index
    %66 = vector.load %arg3[%c0_84, %c0_85] : memref<576x128xbf16, #tpu.memory_space<vmem>>, vector<576x128xbf16>
    %cst_86 = arith.constant dense<0.000000e+00> : vector<256x128xf32>
    %67 = tpu.matmul %65, %66, %cst_86 {dimension_numbers = #tpu.dot_dimension_numbers<[1], [0], [0], [1], [0, 0, 1, 1], [], []>} : vector<256x576xbf16>, vector<576x128xbf16>, vector<256x128xf32> -> vector<256x128xf32>
    %c0_87 = arith.constant 0 : index
    %c0_88 = arith.constant 0 : index
    %68 = vector.load %arg4[%c0_87, %c0_88] : memref<1x128xf32, #tpu.memory_space<vmem>>, vector<1x128xf32>
    %69 = vector.broadcast %68 : vector<1x128xf32> to vector<256x128xf32>
    %70 = arith.addf %67, %69 : vector<256x128xf32>
    %cst_89 = arith.constant 0.000000e+00 : f32
    %71 = vector.broadcast %cst_89 : f32 to vector<256x128xf32>
    %72 = arith.maximumf %70, %71 : vector<256x128xf32>
    %73 = arith.truncf %72 : vector<256x128xf32> to vector<256x128xbf16>
    %74 = vector.shape_cast %73 : vector<256x128xbf16> to vector<4x64x128xbf16>
    %c0_90 = arith.constant 0 : index
    %c0_91 = arith.constant 0 : index
    %75 = vector.load %arg7[%c0_90, %c0_91] : memref<144x64xbf16, #tpu.memory_space<vmem>>, vector<144x64xbf16>
    %76 = vector.shape_cast %75 : vector<144x64xbf16> to vector<1x144x64xbf16>
    %77 = vector.broadcast %76 : vector<1x144x64xbf16> to vector<4x144x64xbf16>
    %cst_92 = arith.constant dense<0.000000e+00> : vector<4x144x128xf32>
    %78 = tpu.matmul %77, %74, %cst_92 {dimension_numbers = #tpu.dot_dimension_numbers<[2], [1], [1], [2], [0, 0, 0, 1, 1, 2], [0], [0]>} : vector<4x144x64xbf16>, vector<4x64x128xbf16>, vector<4x144x128xf32> -> vector<4x144x128xf32>
    %79 = arith.truncf %78 : vector<4x144x128xf32> to vector<4x144x128xbf16>
    %80 = vector.extract_strided_slice %79 {offsets = [0, 0, 0], sizes = [4, 16, 128], strides = [1, 1, 1]} : vector<4x144x128xbf16> to vector<4x16x128xbf16>
    %81 = vector.shape_cast %80 : vector<4x16x128xbf16> to vector<64x128xbf16>
    %c0_93 = arith.constant 0 : index
    %c0_94 = arith.constant 0 : index
    %82 = vector.load %arg11[%c0_93, %c0_94] : memref<64x1152xbf16, #tpu.memory_space<vmem>>, vector<64x128xbf16>
    tpu.vector_store %arg11[%c0_93, %c0_94], %81 {strides = array<i32>} : memref<64x1152xbf16, #tpu.memory_space<vmem>>, vector<64x128xbf16>,
    %83 = vector.extract_strided_slice %79 {offsets = [0, 16, 0], sizes = [4, 16, 128], strides = [1, 1, 1]} : vector<4x144x128xbf16> to vector<4x16x128xbf16>
    %84 = vector.shape_cast %83 : vector<4x16x128xbf16> to vector<64x128xbf16>
    %c0_95 = arith.constant 0 : index
    %c128_96 = arith.constant 128 : index
    %85 = vector.load %arg11[%c0_95, %c128_96] : memref<64x1152xbf16, #tpu.memory_space<vmem>>, vector<64x128xbf16>
    tpu.vector_store %arg11[%c0_95, %c128_96], %84 {strides = array<i32>} : memref<64x1152xbf16, #tpu.memory_space<vmem>>, vector<64x128xbf16>,
    %86 = vector.extract_strided_slice %79 {offsets = [0, 32, 0], sizes = [4, 16, 128], strides = [1, 1, 1]} : vector<4x144x128xbf16> to vector<4x16x128xbf16>
    %87 = vector.shape_cast %86 : vector<4x16x128xbf16> to vector<64x128xbf16>
    %c0_97 = arith.constant 0 : index
    %c256_98 = arith.constant 256 : index
    %88 = vector.load %arg11[%c0_97, %c256_98] : memref<64x1152xbf16, #tpu.memory_space<vmem>>, vector<64x128xbf16>
    tpu.vector_store %arg11[%c0_97, %c256_98], %87 {strides = array<i32>} : memref<64x1152xbf16, #tpu.memory_space<vmem>>, vector<64x128xbf16>,
    %89 = vector.extract_strided_slice %79 {offsets = [0, 48, 0], sizes = [4, 16, 128], strides = [1, 1, 1]} : vector<4x144x128xbf16> to vector<4x16x128xbf16>
    %90 = vector.shape_cast %89 : vector<4x16x128xbf16> to vector<64x128xbf16>
    %c0_99 = arith.constant 0 : index
    %c384_100 = arith.constant 384 : index
    %91 = vector.load %arg11[%c0_99, %c384_100] : memref<64x1152xbf16, #tpu.memory_space<vmem>>, vector<64x128xbf16>
    tpu.vector_store %arg11[%c0_99, %c384_100], %90 {strides = array<i32>} : memref<64x1152xbf16, #tpu.memory_space<vmem>>, vector<64x128xbf16>,
    %92 = vector.extract_strided_slice %79 {offsets = [0, 64, 0], sizes = [4, 16, 128], strides = [1, 1, 1]} : vector<4x144x128xbf16> to vector<4x16x128xbf16>
    %93 = vector.shape_cast %92 : vector<4x16x128xbf16> to vector<64x128xbf16>
    %c0_101 = arith.constant 0 : index
    %c512_102 = arith.constant 512 : index
    %94 = vector.load %arg11[%c0_101, %c512_102] : memref<64x1152xbf16, #tpu.memory_space<vmem>>, vector<64x128xbf16>
    tpu.vector_store %arg11[%c0_101, %c512_102], %93 {strides = array<i32>} : memref<64x1152xbf16, #tpu.memory_space<vmem>>, vector<64x128xbf16>,
    %95 = vector.extract_strided_slice %79 {offsets = [0, 80, 0], sizes = [4, 16, 128], strides = [1, 1, 1]} : vector<4x144x128xbf16> to vector<4x16x128xbf16>
    %96 = vector.shape_cast %95 : vector<4x16x128xbf16> to vector<64x128xbf16>
    %c0_103 = arith.constant 0 : index
    %c640 = arith.constant 640 : index
    %97 = vector.load %arg11[%c0_103, %c640] : memref<64x1152xbf16, #tpu.memory_space<vmem>>, vector<64x128xbf16>
    tpu.vector_store %arg11[%c0_103, %c640], %96 {strides = array<i32>} : memref<64x1152xbf16, #tpu.memory_space<vmem>>, vector<64x128xbf16>,
    %98 = vector.extract_strided_slice %79 {offsets = [0, 96, 0], sizes = [4, 16, 128], strides = [1, 1, 1]} : vector<4x144x128xbf16> to vector<4x16x128xbf16>
    %99 = vector.shape_cast %98 : vector<4x16x128xbf16> to vector<64x128xbf16>
    %c0_104 = arith.constant 0 : index
    %c768 = arith.constant 768 : index
    %100 = vector.load %arg11[%c0_104, %c768] : memref<64x1152xbf16, #tpu.memory_space<vmem>>, vector<64x128xbf16>
    tpu.vector_store %arg11[%c0_104, %c768], %99 {strides = array<i32>} : memref<64x1152xbf16, #tpu.memory_space<vmem>>, vector<64x128xbf16>,
    %101 = vector.extract_strided_slice %79 {offsets = [0, 112, 0], sizes = [4, 16, 128], strides = [1, 1, 1]} : vector<4x144x128xbf16> to vector<4x16x128xbf16>
    %102 = vector.shape_cast %101 : vector<4x16x128xbf16> to vector<64x128xbf16>
    %c0_105 = arith.constant 0 : index
    %c896 = arith.constant 896 : index
    %103 = vector.load %arg11[%c0_105, %c896] : memref<64x1152xbf16, #tpu.memory_space<vmem>>, vector<64x128xbf16>
    tpu.vector_store %arg11[%c0_105, %c896], %102 {strides = array<i32>} : memref<64x1152xbf16, #tpu.memory_space<vmem>>, vector<64x128xbf16>,
    %104 = vector.extract_strided_slice %79 {offsets = [0, 128, 0], sizes = [4, 16, 128], strides = [1, 1, 1]} : vector<4x144x128xbf16> to vector<4x16x128xbf16>
    %105 = vector.shape_cast %104 : vector<4x16x128xbf16> to vector<64x128xbf16>
    %c0_106 = arith.constant 0 : index
    %c1024 = arith.constant 1024 : index
    %106 = vector.load %arg11[%c0_106, %c1024] : memref<64x1152xbf16, #tpu.memory_space<vmem>>, vector<64x128xbf16>
    tpu.vector_store %arg11[%c0_106, %c1024], %105 {strides = array<i32>} : memref<64x1152xbf16, #tpu.memory_space<vmem>>, vector<64x128xbf16>,
    %c0_107 = arith.constant 0 : index
    %c0_108 = arith.constant 0 : index
    %107 = vector.load %arg11[%c0_107, %c0_108] : memref<64x1152xbf16, #tpu.memory_space<vmem>>, vector<64x1152xbf16>
    %c0_109 = arith.constant 0 : index
    %c0_110 = arith.constant 0 : index
    %108 = vector.load %arg5[%c0_109, %c0_110] : memref<1152x256xbf16, #tpu.memory_space<vmem>>, vector<1152x256xbf16>
    %cst_111 = arith.constant dense<0.000000e+00> : vector<64x256xf32>
    %109 = tpu.matmul %107, %108, %cst_111 {dimension_numbers = #tpu.dot_dimension_numbers<[1], [0], [0], [1], [0, 0, 1, 1], [], []>} : vector<64x1152xbf16>, vector<1152x256xbf16>, vector<64x256xf32> -> vector<64x256xf32>
    %c0_112 = arith.constant 0 : index
    %c0_113 = arith.constant 0 : index
    %110 = vector.load %arg6[%c0_112, %c0_113] : memref<1x256xf32, #tpu.memory_space<vmem>>, vector<1x256xf32>
    %111 = vector.broadcast %110 : vector<1x256xf32> to vector<64x256xf32>
    %112 = arith.addf %109, %111 : vector<64x256xf32>
    %cst_114 = arith.constant 0.000000e+00 : f32
    %113 = vector.broadcast %cst_114 : f32 to vector<64x256xf32>
    %114 = arith.maximumf %112, %113 : vector<64x256xf32>
    %c0_115 = arith.constant 0 : index
    %c0_116 = arith.constant 0 : index
    %115 = vector.load %arg8[%c0_115, %c0_116] : memref<64x256xf32, #tpu.memory_space<vmem>>, vector<64x256xf32>
    tpu.vector_store %arg8[%c0_115, %c0_116], %114 {strides = array<i32>} : memref<64x256xf32, #tpu.memory_space<vmem>>, vector<64x256xf32>,
    return
  }
  func.func @transform_0(%arg0: i32) -> (i32, i32) {
    %c0_i32 = arith.constant 0 : i32
    %c0_i32_0 = arith.constant 0 : i32
    return %arg0, %c0_i32 : i32, i32
  }
  func.func @transform_1(%arg0: i32) -> (i32, i32) {
    %c0_i32 = arith.constant 0 : i32
    %c0_i32_0 = arith.constant 0 : i32
    %c0_i32_1 = arith.constant 0 : i32
    return %c0_i32, %c0_i32_0 : i32, i32
  }
  func.func @transform_2(%arg0: i32) -> (i32, i32) {
    %c0_i32 = arith.constant 0 : i32
    %c0_i32_0 = arith.constant 0 : i32
    %c0_i32_1 = arith.constant 0 : i32
    return %c0_i32, %c0_i32_0 : i32, i32
  }
  func.func @transform_3(%arg0: i32) -> (i32, i32) {
    %c0_i32 = arith.constant 0 : i32
    %c0_i32_0 = arith.constant 0 : i32
    %c0_i32_1 = arith.constant 0 : i32
    return %c0_i32, %c0_i32_0 : i32, i32
  }
  func.func @transform_4(%arg0: i32) -> (i32, i32) {
    %c0_i32 = arith.constant 0 : i32
    %c0_i32_0 = arith.constant 0 : i32
    %c0_i32_1 = arith.constant 0 : i32
    return %c0_i32, %c0_i32_0 : i32, i32
  }
  func.func @transform_5(%arg0: i32) -> (i32, i32) {
    %c0_i32 = arith.constant 0 : i32
    %c0_i32_0 = arith.constant 0 : i32
    %c0_i32_1 = arith.constant 0 : i32
    return %c0_i32, %c0_i32_0 : i32, i32
  }
  func.func @transform_6(%arg0: i32) -> (i32, i32) {
    %c0_i32 = arith.constant 0 : i32
    %c0_i32_0 = arith.constant 0 : i32
    %c0_i32_1 = arith.constant 0 : i32
    return %c0_i32, %c0_i32_0 : i32, i32
  }
  func.func @transform_7(%arg0: i32) -> (i32, i32) {
    %c0_i32 = arith.constant 0 : i32
    %c0_i32_0 = arith.constant 0 : i32
    return %arg0, %c0_i32 : i32, i32
  }
}

</mosaic_0001>

<llo_original>
// kernel: _lambda_.1
$region0: #{_lambda_.1}
  #allocation0 [shape = 'u32[]', space=smem, size = 0x4, offset = 0x4, fixed_abs, tag = 'smem constant byte address 0x4 - core index']
  #allocation1 [shape = 'u32[144,128]{1,0:T(1,128)}', space=vmem, size = 0x12000, scoped, tag = 'internal scratch']
  #allocation2 [shape = 'bf16[4,4,9,16,64]{4,3,2,1,0:T(16,128)(2,1)}', space=vmem, size = 0x90000, scoped, tag = 'scratch operand']
  #allocation3 [shape = 'bf16[256,576]{1,0:T(16,128)(2,1)}', space=vmem, size = 0x50000, scoped, tag = 'scratch operand']
  #allocation4 [shape = 'bf16[64,1152]{1,0:T(16,128)(2,1)}', space=vmem, size = 0x24000, scoped, tag = 'scratch operand']
  %s0 = inlined_call_operand.vmem [shape: bf16[4096,32], index: 0, kind: input, shape index: {}]
  %s1 = inlined_call_operand.vmem [shape: bf16[32,64], index: 1, kind: input, shape index: {}]
  %s2 = inlined_call_operand.vmem [shape: bf16[576,128], index: 2, kind: input, shape index: {}]
  %s3 = inlined_call_operand.vmem [shape: f32[1,128], index: 3, kind: input, shape index: {}]
  %s4 = inlined_call_operand.vmem [shape: bf16[1152,256], index: 4, kind: input, shape index: {}]
  %s5 = inlined_call_operand.vmem [shape: f32[1,256], index: 5, kind: input, shape index: {}]
  %s6 = inlined_call_operand.vmem [shape: bf16[144,64], index: 6, kind: input, shape index: {}]
  %s7 = inlined_call_operand.vmem [shape: f32[128,256], index: 7, kind: output, shape index: {}]
  %s8 = sld [smem:[#allocation0]]
  $region61: #{_lambda_.1} parent=0
    _
  %s10 = ssub.s32 1, %s8
  %s11 = scalar_select 0, %s10, %s8
  loop: start=0, step=1, limit=4
  $region2: #{_lambda_.1} parent=0 // loop_pre_header
    _
  $region3: #{_lambda_.1} parent=0 // loop_header
    %s13 = sphi 0, %s17
    %p14 = scmp.ge.s32.totalorder %s13, 4
    %s23 = sphi 0, %s25
    %s26 = sphi 0, %s23
    %s27 = sphi 0, %s26
    %s43 = sphi 0, %s27
    %s47 = sphi 0, %s47
    %s49 = sphi 0, %s47
    %s50 = sphi 0, %s49
    %s64 = sphi 0, %s50
    %s68 = sphi 0, %s68
    %s70 = sphi 0, %s68
    %s71 = sphi 0, %s70
    %s85 = sphi 0, %s71
    %s89 = sphi 0, %s89
    %s91 = sphi 0, %s89
    %s92 = sphi 0, %s91
    %s106 = sphi 0, %s92
    %s110 = sphi 0, %s110
    %s112 = sphi 0, %s110
    %s113 = sphi 0, %s112
    %s127 = sphi 0, %s113
    %s131 = sphi 0, %s131
    %s133 = sphi 0, %s131
    %s134 = sphi 0, %s133
    %s148 = sphi 0, %s134
    %s152 = sphi 0, %s152
    %s154 = sphi 0, %s152
    %s155 = sphi 0, %s154
    %s169 = sphi 0, %s155
    %s175 = sphi 0, %s177
    %s178 = sphi 0, %s175
    %s179 = sphi 0, %s178
    %s195 = sphi 0, %s179
  $region4: #{_lambda_.1} parent=0 // loop_header_branch
    %16 = sbr.rel (%p14) target = $region8
  $region5: #{_lambda_.1} parent=0 // loop_body
    %s18 = ssub.s32 %s13, 1
    %s19 = ssub.s32 %s13, 2
    %s20 = sadd.s32 %s13, 1
    %s21 = ssub.s32 %s13, %s20
    %p22 = scmp.eq.s32.totalorder %s21, 0
    %s24 = sadd.s32 %s23, 1
    %s25 = scalar_select %p22, %s23, %s24
    %p28 = pneg %p22
    %p29 = scmp.eq.s32.totalorder %s13, 1
    %p30 = por %p28, %p29
    %p31 = scmp.ne.s32.totalorder %s23, %s26
    %p32 = scmp.eq.s32.totalorder %s13, 0
    %p33 = por %p31, %p32
    %p34 = scmp.ne.s32.totalorder %s23, %s26
    %p35 = scmp.eq.s32.totalorder %s18, 1
    %p36 = por %p34, %p35
    %p37 = scmp.ne.s32.totalorder %s26, %s27
    %p38 = scmp.eq.s32.totalorder %s18, 0
    %p39 = por %p37, %p38
    %p40 = scmp.ne.s32.totalorder %s26, %s27
    %p41 = scmp.eq.s32.totalorder %s19, 1
    %p42 = por %p40, %p41
    %p44 = scmp.ne.s32.totalorder %s27, %s43
    %p45 = scmp.eq.s32.totalorder %s19, 0
    %p46 = por %p44, %p45
    %s48 = sadd.s32 %s47, 1
    %p51 = scmp.eq.s32.totalorder %s13, 1
    %p52 = scmp.ne.s32.totalorder %s47, %s49
    %p53 = scmp.eq.s32.totalorder %s13, 0
    %p54 = por %p52, %p53
    %p55 = scmp.ne.s32.totalorder %s47, %s49
    %p56 = scmp.eq.s32.totalorder %s18, 1
    %p57 = por %p55, %p56
    %p58 = scmp.ne.s32.totalorder %s49, %s50
    %p59 = scmp.eq.s32.totalorder %s18, 0
    %p60 = por %p58, %p59
    %p61 = scmp.ne.s32.totalorder %s49, %s50
    %p62 = scmp.eq.s32.totalorder %s19, 1
    %p63 = por %p61, %p62
    %p65 = scmp.ne.s32.totalorder %s50, %s64
    %p66 = scmp.eq.s32.totalorder %s19, 0
    %p67 = por %p65, %p66
    %s69 = sadd.s32 %s68, 1
    %p72 = scmp.eq.s32.totalorder %s13, 1
    %p73 = scmp.ne.s32.totalorder %s68, %s70
    %p74 = scmp.eq.s32.totalorder %s13, 0
    %p75 = por %p73, %p74
    %p76 = scmp.ne.s32.totalorder %s68, %s70
    %p77 = scmp.eq.s32.totalorder %s18, 1
    %p78 = por %p76, %p77
    %p79 = scmp.ne.s32.totalorder %s70, %s71
    %p80 = scmp.eq.s32.totalorder %s18, 0
    %p81 = por %p79, %p80
    %p82 = scmp.ne.s32.totalorder %s70, %s71
    %p83 = scmp.eq.s32.totalorder %s19, 1
    %p84 = por %p82, %p83
    %p86 = scmp.ne.s32.totalorder %s71, %s85
    %p87 = scmp.eq.s32.totalorder %s19, 0
    %p88 = por %p86, %p87
    %s90 = sadd.s32 %s89, 1
    %p93 = scmp.eq.s32.totalorder %s13, 1
    %p94 = scmp.ne.s32.totalorder %s89, %s91
    %p95 = scmp.eq.s32.totalorder %s13, 0
    %p96 = por %p94, %p95
    %p97 = scmp.ne.s32.totalorder %s89, %s91
    %p98 = scmp.eq.s32.totalorder %s18, 1
    %p99 = por %p97, %p98
    %p100 = scmp.ne.s32.totalorder %s91, %s92
    %p101 = scmp.eq.s32.totalorder %s18, 0
    %p102 = por %p100, %p101
    %p103 = scmp.ne.s32.totalorder %s91, %s92
    %p104 = scmp.eq.s32.totalorder %s19, 1
    %p105 = por %p103, %p104
    %p107 = scmp.ne.s32.totalorder %s92, %s106
    %p108 = scmp.eq.s32.totalorder %s19, 0
    %p109 = por %p107, %p108
    %s111 = sadd.s32 %s110, 1
    %p114 = scmp.eq.s32.totalorder %s13, 1
    %p115 = scmp.ne.s32.totalorder %s110, %s112
    %p116 = scmp.eq.s32.totalorder %s13, 0
    %p117 = por %p115, %p116
    %p118 = scmp.ne.s32.totalorder %s110, %s112
    %p119 = scmp.eq.s32.totalorder %s18, 1
    %p120 = por %p118, %p119
    %p121 = scmp.ne.s32.totalorder %s112, %s113
    %p122 = scmp.eq.s32.totalorder %s18, 0
    %p123 = por %p121, %p122
    %p124 = scmp.ne.s32.totalorder %s112, %s113
    %p125 = scmp.eq.s32.totalorder %s19, 1
    %p126 = por %p124, %p125
    %p128 = scmp.ne.s32.totalorder %s113, %s127
    %p129 = scmp.eq.s32.totalorder %s19, 0
    %p130 = por %p128, %p129
    %s132 = sadd.s32 %s131, 1
    %p135 = scmp.eq.s32.totalorder %s13, 1
    %p136 = scmp.ne.s32.totalorder %s131, %s133
    %p137 = scmp.eq.s32.totalorder %s13, 0
    %p138 = por %p136, %p137
    %p139 = scmp.ne.s32.totalorder %s131, %s133
    %p140 = scmp.eq.s32.totalorder %s18, 1
    %p141 = por %p139, %p140
    %p142 = scmp.ne.s32.totalorder %s133, %s134
    %p143 = scmp.eq.s32.totalorder %s18, 0
    %p144 = por %p142, %p143
    %p145 = scmp.ne.s32.totalorder %s133, %s134
    %p146 = scmp.eq.s32.totalorder %s19, 1
    %p147 = por %p145, %p146
    %p149 = scmp.ne.s32.totalorder %s134, %s148
    %p150 = scmp.eq.s32.totalorder %s19, 0
    %p151 = por %p149, %p150
    %s153 = sadd.s32 %s152, 1
    %p156 = scmp.eq.s32.totalorder %s13, 1
    %p157 = scmp.ne.s32.totalorder %s152, %s154
    %p158 = scmp.eq.s32.totalorder %s13, 0
    %p159 = por %p157, %p158
    %p160 = scmp.ne.s32.totalorder %s152, %s154
    %p161 = scmp.eq.s32.totalorder %s18, 1
    %p162 = por %p160, %p161
    %p163 = scmp.ne.s32.totalorder %s154, %s155
    %p164 = scmp.eq.s32.totalorder %s18, 0
    %p165 = por %p163, %p164
    %p166 = scmp.ne.s32.totalorder %s154, %s155
    %p167 = scmp.eq.s32.totalorder %s19, 1
    %p168 = por %p166, %p167
    %p170 = scmp.ne.s32.totalorder %s155, %s169
    %p171 = scmp.eq.s32.totalorder %s19, 0
    %p172 = por %p170, %p171
    %s173 = ssub.s32 %s13, %s20
    %p174 = scmp.eq.s32.totalorder %s173, 0
    %s176 = sadd.s32 %s175, 1
    %s177 = scalar_select %p174, %s175, %s176
    %p180 = pneg %p174
    %p181 = scmp.eq.s32.totalorder %s13, 1
    %p182 = por %p180, %p181
    %p183 = scmp.ne.s32.totalorder %s175, %s178
    %p184 = scmp.eq.s32.totalorder %s13, 0
    %p185 = por %p183, %p184
    %p186 = scmp.ne.s32.totalorder %s175, %s178
    %p187 = scmp.eq.s32.totalorder %s18, 1
    %p188 = por %p186, %p187
    %p189 = scmp.ne.s32.totalorder %s178, %s179
    %p190 = scmp.eq.s32.totalorder %s18, 0
    %p191 = por %p189, %p190
    %p192 = scmp.ne.s32.totalorder %s178, %s179
    %p193 = scmp.eq.s32.totalorder %s19, 1
    %p194 = por %p192, %p193
    %p196 = scmp.ne.s32.totalorder %s179, %s195
    %p197 = scmp.eq.s32.totalorder %s19, 0
    %p198 = por %p196, %p197
    %p199 = scmp.le.s32.totalorder 1, %s13
    %p200 = scmp.lt.s32.totalorder %s13, 3
    %p201 = pnand %p199, %p200
    %p202 = pneg %p201
    // Predicated region
    $region9: #{_lambda_.1} parent=5 // pred_check
      _
    $region10: #{_lambda_.1} parent=5 // pred_check_branch
      %204 = sbr.rel (%p201) target = $region12
    $region11: #{_lambda_.1} parent=5 // pred_region
      %s205 = ssub.s32 %s13, 1
      // Predicated region
      $region13: #{_lambda_.1} parent=11 // pred_check
        %p206 = pneg %p60
      $region14: #{_lambda_.1} parent=11 // pred_check_branch
        %208 = sbr.rel (%p206) target = $region16
      $region15: #{_lambda_.1} parent=11 // pred_region
        _
      $region16: #{_lambda_.1} parent=11 // pred_fallthru
        _
      // Predicated region
      $region17: #{_lambda_.1} parent=11 // pred_check
        %p209 = pneg %p81
      $region18: #{_lambda_.1} parent=11 // pred_check_branch
        %211 = sbr.rel (%p209) target = $region20
      $region19: #{_lambda_.1} parent=11 // pred_region
        _
      $region20: #{_lambda_.1} parent=11 // pred_fallthru
        _
      // Predicated region
      $region21: #{_lambda_.1} parent=11 // pred_check
        %p212 = pneg %p102
      $region22: #{_lambda_.1} parent=11 // pred_check_branch
        %214 = sbr.rel (%p212) target = $region24
      $region23: #{_lambda_.1} parent=11 // pred_region
        _
      $region24: #{_lambda_.1} parent=11 // pred_fallthru
        _
      // Predicated region
      $region25: #{_lambda_.1} parent=11 // pred_check
        %p215 = pneg %p123
      $region26: #{_lambda_.1} parent=11 // pred_check_branch
        %217 = sbr.rel (%p215) target = $region28
      $region27: #{_lambda_.1} parent=11 // pred_region
        _
      $region28: #{_lambda_.1} parent=11 // pred_fallthru
        _
      // Predicated region
      $region29: #{_lambda_.1} parent=11 // pred_check
        %p218 = pneg %p144
      $region30: #{_lambda_.1} parent=11 // pred_check_branch
        %220 = sbr.rel (%p218) target = $region32
      $region31: #{_lambda_.1} parent=11 // pred_region
        _
      $region32: #{_lambda_.1} parent=11 // pred_fallthru
        _
      // Predicated region
      $region33: #{_lambda_.1} parent=11 // pred_check
        %p221 = pneg %p165
      $region34: #{_lambda_.1} parent=11 // pred_check_branch
        %223 = sbr.rel (%p221) target = $region36
      $region35: #{_lambda_.1} parent=11 // pred_region
        _
      $region36: #{_lambda_.1} parent=11 // pred_fallthru
        _
    $region12: #{_lambda_.1} parent=5 // pred_fallthru
      _
    %p224 = scmp.lt.s32.totalorder %s13, 2
    // Predicated region
    $region37: #{_lambda_.1} parent=5 // pred_check
      %p225 = pneg %p224
    $region38: #{_lambda_.1} parent=5 // pred_check_branch
      %227 = sbr.rel (%p225) target = $region40
    $region39: #{_lambda_.1} parent=5 // pred_region
      // Predicated region
      $region41: #{_lambda_.1} parent=39 // pred_check
        %p228 = pneg %p33
      $region42: #{_lambda_.1} parent=39 // pred_check_branch
        %230 = sbr.rel (%p228) target = $region44
      $region43: #{_lambda_.1} parent=39 // pred_region
        %s231 = smul.u32 256, %s13
        %p232 = scmp.lt.s32.totalorder %s231, 511
        %s233 = scalar_select %p232, %s231, 511
        %s234 = smul.addr %s233, 4
        %s235 = scalar_lea.vmem %s0, %s234
        %s236 = smul.u32 256, %s13
      $region44: #{_lambda_.1} parent=39 // pred_fallthru
        _
    $region40: #{_lambda_.1} parent=5 // pred_fallthru
      _
    %p237 = scmp.le.s32.totalorder 1, %s13
    %p238 = scmp.lt.s32.totalorder %s13, 3
    %p239 = pnand %p237, %p238
    %p240 = pneg %p239
    // Predicated region
    $region45: #{_lambda_.1} parent=5 // pred_check
      _
    $region46: #{_lambda_.1} parent=5 // pred_check_branch
      %242 = sbr.rel (%p239) target = $region48
    $region47: #{_lambda_.1} parent=5 // pred_region
      %s243 = ssub.s32 %s13, 1
      %s244 = smul.u32 256, %s18
      %p245 = scmp.lt.s32.totalorder %s244, 511
      %s246 = scalar_select %p245, %s244, 511
      %s247 = smul.addr %s246, 4
      %s248 = scalar_lea.vmem %s0, %s247
      %p249 = pneg %p39
      %p250 = pneg %p36
      %p251 = pneg %p60
      %p252 = pneg %p57
      %p253 = pneg %p81
      %p254 = pneg %p78
      %p255 = pneg %p102
      %p256 = pneg %p99
      %p257 = pneg %p123
      %p258 = pneg %p120
      %p259 = pneg %p144
      %p260 = pneg %p141
      %p261 = pneg %p165
      %p262 = pneg %p162
      %p263 = pneg %p191
      %p264 = pneg %p188
      %s265 = smul.u32 8, %s18
      %p266 = scmp.lt.s32.totalorder %s265, 15
      %s267 = scalar_select %p266, %s265, 15
      %s268 = smul.addr %s267, 2
      %s269 = smul.addr %s268, 8
      %s270 = scalar_lea.vmem %s7, %s269
      %s271 = smul.u32 256, %s18
      %p272 = scmp.lt.s32.totalorder %s271, 511
      %s273 = scalar_select %p272, %s271, 511
      %s274 = smul.addr %s273, 4
      %s275 = scalar_lea.vmem %s0, %s274
      %s276 = smul.u32 256, %s18
      %s277 = smul.u32 8, %s18
      %p278 = scmp.lt.s32.totalorder %s277, 15
      %s279 = scalar_select %p278, %s277, 15
      %s280 = smul.addr %s279, 2
      %s281 = smul.addr %s280, 8
      %s282 = scalar_lea.vmem %s7, %s281
      %s283 = smul.u32 8, %s18
      %v285 = vld [vmem:[%s275] sm:$0xf]
      %v286 = vld [vmem:[%s275 + $0x4] sm:$0xf]
      %v287 = vld [vmem:[%s275 + $0x8] sm:$0xf]
      %v288 = vld [vmem:[%s275 + $0xc] sm:$0xf]
      %v289 = vld [vmem:[%s275 + $0x10] sm:$0xf]
      %v290 = vld [vmem:[%s275 + $0x14] sm:$0xf]
      %v291 = vld [vmem:[%s275 + $0x18] sm:$0xf]
      %v292 = vld [vmem:[%s275 + $0x1c] sm:$0xf]
      %v293 = vld [vmem:[%s275 + $0x20] sm:$0xf]
      %v294 = vld [vmem:[%s275 + $0x24] sm:$0xf]
      %v295 = vld [vmem:[%s275 + $0x28] sm:$0xf]
      %v296 = vld [vmem:[%s275 + $0x2c] sm:$0xf]
      %v297 = vld [vmem:[%s275 + $0x30] sm:$0xf]
      %v298 = vld [vmem:[%s275 + $0x34] sm:$0xf]
      %v299 = vld [vmem:[%s275 + $0x38] sm:$0xf]
      %v300 = vld [vmem:[%s275 + $0x3c] sm:$0xf]
      %v301 = vld [vmem:[%s275 + $0x40] sm:$0xf]
      %v302 = vld [vmem:[%s275 + $0x44] sm:$0xf]
      %v303 = vld [vmem:[%s275 + $0x48] sm:$0xf]
      %v304 = vld [vmem:[%s275 + $0x4c] sm:$0xf]
      %v305 = vld [vmem:[%s275 + $0x50] sm:$0xf]
      %v306 = vld [vmem:[%s275 + $0x54] sm:$0xf]
      %v307 = vld [vmem:[%s275 + $0x58] sm:$0xf]
      %v308 = vld [vmem:[%s275 + $0x5c] sm:$0xf]
      %v309 = vld [vmem:[%s275 + $0x60] sm:$0xf]
      %v310 = vld [vmem:[%s275 + $0x64] sm:$0xf]
      %v311 = vld [vmem:[%s275 + $0x68] sm:$0xf]
      %v312 = vld [vmem:[%s275 + $0x6c] sm:$0xf]
      %v313 = vld [vmem:[%s275 + $0x70] sm:$0xf]
      %v314 = vld [vmem:[%s275 + $0x74] sm:$0xf]
      %v315 = vld [vmem:[%s275 + $0x78] sm:$0xf]
      %v316 = vld [vmem:[%s275 + $0x7c] sm:$0xf]
      %v317 = vld [vmem:[%s275 + $0x80] sm:$0xf]
      %v318 = vld [vmem:[%s275 + $0x84] sm:$0xf]
      %v319 = vld [vmem:[%s275 + $0x88] sm:$0xf]
      %v320 = vld [vmem:[%s275 + $0x8c] sm:$0xf]
      %v321 = vld [vmem:[%s275 + $0x90] sm:$0xf]
      %v322 = vld [vmem:[%s275 + $0x94] sm:$0xf]
      %v323 = vld [vmem:[%s275 + $0x98] sm:$0xf]
      %v324 = vld [vmem:[%s275 + $0x9c] sm:$0xf]
      %v325 = vld [vmem:[%s275 + $0xa0] sm:$0xf]
      %v326 = vld [vmem:[%s275 + $0xa4] sm:$0xf]
      %v327 = vld [vmem:[%s275 + $0xa8] sm:$0xf]
      %v328 = vld [vmem:[%s275 + $0xac] sm:$0xf]
      %v329 = vld [vmem:[%s275 + $0xb0] sm:$0xf]
      %v330 = vld [vmem:[%s275 + $0xb4] sm:$0xf]
      %v331 = vld [vmem:[%s275 + $0xb8] sm:$0xf]
      %v332 = vld [vmem:[%s275 + $0xbc] sm:$0xf]
      %v333 = vld [vmem:[%s275 + $0xc0] sm:$0xf]
      %v334 = vld [vmem:[%s275 + $0xc4] sm:$0xf]
      %v335 = vld [vmem:[%s275 + $0xc8] sm:$0xf]
      %v336 = vld [vmem:[%s275 + $0xcc] sm:$0xf]
      %v337 = vld [vmem:[%s275 + $0xd0] sm:$0xf]
      %v338 = vld [vmem:[%s275 + $0xd4] sm:$0xf]
      %v339 = vld [vmem:[%s275 + $0xd8] sm:$0xf]
      %v340 = vld [vmem:[%s275 + $0xdc] sm:$0xf]
      %v341 = vld [vmem:[%s275 + $0xe0] sm:$0xf]
      %v342 = vld [vmem:[%s275 + $0xe4] sm:$0xf]
      %v343 = vld [vmem:[%s275 + $0xe8] sm:$0xf]
      %v344 = vld [vmem:[%s275 + $0xec] sm:$0xf]
      %v345 = vld [vmem:[%s275 + $0xf0] sm:$0xf]
      %v346 = vld [vmem:[%s275 + $0xf4] sm:$0xf]
      %v347 = vld [vmem:[%s275 + $0xf8] sm:$0xf]
      %v348 = vld [vmem:[%s275 + $0xfc] sm:$0xf]
      %v349 = vld [vmem:[%s275 + $0x100] sm:$0xf]
      %v350 = vld [vmem:[%s275 + $0x104] sm:$0xf]
      %v351 = vld [vmem:[%s275 + $0x108] sm:$0xf]
      %v352 = vld [vmem:[%s275 + $0x10c] sm:$0xf]
      %v353 = vld [vmem:[%s275 + $0x110] sm:$0xf]
      %v354 = vld [vmem:[%s275 + $0x114] sm:$0xf]
      %v355 = vld [vmem:[%s275 + $0x118] sm:$0xf]
      %v356 = vld [vmem:[%s275 + $0x11c] sm:$0xf]
      %v357 = vld [vmem:[%s275 + $0x120] sm:$0xf]
      %v358 = vld [vmem:[%s275 + $0x124] sm:$0xf]
      %v359 = vld [vmem:[%s275 + $0x128] sm:$0xf]
      %v360 = vld [vmem:[%s275 + $0x12c] sm:$0xf]
      %v361 = vld [vmem:[%s275 + $0x130] sm:$0xf]
      %v362 = vld [vmem:[%s275 + $0x134] sm:$0xf]
      %v363 = vld [vmem:[%s275 + $0x138] sm:$0xf]
      %v364 = vld [vmem:[%s275 + $0x13c] sm:$0xf]
      %v365 = vld [vmem:[%s275 + $0x140] sm:$0xf]
      %v366 = vld [vmem:[%s275 + $0x144] sm:$0xf]
      %v367 = vld [vmem:[%s275 + $0x148] sm:$0xf]
      %v368 = vld [vmem:[%s275 + $0x14c] sm:$0xf]
      %v369 = vld [vmem:[%s275 + $0x150] sm:$0xf]
      %v370 = vld [vmem:[%s275 + $0x154] sm:$0xf]
      %v371 = vld [vmem:[%s275 + $0x158] sm:$0xf]
      %v372 = vld [vmem:[%s275 + $0x15c] sm:$0xf]
      %v373 = vld [vmem:[%s275 + $0x160] sm:$0xf]
      %v374 = vld [vmem:[%s275 + $0x164] sm:$0xf]
      %v375 = vld [vmem:[%s275 + $0x168] sm:$0xf]
      %v376 = vld [vmem:[%s275 + $0x16c] sm:$0xf]
      %v377 = vld [vmem:[%s275 + $0x170] sm:$0xf]
      %v378 = vld [vmem:[%s275 + $0x174] sm:$0xf]
      %v379 = vld [vmem:[%s275 + $0x178] sm:$0xf]
      %v380 = vld [vmem:[%s275 + $0x17c] sm:$0xf]
      %v381 = vld [vmem:[%s275 + $0x180] sm:$0xf]
      %v382 = vld [vmem:[%s275 + $0x184] sm:$0xf]
      %v383 = vld [vmem:[%s275 + $0x188] sm:$0xf]
      %v384 = vld [vmem:[%s275 + $0x18c] sm:$0xf]
      %v385 = vld [vmem:[%s275 + $0x190] sm:$0xf]
      %v386 = vld [vmem:[%s275 + $0x194] sm:$0xf]
      %v387 = vld [vmem:[%s275 + $0x198] sm:$0xf]
      %v388 = vld [vmem:[%s275 + $0x19c] sm:$0xf]
      %v389 = vld [vmem:[%s275 + $0x1a0] sm:$0xf]
      %v390 = vld [vmem:[%s275 + $0x1a4] sm:$0xf]
      %v391 = vld [vmem:[%s275 + $0x1a8] sm:$0xf]
      %v392 = vld [vmem:[%s275 + $0x1ac] sm:$0xf]
      %v393 = vld [vmem:[%s275 + $0x1b0] sm:$0xf]
      %v394 = vld [vmem:[%s275 + $0x1b4] sm:$0xf]
      %v395 = vld [vmem:[%s275 + $0x1b8] sm:$0xf]
      %v396 = vld [vmem:[%s275 + $0x1bc] sm:$0xf]
      %v397 = vld [vmem:[%s275 + $0x1c0] sm:$0xf]
      %v398 = vld [vmem:[%s275 + $0x1c4] sm:$0xf]
      %v399 = vld [vmem:[%s275 + $0x1c8] sm:$0xf]
      %v400 = vld [vmem:[%s275 + $0x1cc] sm:$0xf]
      %v401 = vld [vmem:[%s275 + $0x1d0] sm:$0xf]
      %v402 = vld [vmem:[%s275 + $0x1d4] sm:$0xf]
      %v403 = vld [vmem:[%s275 + $0x1d8] sm:$0xf]
      %v404 = vld [vmem:[%s275 + $0x1dc] sm:$0xf]
      %v405 = vld [vmem:[%s275 + $0x1e0] sm:$0xf]
      %v406 = vld [vmem:[%s275 + $0x1e4] sm:$0xf]
      %v407 = vld [vmem:[%s275 + $0x1e8] sm:$0xf]
      %v408 = vld [vmem:[%s275 + $0x1ec] sm:$0xf]
      %v409 = vld [vmem:[%s275 + $0x1f0] sm:$0xf]
      %v410 = vld [vmem:[%s275 + $0x1f4] sm:$0xf]
      %v411 = vld [vmem:[%s275 + $0x1f8] sm:$0xf]
      %v412 = vld [vmem:[%s275 + $0x1fc] sm:$0xf]
      %v413 = vld [vmem:[%s275 + $0x200] sm:$0xf]
      %v414 = vld [vmem:[%s275 + $0x204] sm:$0xf]
      %v415 = vld [vmem:[%s275 + $0x208] sm:$0xf]
      %v416 = vld [vmem:[%s275 + $0x20c] sm:$0xf]
      %v417 = vld [vmem:[%s275 + $0x210] sm:$0xf]
      %v418 = vld [vmem:[%s275 + $0x214] sm:$0xf]
      %v419 = vld [vmem:[%s275 + $0x218] sm:$0xf]
      %v420 = vld [vmem:[%s275 + $0x21c] sm:$0xf]
      %v421 = vld [vmem:[%s275 + $0x220] sm:$0xf]
      %v422 = vld [vmem:[%s275 + $0x224] sm:$0xf]
      %v423 = vld [vmem:[%s275 + $0x228] sm:$0xf]
      %v424 = vld [vmem:[%s275 + $0x22c] sm:$0xf]
      %v425 = vld [vmem:[%s275 + $0x230] sm:$0xf]
      %v426 = vld [vmem:[%s275 + $0x234] sm:$0xf]
      %v427 = vld [vmem:[%s275 + $0x238] sm:$0xf]
      %v428 = vld [vmem:[%s275 + $0x23c] sm:$0xf]
      %v429 = vld [vmem:[%s275 + $0x240] sm:$0xf]
      %v430 = vld [vmem:[%s275 + $0x244] sm:$0xf]
      %v431 = vld [vmem:[%s275 + $0x248] sm:$0xf]
      %v432 = vld [vmem:[%s275 + $0x24c] sm:$0xf]
      %v433 = vld [vmem:[%s275 + $0x250] sm:$0xf]
      %v434 = vld [vmem:[%s275 + $0x254] sm:$0xf]
      %v435 = vld [vmem:[%s275 + $0x258] sm:$0xf]
      %v436 = vld [vmem:[%s275 + $0x25c] sm:$0xf]
      %v437 = vld [vmem:[%s275 + $0x260] sm:$0xf]
      %v438 = vld [vmem:[%s275 + $0x264] sm:$0xf]
      %v439 = vld [vmem:[%s275 + $0x268] sm:$0xf]
      %v440 = vld [vmem:[%s275 + $0x26c] sm:$0xf]
      %v441 = vld [vmem:[%s275 + $0x270] sm:$0xf]
      %v442 = vld [vmem:[%s275 + $0x274] sm:$0xf]
      %v443 = vld [vmem:[%s275 + $0x278] sm:$0xf]
      %v444 = vld [vmem:[%s275 + $0x27c] sm:$0xf]
      %v445 = vld [vmem:[%s275 + $0x280] sm:$0xf]
      %v446 = vld [vmem:[%s275 + $0x284] sm:$0xf]
      %v447 = vld [vmem:[%s275 + $0x288] sm:$0xf]
      %v448 = vld [vmem:[%s275 + $0x28c] sm:$0xf]
      %v449 = vld [vmem:[%s275 + $0x290] sm:$0xf]
      %v450 = vld [vmem:[%s275 + $0x294] sm:$0xf]
      %v451 = vld [vmem:[%s275 + $0x298] sm:$0xf]
      %v452 = vld [vmem:[%s275 + $0x29c] sm:$0xf]
      %v453 = vld [vmem:[%s275 + $0x2a0] sm:$0xf]
      %v454 = vld [vmem:[%s275 + $0x2a4] sm:$0xf]
      %v455 = vld [vmem:[%s275 + $0x2a8] sm:$0xf]
      %v456 = vld [vmem:[%s275 + $0x2ac] sm:$0xf]
      %v457 = vld [vmem:[%s275 + $0x2b0] sm:$0xf]
      %v458 = vld [vmem:[%s275 + $0x2b4] sm:$0xf]
      %v459 = vld [vmem:[%s275 + $0x2b8] sm:$0xf]
      %v460 = vld [vmem:[%s275 + $0x2bc] sm:$0xf]
      %v461 = vld [vmem:[%s275 + $0x2c0] sm:$0xf]
      %v462 = vld [vmem:[%s275 + $0x2c4] sm:$0xf]
      %v463 = vld [vmem:[%s275 + $0x2c8] sm:$0xf]
      %v464 = vld [vmem:[%s275 + $0x2cc] sm:$0xf]
      %v465 = vld [vmem:[%s275 + $0x2d0] sm:$0xf]
      %v466 = vld [vmem:[%s275 + $0x2d4] sm:$0xf]
      %v467 = vld [vmem:[%s275 + $0x2d8] sm:$0xf]
      %v468 = vld [vmem:[%s275 + $0x2dc] sm:$0xf]
      %v469 = vld [vmem:[%s275 + $0x2e0] sm:$0xf]
      %v470 = vld [vmem:[%s275 + $0x2e4] sm:$0xf]
      %v471 = vld [vmem:[%s275 + $0x2e8] sm:$0xf]
      %v472 = vld [vmem:[%s275 + $0x2ec] sm:$0xf]
      %v473 = vld [vmem:[%s275 + $0x2f0] sm:$0xf]
      %v474 = vld [vmem:[%s275 + $0x2f4] sm:$0xf]
      %v475 = vld [vmem:[%s275 + $0x2f8] sm:$0xf]
      %v476 = vld [vmem:[%s275 + $0x2fc] sm:$0xf]
      %v477 = vld [vmem:[%s275 + $0x300] sm:$0xf]
      %v478 = vld [vmem:[%s275 + $0x304] sm:$0xf]
      %v479 = vld [vmem:[%s275 + $0x308] sm:$0xf]
      %v480 = vld [vmem:[%s275 + $0x30c] sm:$0xf]
      %v481 = vld [vmem:[%s275 + $0x310] sm:$0xf]
      %v482 = vld [vmem:[%s275 + $0x314] sm:$0xf]
      %v483 = vld [vmem:[%s275 + $0x318] sm:$0xf]
      %v484 = vld [vmem:[%s275 + $0x31c] sm:$0xf]
      %v485 = vld [vmem:[%s275 + $0x320] sm:$0xf]
      %v486 = vld [vmem:[%s275 + $0x324] sm:$0xf]
      %v487 = vld [vmem:[%s275 + $0x328] sm:$0xf]
      %v488 = vld [vmem:[%s275 + $0x32c] sm:$0xf]
      %v489 = vld [vmem:[%s275 + $0x330] sm:$0xf]
      %v490 = vld [vmem:[%s275 + $0x334] sm:$0xf]
      %v491 = vld [vmem:[%s275 + $0x338] sm:$0xf]
      %v492 = vld [vmem:[%s275 + $0x33c] sm:$0xf]
      %v493 = vld [vmem:[%s275 + $0x340] sm:$0xf]
      %v494 = vld [vmem:[%s275 + $0x344] sm:$0xf]
      %v495 = vld [vmem:[%s275 + $0x348] sm:$0xf]
      %v496 = vld [vmem:[%s275 + $0x34c] sm:$0xf]
      %v497 = vld [vmem:[%s275 + $0x350] sm:$0xf]
      %v498 = vld [vmem:[%s275 + $0x354] sm:$0xf]
      %v499 = vld [vmem:[%s275 + $0x358] sm:$0xf]
      %v500 = vld [vmem:[%s275 + $0x35c] sm:$0xf]
      %v501 = vld [vmem:[%s275 + $0x360] sm:$0xf]
      %v502 = vld [vmem:[%s275 + $0x364] sm:$0xf]
      %v503 = vld [vmem:[%s275 + $0x368] sm:$0xf]
      %v504 = vld [vmem:[%s275 + $0x36c] sm:$0xf]
      %v505 = vld [vmem:[%s275 + $0x370] sm:$0xf]
      %v506 = vld [vmem:[%s275 + $0x374] sm:$0xf]
      %v507 = vld [vmem:[%s275 + $0x378] sm:$0xf]
      %v508 = vld [vmem:[%s275 + $0x37c] sm:$0xf]
      %v509 = vld [vmem:[%s275 + $0x380] sm:$0xf]
      %v510 = vld [vmem:[%s275 + $0x384] sm:$0xf]
      %v511 = vld [vmem:[%s275 + $0x388] sm:$0xf]
      %v512 = vld [vmem:[%s275 + $0x38c] sm:$0xf]
      %v513 = vld [vmem:[%s275 + $0x390] sm:$0xf]
      %v514 = vld [vmem:[%s275 + $0x394] sm:$0xf]
      %v515 = vld [vmem:[%s275 + $0x398] sm:$0xf]
      %v516 = vld [vmem:[%s275 + $0x39c] sm:$0xf]
      %v517 = vld [vmem:[%s275 + $0x3a0] sm:$0xf]
      %v518 = vld [vmem:[%s275 + $0x3a4] sm:$0xf]
      %v519 = vld [vmem:[%s275 + $0x3a8] sm:$0xf]
      %v520 = vld [vmem:[%s275 + $0x3ac] sm:$0xf]
      %v521 = vld [vmem:[%s275 + $0x3b0] sm:$0xf]
      %v522 = vld [vmem:[%s275 + $0x3b4] sm:$0xf]
      %v523 = vld [vmem:[%s275 + $0x3b8] sm:$0xf]
      %v524 = vld [vmem:[%s275 + $0x3bc] sm:$0xf]
      %v525 = vld [vmem:[%s275 + $0x3c0] sm:$0xf]
      %v526 = vld [vmem:[%s275 + $0x3c4] sm:$0xf]
      %v527 = vld [vmem:[%s275 + $0x3c8] sm:$0xf]
      %v528 = vld [vmem:[%s275 + $0x3cc] sm:$0xf]
      %v529 = vld [vmem:[%s275 + $0x3d0] sm:$0xf]
      %v530 = vld [vmem:[%s275 + $0x3d4] sm:$0xf]
      %v531 = vld [vmem:[%s275 + $0x3d8] sm:$0xf]
      %v532 = vld [vmem:[%s275 + $0x3dc] sm:$0xf]
      %v533 = vld [vmem:[%s275 + $0x3e0] sm:$0xf]
      %v534 = vld [vmem:[%s275 + $0x3e4] sm:$0xf]
      %v535 = vld [vmem:[%s275 + $0x3e8] sm:$0xf]
      %v536 = vld [vmem:[%s275 + $0x3ec] sm:$0xf]
      %v537 = vld [vmem:[%s275 + $0x3f0] sm:$0xf]
      %v538 = vld [vmem:[%s275 + $0x3f4] sm:$0xf]
      %v539 = vld [vmem:[%s275 + $0x3f8] sm:$0xf]
      %v540 = vld [vmem:[%s275 + $0x3fc] sm:$0xf]
      %v541 = vld [vmem:[%s1] sm:$0xf]
      %v542 = vld [vmem:[%s1 + $0x4] sm:$0xf]
      %v543 = vld [vmem:[%s1 + $0x8] sm:$0xf]
      %v544 = vld [vmem:[%s1 + $0xc] sm:$0xf]
      %v801 = vunpack.c.l.b16 %v285
      %v802 = vunpack.c.l.b16 %v286
      %v803 = vunpack.c.l.b16 %v287
      %v804 = vunpack.c.l.b16 %v288
      %v805 = vunpack.c.l.b16 %v289
      %v806 = vunpack.c.l.b16 %v290
      %v807 = vunpack.c.l.b16 %v291
      %v808 = vunpack.c.l.b16 %v292
      %v809 = vunpack.c.l.b16 %v293
      %v810 = vunpack.c.l.b16 %v294
      %v811 = vunpack.c.l.b16 %v295
      %v812 = vunpack.c.l.b16 %v296
      %v813 = vunpack.c.l.b16 %v297
      %v814 = vunpack.c.l.b16 %v298
      %v815 = vunpack.c.l.b16 %v299
      %v816 = vunpack.c.l.b16 %v300
      %v817 = vunpack.c.l.b16 %v301
      %v818 = vunpack.c.l.b16 %v302
      %v819 = vunpack.c.l.b16 %v303
      %v820 = vunpack.c.l.b16 %v304
      %v821 = vunpack.c.l.b16 %v305
      %v822 = vunpack.c.l.b16 %v306
      %v823 = vunpack.c.l.b16 %v307
      %v824 = vunpack.c.l.b16 %v308
      %v825 = vunpack.c.l.b16 %v309
      %v826 = vunpack.c.l.b16 %v310
      %v827 = vunpack.c.l.b16 %v311
      %v828 = vunpack.c.l.b16 %v312
      %v829 = vunpack.c.l.b16 %v313
      %v830 = vunpack.c.l.b16 %v314
      %v831 = vunpack.c.l.b16 %v315
      %v832 = vunpack.c.l.b16 %v316
      %v833 = vunpack.c.l.b16 %v317
      %v834 = vunpack.c.l.b16 %v318
      %v835 = vunpack.c.l.b16 %v319
      %v836 = vunpack.c.l.b16 %v320
      %v837 = vunpack.c.l.b16 %v321
      %v838 = vunpack.c.l.b16 %v322
      %v839 = vunpack.c.l.b16 %v323
      %v840 = vunpack.c.l.b16 %v324
      %v841 = vunpack.c.l.b16 %v325
      %v842 = vunpack.c.l.b16 %v326
      %v843 = vunpack.c.l.b16 %v327
      %v844 = vunpack.c.l.b16 %v328
      %v845 = vunpack.c.l.b16 %v329
      %v846 = vunpack.c.l.b16 %v330
      %v847 = vunpack.c.l.b16 %v331
      %v848 = vunpack.c.l.b16 %v332
      %v849 = vunpack.c.l.b16 %v333
      %v850 = vunpack.c.l.b16 %v334
      %v851 = vunpack.c.l.b16 %v335
      %v852 = vunpack.c.l.b16 %v336
      %v853 = vunpack.c.l.b16 %v337
      %v854 = vunpack.c.l.b16 %v338
      %v855 = vunpack.c.l.b16 %v339
      %v856 = vunpack.c.l.b16 %v340
      %v857 = vunpack.c.l.b16 %v341
      %v858 = vunpack.c.l.b16 %v342
      %v859 = vunpack.c.l.b16 %v343
      %v860 = vunpack.c.l.b16 %v344
      %v861 = vunpack.c.l.b16 %v345
      %v862 = vunpack.c.l.b16 %v346
      %v863 = vunpack.c.l.b16 %v347
      %v864 = vunpack.c.l.b16 %v348
      %v865 = vunpack.c.l.b16 %v349
      %v866 = vunpack.c.l.b16 %v350
      %v867 = vunpack.c.l.b16 %v351
      %v868 = vunpack.c.l.b16 %v352
      %v869 = vunpack.c.l.b16 %v353
      %v870 = vunpack.c.l.b16 %v354
      %v871 = vunpack.c.l.b16 %v355
      %v872 = vunpack.c.l.b16 %v356
      %v873 = vunpack.c.l.b16 %v357
      %v874 = vunpack.c.l.b16 %v358
      %v875 = vunpack.c.l.b16 %v359
      %v876 = vunpack.c.l.b16 %v360
      %v877 = vunpack.c.l.b16 %v361
      %v878 = vunpack.c.l.b16 %v362
      %v879 = vunpack.c.l.b16 %v363
      %v880 = vunpack.c.l.b16 %v364
      %v881 = vunpack.c.l.b16 %v365
      %v882 = vunpack.c.l.b16 %v366
      %v883 = vunpack.c.l.b16 %v367
      %v884 = vunpack.c.l.b16 %v368
      %v885 = vunpack.c.l.b16 %v369
      %v886 = vunpack.c.l.b16 %v370
      %v887 = vunpack.c.l.b16 %v371
      %v888 = vunpack.c.l.b16 %v372
      %v889 = vunpack.c.l.b16 %v373
      %v890 = vunpack.c.l.b16 %v374
      %v891 = vunpack.c.l.b16 %v375
      %v892 = vunpack.c.l.b16 %v376
      %v893 = vunpack.c.l.b16 %v377
      %v894 = vunpack.c.l.b16 %v378
      %v895 = vunpack.c.l.b16 %v379
      %v896 = vunpack.c.l.b16 %v380
      %v897 = vunpack.c.l.b16 %v381
      %v898 = vunpack.c.l.b16 %v382
      %v899 = vunpack.c.l.b16 %v383
      %v900 = vunpack.c.l.b16 %v384
      %v901 = vunpack.c.l.b16 %v385
      %v902 = vunpack.c.l.b16 %v386
      %v903 = vunpack.c.l.b16 %v387
      %v904 = vunpack.c.l.b16 %v388
      %v905 = vunpack.c.l.b16 %v389
      %v906 = vunpack.c.l.b16 %v390
      %v907 = vunpack.c.l.b16 %v391
      %v908 = vunpack.c.l.b16 %v392
      %v909 = vunpack.c.l.b16 %v393
      %v910 = vunpack.c.l.b16 %v394
      %v911 = vunpack.c.l.b16 %v395
      %v912 = vunpack.c.l.b16 %v396
      %v913 = vunpack.c.l.b16 %v397
      %v914 = vunpack.c.l.b16 %v398
      %v915 = vunpack.c.l.b16 %v399
      %v916 = vunpack.c.l.b16 %v400
      %v917 = vunpack.c.l.b16 %v401
      %v918 = vunpack.c.l.b16 %v402
      %v919 = vunpack.c.l.b16 %v403
      %v920 = vunpack.c.l.b16 %v404
      %v921 = vunpack.c.l.b16 %v405
      %v922 = vunpack.c.l.b16 %v406
      %v923 = vunpack.c.l.b16 %v407
      %v924 = vunpack.c.l.b16 %v408
      %v925 = vunpack.c.l.b16 %v409
      %v926 = vunpack.c.l.b16 %v410
      %v927 = vunpack.c.l.b16 %v411
      %v928 = vunpack.c.l.b16 %v412
      %v929 = vunpack.c.l.b16 %v413
      %v930 = vunpack.c.l.b16 %v414
      %v931 = vunpack.c.l.b16 %v415
      %v932 = vunpack.c.l.b16 %v416
      %v933 = vunpack.c.l.b16 %v417
      %v934 = vunpack.c.l.b16 %v418
      %v935 = vunpack.c.l.b16 %v419
      %v936 = vunpack.c.l.b16 %v420
      %v937 = vunpack.c.l.b16 %v421
      %v938 = vunpack.c.l.b16 %v422
      %v939 = vunpack.c.l.b16 %v423
      %v940 = vunpack.c.l.b16 %v424
      %v941 = vunpack.c.l.b16 %v425
      %v942 = vunpack.c.l.b16 %v426
      %v943 = vunpack.c.l.b16 %v427
      %v944 = vunpack.c.l.b16 %v428
      %v945 = vunpack.c.l.b16 %v429
      %v946 = vunpack.c.l.b16 %v430
      %v947 = vunpack.c.l.b16 %v431
      %v948 = vunpack.c.l.b16 %v432
      %v949 = vunpack.c.l.b16 %v433
      %v950 = vunpack.c.l.b16 %v434
      %v951 = vunpack.c.l.b16 %v435
      %v952 = vunpack.c.l.b16 %v436
      %v953 = vunpack.c.l.b16 %v437
      %v954 = vunpack.c.l.b16 %v438
      %v955 = vunpack.c.l.b16 %v439
      %v956 = vunpack.c.l.b16 %v440
      %v957 = vunpack.c.l.b16 %v441
      %v958 = vunpack.c.l.b16 %v442
      %v959 = vunpack.c.l.b16 %v443
      %v960 = vunpack.c.l.b16 %v444
      %v961 = vunpack.c.l.b16 %v445
      %v962 = vunpack.c.l.b16 %v446
      %v963 = vunpack.c.l.b16 %v447
      %v964 = vunpack.c.l.b16 %v448
      %v965 = vunpack.c.l.b16 %v449
      %v966 = vunpack.c.l.b16 %v450
      %v967 = vunpack.c.l.b16 %v451
      %v968 = vunpack.c.l.b16 %v452
      %v969 = vunpack.c.l.b16 %v453
      %v970 = vunpack.c.l.b16 %v454
      %v971 = vunpack.c.l.b16 %v455
      %v972 = vunpack.c.l.b16 %v456
      %v973 = vunpack.c.l.b16 %v457
      %v974 = vunpack.c.l.b16 %v458
      %v975 = vunpack.c.l.b16 %v459
      %v976 = vunpack.c.l.b16 %v460
      %v977 = vunpack.c.l.b16 %v461
      %v978 = vunpack.c.l.b16 %v462
      %v979 = vunpack.c.l.b16 %v463
      %v980 = vunpack.c.l.b16 %v464
      %v981 = vunpack.c.l.b16 %v465
      %v982 = vunpack.c.l.b16 %v466
      %v983 = vunpack.c.l.b16 %v467
      %v984 = vunpack.c.l.b16 %v468
      %v985 = vunpack.c.l.b16 %v469
      %v986 = vunpack.c.l.b16 %v470
      %v987 = vunpack.c.l.b16 %v471
      %v988 = vunpack.c.l.b16 %v472
      %v989 = vunpack.c.l.b16 %v473
      %v990 = vunpack.c.l.b16 %v474
      %v991 = vunpack.c.l.b16 %v475
      %v992 = vunpack.c.l.b16 %v476
      %v993 = vunpack.c.l.b16 %v477
      %v994 = vunpack.c.l.b16 %v478
      %v995 = vunpack.c.l.b16 %v479
      %v996 = vunpack.c.l.b16 %v480
      %v997 = vunpack.c.l.b16 %v481
      %v998 = vunpack.c.l.b16 %v482
      %v999 = vunpack.c.l.b16 %v483
      %v1000 = vunpack.c.l.b16 %v484
      %v1001 = vunpack.c.l.b16 %v485
      %v1002 = vunpack.c.l.b16 %v486
      %v1003 = vunpack.c.l.b16 %v487
      %v1004 = vunpack.c.l.b16 %v488
      %v1005 = vunpack.c.l.b16 %v489
      %v1006 = vunpack.c.l.b16 %v490
      %v1007 = vunpack.c.l.b16 %v491
      %v1008 = vunpack.c.l.b16 %v492
      %v1009 = vunpack.c.l.b16 %v493
      %v1010 = vunpack.c.l.b16 %v494
      %v1011 = vunpack.c.l.b16 %v495
      %v1012 = vunpack.c.l.b16 %v496
      %v1013 = vunpack.c.l.b16 %v497
      %v1014 = vunpack.c.l.b16 %v498
      %v1015 = vunpack.c.l.b16 %v499
      %v1016 = vunpack.c.l.b16 %v500
      %v1017 = vunpack.c.l.b16 %v501
      %v1018 = vunpack.c.l.b16 %v502
      %v1019 = vunpack.c.l.b16 %v503
      %v1020 = vunpack.c.l.b16 %v504
      %v1021 = vunpack.c.l.b16 %v505
      %v1022 = vunpack.c.l.b16 %v506
      %v1023 = vunpack.c.l.b16 %v507
      %v1024 = vunpack.c.l.b16 %v508
      %v1025 = vunpack.c.l.b16 %v509
      %v1026 = vunpack.c.l.b16 %v510
      %v1027 = vunpack.c.l.b16 %v511
      %v1028 = vunpack.c.l.b16 %v512
      %v1029 = vunpack.c.l.b16 %v513
      %v1030 = vunpack.c.l.b16 %v514
      %v1031 = vunpack.c.l.b16 %v515
      %v1032 = vunpack.c.l.b16 %v516
      %v1033 = vunpack.c.l.b16 %v517
      %v1034 = vunpack.c.l.b16 %v518
      %v1035 = vunpack.c.l.b16 %v519
      %v1036 = vunpack.c.l.b16 %v520
      %v1037 = vunpack.c.l.b16 %v521
      %v1038 = vunpack.c.l.b16 %v522
      %v1039 = vunpack.c.l.b16 %v523
      %v1040 = vunpack.c.l.b16 %v524
      %v1041 = vunpack.c.l.b16 %v525
      %v1042 = vunpack.c.l.b16 %v526
      %v1043 = vunpack.c.l.b16 %v527
      %v1044 = vunpack.c.l.b16 %v528
      %v1045 = vunpack.c.l.b16 %v529
      %v1046 = vunpack.c.l.b16 %v530
      %v1047 = vunpack.c.l.b16 %v531
      %v1048 = vunpack.c.l.b16 %v532
      %v1049 = vunpack.c.l.b16 %v533
      %v1050 = vunpack.c.l.b16 %v534
      %v1051 = vunpack.c.l.b16 %v535
      %v1052 = vunpack.c.l.b16 %v536
      %v1053 = vunpack.c.l.b16 %v537
      %v1054 = vunpack.c.l.b16 %v538
      %v1055 = vunpack.c.l.b16 %v539
      %v1056 = vunpack.c.l.b16 %v540
      %v1057 = vpack.c.b16 %v802, %v801
      %v1058 = vpack.c.b16 %v804, %v803
      %v1059 = vpack.c.b16 %v806, %v805
      %v1060 = vpack.c.b16 %v808, %v807
      %v1061 = vpack.c.b16 %v810, %v809
      %v1062 = vpack.c.b16 %v812, %v811
      %v1063 = vpack.c.b16 %v814, %v813
      %v1064 = vpack.c.b16 %v816, %v815
      %v1065 = vpack.c.b16 %v818, %v817
      %v1066 = vpack.c.b16 %v820, %v819
      %v1067 = vpack.c.b16 %v822, %v821
      %v1068 = vpack.c.b16 %v824, %v823
      %v1069 = vpack.c.b16 %v826, %v825
      %v1070 = vpack.c.b16 %v828, %v827
      %v1071 = vpack.c.b16 %v830, %v829
      %v1072 = vpack.c.b16 %v832, %v831
      %v1073 = vpack.c.b16 %v834, %v833
      %v1074 = vpack.c.b16 %v836, %v835
      %v1075 = vpack.c.b16 %v838, %v837
      %v1076 = vpack.c.b16 %v840, %v839
      %v1077 = vpack.c.b16 %v842, %v841
      %v1078 = vpack.c.b16 %v844, %v843
      %v1079 = vpack.c.b16 %v846, %v845
      %v1080 = vpack.c.b16 %v848, %v847
      %v1081 = vpack.c.b16 %v850, %v849
      %v1082 = vpack.c.b16 %v852, %v851
      %v1083 = vpack.c.b16 %v854, %v853
      %v1084 = vpack.c.b16 %v856, %v855
      %v1085 = vpack.c.b16 %v858, %v857
      %v1086 = vpack.c.b16 %v860, %v859
      %v1087 = vpack.c.b16 %v862, %v861
      %v1088 = vpack.c.b16 %v864, %v863
      %v1089 = vpack.c.b16 %v866, %v865
      %v1090 = vpack.c.b16 %v868, %v867
      %v1091 = vpack.c.b16 %v870, %v869
      %v1092 = vpack.c.b16 %v872, %v871
      %v1093 = vpack.c.b16 %v874, %v873
      %v1094 = vpack.c.b16 %v876, %v875
      %v1095 = vpack.c.b16 %v878, %v877
      %v1096 = vpack.c.b16 %v880, %v879
      %v1097 = vpack.c.b16 %v882, %v881
      %v1098 = vpack.c.b16 %v884, %v883
      %v1099 = vpack.c.b16 %v886, %v885
      %v1100 = vpack.c.b16 %v888, %v887
      %v1101 = vpack.c.b16 %v890, %v889
      %v1102 = vpack.c.b16 %v892, %v891
      %v1103 = vpack.c.b16 %v894, %v893
      %v1104 = vpack.c.b16 %v896, %v895
      %v1105 = vpack.c.b16 %v898, %v897
      %v1106 = vpack.c.b16 %v900, %v899
      %v1107 = vpack.c.b16 %v902, %v901
      %v1108 = vpack.c.b16 %v904, %v903
      %v1109 = vpack.c.b16 %v906, %v905
      %v1110 = vpack.c.b16 %v908, %v907
      %v1111 = vpack.c.b16 %v910, %v909
      %v1112 = vpack.c.b16 %v912, %v911
      %v1113 = vpack.c.b16 %v914, %v913
      %v1114 = vpack.c.b16 %v916, %v915
      %v1115 = vpack.c.b16 %v918, %v917
      %v1116 = vpack.c.b16 %v920, %v919
      %v1117 = vpack.c.b16 %v922, %v921
      %v1118 = vpack.c.b16 %v924, %v923
      %v1119 = vpack.c.b16 %v926, %v925
      %v1120 = vpack.c.b16 %v928, %v927
      %v1121 = vpack.c.b16 %v930, %v929
      %v1122 = vpack.c.b16 %v932, %v931
      %v1123 = vpack.c.b16 %v934, %v933
      %v1124 = vpack.c.b16 %v936, %v935
      %v1125 = vpack.c.b16 %v938, %v937
      %v1126 = vpack.c.b16 %v940, %v939
      %v1127 = vpack.c.b16 %v942, %v941
      %v1128 = vpack.c.b16 %v944, %v943
      %v1129 = vpack.c.b16 %v946, %v945
      %v1130 = vpack.c.b16 %v948, %v947
      %v1131 = vpack.c.b16 %v950, %v949
      %v1132 = vpack.c.b16 %v952, %v951
      %v1133 = vpack.c.b16 %v954, %v953
      %v1134 = vpack.c.b16 %v956, %v955
      %v1135 = vpack.c.b16 %v958, %v957
      %v1136 = vpack.c.b16 %v960, %v959
      %v1137 = vpack.c.b16 %v962, %v961
      %v1138 = vpack.c.b16 %v964, %v963
      %v1139 = vpack.c.b16 %v966, %v965
      %v1140 = vpack.c.b16 %v968, %v967
      %v1141 = vpack.c.b16 %v970, %v969
      %v1142 = vpack.c.b16 %v972, %v971
      %v1143 = vpack.c.b16 %v974, %v973
      %v1144 = vpack.c.b16 %v976, %v975
      %v1145 = vpack.c.b16 %v978, %v977
      %v1146 = vpack.c.b16 %v980, %v979
      %v1147 = vpack.c.b16 %v982, %v981
      %v1148 = vpack.c.b16 %v984, %v983
      %v1149 = vpack.c.b16 %v986, %v985
      %v1150 = vpack.c.b16 %v988, %v987
      %v1151 = vpack.c.b16 %v990, %v989
      %v1152 = vpack.c.b16 %v992, %v991
      %v1153 = vpack.c.b16 %v994, %v993
      %v1154 = vpack.c.b16 %v996, %v995
      %v1155 = vpack.c.b16 %v998, %v997
      %v1156 = vpack.c.b16 %v1000, %v999
      %v1157 = vpack.c.b16 %v1002, %v1001
      %v1158 = vpack.c.b16 %v1004, %v1003
      %v1159 = vpack.c.b16 %v1006, %v1005
      %v1160 = vpack.c.b16 %v1008, %v1007
      %v1161 = vpack.c.b16 %v1010, %v1009
      %v1162 = vpack.c.b16 %v1012, %v1011
      %v1163 = vpack.c.b16 %v1014, %v1013
      %v1164 = vpack.c.b16 %v1016, %v1015
      %v1165 = vpack.c.b16 %v1018, %v1017
      %v1166 = vpack.c.b16 %v1020, %v1019
      %v1167 = vpack.c.b16 %v1022, %v1021
      %v1168 = vpack.c.b16 %v1024, %v1023
      %v1169 = vpack.c.b16 %v1026, %v1025
      %v1170 = vpack.c.b16 %v1028, %v1027
      %v1171 = vpack.c.b16 %v1030, %v1029
      %v1172 = vpack.c.b16 %v1032, %v1031
      %v1173 = vpack.c.b16 %v1034, %v1033
      %v1174 = vpack.c.b16 %v1036, %v1035
      %v1175 = vpack.c.b16 %v1038, %v1037
      %v1176 = vpack.c.b16 %v1040, %v1039
      %v1177 = vpack.c.b16 %v1042, %v1041
      %v1178 = vpack.c.b16 %v1044, %v1043
      %v1179 = vpack.c.b16 %v1046, %v1045
      %v1180 = vpack.c.b16 %v1048, %v1047
      %v1181 = vpack.c.b16 %v1050, %v1049
      %v1182 = vpack.c.b16 %v1052, %v1051
      %v1183 = vpack.c.b16 %v1054, %v1053
      %v1184 = vpack.c.b16 %v1056, %v1055
      %v1189 = vunpack.c.l.b16 %v541
      %v1190 = vunpack.c.l.b16 %v542
      %v1191 = vunpack.c.l.b16 %v543
      %v1192 = vunpack.c.l.b16 %v544
      %v1193 = vpack.c.b16 %v1190, %v1189
      %v1194 = vpack.c.b16 %v1192, %v1191
      %vm1197 = vcmask 261120
      %v1199 = vsel %vm1197, %v1057, 0
      %v1202 = vsel %vm1197, %v1058, 0
      %v1205 = vsel %vm1197, %v1059, 0
      %v1208 = vsel %vm1197, %v1060, 0
      %v1211 = vsel %vm1197, %v1061, 0
      %v1214 = vsel %vm1197, %v1062, 0
      %v1217 = vsel %vm1197, %v1063, 0
      %v1220 = vsel %vm1197, %v1064, 0
      %v1223 = vsel %vm1197, %v1065, 0
      %v1226 = vsel %vm1197, %v1066, 0
      %v1229 = vsel %vm1197, %v1067, 0
      %v1232 = vsel %vm1197, %v1068, 0
      %v1235 = vsel %vm1197, %v1069, 0
      %v1238 = vsel %vm1197, %v1070, 0
      %v1241 = vsel %vm1197, %v1071, 0
      %v1244 = vsel %vm1197, %v1072, 0
      %v1247 = vsel %vm1197, %v1073, 0
      %v1250 = vsel %vm1197, %v1074, 0
      %v1253 = vsel %vm1197, %v1075, 0
      %v1256 = vsel %vm1197, %v1076, 0
      %v1259 = vsel %vm1197, %v1077, 0
      %v1262 = vsel %vm1197, %v1078, 0
      %v1265 = vsel %vm1197, %v1079, 0
      %v1268 = vsel %vm1197, %v1080, 0
      %v1271 = vsel %vm1197, %v1081, 0
      %v1274 = vsel %vm1197, %v1082, 0
      %v1277 = vsel %vm1197, %v1083, 0
      %v1280 = vsel %vm1197, %v1084, 0
      %v1283 = vsel %vm1197, %v1085, 0
      %v1286 = vsel %vm1197, %v1086, 0
      %v1289 = vsel %vm1197, %v1087, 0
      %v1292 = vsel %vm1197, %v1088, 0
      %v1295 = vsel %vm1197, %v1089, 0
      %v1298 = vsel %vm1197, %v1090, 0
      %v1301 = vsel %vm1197, %v1091, 0
      %v1304 = vsel %vm1197, %v1092, 0
      %v1307 = vsel %vm1197, %v1093, 0
      %v1310 = vsel %vm1197, %v1094, 0
      %v1313 = vsel %vm1197, %v1095, 0
      %v1316 = vsel %vm1197, %v1096, 0
      %v1319 = vsel %vm1197, %v1097, 0
      %v1322 = vsel %vm1197, %v1098, 0
      %v1325 = vsel %vm1197, %v1099, 0
      %v1328 = vsel %vm1197, %v1100, 0
      %v1331 = vsel %vm1197, %v1101, 0
      %v1334 = vsel %vm1197, %v1102, 0
      %v1337 = vsel %vm1197, %v1103, 0
      %v1340 = vsel %vm1197, %v1104, 0
      %v1343 = vsel %vm1197, %v1105, 0
      %v1346 = vsel %vm1197, %v1106, 0
      %v1349 = vsel %vm1197, %v1107, 0
      %v1352 = vsel %vm1197, %v1108, 0
      %v1355 = vsel %vm1197, %v1109, 0
      %v1358 = vsel %vm1197, %v1110, 0
      %v1361 = vsel %vm1197, %v1111, 0
      %v1364 = vsel %vm1197, %v1112, 0
      %v1367 = vsel %vm1197, %v1113, 0
      %v1370 = vsel %vm1197, %v1114, 0
      %v1373 = vsel %vm1197, %v1115, 0
      %v1376 = vsel %vm1197, %v1116, 0
      %v1379 = vsel %vm1197, %v1117, 0
      %v1382 = vsel %vm1197, %v1118, 0
      %v1385 = vsel %vm1197, %v1119, 0
      %v1388 = vsel %vm1197, %v1120, 0
      %v1391 = vsel %vm1197, %v1121, 0
      %v1394 = vsel %vm1197, %v1122, 0
      %v1397 = vsel %vm1197, %v1123, 0
      %v1400 = vsel %vm1197, %v1124, 0
      %v1403 = vsel %vm1197, %v1125, 0
      %v1406 = vsel %vm1197, %v1126, 0
      %v1409 = vsel %vm1197, %v1127, 0
      %v1412 = vsel %vm1197, %v1128, 0
      %v1415 = vsel %vm1197, %v1129, 0
      %v1418 = vsel %vm1197, %v1130, 0
      %v1421 = vsel %vm1197, %v1131, 0
      %v1424 = vsel %vm1197, %v1132, 0
      %v1427 = vsel %vm1197, %v1133, 0
      %v1430 = vsel %vm1197, %v1134, 0
      %v1433 = vsel %vm1197, %v1135, 0
      %v1436 = vsel %vm1197, %v1136, 0
      %v1439 = vsel %vm1197, %v1137, 0
      %v1442 = vsel %vm1197, %v1138, 0
      %v1445 = vsel %vm1197, %v1139, 0
      %v1448 = vsel %vm1197, %v1140, 0
      %v1451 = vsel %vm1197, %v1141, 0
      %v1454 = vsel %vm1197, %v1142, 0
      %v1457 = vsel %vm1197, %v1143, 0
      %v1460 = vsel %vm1197, %v1144, 0
      %v1463 = vsel %vm1197, %v1145, 0
      %v1466 = vsel %vm1197, %v1146, 0
      %v1469 = vsel %vm1197, %v1147, 0
      %v1472 = vsel %vm1197, %v1148, 0
      %v1475 = vsel %vm1197, %v1149, 0
      %v1478 = vsel %vm1197, %v1150, 0
      %v1481 = vsel %vm1197, %v1151, 0
      %v1484 = vsel %vm1197, %v1152, 0
      %v1487 = vsel %vm1197, %v1153, 0
      %v1490 = vsel %vm1197, %v1154, 0
      %v1493 = vsel %vm1197, %v1155, 0
      %v1496 = vsel %vm1197, %v1156, 0
      %v1499 = vsel %vm1197, %v1157, 0
      %v1502 = vsel %vm1197, %v1158, 0
      %v1505 = vsel %vm1197, %v1159, 0
      %v1508 = vsel %vm1197, %v1160, 0
      %v1511 = vsel %vm1197, %v1161, 0
      %v1514 = vsel %vm1197, %v1162, 0
      %v1517 = vsel %vm1197, %v1163, 0
      %v1520 = vsel %vm1197, %v1164, 0
      %v1523 = vsel %vm1197, %v1165, 0
      %v1526 = vsel %vm1197, %v1166, 0
      %v1529 = vsel %vm1197, %v1167, 0
      %v1532 = vsel %vm1197, %v1168, 0
      %v1535 = vsel %vm1197, %v1169, 0
      %v1538 = vsel %vm1197, %v1170, 0
      %v1541 = vsel %vm1197, %v1171, 0
      %v1544 = vsel %vm1197, %v1172, 0
      %v1547 = vsel %vm1197, %v1173, 0
      %v1550 = vsel %vm1197, %v1174, 0
      %v1553 = vsel %vm1197, %v1175, 0
      %v1556 = vsel %vm1197, %v1176, 0
      %v1559 = vsel %vm1197, %v1177, 0
      %v1562 = vsel %vm1197, %v1178, 0
      %v1565 = vsel %vm1197, %v1179, 0
      %v1568 = vsel %vm1197, %v1180, 0
      %v1571 = vsel %vm1197, %v1181, 0
      %v1574 = vsel %vm1197, %v1182, 0
      %v1577 = vsel %vm1197, %v1183, 0
      %v1580 = vsel %vm1197, %v1184, 0
      %1582 = vmatprep.subr.bf16.mxu0 0
      %1583 = vmatpush1.bf16.msra.mxu0 %v1193
      %1584 = vmatprep.subr.bf16.mxu0 0
      %1585 = vmatpush1.bf16.msra.mxu0 %v1194
      %1586 = vmatprep.subr.bf16.mxu0 0
      %1587 = vmatpush1.bf16.msra.mxu0 0
      %1588 = vmatprep.subr.bf16.mxu0 0
      %1589 = vmatpush1.bf16.msra.mxu0 0
      %1590 = vmatprep.subr.bf16.mxu0 0
      %1591 = vmatpush1.bf16.msra.mxu0 0
      %1592 = vmatprep.subr.bf16.mxu0 0
      %1593 = vmatpush1.bf16.msra.mxu0 0
      %1594 = vmatprep.subr.bf16.mxu0 0
      %1595 = vmatpush1.bf16.msra.mxu0 0
      %1596 = vmatprep.subr.bf16.mxu0 0
      %1597 = vmatpush1.bf16.msra.mxu0 0
      %1598 = vmatprep.subr.bf16.mxu0 0
      %1599 = vmatpush1.bf16.msra.mxu0 0
      %1600 = vmatprep.subr.bf16.mxu0 0
      %1601 = vmatpush1.bf16.msra.mxu0 0
      %1602 = vmatprep.subr.bf16.mxu0 0
      %1603 = vmatpush1.bf16.msra.mxu0 0
      %1604 = vmatprep.subr.bf16.mxu0 0
      %1605 = vmatpush1.bf16.msra.mxu0 0
      %1606 = vmatprep.subr.bf16.mxu0 0
      %1607 = vmatpush1.bf16.msra.mxu0 0
      %1608 = vmatprep.subr.bf16.mxu0 0
      %1609 = vmatpush1.bf16.msra.mxu0 0
      %1610 = vmatprep.subr.bf16.mxu0 0
      %1611 = vmatpush1.bf16.msra.mxu0 0
      %1612 = vmatprep.subr.bf16.mxu0 0
      %1613 = vmatpush1.bf16.msra.mxu0 0
      %1614 = vmatprep.mubr.bf16.mxu0 0
      %1615 = vmatmul.mubr.bf16.gmra.mrb[0].mxu0 %v1199
      %v1616 = vpop.f32.mrb[0].mxu0
      %v1617 = vadd.f32 0.0, %v1616
      %v1618 = vpop.f32.mrb[0].mxu0
      %v1619 = vpop.f32.mrb[0].mxu0
      %v1620 = vadd.f32 0.0, %v1619
      %v1621 = vpop.f32.mrb[0].mxu0
      %1622 = vmatprep.mubr.bf16.mxu0 0
      %1623 = vmatmul.mubr.bf16.gmra.mrb[0].mxu0 %v1202
      %v1624 = vpop.f32.mrb[0].mxu0
      %v1625 = vadd.f32 0.0, %v1624
      %v1626 = vpop.f32.mrb[0].mxu0
      %v1627 = vpop.f32.mrb[0].mxu0
      %v1628 = vadd.f32 0.0, %v1627
      %v1629 = vpop.f32.mrb[0].mxu0
      %1630 = vmatprep.mubr.bf16.mxu0 0
      %1631 = vmatmul.mubr.bf16.gmra.mrb[0].mxu0 %v1205
      %v1632 = vpop.f32.mrb[0].mxu0
      %v1633 = vadd.f32 0.0, %v1632
      %v1634 = vpop.f32.mrb[0].mxu0
      %v1635 = vpop.f32.mrb[0].mxu0
      %v1636 = vadd.f32 0.0, %v1635
      %v1637 = vpop.f32.mrb[0].mxu0
      %1638 = vmatprep.mubr.bf16.mxu0 0
      %1639 = vmatmul.mubr.bf16.gmra.mrb[0].mxu0 %v1208
      %v1640 = vpop.f32.mrb[0].mxu0
      %v1641 = vadd.f32 0.0, %v1640
      %v1642 = vpop.f32.mrb[0].mxu0
      %v1643 = vpop.f32.mrb[0].mxu0
      %v1644 = vadd.f32 0.0, %v1643
      %v1645 = vpop.f32.mrb[0].mxu0
      %1646 = vmatprep.mubr.bf16.mxu0 0
      %1647 = vmatmul.mubr.bf16.gmra.mrb[0].mxu0 %v1211
      %v1648 = vpop.f32.mrb[0].mxu0
      %v1649 = vadd.f32 0.0, %v1648
      %v1650 = vpop.f32.mrb[0].mxu0
      %v1651 = vpop.f32.mrb[0].mxu0
      %v1652 = vadd.f32 0.0, %v1651
      %v1653 = vpop.f32.mrb[0].mxu0
      %1654 = vmatprep.mubr.bf16.mxu0 0
      %1655 = vmatmul.mubr.bf16.gmra.mrb[0].mxu0 %v1214
      %v1656 = vpop.f32.mrb[0].mxu0
      %v1657 = vadd.f32 0.0, %v1656
      %v1658 = vpop.f32.mrb[0].mxu0
      %v1659 = vpop.f32.mrb[0].mxu0
      %v1660 = vadd.f32 0.0, %v1659
      %v1661 = vpop.f32.mrb[0].mxu0
      %1662 = vmatprep.mubr.bf16.mxu0 0
      %1663 = vmatmul.mubr.bf16.gmra.mrb[0].mxu0 %v1217
      %v1664 = vpop.f32.mrb[0].mxu0
      %v1665 = vadd.f32 0.0, %v1664
      %v1666 = vpop.f32.mrb[0].mxu0
      %v1667 = vpop.f32.mrb[0].mxu0
      %v1668 = vadd.f32 0.0, %v1667
      %v1669 = vpop.f32.mrb[0].mxu0
      %1670 = vmatprep.mubr.bf16.mxu0 0
      %1671 = vmatmul.mubr.bf16.gmra.mrb[0].mxu0 %v1220
      %v1672 = vpop.f32.mrb[0].mxu0
      %v1673 = vadd.f32 0.0, %v1672
      %v1674 = vpop.f32.mrb[0].mxu0
      %v1675 = vpop.f32.mrb[0].mxu0
      %v1676 = vadd.f32 0.0, %v1675
      %v1677 = vpop.f32.mrb[0].mxu0
      %1678 = vmatprep.mubr.bf16.mxu0 0
      %1679 = vmatmul.mubr.bf16.gmra.mrb[0].mxu0 %v1223
      %v1680 = vpop.f32.mrb[0].mxu0
      %v1681 = vadd.f32 0.0, %v1680
      %v1682 = vpop.f32.mrb[0].mxu0
      %v1683 = vpop.f32.mrb[0].mxu0
      %v1684 = vadd.f32 0.0, %v1683
      %v1685 = vpop.f32.mrb[0].mxu0
      %1686 = vmatprep.mubr.bf16.mxu0 0
      %1687 = vmatmul.mubr.bf16.gmra.mrb[0].mxu0 %v1226
      %v1688 = vpop.f32.mrb[0].mxu0
      %v1689 = vadd.f32 0.0, %v1688
      %v1690 = vpop.f32.mrb[0].mxu0
      %v1691 = vpop.f32.mrb[0].mxu0
      %v1692 = vadd.f32 0.0, %v1691
      %v1693 = vpop.f32.mrb[0].mxu0
      %1694 = vmatprep.mubr.bf16.mxu0 0
      %1695 = vmatmul.mubr.bf16.gmra.mrb[0].mxu0 %v1229
      %v1696 = vpop.f32.mrb[0].mxu0
      %v1697 = vadd.f32 0.0, %v1696
      %v1698 = vpop.f32.mrb[0].mxu0
      %v1699 = vpop.f32.mrb[0].mxu0
      %v1700 = vadd.f32 0.0, %v1699
      %v1701 = vpop.f32.mrb[0].mxu0
      %1702 = vmatprep.mubr.bf16.mxu0 0
      %1703 = vmatmul.mubr.bf16.gmra.mrb[0].mxu0 %v1232
      %v1704 = vpop.f32.mrb[0].mxu0
      %v1705 = vadd.f32 0.0, %v1704
      %v1706 = vpop.f32.mrb[0].mxu0
      %v1707 = vpop.f32.mrb[0].mxu0
      %v1708 = vadd.f32 0.0, %v1707
      %v1709 = vpop.f32.mrb[0].mxu0
      %1710 = vmatprep.mubr.bf16.mxu0 0
      %1711 = vmatmul.mubr.bf16.gmra.mrb[0].mxu0 %v1235
      %v1712 = vpop.f32.mrb[0].mxu0
      %v1713 = vadd.f32 0.0, %v1712
      %v1714 = vpop.f32.mrb[0].mxu0
      %v1715 = vpop.f32.mrb[0].mxu0
      %v1716 = vadd.f32 0.0, %v1715
      %v1717 = vpop.f32.mrb[0].mxu0
      %1718 = vmatprep.mubr.bf16.mxu0 0
      %1719 = vmatmul.mubr.bf16.gmra.mrb[0].mxu0 %v1238
      %v1720 = vpop.f32.mrb[0].mxu0
      %v1721 = vadd.f32 0.0, %v1720
      %v1722 = vpop.f32.mrb[0].mxu0
      %v1723 = vpop.f32.mrb[0].mxu0
      %v1724 = vadd.f32 0.0, %v1723
      %v1725 = vpop.f32.mrb[0].mxu0
      %1726 = vmatprep.mubr.bf16.mxu0 0
      %1727 = vmatmul.mubr.bf16.gmra.mrb[0].mxu0 %v1241
      %v1728 = vpop.f32.mrb[0].mxu0
      %v1729 = vadd.f32 0.0, %v1728
      %v1730 = vpop.f32.mrb[0].mxu0
      %v1731 = vpop.f32.mrb[0].mxu0
      %v1732 = vadd.f32 0.0, %v1731
      %v1733 = vpop.f32.mrb[0].mxu0
      %1734 = vmatprep.mubr.bf16.mxu0 0
      %1735 = vmatmul.mubr.bf16.gmra.mrb[0].mxu0 %v1244
      %v1736 = vpop.f32.mrb[0].mxu0
      %v1737 = vadd.f32 0.0, %v1736
      %v1738 = vpop.f32.mrb[0].mxu0
      %v1739 = vpop.f32.mrb[0].mxu0
      %v1740 = vadd.f32 0.0, %v1739
      %v1741 = vpop.f32.mrb[0].mxu0
      %1742 = vmatprep.mubr.bf16.mxu0 0
      %1743 = vmatmul.mubr.bf16.gmra.mrb[0].mxu0 %v1247
      %v1744 = vpop.f32.mrb[0].mxu0
      %v1745 = vadd.f32 0.0, %v1744
      %v1746 = vpop.f32.mrb[0].mxu0
      %v1747 = vpop.f32.mrb[0].mxu0
      %v1748 = vadd.f32 0.0, %v1747
      %v1749 = vpop.f32.mrb[0].mxu0
      %1750 = vmatprep.mubr.bf16.mxu0 0
      %1751 = vmatmul.mubr.bf16.gmra.mrb[0].mxu0 %v1250
      %v1752 = vpop.f32.mrb[0].mxu0
      %v1753 = vadd.f32 0.0, %v1752
      %v1754 = vpop.f32.mrb[0].mxu0
      %v1755 = vpop.f32.mrb[0].mxu0
      %v1756 = vadd.f32 0.0, %v1755
      %v1757 = vpop.f32.mrb[0].mxu0
      %1758 = vmatprep.mubr.bf16.mxu0 0
      %1759 = vmatmul.mubr.bf16.gmra.mrb[0].mxu0 %v1253
      %v1760 = vpop.f32.mrb[0].mxu0
      %v1761 = vadd.f32 0.0, %v1760
      %v1762 = vpop.f32.mrb[0].mxu0
      %v1763 = vpop.f32.mrb[0].mxu0
      %v1764 = vadd.f32 0.0, %v1763
      %v1765 = vpop.f32.mrb[0].mxu0
      %1766 = vmatprep.mubr.bf16.mxu0 0
      %1767 = vmatmul.mubr.bf16.gmra.mrb[0].mxu0 %v1256
      %v1768 = vpop.f32.mrb[0].mxu0
      %v1769 = vadd.f32 0.0, %v1768
      %v1770 = vpop.f32.mrb[0].mxu0
      %v1771 = vpop.f32.mrb[0].mxu0
      %v1772 = vadd.f32 0.0, %v1771
      %v1773 = vpop.f32.mrb[0].mxu0
      %1774 = vmatprep.mubr.bf16.mxu0 0
      %1775 = vmatmul.mubr.bf16.gmra.mrb[0].mxu0 %v1259
      %v1776 = vpop.f32.mrb[0].mxu0
      %v1777 = vadd.f32 0.0, %v1776
      %v1778 = vpop.f32.mrb[0].mxu0
      %v1779 = vpop.f32.mrb[0].mxu0
      %v1780 = vadd.f32 0.0, %v1779
      %v1781 = vpop.f32.mrb[0].mxu0
      %1782 = vmatprep.mubr.bf16.mxu0 0
      %1783 = vmatmul.mubr.bf16.gmra.mrb[0].mxu0 %v1262
      %v1784 = vpop.f32.mrb[0].mxu0
      %v1785 = vadd.f32 0.0, %v1784
      %v1786 = vpop.f32.mrb[0].mxu0
      %v1787 = vpop.f32.mrb[0].mxu0
      %v1788 = vadd.f32 0.0, %v1787
      %v1789 = vpop.f32.mrb[0].mxu0
      %1790 = vmatprep.mubr.bf16.mxu0 0
      %1791 = vmatmul.mubr.bf16.gmra.mrb[0].mxu0 %v1265
      %v1792 = vpop.f32.mrb[0].mxu0
      %v1793 = vadd.f32 0.0, %v1792
      %v1794 = vpop.f32.mrb[0].mxu0
      %v1795 = vpop.f32.mrb[0].mxu0
      %v1796 = vadd.f32 0.0, %v1795
      %v1797 = vpop.f32.mrb[0].mxu0
      %1798 = vmatprep.mubr.bf16.mxu0 0
      %1799 = vmatmul.mubr.bf16.gmra.mrb[0].mxu0 %v1268
      %v1800 = vpop.f32.mrb[0].mxu0
      %v1801 = vadd.f32 0.0, %v1800
      %v1802 = vpop.f32.mrb[0].mxu0
      %v1803 = vpop.f32.mrb[0].mxu0
      %v1804 = vadd.f32 0.0, %v1803
      %v1805 = vpop.f32.mrb[0].mxu0
      %1806 = vmatprep.mubr.bf16.mxu0 0
      %1807 = vmatmul.mubr.bf16.gmra.mrb[0].mxu0 %v1271
      %v1808 = vpop.f32.mrb[0].mxu0
      %v1809 = vadd.f32 0.0, %v1808
      %v1810 = vpop.f32.mrb[0].mxu0
      %v1811 = vpop.f32.mrb[0].mxu0
      %v1812 = vadd.f32 0.0, %v1811
      %v1813 = vpop.f32.mrb[0].mxu0
      %1814 = vmatprep.mubr.bf16.mxu0 0
      %1815 = vmatmul.mubr.bf16.gmra.mrb[0].mxu0 %v1274
      %v1816 = vpop.f32.mrb[0].mxu0
      %v1817 = vadd.f32 0.0, %v1816
      %v1818 = vpop.f32.mrb[0].mxu0
      %v1819 = vpop.f32.mrb[0].mxu0
      %v1820 = vadd.f32 0.0, %v1819
      %v1821 = vpop.f32.mrb[0].mxu0
      %1822 = vmatprep.mubr.bf16.mxu0 0
      %1823 = vmatmul.mubr.bf16.gmra.mrb[0].mxu0 %v1277
      %v1824 = vpop.f32.mrb[0].mxu0
      %v1825 = vadd.f32 0.0, %v1824
      %v1826 = vpop.f32.mrb[0].mxu0
      %v1827 = vpop.f32.mrb[0].mxu0
      %v1828 = vadd.f32 0.0, %v1827
      %v1829 = vpop.f32.mrb[0].mxu0
      %1830 = vmatprep.mubr.bf16.mxu0 0
      %1831 = vmatmul.mubr.bf16.gmra.mrb[0].mxu0 %v1280
      %v1832 = vpop.f32.mrb[0].mxu0
      %v1833 = vadd.f32 0.0, %v1832
      %v1834 = vpop.f32.mrb[0].mxu0
      %v1835 = vpop.f32.mrb[0].mxu0
      %v1836 = vadd.f32 0.0, %v1835
      %v1837 = vpop.f32.mrb[0].mxu0
      %1838 = vmatprep.mubr.bf16.mxu0 0
      %1839 = vmatmul.mubr.bf16.gmra.mrb[0].mxu0 %v1283
      %v1840 = vpop.f32.mrb[0].mxu0
      %v1841 = vadd.f32 0.0, %v1840
      %v1842 = vpop.f32.mrb[0].mxu0
      %v1843 = vpop.f32.mrb[0].mxu0
      %v1844 = vadd.f32 0.0, %v1843
      %v1845 = vpop.f32.mrb[0].mxu0
      %1846 = vmatprep.mubr.bf16.mxu0 0
      %1847 = vmatmul.mubr.bf16.gmra.mrb[0].mxu0 %v1286
      %v1848 = vpop.f32.mrb[0].mxu0
      %v1849 = vadd.f32 0.0, %v1848
      %v1850 = vpop.f32.mrb[0].mxu0
      %v1851 = vpop.f32.mrb[0].mxu0
      %v1852 = vadd.f32 0.0, %v1851
      %v1853 = vpop.f32.mrb[0].mxu0
      %1854 = vmatprep.mubr.bf16.mxu0 0
      %1855 = vmatmul.mubr.bf16.gmra.mrb[0].mxu0 %v1289
      %v1856 = vpop.f32.mrb[0].mxu0
      %v1857 = vadd.f32 0.0, %v1856
      %v1858 = vpop.f32.mrb[0].mxu0
      %v1859 = vpop.f32.mrb[0].mxu0
      %v1860 = vadd.f32 0.0, %v1859
      %v1861 = vpop.f32.mrb[0].mxu0
      %1862 = vmatprep.mubr.bf16.mxu0 0
      %1863 = vmatmul.mubr.bf16.gmra.mrb[0].mxu0 %v1292
      %v1864 = vpop.f32.mrb[0].mxu0
      %v1865 = vadd.f32 0.0, %v1864
      %v1866 = vpop.f32.mrb[0].mxu0
      %v1867 = vpop.f32.mrb[0].mxu0
      %v1868 = vadd.f32 0.0, %v1867
      %v1869 = vpop.f32.mrb[0].mxu0
      %1870 = vmatprep.mubr.bf16.mxu0 0
      %1871 = vmatmul.mubr.bf16.gmra.mrb[0].mxu0 %v1295
      %v1872 = vpop.f32.mrb[0].mxu0
      %v1873 = vadd.f32 0.0, %v1872
      %v1874 = vpop.f32.mrb[0].mxu0
      %v1875 = vpop.f32.mrb[0].mxu0
      %v1876 = vadd.f32 0.0, %v1875
      %v1877 = vpop.f32.mrb[0].mxu0
      %1878 = vmatprep.mubr.bf16.mxu0 0
      %1879 = vmatmul.mubr.bf16.gmra.mrb[0].mxu0 %v1298
      %v1880 = vpop.f32.mrb[0].mxu0
      %v1881 = vadd.f32 0.0, %v1880
      %v1882 = vpop.f32.mrb[0].mxu0
      %v1883 = vpop.f32.mrb[0].mxu0
      %v1884 = vadd.f32 0.0, %v1883
      %v1885 = vpop.f32.mrb[0].mxu0
      %1886 = vmatprep.mubr.bf16.mxu0 0
      %1887 = vmatmul.mubr.bf16.gmra.mrb[0].mxu0 %v1301
      %v1888 = vpop.f32.mrb[0].mxu0
      %v1889 = vadd.f32 0.0, %v1888
      %v1890 = vpop.f32.mrb[0].mxu0
      %v1891 = vpop.f32.mrb[0].mxu0
      %v1892 = vadd.f32 0.0, %v1891
      %v1893 = vpop.f32.mrb[0].mxu0
      %1894 = vmatprep.mubr.bf16.mxu0 0
      %1895 = vmatmul.mubr.bf16.gmra.mrb[0].mxu0 %v1304
      %v1896 = vpop.f32.mrb[0].mxu0
      %v1897 = vadd.f32 0.0, %v1896
      %v1898 = vpop.f32.mrb[0].mxu0
      %v1899 = vpop.f32.mrb[0].mxu0
      %v1900 = vadd.f32 0.0, %v1899
      %v1901 = vpop.f32.mrb[0].mxu0
      %1902 = vmatprep.mubr.bf16.mxu0 0
      %1903 = vmatmul.mubr.bf16.gmra.mrb[0].mxu0 %v1307
      %v1904 = vpop.f32.mrb[0].mxu0
      %v1905 = vadd.f32 0.0, %v1904
      %v1906 = vpop.f32.mrb[0].mxu0
      %v1907 = vpop.f32.mrb[0].mxu0
      %v1908 = vadd.f32 0.0, %v1907
      %v1909 = vpop.f32.mrb[0].mxu0
      %1910 = vmatprep.mubr.bf16.mxu0 0
      %1911 = vmatmul.mubr.bf16.gmra.mrb[0].mxu0 %v1310
      %v1912 = vpop.f32.mrb[0].mxu0
      %v1913 = vadd.f32 0.0, %v1912
      %v1914 = vpop.f32.mrb[0].mxu0
      %v1915 = vpop.f32.mrb[0].mxu0
      %v1916 = vadd.f32 0.0, %v1915
      %v1917 = vpop.f32.mrb[0].mxu0
      %1918 = vmatprep.mubr.bf16.mxu0 0
      %1919 = vmatmul.mubr.bf16.gmra.mrb[0].mxu0 %v1313
      %v1920 = vpop.f32.mrb[0].mxu0
      %v1921 = vadd.f32 0.0, %v1920
      %v1922 = vpop.f32.mrb[0].mxu0
      %v1923 = vpop.f32.mrb[0].mxu0
      %v1924 = vadd.f32 0.0, %v1923
      %v1925 = vpop.f32.mrb[0].mxu0
      %1926 = vmatprep.mubr.bf16.mxu0 0
      %1927 = vmatmul.mubr.bf16.gmra.mrb[0].mxu0 %v1316
      %v1928 = vpop.f32.mrb[0].mxu0
      %v1929 = vadd.f32 0.0, %v1928
      %v1930 = vpop.f32.mrb[0].mxu0
      %v1931 = vpop.f32.mrb[0].mxu0
      %v1932 = vadd.f32 0.0, %v1931
      %v1933 = vpop.f32.mrb[0].mxu0
      %1934 = vmatprep.mubr.bf16.mxu0 0
      %1935 = vmatmul.mubr.bf16.gmra.mrb[0].mxu0 %v1319
      %v1936 = vpop.f32.mrb[0].mxu0
      %v1937 = vadd.f32 0.0, %v1936
      %v1938 = vpop.f32.mrb[0].mxu0
      %v1939 = vpop.f32.mrb[0].mxu0
      %v1940 = vadd.f32 0.0, %v1939
      %v1941 = vpop.f32.mrb[0].mxu0
      %1942 = vmatprep.mubr.bf16.mxu0 0
      %1943 = vmatmul.mubr.bf16.gmra.mrb[0].mxu0 %v1322
      %v1944 = vpop.f32.mrb[0].mxu0
      %v1945 = vadd.f32 0.0, %v1944
      %v1946 = vpop.f32.mrb[0].mxu0
      %v1947 = vpop.f32.mrb[0].mxu0
      %v1948 = vadd.f32 0.0, %v1947
      %v1949 = vpop.f32.mrb[0].mxu0
      %1950 = vmatprep.mubr.bf16.mxu0 0
      %1951 = vmatmul.mubr.bf16.gmra.mrb[0].mxu0 %v1325
      %v1952 = vpop.f32.mrb[0].mxu0
      %v1953 = vadd.f32 0.0, %v1952
      %v1954 = vpop.f32.mrb[0].mxu0
      %v1955 = vpop.f32.mrb[0].mxu0
      %v1956 = vadd.f32 0.0, %v1955
      %v1957 = vpop.f32.mrb[0].mxu0
      %1958 = vmatprep.mubr.bf16.mxu0 0
      %1959 = vmatmul.mubr.bf16.gmra.mrb[0].mxu0 %v1328
      %v1960 = vpop.f32.mrb[0].mxu0
      %v1961 = vadd.f32 0.0, %v1960
      %v1962 = vpop.f32.mrb[0].mxu0
      %v1963 = vpop.f32.mrb[0].mxu0
      %v1964 = vadd.f32 0.0, %v1963
      %v1965 = vpop.f32.mrb[0].mxu0
      %1966 = vmatprep.mubr.bf16.mxu0 0
      %1967 = vmatmul.mubr.bf16.gmra.mrb[0].mxu0 %v1331
      %v1968 = vpop.f32.mrb[0].mxu0
      %v1969 = vadd.f32 0.0, %v1968
      %v1970 = vpop.f32.mrb[0].mxu0
      %v1971 = vpop.f32.mrb[0].mxu0
      %v1972 = vadd.f32 0.0, %v1971
      %v1973 = vpop.f32.mrb[0].mxu0
      %1974 = vmatprep.mubr.bf16.mxu0 0
      %1975 = vmatmul.mubr.bf16.gmra.mrb[0].mxu0 %v1334
      %v1976 = vpop.f32.mrb[0].mxu0
      %v1977 = vadd.f32 0.0, %v1976
      %v1978 = vpop.f32.mrb[0].mxu0
      %v1979 = vpop.f32.mrb[0].mxu0
      %v1980 = vadd.f32 0.0, %v1979
      %v1981 = vpop.f32.mrb[0].mxu0
      %1982 = vmatprep.mubr.bf16.mxu0 0
      %1983 = vmatmul.mubr.bf16.gmra.mrb[0].mxu0 %v1337
      %v1984 = vpop.f32.mrb[0].mxu0
      %v1985 = vadd.f32 0.0, %v1984
      %v1986 = vpop.f32.mrb[0].mxu0
      %v1987 = vpop.f32.mrb[0].mxu0
      %v1988 = vadd.f32 0.0, %v1987
      %v1989 = vpop.f32.mrb[0].mxu0
      %1990 = vmatprep.mubr.bf16.mxu0 0
      %1991 = vmatmul.mubr.bf16.gmra.mrb[0].mxu0 %v1340
      %v1992 = vpop.f32.mrb[0].mxu0
      %v1993 = vadd.f32 0.0, %v1992
      %v1994 = vpop.f32.mrb[0].mxu0
      %v1995 = vpop.f32.mrb[0].mxu0
      %v1996 = vadd.f32 0.0, %v1995
      %v1997 = vpop.f32.mrb[0].mxu0
      %1998 = vmatprep.mubr.bf16.mxu0 0
      %1999 = vmatmul.mubr.bf16.gmra.mrb[0].mxu0 %v1343
      %v2000 = vpop.f32.mrb[0].mxu0
      %v2001 = vadd.f32 0.0, %v2000
      %v2002 = vpop.f32.mrb[0].mxu0
      %v2003 = vpop.f32.mrb[0].mxu0
      %v2004 = vadd.f32 0.0, %v2003
      %v2005 = vpop.f32.mrb[0].mxu0
      %2006 = vmatprep.mubr.bf16.mxu0 0
      %2007 = vmatmul.mubr.bf16.gmra.mrb[0].mxu0 %v1346
      %v2008 = vpop.f32.mrb[0].mxu0
      %v2009 = vadd.f32 0.0, %v2008
      %v2010 = vpop.f32.mrb[0].mxu0
      %v2011 = vpop.f32.mrb[0].mxu0
      %v2012 = vadd.f32 0.0, %v2011
      %v2013 = vpop.f32.mrb[0].mxu0
      %2014 = vmatprep.mubr.bf16.mxu0 0
      %2015 = vmatmul.mubr.bf16.gmra.mrb[0].mxu0 %v1349
      %v2016 = vpop.f32.mrb[0].mxu0
      %v2017 = vadd.f32 0.0, %v2016
      %v2018 = vpop.f32.mrb[0].mxu0
      %v2019 = vpop.f32.mrb[0].mxu0
      %v2020 = vadd.f32 0.0, %v2019
      %v2021 = vpop.f32.mrb[0].mxu0
      %2022 = vmatprep.mubr.bf16.mxu0 0
      %2023 = vmatmul.mubr.bf16.gmra.mrb[0].mxu0 %v1352
      %v2024 = vpop.f32.mrb[0].mxu0
      %v2025 = vadd.f32 0.0, %v2024
      %v2026 = vpop.f32.mrb[0].mxu0
      %v2027 = vpop.f32.mrb[0].mxu0
      %v2028 = vadd.f32 0.0, %v2027
      %v2029 = vpop.f32.mrb[0].mxu0
      %2030 = vmatprep.mubr.bf16.mxu0 0
      %2031 = vmatmul.mubr.bf16.gmra.mrb[0].mxu0 %v1355
      %v2032 = vpop.f32.mrb[0].mxu0
      %v2033 = vadd.f32 0.0, %v2032
      %v2034 = vpop.f32.mrb[0].mxu0
      %v2035 = vpop.f32.mrb[0].mxu0
      %v2036 = vadd.f32 0.0, %v2035
      %v2037 = vpop.f32.mrb[0].mxu0
      %2038 = vmatprep.mubr.bf16.mxu0 0
      %2039 = vmatmul.mubr.bf16.gmra.mrb[0].mxu0 %v1358
      %v2040 = vpop.f32.mrb[0].mxu0
      %v2041 = vadd.f32 0.0, %v2040
      %v2042 = vpop.f32.mrb[0].mxu0
      %v2043 = vpop.f32.mrb[0].mxu0
      %v2044 = vadd.f32 0.0, %v2043
      %v2045 = vpop.f32.mrb[0].mxu0
      %2046 = vmatprep.mubr.bf16.mxu0 0
      %2047 = vmatmul.mubr.bf16.gmra.mrb[0].mxu0 %v1361
      %v2048 = vpop.f32.mrb[0].mxu0
      %v2049 = vadd.f32 0.0, %v2048
      %v2050 = vpop.f32.mrb[0].mxu0
      %v2051 = vpop.f32.mrb[0].mxu0
      %v2052 = vadd.f32 0.0, %v2051
      %v2053 = vpop.f32.mrb[0].mxu0
      %2054 = vmatprep.mubr.bf16.mxu0 0
      %2055 = vmatmul.mubr.bf16.gmra.mrb[0].mxu0 %v1364
      %v2056 = vpop.f32.mrb[0].mxu0
      %v2057 = vadd.f32 0.0, %v2056
      %v2058 = vpop.f32.mrb[0].mxu0
      %v2059 = vpop.f32.mrb[0].mxu0
      %v2060 = vadd.f32 0.0, %v2059
      %v2061 = vpop.f32.mrb[0].mxu0
      %2062 = vmatprep.mubr.bf16.mxu0 0
      %2063 = vmatmul.mubr.bf16.gmra.mrb[0].mxu0 %v1367
      %v2064 = vpop.f32.mrb[0].mxu0
      %v2065 = vadd.f32 0.0, %v2064
      %v2066 = vpop.f32.mrb[0].mxu0
      %v2067 = vpop.f32.mrb[0].mxu0
      %v2068 = vadd.f32 0.0, %v2067
      %v2069 = vpop.f32.mrb[0].mxu0
      %2070 = vmatprep.mubr.bf16.mxu0 0
      %2071 = vmatmul.mubr.bf16.gmra.mrb[0].mxu0 %v1370
      %v2072 = vpop.f32.mrb[0].mxu0
      %v2073 = vadd.f32 0.0, %v2072
      %v2074 = vpop.f32.mrb[0].mxu0
      %v2075 = vpop.f32.mrb[0].mxu0
      %v2076 = vadd.f32 0.0, %v2075
      %v2077 = vpop.f32.mrb[0].mxu0
      %2078 = vmatprep.mubr.bf16.mxu0 0
      %2079 = vmatmul.mubr.bf16.gmra.mrb[0].mxu0 %v1373
      %v2080 = vpop.f32.mrb[0].mxu0
      %v2081 = vadd.f32 0.0, %v2080
      %v2082 = vpop.f32.mrb[0].mxu0
      %v2083 = vpop.f32.mrb[0].mxu0
      %v2084 = vadd.f32 0.0, %v2083
      %v2085 = vpop.f32.mrb[0].mxu0
      %2086 = vmatprep.mubr.bf16.mxu0 0
      %2087 = vmatmul.mubr.bf16.gmra.mrb[0].mxu0 %v1376
      %v2088 = vpop.f32.mrb[0].mxu0
      %v2089 = vadd.f32 0.0, %v2088
      %v2090 = vpop.f32.mrb[0].mxu0
      %v2091 = vpop.f32.mrb[0].mxu0
      %v2092 = vadd.f32 0.0, %v2091
      %v2093 = vpop.f32.mrb[0].mxu0
      %2094 = vmatprep.mubr.bf16.mxu0 0
      %2095 = vmatmul.mubr.bf16.gmra.mrb[0].mxu0 %v1379
      %v2096 = vpop.f32.mrb[0].mxu0
      %v2097 = vadd.f32 0.0, %v2096
      %v2098 = vpop.f32.mrb[0].mxu0
      %v2099 = vpop.f32.mrb[0].mxu0
      %v2100 = vadd.f32 0.0, %v2099
      %v2101 = vpop.f32.mrb[0].mxu0
      %2102 = vmatprep.mubr.bf16.mxu0 0
      %2103 = vmatmul.mubr.bf16.gmra.mrb[0].mxu0 %v1382
      %v2104 = vpop.f32.mrb[0].mxu0
      %v2105 = vadd.f32 0.0, %v2104
      %v2106 = vpop.f32.mrb[0].mxu0
      %v2107 = vpop.f32.mrb[0].mxu0
      %v2108 = vadd.f32 0.0, %v2107
      %v2109 = vpop.f32.mrb[0].mxu0
      %2110 = vmatprep.mubr.bf16.mxu0 0
      %2111 = vmatmul.mubr.bf16.gmra.mrb[0].mxu0 %v1385
      %v2112 = vpop.f32.mrb[0].mxu0
      %v2113 = vadd.f32 0.0, %v2112
      %v2114 = vpop.f32.mrb[0].mxu0
      %v2115 = vpop.f32.mrb[0].mxu0
      %v2116 = vadd.f32 0.0, %v2115
      %v2117 = vpop.f32.mrb[0].mxu0
      %2118 = vmatprep.mubr.bf16.mxu0 0
      %2119 = vmatmul.mubr.bf16.gmra.mrb[0].mxu0 %v1388
      %v2120 = vpop.f32.mrb[0].mxu0
      %v2121 = vadd.f32 0.0, %v2120
      %v2122 = vpop.f32.mrb[0].mxu0
      %v2123 = vpop.f32.mrb[0].mxu0
      %v2124 = vadd.f32 0.0, %v2123
      %v2125 = vpop.f32.mrb[0].mxu0
      %2126 = vmatprep.mubr.bf16.mxu0 0
      %2127 = vmatmul.mubr.bf16.gmra.mrb[0].mxu0 %v1391
      %v2128 = vpop.f32.mrb[0].mxu0
      %v2129 = vadd.f32 0.0, %v2128
      %v2130 = vpop.f32.mrb[0].mxu0
      %v2131 = vpop.f32.mrb[0].mxu0
      %v2132 = vadd.f32 0.0, %v2131
      %v2133 = vpop.f32.mrb[0].mxu0
      %2134 = vmatprep.mubr.bf16.mxu0 0
      %2135 = vmatmul.mubr.bf16.gmra.mrb[0].mxu0 %v1394
      %v2136 = vpop.f32.mrb[0].mxu0
      %v2137 = vadd.f32 0.0, %v2136
      %v2138 = vpop.f32.mrb[0].mxu0
      %v2139 = vpop.f32.mrb[0].mxu0
      %v2140 = vadd.f32 0.0, %v2139
      %v2141 = vpop.f32.mrb[0].mxu0
      %2142 = vmatprep.mubr.bf16.mxu0 0
      %2143 = vmatmul.mubr.bf16.gmra.mrb[0].mxu0 %v1397
      %v2144 = vpop.f32.mrb[0].mxu0
      %v2145 = vadd.f32 0.0, %v2144
      %v2146 = vpop.f32.mrb[0].mxu0
      %v2147 = vpop.f32.mrb[0].mxu0
      %v2148 = vadd.f32 0.0, %v2147
      %v2149 = vpop.f32.mrb[0].mxu0
      %2150 = vmatprep.mubr.bf16.mxu0 0
      %2151 = vmatmul.mubr.bf16.gmra.mrb[0].mxu0 %v1400
      %v2152 = vpop.f32.mrb[0].mxu0
      %v2153 = vadd.f32 0.0, %v2152
      %v2154 = vpop.f32.mrb[0].mxu0
      %v2155 = vpop.f32.mrb[0].mxu0
      %v2156 = vadd.f32 0.0, %v2155
      %v2157 = vpop.f32.mrb[0].mxu0
      %2158 = vmatprep.mubr.bf16.mxu0 0
      %2159 = vmatmul.mubr.bf16.gmra.mrb[0].mxu0 %v1403
      %v2160 = vpop.f32.mrb[0].mxu0
      %v2161 = vadd.f32 0.0, %v2160
      %v2162 = vpop.f32.mrb[0].mxu0
      %v2163 = vpop.f32.mrb[0].mxu0
      %v2164 = vadd.f32 0.0, %v2163
      %v2165 = vpop.f32.mrb[0].mxu0
      %2166 = vmatprep.mubr.bf16.mxu0 0
      %2167 = vmatmul.mubr.bf16.gmra.mrb[0].mxu0 %v1406
      %v2168 = vpop.f32.mrb[0].mxu0
      %v2169 = vadd.f32 0.0, %v2168
      %v2170 = vpop.f32.mrb[0].mxu0
      %v2171 = vpop.f32.mrb[0].mxu0
      %v2172 = vadd.f32 0.0, %v2171
      %v2173 = vpop.f32.mrb[0].mxu0
      %2174 = vmatprep.mubr.bf16.mxu0 0
      %2175 = vmatmul.mubr.bf16.gmra.mrb[0].mxu0 %v1409
      %v2176 = vpop.f32.mrb[0].mxu0
      %v2177 = vadd.f32 0.0, %v2176
      %v2178 = vpop.f32.mrb[0].mxu0
      %v2179 = vpop.f32.mrb[0].mxu0
      %v2180 = vadd.f32 0.0, %v2179
      %v2181 = vpop.f32.mrb[0].mxu0
      %2182 = vmatprep.mubr.bf16.mxu0 0
      %2183 = vmatmul.mubr.bf16.gmra.mrb[0].mxu0 %v1412
      %v2184 = vpop.f32.mrb[0].mxu0
      %v2185 = vadd.f32 0.0, %v2184
      %v2186 = vpop.f32.mrb[0].mxu0
      %v2187 = vpop.f32.mrb[0].mxu0
      %v2188 = vadd.f32 0.0, %v2187
      %v2189 = vpop.f32.mrb[0].mxu0
      %2190 = vmatprep.mubr.bf16.mxu0 0
      %2191 = vmatmul.mubr.bf16.gmra.mrb[0].mxu0 %v1415
      %v2192 = vpop.f32.mrb[0].mxu0
      %v2193 = vadd.f32 0.0, %v2192
      %v2194 = vpop.f32.mrb[0].mxu0
      %v2195 = vpop.f32.mrb[0].mxu0
      %v2196 = vadd.f32 0.0, %v2195
      %v2197 = vpop.f32.mrb[0].mxu0
      %2198 = vmatprep.mubr.bf16.mxu0 0
      %2199 = vmatmul.mubr.bf16.gmra.mrb[0].mxu0 %v1418
      %v2200 = vpop.f32.mrb[0].mxu0
      %v2201 = vadd.f32 0.0, %v2200
      %v2202 = vpop.f32.mrb[0].mxu0
      %v2203 = vpop.f32.mrb[0].mxu0
      %v2204 = vadd.f32 0.0, %v2203
      %v2205 = vpop.f32.mrb[0].mxu0
      %2206 = vmatprep.mubr.bf16.mxu0 0
      %2207 = vmatmul.mubr.bf16.gmra.mrb[0].mxu0 %v1421
      %v2208 = vpop.f32.mrb[0].mxu0
      %v2209 = vadd.f32 0.0, %v2208
      %v2210 = vpop.f32.mrb[0].mxu0
      %v2211 = vpop.f32.mrb[0].mxu0
      %v2212 = vadd.f32 0.0, %v2211
      %v2213 = vpop.f32.mrb[0].mxu0
      %2214 = vmatprep.mubr.bf16.mxu0 0
      %2215 = vmatmul.mubr.bf16.gmra.mrb[0].mxu0 %v1424
      %v2216 = vpop.f32.mrb[0].mxu0
      %v2217 = vadd.f32 0.0, %v2216
      %v2218 = vpop.f32.mrb[0].mxu0
      %v2219 = vpop.f32.mrb[0].mxu0
      %v2220 = vadd.f32 0.0, %v2219
      %v2221 = vpop.f32.mrb[0].mxu0
      %2222 = vmatprep.mubr.bf16.mxu0 0
      %2223 = vmatmul.mubr.bf16.gmra.mrb[0].mxu0 %v1427
      %v2224 = vpop.f32.mrb[0].mxu0
      %v2225 = vadd.f32 0.0, %v2224
      %v2226 = vpop.f32.mrb[0].mxu0
      %v2227 = vpop.f32.mrb[0].mxu0
      %v2228 = vadd.f32 0.0, %v2227
      %v2229 = vpop.f32.mrb[0].mxu0
      %2230 = vmatprep.mubr.bf16.mxu0 0
      %2231 = vmatmul.mubr.bf16.gmra.mrb[0].mxu0 %v1430
      %v2232 = vpop.f32.mrb[0].mxu0
      %v2233 = vadd.f32 0.0, %v2232
      %v2234 = vpop.f32.mrb[0].mxu0
      %v2235 = vpop.f32.mrb[0].mxu0
      %v2236 = vadd.f32 0.0, %v2235
      %v2237 = vpop.f32.mrb[0].mxu0
      %2238 = vmatprep.mubr.bf16.mxu0 0
      %2239 = vmatmul.mubr.bf16.gmra.mrb[0].mxu0 %v1433
      %v2240 = vpop.f32.mrb[0].mxu0
      %v2241 = vadd.f32 0.0, %v2240
      %v2242 = vpop.f32.mrb[0].mxu0
      %v2243 = vpop.f32.mrb[0].mxu0
      %v2244 = vadd.f32 0.0, %v2243
      %v2245 = vpop.f32.mrb[0].mxu0
      %2246 = vmatprep.mubr.bf16.mxu0 0
      %2247 = vmatmul.mubr.bf16.gmra.mrb[0].mxu0 %v1436
      %v2248 = vpop.f32.mrb[0].mxu0
      %v2249 = vadd.f32 0.0, %v2248
      %v2250 = vpop.f32.mrb[0].mxu0
      %v2251 = vpop.f32.mrb[0].mxu0
      %v2252 = vadd.f32 0.0, %v2251
      %v2253 = vpop.f32.mrb[0].mxu0
      %2254 = vmatprep.mubr.bf16.mxu0 0
      %2255 = vmatmul.mubr.bf16.gmra.mrb[0].mxu0 %v1439
      %v2256 = vpop.f32.mrb[0].mxu0
      %v2257 = vadd.f32 0.0, %v2256
      %v2258 = vpop.f32.mrb[0].mxu0
      %v2259 = vpop.f32.mrb[0].mxu0
      %v2260 = vadd.f32 0.0, %v2259
      %v2261 = vpop.f32.mrb[0].mxu0
      %2262 = vmatprep.mubr.bf16.mxu0 0
      %2263 = vmatmul.mubr.bf16.gmra.mrb[0].mxu0 %v1442
      %v2264 = vpop.f32.mrb[0].mxu0
      %v2265 = vadd.f32 0.0, %v2264
      %v2266 = vpop.f32.mrb[0].mxu0
      %v2267 = vpop.f32.mrb[0].mxu0
      %v2268 = vadd.f32 0.0, %v2267
      %v2269 = vpop.f32.mrb[0].mxu0
      %2270 = vmatprep.mubr.bf16.mxu0 0
      %2271 = vmatmul.mubr.bf16.gmra.mrb[0].mxu0 %v1445
      %v2272 = vpop.f32.mrb[0].mxu0
      %v2273 = vadd.f32 0.0, %v2272
      %v2274 = vpop.f32.mrb[0].mxu0
      %v2275 = vpop.f32.mrb[0].mxu0
      %v2276 = vadd.f32 0.0, %v2275
      %v2277 = vpop.f32.mrb[0].mxu0
      %2278 = vmatprep.mubr.bf16.mxu0 0
      %2279 = vmatmul.mubr.bf16.gmra.mrb[0].mxu0 %v1448
      %v2280 = vpop.f32.mrb[0].mxu0
      %v2281 = vadd.f32 0.0, %v2280
      %v2282 = vpop.f32.mrb[0].mxu0
      %v2283 = vpop.f32.mrb[0].mxu0
      %v2284 = vadd.f32 0.0, %v2283
      %v2285 = vpop.f32.mrb[0].mxu0
      %2286 = vmatprep.mubr.bf16.mxu0 0
      %2287 = vmatmul.mubr.bf16.gmra.mrb[0].mxu0 %v1451
      %v2288 = vpop.f32.mrb[0].mxu0
      %v2289 = vadd.f32 0.0, %v2288
      %v2290 = vpop.f32.mrb[0].mxu0
      %v2291 = vpop.f32.mrb[0].mxu0
      %v2292 = vadd.f32 0.0, %v2291
      %v2293 = vpop.f32.mrb[0].mxu0
      %2294 = vmatprep.mubr.bf16.mxu0 0
      %2295 = vmatmul.mubr.bf16.gmra.mrb[0].mxu0 %v1454
      %v2296 = vpop.f32.mrb[0].mxu0
      %v2297 = vadd.f32 0.0, %v2296
      %v2298 = vpop.f32.mrb[0].mxu0
      %v2299 = vpop.f32.mrb[0].mxu0
      %v2300 = vadd.f32 0.0, %v2299
      %v2301 = vpop.f32.mrb[0].mxu0
      %2302 = vmatprep.mubr.bf16.mxu0 0
      %2303 = vmatmul.mubr.bf16.gmra.mrb[0].mxu0 %v1457
      %v2304 = vpop.f32.mrb[0].mxu0
      %v2305 = vadd.f32 0.0, %v2304
      %v2306 = vpop.f32.mrb[0].mxu0
      %v2307 = vpop.f32.mrb[0].mxu0
      %v2308 = vadd.f32 0.0, %v2307
      %v2309 = vpop.f32.mrb[0].mxu0
      %2310 = vmatprep.mubr.bf16.mxu0 0
      %2311 = vmatmul.mubr.bf16.gmra.mrb[0].mxu0 %v1460
      %v2312 = vpop.f32.mrb[0].mxu0
      %v2313 = vadd.f32 0.0, %v2312
      %v2314 = vpop.f32.mrb[0].mxu0
      %v2315 = vpop.f32.mrb[0].mxu0
      %v2316 = vadd.f32 0.0, %v2315
      %v2317 = vpop.f32.mrb[0].mxu0
      %2318 = vmatprep.mubr.bf16.mxu0 0
      %2319 = vmatmul.mubr.bf16.gmra.mrb[0].mxu0 %v1463
      %v2320 = vpop.f32.mrb[0].mxu0
      %v2321 = vadd.f32 0.0, %v2320
      %v2322 = vpop.f32.mrb[0].mxu0
      %v2323 = vpop.f32.mrb[0].mxu0
      %v2324 = vadd.f32 0.0, %v2323
      %v2325 = vpop.f32.mrb[0].mxu0
      %2326 = vmatprep.mubr.bf16.mxu0 0
      %2327 = vmatmul.mubr.bf16.gmra.mrb[0].mxu0 %v1466
      %v2328 = vpop.f32.mrb[0].mxu0
      %v2329 = vadd.f32 0.0, %v2328
      %v2330 = vpop.f32.mrb[0].mxu0
      %v2331 = vpop.f32.mrb[0].mxu0
      %v2332 = vadd.f32 0.0, %v2331
      %v2333 = vpop.f32.mrb[0].mxu0
      %2334 = vmatprep.mubr.bf16.mxu0 0
      %2335 = vmatmul.mubr.bf16.gmra.mrb[0].mxu0 %v1469
      %v2336 = vpop.f32.mrb[0].mxu0
      %v2337 = vadd.f32 0.0, %v2336
      %v2338 = vpop.f32.mrb[0].mxu0
      %v2339 = vpop.f32.mrb[0].mxu0
      %v2340 = vadd.f32 0.0, %v2339
      %v2341 = vpop.f32.mrb[0].mxu0
      %2342 = vmatprep.mubr.bf16.mxu0 0
      %2343 = vmatmul.mubr.bf16.gmra.mrb[0].mxu0 %v1472
      %v2344 = vpop.f32.mrb[0].mxu0
      %v2345 = vadd.f32 0.0, %v2344
      %v2346 = vpop.f32.mrb[0].mxu0
      %v2347 = vpop.f32.mrb[0].mxu0
      %v2348 = vadd.f32 0.0, %v2347
      %v2349 = vpop.f32.mrb[0].mxu0
      %2350 = vmatprep.mubr.bf16.mxu0 0
      %2351 = vmatmul.mubr.bf16.gmra.mrb[0].mxu0 %v1475
      %v2352 = vpop.f32.mrb[0].mxu0
      %v2353 = vadd.f32 0.0, %v2352
      %v2354 = vpop.f32.mrb[0].mxu0
      %v2355 = vpop.f32.mrb[0].mxu0
      %v2356 = vadd.f32 0.0, %v2355
      %v2357 = vpop.f32.mrb[0].mxu0
      %2358 = vmatprep.mubr.bf16.mxu0 0
      %2359 = vmatmul.mubr.bf16.gmra.mrb[0].mxu0 %v1478
      %v2360 = vpop.f32.mrb[0].mxu0
      %v2361 = vadd.f32 0.0, %v2360
      %v2362 = vpop.f32.mrb[0].mxu0
      %v2363 = vpop.f32.mrb[0].mxu0
      %v2364 = vadd.f32 0.0, %v2363
      %v2365 = vpop.f32.mrb[0].mxu0
      %2366 = vmatprep.mubr.bf16.mxu0 0
      %2367 = vmatmul.mubr.bf16.gmra.mrb[0].mxu0 %v1481
      %v2368 = vpop.f32.mrb[0].mxu0
      %v2369 = vadd.f32 0.0, %v2368
      %v2370 = vpop.f32.mrb[0].mxu0
      %v2371 = vpop.f32.mrb[0].mxu0
      %v2372 = vadd.f32 0.0, %v2371
      %v2373 = vpop.f32.mrb[0].mxu0
      %2374 = vmatprep.mubr.bf16.mxu0 0
      %2375 = vmatmul.mubr.bf16.gmra.mrb[0].mxu0 %v1484
      %v2376 = vpop.f32.mrb[0].mxu0
      %v2377 = vadd.f32 0.0, %v2376
      %v2378 = vpop.f32.mrb[0].mxu0
      %v2379 = vpop.f32.mrb[0].mxu0
      %v2380 = vadd.f32 0.0, %v2379
      %v2381 = vpop.f32.mrb[0].mxu0
      %2382 = vmatprep.mubr.bf16.mxu0 0
      %2383 = vmatmul.mubr.bf16.gmra.mrb[0].mxu0 %v1487
      %v2384 = vpop.f32.mrb[0].mxu0
      %v2385 = vadd.f32 0.0, %v2384
      %v2386 = vpop.f32.mrb[0].mxu0
      %v2387 = vpop.f32.mrb[0].mxu0
      %v2388 = vadd.f32 0.0, %v2387
      %v2389 = vpop.f32.mrb[0].mxu0
      %2390 = vmatprep.mubr.bf16.mxu0 0
      %2391 = vmatmul.mubr.bf16.gmra.mrb[0].mxu0 %v1490
      %v2392 = vpop.f32.mrb[0].mxu0
      %v2393 = vadd.f32 0.0, %v2392
      %v2394 = vpop.f32.mrb[0].mxu0
      %v2395 = vpop.f32.mrb[0].mxu0
      %v2396 = vadd.f32 0.0, %v2395
      %v2397 = vpop.f32.mrb[0].mxu0
      %2398 = vmatprep.mubr.bf16.mxu0 0
      %2399 = vmatmul.mubr.bf16.gmra.mrb[0].mxu0 %v1493
      %v2400 = vpop.f32.mrb[0].mxu0
      %v2401 = vadd.f32 0.0, %v2400
      %v2402 = vpop.f32.mrb[0].mxu0
      %v2403 = vpop.f32.mrb[0].mxu0
      %v2404 = vadd.f32 0.0, %v2403
      %v2405 = vpop.f32.mrb[0].mxu0
      %2406 = vmatprep.mubr.bf16.mxu0 0
      %2407 = vmatmul.mubr.bf16.gmra.mrb[0].mxu0 %v1496
      %v2408 = vpop.f32.mrb[0].mxu0
      %v2409 = vadd.f32 0.0, %v2408
      %v2410 = vpop.f32.mrb[0].mxu0
      %v2411 = vpop.f32.mrb[0].mxu0
      %v2412 = vadd.f32 0.0, %v2411
      %v2413 = vpop.f32.mrb[0].mxu0
      %2414 = vmatprep.mubr.bf16.mxu0 0
      %2415 = vmatmul.mubr.bf16.gmra.mrb[0].mxu0 %v1499
      %v2416 = vpop.f32.mrb[0].mxu0
      %v2417 = vadd.f32 0.0, %v2416
      %v2418 = vpop.f32.mrb[0].mxu0
      %v2419 = vpop.f32.mrb[0].mxu0
      %v2420 = vadd.f32 0.0, %v2419
      %v2421 = vpop.f32.mrb[0].mxu0
      %2422 = vmatprep.mubr.bf16.mxu0 0
      %2423 = vmatmul.mubr.bf16.gmra.mrb[0].mxu0 %v1502
      %v2424 = vpop.f32.mrb[0].mxu0
      %v2425 = vadd.f32 0.0, %v2424
      %v2426 = vpop.f32.mrb[0].mxu0
      %v2427 = vpop.f32.mrb[0].mxu0
      %v2428 = vadd.f32 0.0, %v2427
      %v2429 = vpop.f32.mrb[0].mxu0
      %2430 = vmatprep.mubr.bf16.mxu0 0
      %2431 = vmatmul.mubr.bf16.gmra.mrb[0].mxu0 %v1505
      %v2432 = vpop.f32.mrb[0].mxu0
      %v2433 = vadd.f32 0.0, %v2432
      %v2434 = vpop.f32.mrb[0].mxu0
      %v2435 = vpop.f32.mrb[0].mxu0
      %v2436 = vadd.f32 0.0, %v2435
      %v2437 = vpop.f32.mrb[0].mxu0
      %2438 = vmatprep.mubr.bf16.mxu0 0
      %2439 = vmatmul.mubr.bf16.gmra.mrb[0].mxu0 %v1508
      %v2440 = vpop.f32.mrb[0].mxu0
      %v2441 = vadd.f32 0.0, %v2440
      %v2442 = vpop.f32.mrb[0].mxu0
      %v2443 = vpop.f32.mrb[0].mxu0
      %v2444 = vadd.f32 0.0, %v2443
      %v2445 = vpop.f32.mrb[0].mxu0
      %2446 = vmatprep.mubr.bf16.mxu0 0
      %2447 = vmatmul.mubr.bf16.gmra.mrb[0].mxu0 %v1511
      %v2448 = vpop.f32.mrb[0].mxu0
      %v2449 = vadd.f32 0.0, %v2448
      %v2450 = vpop.f32.mrb[0].mxu0
      %v2451 = vpop.f32.mrb[0].mxu0
      %v2452 = vadd.f32 0.0, %v2451
      %v2453 = vpop.f32.mrb[0].mxu0
      %2454 = vmatprep.mubr.bf16.mxu0 0
      %2455 = vmatmul.mubr.bf16.gmra.mrb[0].mxu0 %v1514
      %v2456 = vpop.f32.mrb[0].mxu0
      %v2457 = vadd.f32 0.0, %v2456
      %v2458 = vpop.f32.mrb[0].mxu0
      %v2459 = vpop.f32.mrb[0].mxu0
      %v2460 = vadd.f32 0.0, %v2459
      %v2461 = vpop.f32.mrb[0].mxu0
      %2462 = vmatprep.mubr.bf16.mxu0 0
      %2463 = vmatmul.mubr.bf16.gmra.mrb[0].mxu0 %v1517
      %v2464 = vpop.f32.mrb[0].mxu0
      %v2465 = vadd.f32 0.0, %v2464
      %v2466 = vpop.f32.mrb[0].mxu0
      %v2467 = vpop.f32.mrb[0].mxu0
      %v2468 = vadd.f32 0.0, %v2467
      %v2469 = vpop.f32.mrb[0].mxu0
      %2470 = vmatprep.mubr.bf16.mxu0 0
      %2471 = vmatmul.mubr.bf16.gmra.mrb[0].mxu0 %v1520
      %v2472 = vpop.f32.mrb[0].mxu0
      %v2473 = vadd.f32 0.0, %v2472
      %v2474 = vpop.f32.mrb[0].mxu0
      %v2475 = vpop.f32.mrb[0].mxu0
      %v2476 = vadd.f32 0.0, %v2475
      %v2477 = vpop.f32.mrb[0].mxu0
      %2478 = vmatprep.mubr.bf16.mxu0 0
      %2479 = vmatmul.mubr.bf16.gmra.mrb[0].mxu0 %v1523
      %v2480 = vpop.f32.mrb[0].mxu0
      %v2481 = vadd.f32 0.0, %v2480
      %v2482 = vpop.f32.mrb[0].mxu0
      %v2483 = vpop.f32.mrb[0].mxu0
      %v2484 = vadd.f32 0.0, %v2483
      %v2485 = vpop.f32.mrb[0].mxu0
      %2486 = vmatprep.mubr.bf16.mxu0 0
      %2487 = vmatmul.mubr.bf16.gmra.mrb[0].mxu0 %v1526
      %v2488 = vpop.f32.mrb[0].mxu0
      %v2489 = vadd.f32 0.0, %v2488
      %v2490 = vpop.f32.mrb[0].mxu0
      %v2491 = vpop.f32.mrb[0].mxu0
      %v2492 = vadd.f32 0.0, %v2491
      %v2493 = vpop.f32.mrb[0].mxu0
      %2494 = vmatprep.mubr.bf16.mxu0 0
      %2495 = vmatmul.mubr.bf16.gmra.mrb[0].mxu0 %v1529
      %v2496 = vpop.f32.mrb[0].mxu0
      %v2497 = vadd.f32 0.0, %v2496
      %v2498 = vpop.f32.mrb[0].mxu0
      %v2499 = vpop.f32.mrb[0].mxu0
      %v2500 = vadd.f32 0.0, %v2499
      %v2501 = vpop.f32.mrb[0].mxu0
      %2502 = vmatprep.mubr.bf16.mxu0 0
      %2503 = vmatmul.mubr.bf16.gmra.mrb[0].mxu0 %v1532
      %v2504 = vpop.f32.mrb[0].mxu0
      %v2505 = vadd.f32 0.0, %v2504
      %v2506 = vpop.f32.mrb[0].mxu0
      %v2507 = vpop.f32.mrb[0].mxu0
      %v2508 = vadd.f32 0.0, %v2507
      %v2509 = vpop.f32.mrb[0].mxu0
      %2510 = vmatprep.mubr.bf16.mxu0 0
      %2511 = vmatmul.mubr.bf16.gmra.mrb[0].mxu0 %v1535
      %v2512 = vpop.f32.mrb[0].mxu0
      %v2513 = vadd.f32 0.0, %v2512
      %v2514 = vpop.f32.mrb[0].mxu0
      %v2515 = vpop.f32.mrb[0].mxu0
      %v2516 = vadd.f32 0.0, %v2515
      %v2517 = vpop.f32.mrb[0].mxu0
      %2518 = vmatprep.mubr.bf16.mxu0 0
      %2519 = vmatmul.mubr.bf16.gmra.mrb[0].mxu0 %v1538
      %v2520 = vpop.f32.mrb[0].mxu0
      %v2521 = vadd.f32 0.0, %v2520
      %v2522 = vpop.f32.mrb[0].mxu0
      %v2523 = vpop.f32.mrb[0].mxu0
      %v2524 = vadd.f32 0.0, %v2523
      %v2525 = vpop.f32.mrb[0].mxu0
      %2526 = vmatprep.mubr.bf16.mxu0 0
      %2527 = vmatmul.mubr.bf16.gmra.mrb[0].mxu0 %v1541
      %v2528 = vpop.f32.mrb[0].mxu0
      %v2529 = vadd.f32 0.0, %v2528
      %v2530 = vpop.f32.mrb[0].mxu0
      %v2531 = vpop.f32.mrb[0].mxu0
      %v2532 = vadd.f32 0.0, %v2531
      %v2533 = vpop.f32.mrb[0].mxu0
      %2534 = vmatprep.mubr.bf16.mxu0 0
      %2535 = vmatmul.mubr.bf16.gmra.mrb[0].mxu0 %v1544
      %v2536 = vpop.f32.mrb[0].mxu0
      %v2537 = vadd.f32 0.0, %v2536
      %v2538 = vpop.f32.mrb[0].mxu0
      %v2539 = vpop.f32.mrb[0].mxu0
      %v2540 = vadd.f32 0.0, %v2539
      %v2541 = vpop.f32.mrb[0].mxu0
      %2542 = vmatprep.mubr.bf16.mxu0 0
      %2543 = vmatmul.mubr.bf16.gmra.mrb[0].mxu0 %v1547
      %v2544 = vpop.f32.mrb[0].mxu0
      %v2545 = vadd.f32 0.0, %v2544
      %v2546 = vpop.f32.mrb[0].mxu0
      %v2547 = vpop.f32.mrb[0].mxu0
      %v2548 = vadd.f32 0.0, %v2547
      %v2549 = vpop.f32.mrb[0].mxu0
      %2550 = vmatprep.mubr.bf16.mxu0 0
      %2551 = vmatmul.mubr.bf16.gmra.mrb[0].mxu0 %v1550
      %v2552 = vpop.f32.mrb[0].mxu0
      %v2553 = vadd.f32 0.0, %v2552
      %v2554 = vpop.f32.mrb[0].mxu0
      %v2555 = vpop.f32.mrb[0].mxu0
      %v2556 = vadd.f32 0.0, %v2555
      %v2557 = vpop.f32.mrb[0].mxu0
      %2558 = vmatprep.mubr.bf16.mxu0 0
      %2559 = vmatmul.mubr.bf16.gmra.mrb[0].mxu0 %v1553
      %v2560 = vpop.f32.mrb[0].mxu0
      %v2561 = vadd.f32 0.0, %v2560
      %v2562 = vpop.f32.mrb[0].mxu0
      %v2563 = vpop.f32.mrb[0].mxu0
      %v2564 = vadd.f32 0.0, %v2563
      %v2565 = vpop.f32.mrb[0].mxu0
      %2566 = vmatprep.mubr.bf16.mxu0 0
      %2567 = vmatmul.mubr.bf16.gmra.mrb[0].mxu0 %v1556
      %v2568 = vpop.f32.mrb[0].mxu0
      %v2569 = vadd.f32 0.0, %v2568
      %v2570 = vpop.f32.mrb[0].mxu0
      %v2571 = vpop.f32.mrb[0].mxu0
      %v2572 = vadd.f32 0.0, %v2571
      %v2573 = vpop.f32.mrb[0].mxu0
      %2574 = vmatprep.mubr.bf16.mxu0 0
      %2575 = vmatmul.mubr.bf16.gmra.mrb[0].mxu0 %v1559
      %v2576 = vpop.f32.mrb[0].mxu0
      %v2577 = vadd.f32 0.0, %v2576
      %v2578 = vpop.f32.mrb[0].mxu0
      %v2579 = vpop.f32.mrb[0].mxu0
      %v2580 = vadd.f32 0.0, %v2579
      %v2581 = vpop.f32.mrb[0].mxu0
      %2582 = vmatprep.mubr.bf16.mxu0 0
      %2583 = vmatmul.mubr.bf16.gmra.mrb[0].mxu0 %v1562
      %v2584 = vpop.f32.mrb[0].mxu0
      %v2585 = vadd.f32 0.0, %v2584
      %v2586 = vpop.f32.mrb[0].mxu0
      %v2587 = vpop.f32.mrb[0].mxu0
      %v2588 = vadd.f32 0.0, %v2587
      %v2589 = vpop.f32.mrb[0].mxu0
      %2590 = vmatprep.mubr.bf16.mxu0 0
      %2591 = vmatmul.mubr.bf16.gmra.mrb[0].mxu0 %v1565
      %v2592 = vpop.f32.mrb[0].mxu0
      %v2593 = vadd.f32 0.0, %v2592
      %v2594 = vpop.f32.mrb[0].mxu0
      %v2595 = vpop.f32.mrb[0].mxu0
      %v2596 = vadd.f32 0.0, %v2595
      %v2597 = vpop.f32.mrb[0].mxu0
      %2598 = vmatprep.mubr.bf16.mxu0 0
      %2599 = vmatmul.mubr.bf16.gmra.mrb[0].mxu0 %v1568
      %v2600 = vpop.f32.mrb[0].mxu0
      %v2601 = vadd.f32 0.0, %v2600
      %v2602 = vpop.f32.mrb[0].mxu0
      %v2603 = vpop.f32.mrb[0].mxu0
      %v2604 = vadd.f32 0.0, %v2603
      %v2605 = vpop.f32.mrb[0].mxu0
      %2606 = vmatprep.mubr.bf16.mxu0 0
      %2607 = vmatmul.mubr.bf16.gmra.mrb[0].mxu0 %v1571
      %v2608 = vpop.f32.mrb[0].mxu0
      %v2609 = vadd.f32 0.0, %v2608
      %v2610 = vpop.f32.mrb[0].mxu0
      %v2611 = vpop.f32.mrb[0].mxu0
      %v2612 = vadd.f32 0.0, %v2611
      %v2613 = vpop.f32.mrb[0].mxu0
      %2614 = vmatprep.mubr.bf16.mxu0 0
      %2615 = vmatmul.mubr.bf16.gmra.mrb[0].mxu0 %v1574
      %v2616 = vpop.f32.mrb[0].mxu0
      %v2617 = vadd.f32 0.0, %v2616
      %v2618 = vpop.f32.mrb[0].mxu0
      %v2619 = vpop.f32.mrb[0].mxu0
      %v2620 = vadd.f32 0.0, %v2619
      %v2621 = vpop.f32.mrb[0].mxu0
      %2622 = vmatprep.mubr.bf16.mxu0 0
      %2623 = vmatmul.mubr.bf16.gmra.mrb[0].mxu0 %v1577
      %v2624 = vpop.f32.mrb[0].mxu0
      %v2625 = vadd.f32 0.0, %v2624
      %v2626 = vpop.f32.mrb[0].mxu0
      %v2627 = vpop.f32.mrb[0].mxu0
      %v2628 = vadd.f32 0.0, %v2627
      %v2629 = vpop.f32.mrb[0].mxu0
      %2630 = vmatprep.mubr.bf16.mxu0 0
      %2631 = vmatmul.mubr.bf16.gmra.mrb[0].mxu0 %v1580
      %v2632 = vpop.f32.mrb[0].mxu0
      %v2633 = vadd.f32 0.0, %v2632
      %v2634 = vpop.f32.mrb[0].mxu0
      %v2635 = vpop.f32.mrb[0].mxu0
      %v2636 = vadd.f32 0.0, %v2635
      %v2637 = vpop.f32.mrb[0].mxu0
      %2638 = vdwg.mxu0
      %v2639 = vmax.f32 %v1617, 0.0
      %v2640 = vmax.f32 %v1620, 0.0
      %v2641 = vmax.f32 %v1625, 0.0
      %v2642 = vmax.f32 %v1628, 0.0
      %v2643 = vmax.f32 %v1633, 0.0
      %v2644 = vmax.f32 %v1636, 0.0
      %v2645 = vmax.f32 %v1641, 0.0
      %v2646 = vmax.f32 %v1644, 0.0
      %v2647 = vmax.f32 %v1649, 0.0
      %v2648 = vmax.f32 %v1652, 0.0
      %v2649 = vmax.f32 %v1657, 0.0
      %v2650 = vmax.f32 %v1660, 0.0
      %v2651 = vmax.f32 %v1665, 0.0
      %v2652 = vmax.f32 %v1668, 0.0
      %v2653 = vmax.f32 %v1673, 0.0
      %v2654 = vmax.f32 %v1676, 0.0
      %v2655 = vmax.f32 %v1681, 0.0
      %v2656 = vmax.f32 %v1684, 0.0
      %v2657 = vmax.f32 %v1689, 0.0
      %v2658 = vmax.f32 %v1692, 0.0
      %v2659 = vmax.f32 %v1697, 0.0
      %v2660 = vmax.f32 %v1700, 0.0
      %v2661 = vmax.f32 %v1705, 0.0
      %v2662 = vmax.f32 %v1708, 0.0
      %v2663 = vmax.f32 %v1713, 0.0
      %v2664 = vmax.f32 %v1716, 0.0
      %v2665 = vmax.f32 %v1721, 0.0
      %v2666 = vmax.f32 %v1724, 0.0
      %v2667 = vmax.f32 %v1729, 0.0
      %v2668 = vmax.f32 %v1732, 0.0
      %v2669 = vmax.f32 %v1737, 0.0
      %v2670 = vmax.f32 %v1740, 0.0
      %v2671 = vmax.f32 %v1745, 0.0
      %v2672 = vmax.f32 %v1748, 0.0
      %v2673 = vmax.f32 %v1753, 0.0
      %v2674 = vmax.f32 %v1756, 0.0
      %v2675 = vmax.f32 %v1761, 0.0
      %v2676 = vmax.f32 %v1764, 0.0
      %v2677 = vmax.f32 %v1769, 0.0
      %v2678 = vmax.f32 %v1772, 0.0
      %v2679 = vmax.f32 %v1777, 0.0
      %v2680 = vmax.f32 %v1780, 0.0
      %v2681 = vmax.f32 %v1785, 0.0
      %v2682 = vmax.f32 %v1788, 0.0
      %v2683 = vmax.f32 %v1793, 0.0
      %v2684 = vmax.f32 %v1796, 0.0
      %v2685 = vmax.f32 %v1801, 0.0
      %v2686 = vmax.f32 %v1804, 0.0
      %v2687 = vmax.f32 %v1809, 0.0
      %v2688 = vmax.f32 %v1812, 0.0
      %v2689 = vmax.f32 %v1817, 0.0
      %v2690 = vmax.f32 %v1820, 0.0
      %v2691 = vmax.f32 %v1825, 0.0
      %v2692 = vmax.f32 %v1828, 0.0
      %v2693 = vmax.f32 %v1833, 0.0
      %v2694 = vmax.f32 %v1836, 0.0
      %v2695 = vmax.f32 %v1841, 0.0
      %v2696 = vmax.f32 %v1844, 0.0
      %v2697 = vmax.f32 %v1849, 0.0
      %v2698 = vmax.f32 %v1852, 0.0
      %v2699 = vmax.f32 %v1857, 0.0
      %v2700 = vmax.f32 %v1860, 0.0
      %v2701 = vmax.f32 %v1865, 0.0
      %v2702 = vmax.f32 %v1868, 0.0
      %v2703 = vmax.f32 %v1873, 0.0
      %v2704 = vmax.f32 %v1876, 0.0
      %v2705 = vmax.f32 %v1881, 0.0
      %v2706 = vmax.f32 %v1884, 0.0
      %v2707 = vmax.f32 %v1889, 0.0
      %v2708 = vmax.f32 %v1892, 0.0
      %v2709 = vmax.f32 %v1897, 0.0
      %v2710 = vmax.f32 %v1900, 0.0
      %v2711 = vmax.f32 %v1905, 0.0
      %v2712 = vmax.f32 %v1908, 0.0
      %v2713 = vmax.f32 %v1913, 0.0
      %v2714 = vmax.f32 %v1916, 0.0
      %v2715 = vmax.f32 %v1921, 0.0
      %v2716 = vmax.f32 %v1924, 0.0
      %v2717 = vmax.f32 %v1929, 0.0
      %v2718 = vmax.f32 %v1932, 0.0
      %v2719 = vmax.f32 %v1937, 0.0
      %v2720 = vmax.f32 %v1940, 0.0
      %v2721 = vmax.f32 %v1945, 0.0
      %v2722 = vmax.f32 %v1948, 0.0
      %v2723 = vmax.f32 %v1953, 0.0
      %v2724 = vmax.f32 %v1956, 0.0
      %v2725 = vmax.f32 %v1961, 0.0
      %v2726 = vmax.f32 %v1964, 0.0
      %v2727 = vmax.f32 %v1969, 0.0
      %v2728 = vmax.f32 %v1972, 0.0
      %v2729 = vmax.f32 %v1977, 0.0
      %v2730 = vmax.f32 %v1980, 0.0
      %v2731 = vmax.f32 %v1985, 0.0
      %v2732 = vmax.f32 %v1988, 0.0
      %v2733 = vmax.f32 %v1993, 0.0
      %v2734 = vmax.f32 %v1996, 0.0
      %v2735 = vmax.f32 %v2001, 0.0
      %v2736 = vmax.f32 %v2004, 0.0
      %v2737 = vmax.f32 %v2009, 0.0
      %v2738 = vmax.f32 %v2012, 0.0
      %v2739 = vmax.f32 %v2017, 0.0
      %v2740 = vmax.f32 %v2020, 0.0
      %v2741 = vmax.f32 %v2025, 0.0
      %v2742 = vmax.f32 %v2028, 0.0
      %v2743 = vmax.f32 %v2033, 0.0
      %v2744 = vmax.f32 %v2036, 0.0
      %v2745 = vmax.f32 %v2041, 0.0
      %v2746 = vmax.f32 %v2044, 0.0
      %v2747 = vmax.f32 %v2049, 0.0
      %v2748 = vmax.f32 %v2052, 0.0
      %v2749 = vmax.f32 %v2057, 0.0
      %v2750 = vmax.f32 %v2060, 0.0
      %v2751 = vmax.f32 %v2065, 0.0
      %v2752 = vmax.f32 %v2068, 0.0
      %v2753 = vmax.f32 %v2073, 0.0
      %v2754 = vmax.f32 %v2076, 0.0
      %v2755 = vmax.f32 %v2081, 0.0
      %v2756 = vmax.f32 %v2084, 0.0
      %v2757 = vmax.f32 %v2089, 0.0
      %v2758 = vmax.f32 %v2092, 0.0
      %v2759 = vmax.f32 %v2097, 0.0
      %v2760 = vmax.f32 %v2100, 0.0
      %v2761 = vmax.f32 %v2105, 0.0
      %v2762 = vmax.f32 %v2108, 0.0
      %v2763 = vmax.f32 %v2113, 0.0
      %v2764 = vmax.f32 %v2116, 0.0
      %v2765 = vmax.f32 %v2121, 0.0
      %v2766 = vmax.f32 %v2124, 0.0
      %v2767 = vmax.f32 %v2129, 0.0
      %v2768 = vmax.f32 %v2132, 0.0
      %v2769 = vmax.f32 %v2137, 0.0
      %v2770 = vmax.f32 %v2140, 0.0
      %v2771 = vmax.f32 %v2145, 0.0
      %v2772 = vmax.f32 %v2148, 0.0
      %v2773 = vmax.f32 %v2153, 0.0
      %v2774 = vmax.f32 %v2156, 0.0
      %v2775 = vmax.f32 %v2161, 0.0
      %v2776 = vmax.f32 %v2164, 0.0
      %v2777 = vmax.f32 %v2169, 0.0
      %v2778 = vmax.f32 %v2172, 0.0
      %v2779 = vmax.f32 %v2177, 0.0
      %v2780 = vmax.f32 %v2180, 0.0
      %v2781 = vmax.f32 %v2185, 0.0
      %v2782 = vmax.f32 %v2188, 0.0
      %v2783 = vmax.f32 %v2193, 0.0
      %v2784 = vmax.f32 %v2196, 0.0
      %v2785 = vmax.f32 %v2201, 0.0
      %v2786 = vmax.f32 %v2204, 0.0
      %v2787 = vmax.f32 %v2209, 0.0
      %v2788 = vmax.f32 %v2212, 0.0
      %v2789 = vmax.f32 %v2217, 0.0
      %v2790 = vmax.f32 %v2220, 0.0
      %v2791 = vmax.f32 %v2225, 0.0
      %v2792 = vmax.f32 %v2228, 0.0
      %v2793 = vmax.f32 %v2233, 0.0
      %v2794 = vmax.f32 %v2236, 0.0
      %v2795 = vmax.f32 %v2241, 0.0
      %v2796 = vmax.f32 %v2244, 0.0
      %v2797 = vmax.f32 %v2249, 0.0
      %v2798 = vmax.f32 %v2252, 0.0
      %v2799 = vmax.f32 %v2257, 0.0
      %v2800 = vmax.f32 %v2260, 0.0
      %v2801 = vmax.f32 %v2265, 0.0
      %v2802 = vmax.f32 %v2268, 0.0
      %v2803 = vmax.f32 %v2273, 0.0
      %v2804 = vmax.f32 %v2276, 0.0
      %v2805 = vmax.f32 %v2281, 0.0
      %v2806 = vmax.f32 %v2284, 0.0
      %v2807 = vmax.f32 %v2289, 0.0
      %v2808 = vmax.f32 %v2292, 0.0
      %v2809 = vmax.f32 %v2297, 0.0
      %v2810 = vmax.f32 %v2300, 0.0
      %v2811 = vmax.f32 %v2305, 0.0
      %v2812 = vmax.f32 %v2308, 0.0
      %v2813 = vmax.f32 %v2313, 0.0
      %v2814 = vmax.f32 %v2316, 0.0
      %v2815 = vmax.f32 %v2321, 0.0
      %v2816 = vmax.f32 %v2324, 0.0
      %v2817 = vmax.f32 %v2329, 0.0
      %v2818 = vmax.f32 %v2332, 0.0
      %v2819 = vmax.f32 %v2337, 0.0
      %v2820 = vmax.f32 %v2340, 0.0
      %v2821 = vmax.f32 %v2345, 0.0
      %v2822 = vmax.f32 %v2348, 0.0
      %v2823 = vmax.f32 %v2353, 0.0
      %v2824 = vmax.f32 %v2356, 0.0
      %v2825 = vmax.f32 %v2361, 0.0
      %v2826 = vmax.f32 %v2364, 0.0
      %v2827 = vmax.f32 %v2369, 0.0
      %v2828 = vmax.f32 %v2372, 0.0
      %v2829 = vmax.f32 %v2377, 0.0
      %v2830 = vmax.f32 %v2380, 0.0
      %v2831 = vmax.f32 %v2385, 0.0
      %v2832 = vmax.f32 %v2388, 0.0
      %v2833 = vmax.f32 %v2393, 0.0
      %v2834 = vmax.f32 %v2396, 0.0
      %v2835 = vmax.f32 %v2401, 0.0
      %v2836 = vmax.f32 %v2404, 0.0
      %v2837 = vmax.f32 %v2409, 0.0
      %v2838 = vmax.f32 %v2412, 0.0
      %v2839 = vmax.f32 %v2417, 0.0
      %v2840 = vmax.f32 %v2420, 0.0
      %v2841 = vmax.f32 %v2425, 0.0
      %v2842 = vmax.f32 %v2428, 0.0
      %v2843 = vmax.f32 %v2433, 0.0
      %v2844 = vmax.f32 %v2436, 0.0
      %v2845 = vmax.f32 %v2441, 0.0
      %v2846 = vmax.f32 %v2444, 0.0
      %v2847 = vmax.f32 %v2449, 0.0
      %v2848 = vmax.f32 %v2452, 0.0
      %v2849 = vmax.f32 %v2457, 0.0
      %v2850 = vmax.f32 %v2460, 0.0
      %v2851 = vmax.f32 %v2465, 0.0
      %v2852 = vmax.f32 %v2468, 0.0
      %v2853 = vmax.f32 %v2473, 0.0
      %v2854 = vmax.f32 %v2476, 0.0
      %v2855 = vmax.f32 %v2481, 0.0
      %v2856 = vmax.f32 %v2484, 0.0
      %v2857 = vmax.f32 %v2489, 0.0
      %v2858 = vmax.f32 %v2492, 0.0
      %v2859 = vmax.f32 %v2497, 0.0
      %v2860 = vmax.f32 %v2500, 0.0
      %v2861 = vmax.f32 %v2505, 0.0
      %v2862 = vmax.f32 %v2508, 0.0
      %v2863 = vmax.f32 %v2513, 0.0
      %v2864 = vmax.f32 %v2516, 0.0
      %v2865 = vmax.f32 %v2521, 0.0
      %v2866 = vmax.f32 %v2524, 0.0
      %v2867 = vmax.f32 %v2529, 0.0
      %v2868 = vmax.f32 %v2532, 0.0
      %v2869 = vmax.f32 %v2537, 0.0
      %v2870 = vmax.f32 %v2540, 0.0
      %v2871 = vmax.f32 %v2545, 0.0
      %v2872 = vmax.f32 %v2548, 0.0
      %v2873 = vmax.f32 %v2553, 0.0
      %v2874 = vmax.f32 %v2556, 0.0
      %v2875 = vmax.f32 %v2561, 0.0
      %v2876 = vmax.f32 %v2564, 0.0
      %v2877 = vmax.f32 %v2569, 0.0
      %v2878 = vmax.f32 %v2572, 0.0
      %v2879 = vmax.f32 %v2577, 0.0
      %v2880 = vmax.f32 %v2580, 0.0
      %v2881 = vmax.f32 %v2585, 0.0
      %v2882 = vmax.f32 %v2588, 0.0
      %v2883 = vmax.f32 %v2593, 0.0
      %v2884 = vmax.f32 %v2596, 0.0
      %v2885 = vmax.f32 %v2601, 0.0
      %v2886 = vmax.f32 %v2604, 0.0
      %v2887 = vmax.f32 %v2609, 0.0
      %v2888 = vmax.f32 %v2612, 0.0
      %v2889 = vmax.f32 %v2617, 0.0
      %v2890 = vmax.f32 %v2620, 0.0
      %v2891 = vmax.f32 %v2625, 0.0
      %v2892 = vmax.f32 %v2628, 0.0
      %v2893 = vmax.f32 %v2633, 0.0
      %v2894 = vmax.f32 %v2636, 0.0
      %v2895 = vpack.c.bf16 %v2640, %v2639
      %v2896 = vpack.c.bf16 %v2642, %v2641
      %v2897 = vpack.c.bf16 %v2644, %v2643
      %v2898 = vpack.c.bf16 %v2646, %v2645
      %v2899 = vpack.c.bf16 %v2648, %v2647
      %v2900 = vpack.c.bf16 %v2650, %v2649
      %v2901 = vpack.c.bf16 %v2652, %v2651
      %v2902 = vpack.c.bf16 %v2654, %v2653
      %v2903 = vpack.c.bf16 %v2656, %v2655
      %v2904 = vpack.c.bf16 %v2658, %v2657
      %v2905 = vpack.c.bf16 %v2660, %v2659
      %v2906 = vpack.c.bf16 %v2662, %v2661
      %v2907 = vpack.c.bf16 %v2664, %v2663
      %v2908 = vpack.c.bf16 %v2666, %v2665
      %v2909 = vpack.c.bf16 %v2668, %v2667
      %v2910 = vpack.c.bf16 %v2670, %v2669
      %v2911 = vpack.c.bf16 %v2672, %v2671
      %v2912 = vpack.c.bf16 %v2674, %v2673
      %v2913 = vpack.c.bf16 %v2676, %v2675
      %v2914 = vpack.c.bf16 %v2678, %v2677
      %v2915 = vpack.c.bf16 %v2680, %v2679
      %v2916 = vpack.c.bf16 %v2682, %v2681
      %v2917 = vpack.c.bf16 %v2684, %v2683
      %v2918 = vpack.c.bf16 %v2686, %v2685
      %v2919 = vpack.c.bf16 %v2688, %v2687
      %v2920 = vpack.c.bf16 %v2690, %v2689
      %v2921 = vpack.c.bf16 %v2692, %v2691
      %v2922 = vpack.c.bf16 %v2694, %v2693
      %v2923 = vpack.c.bf16 %v2696, %v2695
      %v2924 = vpack.c.bf16 %v2698, %v2697
      %v2925 = vpack.c.bf16 %v2700, %v2699
      %v2926 = vpack.c.bf16 %v2702, %v2701
      %v2927 = vpack.c.bf16 %v2704, %v2703
      %v2928 = vpack.c.bf16 %v2706, %v2705
      %v2929 = vpack.c.bf16 %v2708, %v2707
      %v2930 = vpack.c.bf16 %v2710, %v2709
      %v2931 = vpack.c.bf16 %v2712, %v2711
      %v2932 = vpack.c.bf16 %v2714, %v2713
      %v2933 = vpack.c.bf16 %v2716, %v2715
      %v2934 = vpack.c.bf16 %v2718, %v2717
      %v2935 = vpack.c.bf16 %v2720, %v2719
      %v2936 = vpack.c.bf16 %v2722, %v2721
      %v2937 = vpack.c.bf16 %v2724, %v2723
      %v2938 = vpack.c.bf16 %v2726, %v2725
      %v2939 = vpack.c.bf16 %v2728, %v2727
      %v2940 = vpack.c.bf16 %v2730, %v2729
      %v2941 = vpack.c.bf16 %v2732, %v2731
      %v2942 = vpack.c.bf16 %v2734, %v2733
      %v2943 = vpack.c.bf16 %v2736, %v2735
      %v2944 = vpack.c.bf16 %v2738, %v2737
      %v2945 = vpack.c.bf16 %v2740, %v2739
      %v2946 = vpack.c.bf16 %v2742, %v2741
      %v2947 = vpack.c.bf16 %v2744, %v2743
      %v2948 = vpack.c.bf16 %v2746, %v2745
      %v2949 = vpack.c.bf16 %v2748, %v2747
      %v2950 = vpack.c.bf16 %v2750, %v2749
      %v2951 = vpack.c.bf16 %v2752, %v2751
      %v2952 = vpack.c.bf16 %v2754, %v2753
      %v2953 = vpack.c.bf16 %v2756, %v2755
      %v2954 = vpack.c.bf16 %v2758, %v2757
      %v2955 = vpack.c.bf16 %v2760, %v2759
      %v2956 = vpack.c.bf16 %v2762, %v2761
      %v2957 = vpack.c.bf16 %v2764, %v2763
      %v2958 = vpack.c.bf16 %v2766, %v2765
      %v2959 = vpack.c.bf16 %v2768, %v2767
      %v2960 = vpack.c.bf16 %v2770, %v2769
      %v2961 = vpack.c.bf16 %v2772, %v2771
      %v2962 = vpack.c.bf16 %v2774, %v2773
      %v2963 = vpack.c.bf16 %v2776, %v2775
      %v2964 = vpack.c.bf16 %v2778, %v2777
      %v2965 = vpack.c.bf16 %v2780, %v2779
      %v2966 = vpack.c.bf16 %v2782, %v2781
      %v2967 = vpack.c.bf16 %v2784, %v2783
      %v2968 = vpack.c.bf16 %v2786, %v2785
      %v2969 = vpack.c.bf16 %v2788, %v2787
      %v2970 = vpack.c.bf16 %v2790, %v2789
      %v2971 = vpack.c.bf16 %v2792, %v2791
      %v2972 = vpack.c.bf16 %v2794, %v2793
      %v2973 = vpack.c.bf16 %v2796, %v2795
      %v2974 = vpack.c.bf16 %v2798, %v2797
      %v2975 = vpack.c.bf16 %v2800, %v2799
      %v2976 = vpack.c.bf16 %v2802, %v2801
      %v2977 = vpack.c.bf16 %v2804, %v2803
      %v2978 = vpack.c.bf16 %v2806, %v2805
      %v2979 = vpack.c.bf16 %v2808, %v2807
      %v2980 = vpack.c.bf16 %v2810, %v2809
      %v2981 = vpack.c.bf16 %v2812, %v2811
      %v2982 = vpack.c.bf16 %v2814, %v2813
      %v2983 = vpack.c.bf16 %v2816, %v2815
      %v2984 = vpack.c.bf16 %v2818, %v2817
      %v2985 = vpack.c.bf16 %v2820, %v2819
      %v2986 = vpack.c.bf16 %v2822, %v2821
      %v2987 = vpack.c.bf16 %v2824, %v2823
      %v2988 = vpack.c.bf16 %v2826, %v2825
      %v2989 = vpack.c.bf16 %v2828, %v2827
      %v2990 = vpack.c.bf16 %v2830, %v2829
      %v2991 = vpack.c.bf16 %v2832, %v2831
      %v2992 = vpack.c.bf16 %v2834, %v2833
      %v2993 = vpack.c.bf16 %v2836, %v2835
      %v2994 = vpack.c.bf16 %v2838, %v2837
      %v2995 = vpack.c.bf16 %v2840, %v2839
      %v2996 = vpack.c.bf16 %v2842, %v2841
      %v2997 = vpack.c.bf16 %v2844, %v2843
      %v2998 = vpack.c.bf16 %v2846, %v2845
      %v2999 = vpack.c.bf16 %v2848, %v2847
      %v3000 = vpack.c.bf16 %v2850, %v2849
      %v3001 = vpack.c.bf16 %v2852, %v2851
      %v3002 = vpack.c.bf16 %v2854, %v2853
      %v3003 = vpack.c.bf16 %v2856, %v2855
      %v3004 = vpack.c.bf16 %v2858, %v2857
      %v3005 = vpack.c.bf16 %v2860, %v2859
      %v3006 = vpack.c.bf16 %v2862, %v2861
      %v3007 = vpack.c.bf16 %v2864, %v2863
      %v3008 = vpack.c.bf16 %v2866, %v2865
      %v3009 = vpack.c.bf16 %v2868, %v2867
      %v3010 = vpack.c.bf16 %v2870, %v2869
      %v3011 = vpack.c.bf16 %v2872, %v2871
      %v3012 = vpack.c.bf16 %v2874, %v2873
      %v3013 = vpack.c.bf16 %v2876, %v2875
      %v3014 = vpack.c.bf16 %v2878, %v2877
      %v3015 = vpack.c.bf16 %v2880, %v2879
      %v3016 = vpack.c.bf16 %v2882, %v2881
      %v3017 = vpack.c.bf16 %v2884, %v2883
      %v3018 = vpack.c.bf16 %v2886, %v2885
      %v3019 = vpack.c.bf16 %v2888, %v2887
      %v3020 = vpack.c.bf16 %v2890, %v2889
      %v3021 = vpack.c.bf16 %v2892, %v2891
      %v3022 = vpack.c.bf16 %v2894, %v2893
      %vm3023 = vcmask 523264
      %3024 = vst.msk [vmem:[#allocation2] sm:$0xff] %vm3023, 0
      %3025 = vst.msk [vmem:[#allocation2 + $0x48] sm:$0xff] %vm3023, 0
      %3026 = vst.msk [vmem:[#allocation2 + $0x90] sm:$0xff] %vm3023, 0
      %3027 = vst.msk [vmem:[#allocation2 + $0xd8] sm:$0xff] %vm3023, 0
      %3028 = vst.msk [vmem:[#allocation2 + $0x120] sm:$0xff] %vm3023, 0
      %3029 = vst.msk [vmem:[#allocation2 + $0x168] sm:$0xff] %vm3023, 0
      %3030 = vst.msk [vmem:[#allocation2 + $0x1b0] sm:$0xff] %vm3023, 0
      %3031 = vst.msk [vmem:[#allocation2 + $0x1f8] sm:$0xff] %vm3023, 0
      %3032 = vst.msk [vmem:[#allocation2 + $0x240] sm:$0xff] %vm3023, 0
      %3033 = vst.msk [vmem:[#allocation2 + $0x288] sm:$0xff] %vm3023, 0
      %3034 = vst.msk [vmem:[#allocation2 + $0x2d0] sm:$0xff] %vm3023, 0
      %3035 = vst.msk [vmem:[#allocation2 + $0x318] sm:$0xff] %vm3023, 0
      %3036 = vst.msk [vmem:[#allocation2 + $0x360] sm:$0xff] %vm3023, 0
      %3037 = vst.msk [vmem:[#allocation2 + $0x3a8] sm:$0xff] %vm3023, 0
      %3038 = vst.msk [vmem:[#allocation2 + $0x3f0] sm:$0xff] %vm3023, 0
      %3039 = vst.msk [vmem:[#allocation2 + $0x438] sm:$0xff] %vm3023, 0
      %s3040 = scalar_lea.vmem [#allocation2], 8
      %3041 = vst.msk [vmem:[%s3040] sm:$0xff] %vm3023, %v2895
      %3042 = vst.msk [vmem:[%s3040 + $0x8] sm:$0xff] %vm3023, %v2896
      %3043 = vst.msk [vmem:[%s3040 + $0x10] sm:$0xff] %vm3023, %v2897
      %3044 = vst.msk [vmem:[%s3040 + $0x18] sm:$0xff] %vm3023, %v2898
      %3045 = vst.msk [vmem:[%s3040 + $0x20] sm:$0xff] %vm3023, %v2899
      %3046 = vst.msk [vmem:[%s3040 + $0x28] sm:$0xff] %vm3023, %v2900
      %3047 = vst.msk [vmem:[%s3040 + $0x30] sm:$0xff] %vm3023, %v2901
      %3048 = vst.msk [vmem:[%s3040 + $0x38] sm:$0xff] %vm3023, %v2902
      %3049 = vst.msk [vmem:[%s3040 + $0x120] sm:$0xff] %vm3023, %v2927
      %3050 = vst.msk [vmem:[%s3040 + $0x128] sm:$0xff] %vm3023, %v2928
      %3051 = vst.msk [vmem:[%s3040 + $0x130] sm:$0xff] %vm3023, %v2929
      %3052 = vst.msk [vmem:[%s3040 + $0x138] sm:$0xff] %vm3023, %v2930
      %3053 = vst.msk [vmem:[%s3040 + $0x140] sm:$0xff] %vm3023, %v2931
      %3054 = vst.msk [vmem:[%s3040 + $0x148] sm:$0xff] %vm3023, %v2932
      %3055 = vst.msk [vmem:[%s3040 + $0x150] sm:$0xff] %vm3023, %v2933
      %3056 = vst.msk [vmem:[%s3040 + $0x158] sm:$0xff] %vm3023, %v2934
      %3057 = vst.msk [vmem:[%s3040 + $0x240] sm:$0xff] %vm3023, %v2959
      %3058 = vst.msk [vmem:[%s3040 + $0x248] sm:$0xff] %vm3023, %v2960
      %3059 = vst.msk [vmem:[%s3040 + $0x250] sm:$0xff] %vm3023, %v2961
      %3060 = vst.msk [vmem:[%s3040 + $0x258] sm:$0xff] %vm3023, %v2962
      %3061 = vst.msk [vmem:[%s3040 + $0x260] sm:$0xff] %vm3023, %v2963
      %3062 = vst.msk [vmem:[%s3040 + $0x268] sm:$0xff] %vm3023, %v2964
      %3063 = vst.msk [vmem:[%s3040 + $0x270] sm:$0xff] %vm3023, %v2965
      %3064 = vst.msk [vmem:[%s3040 + $0x278] sm:$0xff] %vm3023, %v2966
      %3065 = vst.msk [vmem:[%s3040 + $0x360] sm:$0xff] %vm3023, %v2991
      %3066 = vst.msk [vmem:[%s3040 + $0x368] sm:$0xff] %vm3023, %v2992
      %3067 = vst.msk [vmem:[%s3040 + $0x370] sm:$0xff] %vm3023, %v2993
      %3068 = vst.msk [vmem:[%s3040 + $0x378] sm:$0xff] %vm3023, %v2994
      %3069 = vst.msk [vmem:[%s3040 + $0x380] sm:$0xff] %vm3023, %v2995
      %3070 = vst.msk [vmem:[%s3040 + $0x388] sm:$0xff] %vm3023, %v2996
      %3071 = vst.msk [vmem:[%s3040 + $0x390] sm:$0xff] %vm3023, %v2997
      %3072 = vst.msk [vmem:[%s3040 + $0x398] sm:$0xff] %vm3023, %v2998
      %s3073 = scalar_lea.vmem [#allocation2], 80
      %3074 = vst.msk [vmem:[%s3073] sm:$0xff] %vm3023, %v2903
      %3075 = vst.msk [vmem:[%s3073 + $0x8] sm:$0xff] %vm3023, %v2904
      %3076 = vst.msk [vmem:[%s3073 + $0x10] sm:$0xff] %vm3023, %v2905
      %3077 = vst.msk [vmem:[%s3073 + $0x18] sm:$0xff] %vm3023, %v2906
      %3078 = vst.msk [vmem:[%s3073 + $0x20] sm:$0xff] %vm3023, %v2907
      %3079 = vst.msk [vmem:[%s3073 + $0x28] sm:$0xff] %vm3023, %v2908
      %3080 = vst.msk [vmem:[%s3073 + $0x30] sm:$0xff] %vm3023, %v2909
      %3081 = vst.msk [vmem:[%s3073 + $0x38] sm:$0xff] %vm3023, %v2910
      %3082 = vst.msk [vmem:[%s3073 + $0x120] sm:$0xff] %vm3023, %v2935
      %3083 = vst.msk [vmem:[%s3073 + $0x128] sm:$0xff] %vm3023, %v2936
      %3084 = vst.msk [vmem:[%s3073 + $0x130] sm:$0xff] %vm3023, %v2937
      %3085 = vst.msk [vmem:[%s3073 + $0x138] sm:$0xff] %vm3023, %v2938
      %3086 = vst.msk [vmem:[%s3073 + $0x140] sm:$0xff] %vm3023, %v2939
      %3087 = vst.msk [vmem:[%s3073 + $0x148] sm:$0xff] %vm3023, %v2940
      %3088 = vst.msk [vmem:[%s3073 + $0x150] sm:$0xff] %vm3023, %v2941
      %3089 = vst.msk [vmem:[%s3073 + $0x158] sm:$0xff] %vm3023, %v2942
      %3090 = vst.msk [vmem:[%s3073 + $0x240] sm:$0xff] %vm3023, %v2967
      %3091 = vst.msk [vmem:[%s3073 + $0x248] sm:$0xff] %vm3023, %v2968
      %3092 = vst.msk [vmem:[%s3073 + $0x250] sm:$0xff] %vm3023, %v2969
      %3093 = vst.msk [vmem:[%s3073 + $0x258] sm:$0xff] %vm3023, %v2970
      %3094 = vst.msk [vmem:[%s3073 + $0x260] sm:$0xff] %vm3023, %v2971
      %3095 = vst.msk [vmem:[%s3073 + $0x268] sm:$0xff] %vm3023, %v2972
      %3096 = vst.msk [vmem:[%s3073 + $0x270] sm:$0xff] %vm3023, %v2973
      %3097 = vst.msk [vmem:[%s3073 + $0x278] sm:$0xff] %vm3023, %v2974
      %3098 = vst.msk [vmem:[%s3073 + $0x360] sm:$0xff] %vm3023, %v2999
      %3099 = vst.msk [vmem:[%s3073 + $0x368] sm:$0xff] %vm3023, %v3000
      %3100 = vst.msk [vmem:[%s3073 + $0x370] sm:$0xff] %vm3023, %v3001
      %3101 = vst.msk [vmem:[%s3073 + $0x378] sm:$0xff] %vm3023, %v3002
      %3102 = vst.msk [vmem:[%s3073 + $0x380] sm:$0xff] %vm3023, %v3003
      %3103 = vst.msk [vmem:[%s3073 + $0x388] sm:$0xff] %vm3023, %v3004
      %3104 = vst.msk [vmem:[%s3073 + $0x390] sm:$0xff] %vm3023, %v3005
      %3105 = vst.msk [vmem:[%s3073 + $0x398] sm:$0xff] %vm3023, %v3006
      %s3106 = scalar_lea.vmem [#allocation2], 152
      %3107 = vst.msk [vmem:[%s3106] sm:$0xff] %vm3023, %v2911
      %3108 = vst.msk [vmem:[%s3106 + $0x8] sm:$0xff] %vm3023, %v2912
      %3109 = vst.msk [vmem:[%s3106 + $0x10] sm:$0xff] %vm3023, %v2913
      %3110 = vst.msk [vmem:[%s3106 + $0x18] sm:$0xff] %vm3023, %v2914
      %3111 = vst.msk [vmem:[%s3106 + $0x20] sm:$0xff] %vm3023, %v2915
      %3112 = vst.msk [vmem:[%s3106 + $0x28] sm:$0xff] %vm3023, %v2916
      %3113 = vst.msk [vmem:[%s3106 + $0x30] sm:$0xff] %vm3023, %v2917
      %3114 = vst.msk [vmem:[%s3106 + $0x38] sm:$0xff] %vm3023, %v2918
      %3115 = vst.msk [vmem:[%s3106 + $0x120] sm:$0xff] %vm3023, %v2943
      %3116 = vst.msk [vmem:[%s3106 + $0x128] sm:$0xff] %vm3023, %v2944
      %3117 = vst.msk [vmem:[%s3106 + $0x130] sm:$0xff] %vm3023, %v2945
      %3118 = vst.msk [vmem:[%s3106 + $0x138] sm:$0xff] %vm3023, %v2946
      %3119 = vst.msk [vmem:[%s3106 + $0x140] sm:$0xff] %vm3023, %v2947
      %3120 = vst.msk [vmem:[%s3106 + $0x148] sm:$0xff] %vm3023, %v2948
      %3121 = vst.msk [vmem:[%s3106 + $0x150] sm:$0xff] %vm3023, %v2949
      %3122 = vst.msk [vmem:[%s3106 + $0x158] sm:$0xff] %vm3023, %v2950
      %3123 = vst.msk [vmem:[%s3106 + $0x240] sm:$0xff] %vm3023, %v2975
      %3124 = vst.msk [vmem:[%s3106 + $0x248] sm:$0xff] %vm3023, %v2976
      %3125 = vst.msk [vmem:[%s3106 + $0x250] sm:$0xff] %vm3023, %v2977
      %3126 = vst.msk [vmem:[%s3106 + $0x258] sm:$0xff] %vm3023, %v2978
      %3127 = vst.msk [vmem:[%s3106 + $0x260] sm:$0xff] %vm3023, %v2979
      %3128 = vst.msk [vmem:[%s3106 + $0x268] sm:$0xff] %vm3023, %v2980
      %3129 = vst.msk [vmem:[%s3106 + $0x270] sm:$0xff] %vm3023, %v2981
      %3130 = vst.msk [vmem:[%s3106 + $0x278] sm:$0xff] %vm3023, %v2982
      %3131 = vst.msk [vmem:[%s3106 + $0x360] sm:$0xff] %vm3023, %v3007
      %3132 = vst.msk [vmem:[%s3106 + $0x368] sm:$0xff] %vm3023, %v3008
      %3133 = vst.msk [vmem:[%s3106 + $0x370] sm:$0xff] %vm3023, %v3009
      %3134 = vst.msk [vmem:[%s3106 + $0x378] sm:$0xff] %vm3023, %v3010
      %3135 = vst.msk [vmem:[%s3106 + $0x380] sm:$0xff] %vm3023, %v3011
      %3136 = vst.msk [vmem:[%s3106 + $0x388] sm:$0xff] %vm3023, %v3012
      %3137 = vst.msk [vmem:[%s3106 + $0x390] sm:$0xff] %vm3023, %v3013
      %3138 = vst.msk [vmem:[%s3106 + $0x398] sm:$0xff] %vm3023, %v3014
      %s3139 = scalar_lea.vmem [#allocation2], 224
      %3140 = vst.msk [vmem:[%s3139] sm:$0xff] %vm3023, %v2919
      %3141 = vst.msk [vmem:[%s3139 + $0x8] sm:$0xff] %vm3023, %v2920
      %3142 = vst.msk [vmem:[%s3139 + $0x10] sm:$0xff] %vm3023, %v2921
      %3143 = vst.msk [vmem:[%s3139 + $0x18] sm:$0xff] %vm3023, %v2922
      %3144 = vst.msk [vmem:[%s3139 + $0x20] sm:$0xff] %vm3023, %v2923
      %3145 = vst.msk [vmem:[%s3139 + $0x28] sm:$0xff] %vm3023, %v2924
      %3146 = vst.msk [vmem:[%s3139 + $0x30] sm:$0xff] %vm3023, %v2925
      %3147 = vst.msk [vmem:[%s3139 + $0x38] sm:$0xff] %vm3023, %v2926
      %3148 = vst.msk [vmem:[%s3139 + $0x120] sm:$0xff] %vm3023, %v2951
      %3149 = vst.msk [vmem:[%s3139 + $0x128] sm:$0xff] %vm3023, %v2952
      %3150 = vst.msk [vmem:[%s3139 + $0x130] sm:$0xff] %vm3023, %v2953
      %3151 = vst.msk [vmem:[%s3139 + $0x138] sm:$0xff] %vm3023, %v2954
      %3152 = vst.msk [vmem:[%s3139 + $0x140] sm:$0xff] %vm3023, %v2955
      %3153 = vst.msk [vmem:[%s3139 + $0x148] sm:$0xff] %vm3023, %v2956
      %3154 = vst.msk [vmem:[%s3139 + $0x150] sm:$0xff] %vm3023, %v2957
      %3155 = vst.msk [vmem:[%s3139 + $0x158] sm:$0xff] %vm3023, %v2958
      %3156 = vst.msk [vmem:[%s3139 + $0x240] sm:$0xff] %vm3023, %v2983
      %3157 = vst.msk [vmem:[%s3139 + $0x248] sm:$0xff] %vm3023, %v2984
      %3158 = vst.msk [vmem:[%s3139 + $0x250] sm:$0xff] %vm3023, %v2985
      %3159 = vst.msk [vmem:[%s3139 + $0x258] sm:$0xff] %vm3023, %v2986
      %3160 = vst.msk [vmem:[%s3139 + $0x260] sm:$0xff] %vm3023, %v2987
      %3161 = vst.msk [vmem:[%s3139 + $0x268] sm:$0xff] %vm3023, %v2988
      %3162 = vst.msk [vmem:[%s3139 + $0x270] sm:$0xff] %vm3023, %v2989
      %3163 = vst.msk [vmem:[%s3139 + $0x278] sm:$0xff] %vm3023, %v2990
      %3164 = vst.msk [vmem:[%s3139 + $0x360] sm:$0xff] %vm3023, %v3015
      %3165 = vst.msk [vmem:[%s3139 + $0x368] sm:$0xff] %vm3023, %v3016
      %3166 = vst.msk [vmem:[%s3139 + $0x370] sm:$0xff] %vm3023, %v3017
      %3167 = vst.msk [vmem:[%s3139 + $0x378] sm:$0xff] %vm3023, %v3018
      %3168 = vst.msk [vmem:[%s3139 + $0x380] sm:$0xff] %vm3023, %v3019
      %3169 = vst.msk [vmem:[%s3139 + $0x388] sm:$0xff] %vm3023, %v3020
      %3170 = vst.msk [vmem:[%s3139 + $0x390] sm:$0xff] %vm3023, %v3021
      %3171 = vst.msk [vmem:[%s3139 + $0x398] sm:$0xff] %vm3023, %v3022
      %v3172 = vld [vmem:[#allocation2] sm:$0xf]
      %v3173 = vld [vmem:[#allocation2 + $0x8] sm:$0xf]
      %v3174 = vld [vmem:[#allocation2 + $0x10] sm:$0xf]
      %v3175 = vld [vmem:[#allocation2 + $0x18] sm:$0xf]
      %v3176 = vld [vmem:[#allocation2 + $0x20] sm:$0xf]
      %v3177 = vld [vmem:[#allocation2 + $0x28] sm:$0xf]
      %v3178 = vld [vmem:[#allocation2 + $0x30] sm:$0xf]
      %v3179 = vld [vmem:[#allocation2 + $0x38] sm:$0xf]
      %v3180 = vld [vmem:[#allocation2 + $0x120] sm:$0xf]
      %v3181 = vld [vmem:[#allocation2 + $0x128] sm:$0xf]
      %v3182 = vld [vmem:[#allocation2 + $0x130] sm:$0xf]
      %v3183 = vld [vmem:[#allocation2 + $0x138] sm:$0xf]
      %v3184 = vld [vmem:[#allocation2 + $0x140] sm:$0xf]
      %v3185 = vld [vmem:[#allocation2 + $0x148] sm:$0xf]
      %v3186 = vld [vmem:[#allocation2 + $0x150] sm:$0xf]
      %v3187 = vld [vmem:[#allocation2 + $0x158] sm:$0xf]
      %v3188 = vld [vmem:[#allocation2 + $0x240] sm:$0xf]
      %v3189 = vld [vmem:[#allocation2 + $0x248] sm:$0xf]
      %v3190 = vld [vmem:[#allocation2 + $0x250] sm:$0xf]
      %v3191 = vld [vmem:[#allocation2 + $0x258] sm:$0xf]
      %v3192 = vld [vmem:[#allocation2 + $0x260] sm:$0xf]
      %v3193 = vld [vmem:[#allocation2 + $0x268] sm:$0xf]
      %v3194 = vld [vmem:[#allocation2 + $0x270] sm:$0xf]
      %v3195 = vld [vmem:[#allocation2 + $0x278] sm:$0xf]
      %v3196 = vld [vmem:[#allocation2 + $0x360] sm:$0xf]
      %v3197 = vld [vmem:[#allocation2 + $0x368] sm:$0xf]
      %v3198 = vld [vmem:[#allocation2 + $0x370] sm:$0xf]
      %v3199 = vld [vmem:[#allocation2 + $0x378] sm:$0xf]
      %v3200 = vld [vmem:[#allocation2 + $0x380] sm:$0xf]
      %v3201 = vld [vmem:[#allocation2 + $0x388] sm:$0xf]
      %v3202 = vld [vmem:[#allocation2 + $0x390] sm:$0xf]
      %v3203 = vld [vmem:[#allocation2 + $0x398] sm:$0xf]
      %v3236 = vunpack.c.l.b16 %v3172
      %v3237 = vunpack.c.l.b16 %v3173
      %v3238 = vunpack.c.l.b16 %v3174
      %v3239 = vunpack.c.l.b16 %v3175
      %v3240 = vunpack.c.l.b16 %v3176
      %v3241 = vunpack.c.l.b16 %v3177
      %v3242 = vunpack.c.l.b16 %v3178
      %v3243 = vunpack.c.l.b16 %v3179
      %v3244 = vunpack.c.l.b16 %v3180
      %v3245 = vunpack.c.l.b16 %v3181
      %v3246 = vunpack.c.l.b16 %v3182
      %v3247 = vunpack.c.l.b16 %v3183
      %v3248 = vunpack.c.l.b16 %v3184
      %v3249 = vunpack.c.l.b16 %v3185
      %v3250 = vunpack.c.l.b16 %v3186
      %v3251 = vunpack.c.l.b16 %v3187
      %v3252 = vunpack.c.l.b16 %v3188
      %v3253 = vunpack.c.l.b16 %v3189
      %v3254 = vunpack.c.l.b16 %v3190
      %v3255 = vunpack.c.l.b16 %v3191
      %v3256 = vunpack.c.l.b16 %v3192
      %v3257 = vunpack.c.l.b16 %v3193
      %v3258 = vunpack.c.l.b16 %v3194
      %v3259 = vunpack.c.l.b16 %v3195
      %v3260 = vunpack.c.l.b16 %v3196
      %v3261 = vunpack.c.l.b16 %v3197
      %v3262 = vunpack.c.l.b16 %v3198
      %v3263 = vunpack.c.l.b16 %v3199
      %v3264 = vunpack.c.l.b16 %v3200
      %v3265 = vunpack.c.l.b16 %v3201
      %v3266 = vunpack.c.l.b16 %v3202
      %v3267 = vunpack.c.l.b16 %v3203
      %v3268 = vpack.c.b16 %v3237, %v3236
      %v3269 = vpack.c.b16 %v3239, %v3238
      %v3270 = vpack.c.b16 %v3241, %v3240
      %v3271 = vpack.c.b16 %v3243, %v3242
      %v3272 = vpack.c.b16 %v3245, %v3244
      %v3273 = vpack.c.b16 %v3247, %v3246
      %v3274 = vpack.c.b16 %v3249, %v3248
      %v3275 = vpack.c.b16 %v3251, %v3250
      %v3276 = vpack.c.b16 %v3253, %v3252
      %v3277 = vpack.c.b16 %v3255, %v3254
      %v3278 = vpack.c.b16 %v3257, %v3256
      %v3279 = vpack.c.b16 %v3259, %v3258
      %v3280 = vpack.c.b16 %v3261, %v3260
      %v3281 = vpack.c.b16 %v3263, %v3262
      %v3282 = vpack.c.b16 %v3265, %v3264
      %v3283 = vpack.c.b16 %v3267, %v3266
      %3300 = vst.msk [vmem:[#allocation3] sm:$0xff] %vm3023, %v3268
      %3301 = vst.msk [vmem:[#allocation3 + $0x28] sm:$0xff] %vm3023, %v3269
      %3302 = vst.msk [vmem:[#allocation3 + $0x50] sm:$0xff] %vm3023, %v3270
      %3303 = vst.msk [vmem:[#allocation3 + $0x78] sm:$0xff] %vm3023, %v3271
      %3304 = vst.msk [vmem:[#allocation3 + $0xa0] sm:$0xff] %vm3023, %v3272
      %3305 = vst.msk [vmem:[#allocation3 + $0xc8] sm:$0xff] %vm3023, %v3273
      %3306 = vst.msk [vmem:[#allocation3 + $0xf0] sm:$0xff] %vm3023, %v3274
      %3307 = vst.msk [vmem:[#allocation3 + $0x118] sm:$0xff] %vm3023, %v3275
      %3308 = vst.msk [vmem:[#allocation3 + $0x140] sm:$0xff] %vm3023, %v3276
      %3309 = vst.msk [vmem:[#allocation3 + $0x168] sm:$0xff] %vm3023, %v3277
      %3310 = vst.msk [vmem:[#allocation3 + $0x190] sm:$0xff] %vm3023, %v3278
      %3311 = vst.msk [vmem:[#allocation3 + $0x1b8] sm:$0xff] %vm3023, %v3279
      %3312 = vst.msk [vmem:[#allocation3 + $0x1e0] sm:$0xff] %vm3023, %v3280
      %3313 = vst.msk [vmem:[#allocation3 + $0x208] sm:$0xff] %vm3023, %v3281
      %3314 = vst.msk [vmem:[#allocation3 + $0x230] sm:$0xff] %vm3023, %v3282
      %3315 = vst.msk [vmem:[#allocation3 + $0x258] sm:$0xff] %vm3023, %v3283
      %s3316 = scalar_lea.vmem [#allocation2], 72
      %v3317 = vld [vmem:[%s3316] sm:$0x1f]
      %v3318 = vld [vmem:[%s3316 + $0x8] sm:$0x1f]
      %v3319 = vld [vmem:[%s3316 + $0x10] sm:$0x1f]
      %v3320 = vld [vmem:[%s3316 + $0x18] sm:$0x1f]
      %v3321 = vld [vmem:[%s3316 + $0x20] sm:$0x1f]
      %v3322 = vld [vmem:[%s3316 + $0x28] sm:$0x1f]
      %v3323 = vld [vmem:[%s3316 + $0x30] sm:$0x1f]
      %v3324 = vld [vmem:[%s3316 + $0x38] sm:$0x1f]
      %v3325 = vld [vmem:[%s3316 + $0x120] sm:$0x1f]
      %v3326 = vld [vmem:[%s3316 + $0x128] sm:$0x1f]
      %v3327 = vld [vmem:[%s3316 + $0x130] sm:$0x1f]
      %v3328 = vld [vmem:[%s3316 + $0x138] sm:$0x1f]
      %v3329 = vld [vmem:[%s3316 + $0x140] sm:$0x1f]
      %v3330 = vld [vmem:[%s3316 + $0x148] sm:$0x1f]
      %v3331 = vld [vmem:[%s3316 + $0x150] sm:$0x1f]
      %v3332 = vld [vmem:[%s3316 + $0x158] sm:$0x1f]
      %v3333 = vld [vmem:[%s3316 + $0x240] sm:$0x1f]
      %v3334 = vld [vmem:[%s3316 + $0x248] sm:$0x1f]
      %v3335 = vld [vmem:[%s3316 + $0x250] sm:$0x1f]
      %v3336 = vld [vmem:[%s3316 + $0x258] sm:$0x1f]
      %v3337 = vld [vmem:[%s3316 + $0x260] sm:$0x1f]
      %v3338 = vld [vmem:[%s3316 + $0x268] sm:$0x1f]
      %v3339 = vld [vmem:[%s3316 + $0x270] sm:$0x1f]
      %v3340 = vld [vmem:[%s3316 + $0x278] sm:$0x1f]
      %v3341 = vld [vmem:[%s3316 + $0x360] sm:$0x1f]
      %v3342 = vld [vmem:[%s3316 + $0x368] sm:$0x1f]
      %v3343 = vld [vmem:[%s3316 + $0x370] sm:$0x1f]
      %v3344 = vld [vmem:[%s3316 + $0x378] sm:$0x1f]
      %v3345 = vld [vmem:[%s3316 + $0x380] sm:$0x1f]
      %v3346 = vld [vmem:[%s3316 + $0x388] sm:$0x1f]
      %v3347 = vld [vmem:[%s3316 + $0x390] sm:$0x1f]
      %v3348 = vld [vmem:[%s3316 + $0x398] sm:$0x1f]
      %v3381 = vunpack.c.l.b16 %v3317
      %v3382 = vunpack.c.h.b16 %v3317
      %v3383 = vunpack.c.l.b16 %v3318
      %v3384 = vunpack.c.h.b16 %v3318
      %v3385 = vunpack.c.l.b16 %v3319
      %v3386 = vunpack.c.h.b16 %v3319
      %v3387 = vunpack.c.l.b16 %v3320
      %v3388 = vunpack.c.h.b16 %v3320
      %v3389 = vunpack.c.l.b16 %v3321
      %v3390 = vunpack.c.h.b16 %v3321
      %v3391 = vunpack.c.l.b16 %v3322
      %v3392 = vunpack.c.h.b16 %v3322
      %v3393 = vunpack.c.l.b16 %v3323
      %v3394 = vunpack.c.h.b16 %v3323
      %v3395 = vunpack.c.l.b16 %v3324
      %v3396 = vunpack.c.h.b16 %v3324
      %v3397 = vunpack.c.l.b16 %v3325
      %v3398 = vunpack.c.h.b16 %v3325
      %v3399 = vunpack.c.l.b16 %v3326
      %v3400 = vunpack.c.h.b16 %v3326
      %v3401 = vunpack.c.l.b16 %v3327
      %v3402 = vunpack.c.h.b16 %v3327
      %v3403 = vunpack.c.l.b16 %v3328
      %v3404 = vunpack.c.h.b16 %v3328
      %v3405 = vunpack.c.l.b16 %v3329
      %v3406 = vunpack.c.h.b16 %v3329
      %v3407 = vunpack.c.l.b16 %v3330
      %v3408 = vunpack.c.h.b16 %v3330
      %v3409 = vunpack.c.l.b16 %v3331
      %v3410 = vunpack.c.h.b16 %v3331
      %v3411 = vunpack.c.l.b16 %v3332
      %v3412 = vunpack.c.h.b16 %v3332
      %v3413 = vunpack.c.l.b16 %v3333
      %v3414 = vunpack.c.h.b16 %v3333
      %v3415 = vunpack.c.l.b16 %v3334
      %v3416 = vunpack.c.h.b16 %v3334
      %v3417 = vunpack.c.l.b16 %v3335
      %v3418 = vunpack.c.h.b16 %v3335
      %v3419 = vunpack.c.l.b16 %v3336
      %v3420 = vunpack.c.h.b16 %v3336
      %v3421 = vunpack.c.l.b16 %v3337
      %v3422 = vunpack.c.h.b16 %v3337
      %v3423 = vunpack.c.l.b16 %v3338
      %v3424 = vunpack.c.h.b16 %v3338
      %v3425 = vunpack.c.l.b16 %v3339
      %v3426 = vunpack.c.h.b16 %v3339
      %v3427 = vunpack.c.l.b16 %v3340
      %v3428 = vunpack.c.h.b16 %v3340
      %v3429 = vunpack.c.l.b16 %v3341
      %v3430 = vunpack.c.h.b16 %v3341
      %v3431 = vunpack.c.l.b16 %v3342
      %v3432 = vunpack.c.h.b16 %v3342
      %v3433 = vunpack.c.l.b16 %v3343
      %v3434 = vunpack.c.h.b16 %v3343
      %v3435 = vunpack.c.l.b16 %v3344
      %v3436 = vunpack.c.h.b16 %v3344
      %v3437 = vunpack.c.l.b16 %v3345
      %v3438 = vunpack.c.h.b16 %v3345
      %v3439 = vunpack.c.l.b16 %v3346
      %v3440 = vunpack.c.h.b16 %v3346
      %v3441 = vunpack.c.l.b16 %v3347
      %v3442 = vunpack.c.h.b16 %v3347
      %v3443 = vunpack.c.l.b16 %v3348
      %v3444 = vunpack.c.h.b16 %v3348
      %v3445 = vpack.c.b16 %v3381, %v3381
      %v3446 = vpack.c.b16 %v3382, %v3382
      %v3447 = vpack.c.b16 %v3383, %v3383
      %v3448 = vpack.c.b16 %v3384, %v3384
      %v3449 = vpack.c.b16 %v3385, %v3385
      %v3450 = vpack.c.b16 %v3386, %v3386
      %v3451 = vpack.c.b16 %v3387, %v3387
      %v3452 = vpack.c.b16 %v3388, %v3388
      %v3453 = vpack.c.b16 %v3389, %v3389
      %v3454 = vpack.c.b16 %v3390, %v3390
      %v3455 = vpack.c.b16 %v3391, %v3391
      %v3456 = vpack.c.b16 %v3392, %v3392
      %v3457 = vpack.c.b16 %v3393, %v3393
      %v3458 = vpack.c.b16 %v3394, %v3394
      %v3459 = vpack.c.b16 %v3395, %v3395
      %v3460 = vpack.c.b16 %v3396, %v3396
      %v3461 = vpack.c.b16 %v3397, %v3397
      %v3462 = vpack.c.b16 %v3398, %v3398
      %v3463 = vpack.c.b16 %v3399, %v3399
      %v3464 = vpack.c.b16 %v3400, %v3400
      %v3465 = vpack.c.b16 %v3401, %v3401
      %v3466 = vpack.c.b16 %v3402, %v3402
      %v3467 = vpack.c.b16 %v3403, %v3403
      %v3468 = vpack.c.b16 %v3404, %v3404
      %v3469 = vpack.c.b16 %v3405, %v3405
      %v3470 = vpack.c.b16 %v3406, %v3406
      %v3471 = vpack.c.b16 %v3407, %v3407
      %v3472 = vpack.c.b16 %v3408, %v3408
      %v3473 = vpack.c.b16 %v3409, %v3409
      %v3474 = vpack.c.b16 %v3410, %v3410
      %v3475 = vpack.c.b16 %v3411, %v3411
      %v3476 = vpack.c.b16 %v3412, %v3412
      %v3477 = vpack.c.b16 %v3413, %v3413
      %v3478 = vpack.c.b16 %v3414, %v3414
      %v3479 = vpack.c.b16 %v3415, %v3415
      %v3480 = vpack.c.b16 %v3416, %v3416
      %v3481 = vpack.c.b16 %v3417, %v3417
      %v3482 = vpack.c.b16 %v3418, %v3418
      %v3483 = vpack.c.b16 %v3419, %v3419
      %v3484 = vpack.c.b16 %v3420, %v3420
      %v3485 = vpack.c.b16 %v3421, %v3421
      %v3486 = vpack.c.b16 %v3422, %v3422
      %v3487 = vpack.c.b16 %v3423, %v3423
      %v3488 = vpack.c.b16 %v3424, %v3424
      %v3489 = vpack.c.b16 %v3425, %v3425
      %v3490 = vpack.c.b16 %v3426, %v3426
      %v3491 = vpack.c.b16 %v3427, %v3427
      %v3492 = vpack.c.b16 %v3428, %v3428
      %v3493 = vpack.c.b16 %v3429, %v3429
      %v3494 = vpack.c.b16 %v3430, %v3430
      %v3495 = vpack.c.b16 %v3431, %v3431
      %v3496 = vpack.c.b16 %v3432, %v3432
      %v3497 = vpack.c.b16 %v3433, %v3433
      %v3498 = vpack.c.b16 %v3434, %v3434
      %v3499 = vpack.c.b16 %v3435, %v3435
      %v3500 = vpack.c.b16 %v3436, %v3436
      %v3501 = vpack.c.b16 %v3437, %v3437
      %v3502 = vpack.c.b16 %v3438, %v3438
      %v3503 = vpack.c.b16 %v3439, %v3439
      %v3504 = vpack.c.b16 %v3440, %v3440
      %v3505 = vpack.c.b16 %v3441, %v3441
      %v3506 = vpack.c.b16 %v3442, %v3442
      %v3507 = vpack.c.b16 %v3443, %v3443
      %v3508 = vpack.c.b16 %v3444, %v3444
      %vm3509 = vsmask.f32 3328
      %vm3510 = vsmask.f32 7440
      %vm3511 = vmor %vm3509, %vm3510
      %v3513 = vshrl.u32 %v3445, 16
      %v3515 = vrot.slane %v3513, 4
      %v3516 = vshll.u32 %v3445, 16
      %v3518 = vrot.slane %v3516, 5
      %v3519 = vor.u32 %v3515, %v3518
      %v3520 = vrot.slane %v3519, 4
      %v3522 = vshll.u32 %v3446, 16
      %v3524 = vrot.slane %v3522, 5
      %v3525 = vsel %vm3511, %v3520, %v3524
      %v3527 = vshrl.u32 %v3447, 16
      %v3529 = vrot.slane %v3527, 4
      %v3530 = vshll.u32 %v3447, 16
      %v3532 = vrot.slane %v3530, 5
      %v3533 = vor.u32 %v3529, %v3532
      %v3534 = vrot.slane %v3533, 4
      %v3536 = vshll.u32 %v3448, 16
      %v3538 = vrot.slane %v3536, 5
      %v3539 = vsel %vm3511, %v3534, %v3538
      %v3541 = vshrl.u32 %v3449, 16
      %v3543 = vrot.slane %v3541, 4
      %v3544 = vshll.u32 %v3449, 16
      %v3546 = vrot.slane %v3544, 5
      %v3547 = vor.u32 %v3543, %v3546
      %v3548 = vrot.slane %v3547, 4
      %v3550 = vshll.u32 %v3450, 16
      %v3552 = vrot.slane %v3550, 5
      %v3553 = vsel %vm3511, %v3548, %v3552
      %v3555 = vshrl.u32 %v3451, 16
      %v3557 = vrot.slane %v3555, 4
      %v3558 = vshll.u32 %v3451, 16
      %v3560 = vrot.slane %v3558, 5
      %v3561 = vor.u32 %v3557, %v3560
      %v3562 = vrot.slane %v3561, 4
      %v3564 = vshll.u32 %v3452, 16
      %v3566 = vrot.slane %v3564, 5
      %v3567 = vsel %vm3511, %v3562, %v3566
      %v3569 = vshrl.u32 %v3453, 16
      %v3571 = vrot.slane %v3569, 4
      %v3572 = vshll.u32 %v3453, 16
      %v3574 = vrot.slane %v3572, 5
      %v3575 = vor.u32 %v3571, %v3574
      %v3576 = vrot.slane %v3575, 4
      %v3578 = vshll.u32 %v3454, 16
      %v3580 = vrot.slane %v3578, 5
      %v3581 = vsel %vm3511, %v3576, %v3580
      %v3583 = vshrl.u32 %v3455, 16
      %v3585 = vrot.slane %v3583, 4
      %v3586 = vshll.u32 %v3455, 16
      %v3588 = vrot.slane %v3586, 5
      %v3589 = vor.u32 %v3585, %v3588
      %v3590 = vrot.slane %v3589, 4
      %v3592 = vshll.u32 %v3456, 16
      %v3594 = vrot.slane %v3592, 5
      %v3595 = vsel %vm3511, %v3590, %v3594
      %v3597 = vshrl.u32 %v3457, 16
      %v3599 = vrot.slane %v3597, 4
      %v3600 = vshll.u32 %v3457, 16
      %v3602 = vrot.slane %v3600, 5
      %v3603 = vor.u32 %v3599, %v3602
      %v3604 = vrot.slane %v3603, 4
      %v3606 = vshll.u32 %v3458, 16
      %v3608 = vrot.slane %v3606, 5
      %v3609 = vsel %vm3511, %v3604, %v3608
      %v3611 = vshrl.u32 %v3459, 16
      %v3613 = vrot.slane %v3611, 4
      %v3614 = vshll.u32 %v3459, 16
      %v3616 = vrot.slane %v3614, 5
      %v3617 = vor.u32 %v3613, %v3616
      %v3618 = vrot.slane %v3617, 4
      %v3620 = vshll.u32 %v3460, 16
      %v3622 = vrot.slane %v3620, 5
      %v3623 = vsel %vm3511, %v3618, %v3622
      %v3625 = vshrl.u32 %v3461, 16
      %v3627 = vrot.slane %v3625, 4
      %v3628 = vshll.u32 %v3461, 16
      %v3630 = vrot.slane %v3628, 5
      %v3631 = vor.u32 %v3627, %v3630
      %v3632 = vrot.slane %v3631, 4
      %v3634 = vshll.u32 %v3462, 16
      %v3636 = vrot.slane %v3634, 5
      %v3637 = vsel %vm3511, %v3632, %v3636
      %v3639 = vshrl.u32 %v3463, 16
      %v3641 = vrot.slane %v3639, 4
      %v3642 = vshll.u32 %v3463, 16
      %v3644 = vrot.slane %v3642, 5
      %v3645 = vor.u32 %v3641, %v3644
      %v3646 = vrot.slane %v3645, 4
      %v3648 = vshll.u32 %v3464, 16
      %v3650 = vrot.slane %v3648, 5
      %v3651 = vsel %vm3511, %v3646, %v3650
      %v3653 = vshrl.u32 %v3465, 16
      %v3655 = vrot.slane %v3653, 4
      %v3656 = vshll.u32 %v3465, 16
      %v3658 = vrot.slane %v3656, 5
      %v3659 = vor.u32 %v3655, %v3658
      %v3660 = vrot.slane %v3659, 4
      %v3662 = vshll.u32 %v3466, 16
      %v3664 = vrot.slane %v3662, 5
      %v3665 = vsel %vm3511, %v3660, %v3664
      %v3667 = vshrl.u32 %v3467, 16
      %v3669 = vrot.slane %v3667, 4
      %v3670 = vshll.u32 %v3467, 16
      %v3672 = vrot.slane %v3670, 5
      %v3673 = vor.u32 %v3669, %v3672
      %v3674 = vrot.slane %v3673, 4
      %v3676 = vshll.u32 %v3468, 16
      %v3678 = vrot.slane %v3676, 5
      %v3679 = vsel %vm3511, %v3674, %v3678
      %v3681 = vshrl.u32 %v3469, 16
      %v3683 = vrot.slane %v3681, 4
      %v3684 = vshll.u32 %v3469, 16
      %v3686 = vrot.slane %v3684, 5
      %v3687 = vor.u32 %v3683, %v3686
      %v3688 = vrot.slane %v3687, 4
      %v3690 = vshll.u32 %v3470, 16
      %v3692 = vrot.slane %v3690, 5
      %v3693 = vsel %vm3511, %v3688, %v3692
      %v3695 = vshrl.u32 %v3471, 16
      %v3697 = vrot.slane %v3695, 4
      %v3698 = vshll.u32 %v3471, 16
      %v3700 = vrot.slane %v3698, 5
      %v3701 = vor.u32 %v3697, %v3700
      %v3702 = vrot.slane %v3701, 4
      %v3704 = vshll.u32 %v3472, 16
      %v3706 = vrot.slane %v3704, 5
      %v3707 = vsel %vm3511, %v3702, %v3706
      %v3709 = vshrl.u32 %v3473, 16
      %v3711 = vrot.slane %v3709, 4
      %v3712 = vshll.u32 %v3473, 16
      %v3714 = vrot.slane %v3712, 5
      %v3715 = vor.u32 %v3711, %v3714
      %v3716 = vrot.slane %v3715, 4
      %v3718 = vshll.u32 %v3474, 16
      %v3720 = vrot.slane %v3718, 5
      %v3721 = vsel %vm3511, %v3716, %v3720
      %v3723 = vshrl.u32 %v3475, 16
      %v3725 = vrot.slane %v3723, 4
      %v3726 = vshll.u32 %v3475, 16
      %v3728 = vrot.slane %v3726, 5
      %v3729 = vor.u32 %v3725, %v3728
      %v3730 = vrot.slane %v3729, 4
      %v3732 = vshll.u32 %v3476, 16
      %v3734 = vrot.slane %v3732, 5
      %v3735 = vsel %vm3511, %v3730, %v3734
      %v3737 = vshrl.u32 %v3477, 16
      %v3739 = vrot.slane %v3737, 4
      %v3740 = vshll.u32 %v3477, 16
      %v3742 = vrot.slane %v3740, 5
      %v3743 = vor.u32 %v3739, %v3742
      %v3744 = vrot.slane %v3743, 4
      %v3746 = vshll.u32 %v3478, 16
      %v3748 = vrot.slane %v3746, 5
      %v3749 = vsel %vm3511, %v3744, %v3748
      %v3751 = vshrl.u32 %v3479, 16
      %v3753 = vrot.slane %v3751, 4
      %v3754 = vshll.u32 %v3479, 16
      %v3756 = vrot.slane %v3754, 5
      %v3757 = vor.u32 %v3753, %v3756
      %v3758 = vrot.slane %v3757, 4
      %v3760 = vshll.u32 %v3480, 16
      %v3762 = vrot.slane %v3760, 5
      %v3763 = vsel %vm3511, %v3758, %v3762
      %v3765 = vshrl.u32 %v3481, 16
      %v3767 = vrot.slane %v3765, 4
      %v3768 = vshll.u32 %v3481, 16
      %v3770 = vrot.slane %v3768, 5
      %v3771 = vor.u32 %v3767, %v3770
      %v3772 = vrot.slane %v3771, 4
      %v3774 = vshll.u32 %v3482, 16
      %v3776 = vrot.slane %v3774, 5
      %v3777 = vsel %vm3511, %v3772, %v3776
      %v3779 = vshrl.u32 %v3483, 16
      %v3781 = vrot.slane %v3779, 4
      %v3782 = vshll.u32 %v3483, 16
      %v3784 = vrot.slane %v3782, 5
      %v3785 = vor.u32 %v3781, %v3784
      %v3786 = vrot.slane %v3785, 4
      %v3788 = vshll.u32 %v3484, 16
      %v3790 = vrot.slane %v3788, 5
      %v3791 = vsel %vm3511, %v3786, %v3790
      %v3793 = vshrl.u32 %v3485, 16
      %v3795 = vrot.slane %v3793, 4
      %v3796 = vshll.u32 %v3485, 16
      %v3798 = vrot.slane %v3796, 5
      %v3799 = vor.u32 %v3795, %v3798
      %v3800 = vrot.slane %v3799, 4
      %v3802 = vshll.u32 %v3486, 16
      %v3804 = vrot.slane %v3802, 5
      %v3805 = vsel %vm3511, %v3800, %v3804
      %v3807 = vshrl.u32 %v3487, 16
      %v3809 = vrot.slane %v3807, 4
      %v3810 = vshll.u32 %v3487, 16
      %v3812 = vrot.slane %v3810, 5
      %v3813 = vor.u32 %v3809, %v3812
      %v3814 = vrot.slane %v3813, 4
      %v3816 = vshll.u32 %v3488, 16
      %v3818 = vrot.slane %v3816, 5
      %v3819 = vsel %vm3511, %v3814, %v3818
      %v3821 = vshrl.u32 %v3489, 16
      %v3823 = vrot.slane %v3821, 4
      %v3824 = vshll.u32 %v3489, 16
      %v3826 = vrot.slane %v3824, 5
      %v3827 = vor.u32 %v3823, %v3826
      %v3828 = vrot.slane %v3827, 4
      %v3830 = vshll.u32 %v3490, 16
      %v3832 = vrot.slane %v3830, 5
      %v3833 = vsel %vm3511, %v3828, %v3832
      %v3835 = vshrl.u32 %v3491, 16
      %v3837 = vrot.slane %v3835, 4
      %v3838 = vshll.u32 %v3491, 16
      %v3840 = vrot.slane %v3838, 5
      %v3841 = vor.u32 %v3837, %v3840
      %v3842 = vrot.slane %v3841, 4
      %v3844 = vshll.u32 %v3492, 16
      %v3846 = vrot.slane %v3844, 5
      %v3847 = vsel %vm3511, %v3842, %v3846
      %v3849 = vshrl.u32 %v3493, 16
      %v3851 = vrot.slane %v3849, 4
      %v3852 = vshll.u32 %v3493, 16
      %v3854 = vrot.slane %v3852, 5
      %v3855 = vor.u32 %v3851, %v3854
      %v3856 = vrot.slane %v3855, 4
      %v3858 = vshll.u32 %v3494, 16
      %v3860 = vrot.slane %v3858, 5
      %v3861 = vsel %vm3511, %v3856, %v3860
      %v3863 = vshrl.u32 %v3495, 16
      %v3865 = vrot.slane %v3863, 4
      %v3866 = vshll.u32 %v3495, 16
      %v3868 = vrot.slane %v3866, 5
      %v3869 = vor.u32 %v3865, %v3868
      %v3870 = vrot.slane %v3869, 4
      %v3872 = vshll.u32 %v3496, 16
      %v3874 = vrot.slane %v3872, 5
      %v3875 = vsel %vm3511, %v3870, %v3874
      %v3877 = vshrl.u32 %v3497, 16
      %v3879 = vrot.slane %v3877, 4
      %v3880 = vshll.u32 %v3497, 16
      %v3882 = vrot.slane %v3880, 5
      %v3883 = vor.u32 %v3879, %v3882
      %v3884 = vrot.slane %v3883, 4
      %v3886 = vshll.u32 %v3498, 16
      %v3888 = vrot.slane %v3886, 5
      %v3889 = vsel %vm3511, %v3884, %v3888
      %v3891 = vshrl.u32 %v3499, 16
      %v3893 = vrot.slane %v3891, 4
      %v3894 = vshll.u32 %v3499, 16
      %v3896 = vrot.slane %v3894, 5
      %v3897 = vor.u32 %v3893, %v3896
      %v3898 = vrot.slane %v3897, 4
      %v3900 = vshll.u32 %v3500, 16
      %v3902 = vrot.slane %v3900, 5
      %v3903 = vsel %vm3511, %v3898, %v3902
      %v3905 = vshrl.u32 %v3501, 16
      %v3907 = vrot.slane %v3905, 4
      %v3908 = vshll.u32 %v3501, 16
      %v3910 = vrot.slane %v3908, 5
      %v3911 = vor.u32 %v3907, %v3910
      %v3912 = vrot.slane %v3911, 4
      %v3914 = vshll.u32 %v3502, 16
      %v3916 = vrot.slane %v3914, 5
      %v3917 = vsel %vm3511, %v3912, %v3916
      %v3919 = vshrl.u32 %v3503, 16
      %v3921 = vrot.slane %v3919, 4
      %v3922 = vshll.u32 %v3503, 16
      %v3924 = vrot.slane %v3922, 5
      %v3925 = vor.u32 %v3921, %v3924
      %v3926 = vrot.slane %v3925, 4
      %v3928 = vshll.u32 %v3504, 16
      %v3930 = vrot.slane %v3928, 5
      %v3931 = vsel %vm3511, %v3926, %v3930
      %v3933 = vshrl.u32 %v3505, 16
      %v3935 = vrot.slane %v3933, 4
      %v3936 = vshll.u32 %v3505, 16
      %v3938 = vrot.slane %v3936, 5
      %v3939 = vor.u32 %v3935, %v3938
      %v3940 = vrot.slane %v3939, 4
      %v3942 = vshll.u32 %v3506, 16
      %v3944 = vrot.slane %v3942, 5
      %v3945 = vsel %vm3511, %v3940, %v3944
      %v3947 = vshrl.u32 %v3507, 16
      %v3949 = vrot.slane %v3947, 4
      %v3950 = vshll.u32 %v3507, 16
      %v3952 = vrot.slane %v3950, 5
      %v3953 = vor.u32 %v3949, %v3952
      %v3954 = vrot.slane %v3953, 4
      %v3956 = vshll.u32 %v3508, 16
      %v3958 = vrot.slane %v3956, 5
      %v3959 = vsel %vm3511, %v3954, %v3958
      %v3960 = vunpack.c.l.b16 %v3525
      %v3961 = vunpack.c.l.b16 %v3539
      %v3962 = vunpack.c.l.b16 %v3553
      %v3963 = vunpack.c.l.b16 %v3567
      %v3964 = vunpack.c.l.b16 %v3581
      %v3965 = vunpack.c.l.b16 %v3595
      %v3966 = vunpack.c.l.b16 %v3609
      %v3967 = vunpack.c.l.b16 %v3623
      %v3968 = vunpack.c.l.b16 %v3637
      %v3969 = vunpack.c.l.b16 %v3651
      %v3970 = vunpack.c.l.b16 %v3665
      %v3971 = vunpack.c.l.b16 %v3679
      %v3972 = vunpack.c.l.b16 %v3693
      %v3973 = vunpack.c.l.b16 %v3707
      %v3974 = vunpack.c.l.b16 %v3721
      %v3975 = vunpack.c.l.b16 %v3735
      %v3976 = vunpack.c.l.b16 %v3749
      %v3977 = vunpack.c.l.b16 %v3763
      %v3978 = vunpack.c.l.b16 %v3777
      %v3979 = vunpack.c.l.b16 %v3791
      %v3980 = vunpack.c.l.b16 %v3805
      %v3981 = vunpack.c.l.b16 %v3819
      %v3982 = vunpack.c.l.b16 %v3833
      %v3983 = vunpack.c.l.b16 %v3847
      %v3984 = vunpack.c.l.b16 %v3861
      %v3985 = vunpack.c.l.b16 %v3875
      %v3986 = vunpack.c.l.b16 %v3889
      %v3987 = vunpack.c.l.b16 %v3903
      %v3988 = vunpack.c.l.b16 %v3917
      %v3989 = vunpack.c.l.b16 %v3931
      %v3990 = vunpack.c.l.b16 %v3945
      %v3991 = vunpack.c.l.b16 %v3959
      %v3992 = vpack.c.b16 %v3961, %v3960
      %v3993 = vpack.c.b16 %v3963, %v3962
      %v3994 = vpack.c.b16 %v3965, %v3964
      %v3995 = vpack.c.b16 %v3967, %v3966
      %v3996 = vpack.c.b16 %v3969, %v3968
      %v3997 = vpack.c.b16 %v3971, %v3970
      %v3998 = vpack.c.b16 %v3973, %v3972
      %v3999 = vpack.c.b16 %v3975, %v3974
      %v4000 = vpack.c.b16 %v3977, %v3976
      %v4001 = vpack.c.b16 %v3979, %v3978
      %v4002 = vpack.c.b16 %v3981, %v3980
      %v4003 = vpack.c.b16 %v3983, %v3982
      %v4004 = vpack.c.b16 %v3985, %v3984
      %v4005 = vpack.c.b16 %v3987, %v3986
      %v4006 = vpack.c.b16 %v3989, %v3988
      %v4007 = vpack.c.b16 %v3991, %v3990
      %4008 = vrot.lane.b32.xlu0 %v3992, 64
      %v4009 = vpop.permute.xlu0 %4008
      %4010 = vrot.lane.b32.xlu0 %v3993, 64
      %v4011 = vpop.permute.xlu0 %4010
      %4012 = vrot.lane.b32.xlu0 %v3994, 64
      %v4013 = vpop.permute.xlu0 %4012
      %4014 = vrot.lane.b32.xlu0 %v3995, 64
      %v4015 = vpop.permute.xlu0 %4014
      %4016 = vrot.lane.b32.xlu0 %v3996, 64
      %v4017 = vpop.permute.xlu0 %4016
      %4018 = vrot.lane.b32.xlu0 %v3997, 64
      %v4019 = vpop.permute.xlu0 %4018
      %4020 = vrot.lane.b32.xlu0 %v3998, 64
      %v4021 = vpop.permute.xlu0 %4020
      %4022 = vrot.lane.b32.xlu0 %v3999, 64
      %v4023 = vpop.permute.xlu0 %4022
      %4024 = vrot.lane.b32.xlu0 %v4000, 64
      %v4025 = vpop.permute.xlu0 %4024
      %4026 = vrot.lane.b32.xlu0 %v4001, 64
      %v4027 = vpop.permute.xlu0 %4026
      %4028 = vrot.lane.b32.xlu0 %v4002, 64
      %v4029 = vpop.permute.xlu0 %4028
      %4030 = vrot.lane.b32.xlu0 %v4003, 64
      %v4031 = vpop.permute.xlu0 %4030
      %4032 = vrot.lane.b32.xlu0 %v4004, 64
      %v4033 = vpop.permute.xlu0 %4032
      %4034 = vrot.lane.b32.xlu0 %v4005, 64
      %v4035 = vpop.permute.xlu0 %4034
      %4036 = vrot.lane.b32.xlu0 %v4006, 64
      %v4037 = vpop.permute.xlu0 %4036
      %4038 = vrot.lane.b32.xlu0 %v4007, 64
      %v4039 = vpop.permute.xlu0 %4038
      %vm4056 = vcmask 1048064
      %4057 = vst.msk [vmem:[#allocation3] sm:$0xff] %vm4056, %v4009
      %4058 = vst.msk [vmem:[#allocation3 + $0x28] sm:$0xff] %vm4056, %v4011
      %4059 = vst.msk [vmem:[#allocation3 + $0x50] sm:$0xff] %vm4056, %v4013
      %4060 = vst.msk [vmem:[#allocation3 + $0x78] sm:$0xff] %vm4056, %v4015
      %4061 = vst.msk [vmem:[#allocation3 + $0xa0] sm:$0xff] %vm4056, %v4017
      %4062 = vst.msk [vmem:[#allocation3 + $0xc8] sm:$0xff] %vm4056, %v4019
      %4063 = vst.msk [vmem:[#allocation3 + $0xf0] sm:$0xff] %vm4056, %v4021
      %4064 = vst.msk [vmem:[#allocation3 + $0x118] sm:$0xff] %vm4056, %v4023
      %4065 = vst.msk [vmem:[#allocation3 + $0x140] sm:$0xff] %vm4056, %v4025
      %4066 = vst.msk [vmem:[#allocation3 + $0x168] sm:$0xff] %vm4056, %v4027
      %4067 = vst.msk [vmem:[#allocation3 + $0x190] sm:$0xff] %vm4056, %v4029
      %4068 = vst.msk [vmem:[#allocation3 + $0x1b8] sm:$0xff] %vm4056, %v4031
      %4069 = vst.msk [vmem:[#allocation3 + $0x1e0] sm:$0xff] %vm4056, %v4033
      %4070 = vst.msk [vmem:[#allocation3 + $0x208] sm:$0xff] %vm4056, %v4035
      %4071 = vst.msk [vmem:[#allocation3 + $0x230] sm:$0xff] %vm4056, %v4037
      %4072 = vst.msk [vmem:[#allocation3 + $0x258] sm:$0xff] %vm4056, %v4039
      %v4073 = vld [vmem:[#allocation2] sm:$0x1f]
      %v4074 = vld [vmem:[#allocation2 + $0x8] sm:$0x1f]
      %v4075 = vld [vmem:[#allocation2 + $0x10] sm:$0x1f]
      %v4076 = vld [vmem:[#allocation2 + $0x18] sm:$0x1f]
      %v4077 = vld [vmem:[#allocation2 + $0x20] sm:$0x1f]
      %v4078 = vld [vmem:[#allocation2 + $0x28] sm:$0x1f]
      %v4079 = vld [vmem:[#allocation2 + $0x30] sm:$0x1f]
      %v4080 = vld [vmem:[#allocation2 + $0x38] sm:$0x1f]
      %v4081 = vld [vmem:[#allocation2 + $0x120] sm:$0x1f]
      %v4082 = vld [vmem:[#allocation2 + $0x128] sm:$0x1f]
      %v4083 = vld [vmem:[#allocation2 + $0x130] sm:$0x1f]
      %v4084 = vld [vmem:[#allocation2 + $0x138] sm:$0x1f]
      %v4085 = vld [vmem:[#allocation2 + $0x140] sm:$0x1f]
      %v4086 = vld [vmem:[#allocation2 + $0x148] sm:$0x1f]
      %v4087 = vld [vmem:[#allocation2 + $0x150] sm:$0x1f]
      %v4088 = vld [vmem:[#allocation2 + $0x158] sm:$0x1f]
      %v4089 = vld [vmem:[#allocation2 + $0x240] sm:$0x1f]
      %v4090 = vld [vmem:[#allocation2 + $0x248] sm:$0x1f]
      %v4091 = vld [vmem:[#allocation2 + $0x250] sm:$0x1f]
      %v4092 = vld [vmem:[#allocation2 + $0x258] sm:$0x1f]
      %v4093 = vld [vmem:[#allocation2 + $0x260] sm:$0x1f]
      %v4094 = vld [vmem:[#allocation2 + $0x268] sm:$0x1f]
      %v4095 = vld [vmem:[#allocation2 + $0x270] sm:$0x1f]
      %v4096 = vld [vmem:[#allocation2 + $0x278] sm:$0x1f]
      %v4097 = vld [vmem:[#allocation2 + $0x360] sm:$0x1f]
      %v4098 = vld [vmem:[#allocation2 + $0x368] sm:$0x1f]
      %v4099 = vld [vmem:[#allocation2 + $0x370] sm:$0x1f]
      %v4100 = vld [vmem:[#allocation2 + $0x378] sm:$0x1f]
      %v4101 = vld [vmem:[#allocation2 + $0x380] sm:$0x1f]
      %v4102 = vld [vmem:[#allocation2 + $0x388] sm:$0x1f]
      %v4103 = vld [vmem:[#allocation2 + $0x390] sm:$0x1f]
      %v4104 = vld [vmem:[#allocation2 + $0x398] sm:$0x1f]
      %v4137 = vunpack.c.l.b16 %v4073
      %v4138 = vunpack.c.h.b16 %v4073
      %v4139 = vunpack.c.l.b16 %v4074
      %v4140 = vunpack.c.h.b16 %v4074
      %v4141 = vunpack.c.l.b16 %v4075
      %v4142 = vunpack.c.h.b16 %v4075
      %v4143 = vunpack.c.l.b16 %v4076
      %v4144 = vunpack.c.h.b16 %v4076
      %v4145 = vunpack.c.l.b16 %v4077
      %v4146 = vunpack.c.h.b16 %v4077
      %v4147 = vunpack.c.l.b16 %v4078
      %v4148 = vunpack.c.h.b16 %v4078
      %v4149 = vunpack.c.l.b16 %v4079
      %v4150 = vunpack.c.h.b16 %v4079
      %v4151 = vunpack.c.l.b16 %v4080
      %v4152 = vunpack.c.h.b16 %v4080
      %v4153 = vunpack.c.l.b16 %v4081
      %v4154 = vunpack.c.h.b16 %v4081
      %v4155 = vunpack.c.l.b16 %v4082
      %v4156 = vunpack.c.h.b16 %v4082
      %v4157 = vunpack.c.l.b16 %v4083
      %v4158 = vunpack.c.h.b16 %v4083
      %v4159 = vunpack.c.l.b16 %v4084
      %v4160 = vunpack.c.h.b16 %v4084
      %v4161 = vunpack.c.l.b16 %v4085
      %v4162 = vunpack.c.h.b16 %v4085
      %v4163 = vunpack.c.l.b16 %v4086
      %v4164 = vunpack.c.h.b16 %v4086
      %v4165 = vunpack.c.l.b16 %v4087
      %v4166 = vunpack.c.h.b16 %v4087
      %v4167 = vunpack.c.l.b16 %v4088
      %v4168 = vunpack.c.h.b16 %v4088
      %v4169 = vunpack.c.l.b16 %v4089
      %v4170 = vunpack.c.h.b16 %v4089
      %v4171 = vunpack.c.l.b16 %v4090
      %v4172 = vunpack.c.h.b16 %v4090
      %v4173 = vunpack.c.l.b16 %v4091
      %v4174 = vunpack.c.h.b16 %v4091
      %v4175 = vunpack.c.l.b16 %v4092
      %v4176 = vunpack.c.h.b16 %v4092
      %v4177 = vunpack.c.l.b16 %v4093
      %v4178 = vunpack.c.h.b16 %v4093
      %v4179 = vunpack.c.l.b16 %v4094
      %v4180 = vunpack.c.h.b16 %v4094
      %v4181 = vunpack.c.l.b16 %v4095
      %v4182 = vunpack.c.h.b16 %v4095
      %v4183 = vunpack.c.l.b16 %v4096
      %v4184 = vunpack.c.h.b16 %v4096
      %v4185 = vunpack.c.l.b16 %v4097
      %v4186 = vunpack.c.h.b16 %v4097
      %v4187 = vunpack.c.l.b16 %v4098
      %v4188 = vunpack.c.h.b16 %v4098
      %v4189 = vunpack.c.l.b16 %v4099
      %v4190 = vunpack.c.h.b16 %v4099
      %v4191 = vunpack.c.l.b16 %v4100
      %v4192 = vunpack.c.h.b16 %v4100
      %v4193 = vunpack.c.l.b16 %v4101
      %v4194 = vunpack.c.h.b16 %v4101
      %v4195 = vunpack.c.l.b16 %v4102
      %v4196 = vunpack.c.h.b16 %v4102
      %v4197 = vunpack.c.l.b16 %v4103
      %v4198 = vunpack.c.h.b16 %v4103
      %v4199 = vunpack.c.l.b16 %v4104
      %v4200 = vunpack.c.h.b16 %v4104
      %v4201 = vpack.c.b16 %v4137, %v4137
      %v4202 = vpack.c.b16 %v4138, %v4138
      %v4203 = vpack.c.b16 %v4139, %v4139
      %v4204 = vpack.c.b16 %v4140, %v4140
      %v4205 = vpack.c.b16 %v4141, %v4141
      %v4206 = vpack.c.b16 %v4142, %v4142
      %v4207 = vpack.c.b16 %v4143, %v4143
      %v4208 = vpack.c.b16 %v4144, %v4144
      %v4209 = vpack.c.b16 %v4145, %v4145
      %v4210 = vpack.c.b16 %v4146, %v4146
      %v4211 = vpack.c.b16 %v4147, %v4147
      %v4212 = vpack.c.b16 %v4148, %v4148
      %v4213 = vpack.c.b16 %v4149, %v4149
      %v4214 = vpack.c.b16 %v4150, %v4150
      %v4215 = vpack.c.b16 %v4151, %v4151
      %v4216 = vpack.c.b16 %v4152, %v4152
      %v4217 = vpack.c.b16 %v4153, %v4153
      %v4218 = vpack.c.b16 %v4154, %v4154
      %v4219 = vpack.c.b16 %v4155, %v4155
      %v4220 = vpack.c.b16 %v4156, %v4156
      %v4221 = vpack.c.b16 %v4157, %v4157
      %v4222 = vpack.c.b16 %v4158, %v4158
      %v4223 = vpack.c.b16 %v4159, %v4159
      %v4224 = vpack.c.b16 %v4160, %v4160
      %v4225 = vpack.c.b16 %v4161, %v4161
      %v4226 = vpack.c.b16 %v4162, %v4162
      %v4227 = vpack.c.b16 %v4163, %v4163
      %v4228 = vpack.c.b16 %v4164, %v4164
      %v4229 = vpack.c.b16 %v4165, %v4165
      %v4230 = vpack.c.b16 %v4166, %v4166
      %v4231 = vpack.c.b16 %v4167, %v4167
      %v4232 = vpack.c.b16 %v4168, %v4168
      %v4233 = vpack.c.b16 %v4169, %v4169
      %v4234 = vpack.c.b16 %v4170, %v4170
      %v4235 = vpack.c.b16 %v4171, %v4171
      %v4236 = vpack.c.b16 %v4172, %v4172
      %v4237 = vpack.c.b16 %v4173, %v4173
      %v4238 = vpack.c.b16 %v4174, %v4174
      %v4239 = vpack.c.b16 %v4175, %v4175
      %v4240 = vpack.c.b16 %v4176, %v4176
      %v4241 = vpack.c.b16 %v4177, %v4177
      %v4242 = vpack.c.b16 %v4178, %v4178
      %v4243 = vpack.c.b16 %v4179, %v4179
      %v4244 = vpack.c.b16 %v4180, %v4180
      %v4245 = vpack.c.b16 %v4181, %v4181
      %v4246 = vpack.c.b16 %v4182, %v4182
      %v4247 = vpack.c.b16 %v4183, %v4183
      %v4248 = vpack.c.b16 %v4184, %v4184
      %v4249 = vpack.c.b16 %v4185, %v4185
      %v4250 = vpack.c.b16 %v4186, %v4186
      %v4251 = vpack.c.b16 %v4187, %v4187
      %v4252 = vpack.c.b16 %v4188, %v4188
      %v4253 = vpack.c.b16 %v4189, %v4189
      %v4254 = vpack.c.b16 %v4190, %v4190
      %v4255 = vpack.c.b16 %v4191, %v4191
      %v4256 = vpack.c.b16 %v4192, %v4192
      %v4257 = vpack.c.b16 %v4193, %v4193
      %v4258 = vpack.c.b16 %v4194, %v4194
      %v4259 = vpack.c.b16 %v4195, %v4195
      %v4260 = vpack.c.b16 %v4196, %v4196
      %v4261 = vpack.c.b16 %v4197, %v4197
      %v4262 = vpack.c.b16 %v4198, %v4198
      %v4263 = vpack.c.b16 %v4199, %v4199
      %v4264 = vpack.c.b16 %v4200, %v4200
      %v4266 = vshrl.u32 %v4201, 16
      %v4268 = vrot.slane %v4266, 4
      %v4269 = vshll.u32 %v4201, 16
      %v4271 = vrot.slane %v4269, 5
      %v4272 = vor.u32 %v4268, %v4271
      %v4273 = vrot.slane %v4272, 4
      %v4275 = vshll.u32 %v4202, 16
      %v4277 = vrot.slane %v4275, 5
      %v4278 = vsel %vm3511, %v4273, %v4277
      %v4280 = vshrl.u32 %v4203, 16
      %v4282 = vrot.slane %v4280, 4
      %v4283 = vshll.u32 %v4203, 16
      %v4285 = vrot.slane %v4283, 5
      %v4286 = vor.u32 %v4282, %v4285
      %v4287 = vrot.slane %v4286, 4
      %v4289 = vshll.u32 %v4204, 16
      %v4291 = vrot.slane %v4289, 5
      %v4292 = vsel %vm3511, %v4287, %v4291
      %v4294 = vshrl.u32 %v4205, 16
      %v4296 = vrot.slane %v4294, 4
      %v4297 = vshll.u32 %v4205, 16
      %v4299 = vrot.slane %v4297, 5
      %v4300 = vor.u32 %v4296, %v4299
      %v4301 = vrot.slane %v4300, 4
      %v4303 = vshll.u32 %v4206, 16
      %v4305 = vrot.slane %v4303, 5
      %v4306 = vsel %vm3511, %v4301, %v4305
      %v4308 = vshrl.u32 %v4207, 16
      %v4310 = vrot.slane %v4308, 4
      %v4311 = vshll.u32 %v4207, 16
      %v4313 = vrot.slane %v4311, 5
      %v4314 = vor.u32 %v4310, %v4313
      %v4315 = vrot.slane %v4314, 4
      %v4317 = vshll.u32 %v4208, 16
      %v4319 = vrot.slane %v4317, 5
      %v4320 = vsel %vm3511, %v4315, %v4319
      %v4322 = vshrl.u32 %v4209, 16
      %v4324 = vrot.slane %v4322, 4
      %v4325 = vshll.u32 %v4209, 16
      %v4327 = vrot.slane %v4325, 5
      %v4328 = vor.u32 %v4324, %v4327
      %v4329 = vrot.slane %v4328, 4
      %v4331 = vshll.u32 %v4210, 16
      %v4333 = vrot.slane %v4331, 5
      %v4334 = vsel %vm3511, %v4329, %v4333
      %v4336 = vshrl.u32 %v4211, 16
      %v4338 = vrot.slane %v4336, 4
      %v4339 = vshll.u32 %v4211, 16
      %v4341 = vrot.slane %v4339, 5
      %v4342 = vor.u32 %v4338, %v4341
      %v4343 = vrot.slane %v4342, 4
      %v4345 = vshll.u32 %v4212, 16
      %v4347 = vrot.slane %v4345, 5
      %v4348 = vsel %vm3511, %v4343, %v4347
      %v4350 = vshrl.u32 %v4213, 16
      %v4352 = vrot.slane %v4350, 4
      %v4353 = vshll.u32 %v4213, 16
      %v4355 = vrot.slane %v4353, 5
      %v4356 = vor.u32 %v4352, %v4355
      %v4357 = vrot.slane %v4356, 4
      %v4359 = vshll.u32 %v4214, 16
      %v4361 = vrot.slane %v4359, 5
      %v4362 = vsel %vm3511, %v4357, %v4361
      %v4364 = vshrl.u32 %v4215, 16
      %v4366 = vrot.slane %v4364, 4
      %v4367 = vshll.u32 %v4215, 16
      %v4369 = vrot.slane %v4367, 5
      %v4370 = vor.u32 %v4366, %v4369
      %v4371 = vrot.slane %v4370, 4
      %v4373 = vshll.u32 %v4216, 16
      %v4375 = vrot.slane %v4373, 5
      %v4376 = vsel %vm3511, %v4371, %v4375
      %v4378 = vshrl.u32 %v4217, 16
      %v4380 = vrot.slane %v4378, 4
      %v4381 = vshll.u32 %v4217, 16
      %v4383 = vrot.slane %v4381, 5
      %v4384 = vor.u32 %v4380, %v4383
      %v4385 = vrot.slane %v4384, 4
      %v4387 = vshll.u32 %v4218, 16
      %v4389 = vrot.slane %v4387, 5
      %v4390 = vsel %vm3511, %v4385, %v4389
      %v4392 = vshrl.u32 %v4219, 16
      %v4394 = vrot.slane %v4392, 4
      %v4395 = vshll.u32 %v4219, 16
      %v4397 = vrot.slane %v4395, 5
      %v4398 = vor.u32 %v4394, %v4397
      %v4399 = vrot.slane %v4398, 4
      %v4401 = vshll.u32 %v4220, 16
      %v4403 = vrot.slane %v4401, 5
      %v4404 = vsel %vm3511, %v4399, %v4403
      %v4406 = vshrl.u32 %v4221, 16
      %v4408 = vrot.slane %v4406, 4
      %v4409 = vshll.u32 %v4221, 16
      %v4411 = vrot.slane %v4409, 5
      %v4412 = vor.u32 %v4408, %v4411
      %v4413 = vrot.slane %v4412, 4
      %v4415 = vshll.u32 %v4222, 16
      %v4417 = vrot.slane %v4415, 5
      %v4418 = vsel %vm3511, %v4413, %v4417
      %v4420 = vshrl.u32 %v4223, 16
      %v4422 = vrot.slane %v4420, 4
      %v4423 = vshll.u32 %v4223, 16
      %v4425 = vrot.slane %v4423, 5
      %v4426 = vor.u32 %v4422, %v4425
      %v4427 = vrot.slane %v4426, 4
      %v4429 = vshll.u32 %v4224, 16
      %v4431 = vrot.slane %v4429, 5
      %v4432 = vsel %vm3511, %v4427, %v4431
      %v4434 = vshrl.u32 %v4225, 16
      %v4436 = vrot.slane %v4434, 4
      %v4437 = vshll.u32 %v4225, 16
      %v4439 = vrot.slane %v4437, 5
      %v4440 = vor.u32 %v4436, %v4439
      %v4441 = vrot.slane %v4440, 4
      %v4443 = vshll.u32 %v4226, 16
      %v4445 = vrot.slane %v4443, 5
      %v4446 = vsel %vm3511, %v4441, %v4445
      %v4448 = vshrl.u32 %v4227, 16
      %v4450 = vrot.slane %v4448, 4
      %v4451 = vshll.u32 %v4227, 16
      %v4453 = vrot.slane %v4451, 5
      %v4454 = vor.u32 %v4450, %v4453
      %v4455 = vrot.slane %v4454, 4
      %v4457 = vshll.u32 %v4228, 16
      %v4459 = vrot.slane %v4457, 5
      %v4460 = vsel %vm3511, %v4455, %v4459
      %v4462 = vshrl.u32 %v4229, 16
      %v4464 = vrot.slane %v4462, 4
      %v4465 = vshll.u32 %v4229, 16
      %v4467 = vrot.slane %v4465, 5
      %v4468 = vor.u32 %v4464, %v4467
      %v4469 = vrot.slane %v4468, 4
      %v4471 = vshll.u32 %v4230, 16
      %v4473 = vrot.slane %v4471, 5
      %v4474 = vsel %vm3511, %v4469, %v4473
      %v4476 = vshrl.u32 %v4231, 16
      %v4478 = vrot.slane %v4476, 4
      %v4479 = vshll.u32 %v4231, 16
      %v4481 = vrot.slane %v4479, 5
      %v4482 = vor.u32 %v4478, %v4481
      %v4483 = vrot.slane %v4482, 4
      %v4485 = vshll.u32 %v4232, 16
      %v4487 = vrot.slane %v4485, 5
      %v4488 = vsel %vm3511, %v4483, %v4487
      %v4490 = vshrl.u32 %v4233, 16
      %v4492 = vrot.slane %v4490, 4
      %v4493 = vshll.u32 %v4233, 16
      %v4495 = vrot.slane %v4493, 5
      %v4496 = vor.u32 %v4492, %v4495
      %v4497 = vrot.slane %v4496, 4
      %v4499 = vshll.u32 %v4234, 16
      %v4501 = vrot.slane %v4499, 5
      %v4502 = vsel %vm3511, %v4497, %v4501
      %v4504 = vshrl.u32 %v4235, 16
      %v4506 = vrot.slane %v4504, 4
      %v4507 = vshll.u32 %v4235, 16
      %v4509 = vrot.slane %v4507, 5
      %v4510 = vor.u32 %v4506, %v4509
      %v4511 = vrot.slane %v4510, 4
      %v4513 = vshll.u32 %v4236, 16
      %v4515 = vrot.slane %v4513, 5
      %v4516 = vsel %vm3511, %v4511, %v4515
      %v4518 = vshrl.u32 %v4237, 16
      %v4520 = vrot.slane %v4518, 4
      %v4521 = vshll.u32 %v4237, 16
      %v4523 = vrot.slane %v4521, 5
      %v4524 = vor.u32 %v4520, %v4523
      %v4525 = vrot.slane %v4524, 4
      %v4527 = vshll.u32 %v4238, 16
      %v4529 = vrot.slane %v4527, 5
      %v4530 = vsel %vm3511, %v4525, %v4529
      %v4532 = vshrl.u32 %v4239, 16
      %v4534 = vrot.slane %v4532, 4
      %v4535 = vshll.u32 %v4239, 16
      %v4537 = vrot.slane %v4535, 5
      %v4538 = vor.u32 %v4534, %v4537
      %v4539 = vrot.slane %v4538, 4
      %v4541 = vshll.u32 %v4240, 16
      %v4543 = vrot.slane %v4541, 5
      %v4544 = vsel %vm3511, %v4539, %v4543
      %v4546 = vshrl.u32 %v4241, 16
      %v4548 = vrot.slane %v4546, 4
      %v4549 = vshll.u32 %v4241, 16
      %v4551 = vrot.slane %v4549, 5
      %v4552 = vor.u32 %v4548, %v4551
      %v4553 = vrot.slane %v4552, 4
      %v4555 = vshll.u32 %v4242, 16
      %v4557 = vrot.slane %v4555, 5
      %v4558 = vsel %vm3511, %v4553, %v4557
      %v4560 = vshrl.u32 %v4243, 16
      %v4562 = vrot.slane %v4560, 4
      %v4563 = vshll.u32 %v4243, 16
      %v4565 = vrot.slane %v4563, 5
      %v4566 = vor.u32 %v4562, %v4565
      %v4567 = vrot.slane %v4566, 4
      %v4569 = vshll.u32 %v4244, 16
      %v4571 = vrot.slane %v4569, 5
      %v4572 = vsel %vm3511, %v4567, %v4571
      %v4574 = vshrl.u32 %v4245, 16
      %v4576 = vrot.slane %v4574, 4
      %v4577 = vshll.u32 %v4245, 16
      %v4579 = vrot.slane %v4577, 5
      %v4580 = vor.u32 %v4576, %v4579
      %v4581 = vrot.slane %v4580, 4
      %v4583 = vshll.u32 %v4246, 16
      %v4585 = vrot.slane %v4583, 5
      %v4586 = vsel %vm3511, %v4581, %v4585
      %v4588 = vshrl.u32 %v4247, 16
      %v4590 = vrot.slane %v4588, 4
      %v4591 = vshll.u32 %v4247, 16
      %v4593 = vrot.slane %v4591, 5
      %v4594 = vor.u32 %v4590, %v4593
      %v4595 = vrot.slane %v4594, 4
      %v4597 = vshll.u32 %v4248, 16
      %v4599 = vrot.slane %v4597, 5
      %v4600 = vsel %vm3511, %v4595, %v4599
      %v4602 = vshrl.u32 %v4249, 16
      %v4604 = vrot.slane %v4602, 4
      %v4605 = vshll.u32 %v4249, 16
      %v4607 = vrot.slane %v4605, 5
      %v4608 = vor.u32 %v4604, %v4607
      %v4609 = vrot.slane %v4608, 4
      %v4611 = vshll.u32 %v4250, 16
      %v4613 = vrot.slane %v4611, 5
      %v4614 = vsel %vm3511, %v4609, %v4613
      %v4616 = vshrl.u32 %v4251, 16
      %v4618 = vrot.slane %v4616, 4
      %v4619 = vshll.u32 %v4251, 16
      %v4621 = vrot.slane %v4619, 5
      %v4622 = vor.u32 %v4618, %v4621
      %v4623 = vrot.slane %v4622, 4
      %v4625 = vshll.u32 %v4252, 16
      %v4627 = vrot.slane %v4625, 5
      %v4628 = vsel %vm3511, %v4623, %v4627
      %v4630 = vshrl.u32 %v4253, 16
      %v4632 = vrot.slane %v4630, 4
      %v4633 = vshll.u32 %v4253, 16
      %v4635 = vrot.slane %v4633, 5
      %v4636 = vor.u32 %v4632, %v4635
      %v4637 = vrot.slane %v4636, 4
      %v4639 = vshll.u32 %v4254, 16
      %v4641 = vrot.slane %v4639, 5
      %v4642 = vsel %vm3511, %v4637, %v4641
      %v4644 = vshrl.u32 %v4255, 16
      %v4646 = vrot.slane %v4644, 4
      %v4647 = vshll.u32 %v4255, 16
      %v4649 = vrot.slane %v4647, 5
      %v4650 = vor.u32 %v4646, %v4649
      %v4651 = vrot.slane %v4650, 4
      %v4653 = vshll.u32 %v4256, 16
      %v4655 = vrot.slane %v4653, 5
      %v4656 = vsel %vm3511, %v4651, %v4655
      %v4658 = vshrl.u32 %v4257, 16
      %v4660 = vrot.slane %v4658, 4
      %v4661 = vshll.u32 %v4257, 16
      %v4663 = vrot.slane %v4661, 5
      %v4664 = vor.u32 %v4660, %v4663
      %v4665 = vrot.slane %v4664, 4
      %v4667 = vshll.u32 %v4258, 16
      %v4669 = vrot.slane %v4667, 5
      %v4670 = vsel %vm3511, %v4665, %v4669
      %v4672 = vshrl.u32 %v4259, 16
      %v4674 = vrot.slane %v4672, 4
      %v4675 = vshll.u32 %v4259, 16
      %v4677 = vrot.slane %v4675, 5
      %v4678 = vor.u32 %v4674, %v4677
      %v4679 = vrot.slane %v4678, 4
      %v4681 = vshll.u32 %v4260, 16
      %v4683 = vrot.slane %v4681, 5
      %v4684 = vsel %vm3511, %v4679, %v4683
      %v4686 = vshrl.u32 %v4261, 16
      %v4688 = vrot.slane %v4686, 4
      %v4689 = vshll.u32 %v4261, 16
      %v4691 = vrot.slane %v4689, 5
      %v4692 = vor.u32 %v4688, %v4691
      %v4693 = vrot.slane %v4692, 4
      %v4695 = vshll.u32 %v4262, 16
      %v4697 = vrot.slane %v4695, 5
      %v4698 = vsel %vm3511, %v4693, %v4697
      %v4700 = vshrl.u32 %v4263, 16
      %v4702 = vrot.slane %v4700, 4
      %v4703 = vshll.u32 %v4263, 16
      %v4705 = vrot.slane %v4703, 5
      %v4706 = vor.u32 %v4702, %v4705
      %v4707 = vrot.slane %v4706, 4
      %v4709 = vshll.u32 %v4264, 16
      %v4711 = vrot.slane %v4709, 5
      %v4712 = vsel %vm3511, %v4707, %v4711
      %v4713 = vunpack.c.l.b16 %v4278
      %v4714 = vunpack.c.l.b16 %v4292
      %v4715 = vunpack.c.l.b16 %v4306
      %v4716 = vunpack.c.l.b16 %v4320
      %v4717 = vunpack.c.l.b16 %v4334
      %v4718 = vunpack.c.l.b16 %v4348
      %v4719 = vunpack.c.l.b16 %v4362
      %v4720 = vunpack.c.l.b16 %v4376
      %v4721 = vunpack.c.l.b16 %v4390
      %v4722 = vunpack.c.l.b16 %v4404
      %v4723 = vunpack.c.l.b16 %v4418
      %v4724 = vunpack.c.l.b16 %v4432
      %v4725 = vunpack.c.l.b16 %v4446
      %v4726 = vunpack.c.l.b16 %v4460
      %v4727 = vunpack.c.l.b16 %v4474
      %v4728 = vunpack.c.l.b16 %v4488
      %v4729 = vunpack.c.l.b16 %v4502
      %v4730 = vunpack.c.l.b16 %v4516
      %v4731 = vunpack.c.l.b16 %v4530
      %v4732 = vunpack.c.l.b16 %v4544
      %v4733 = vunpack.c.l.b16 %v4558
      %v4734 = vunpack.c.l.b16 %v4572
      %v4735 = vunpack.c.l.b16 %v4586
      %v4736 = vunpack.c.l.b16 %v4600
      %v4737 = vunpack.c.l.b16 %v4614
      %v4738 = vunpack.c.l.b16 %v4628
      %v4739 = vunpack.c.l.b16 %v4642
      %v4740 = vunpack.c.l.b16 %v4656
      %v4741 = vunpack.c.l.b16 %v4670
      %v4742 = vunpack.c.l.b16 %v4684
      %v4743 = vunpack.c.l.b16 %v4698
      %v4744 = vunpack.c.l.b16 %v4712
      %v4745 = vpack.c.b16 %v4714, %v4713
      %v4746 = vpack.c.b16 %v4716, %v4715
      %v4747 = vpack.c.b16 %v4718, %v4717
      %v4748 = vpack.c.b16 %v4720, %v4719
      %v4749 = vpack.c.b16 %v4722, %v4721
      %v4750 = vpack.c.b16 %v4724, %v4723
      %v4751 = vpack.c.b16 %v4726, %v4725
      %v4752 = vpack.c.b16 %v4728, %v4727
      %v4753 = vpack.c.b16 %v4730, %v4729
      %v4754 = vpack.c.b16 %v4732, %v4731
      %v4755 = vpack.c.b16 %v4734, %v4733
      %v4756 = vpack.c.b16 %v4736, %v4735
      %v4757 = vpack.c.b16 %v4738, %v4737
      %v4758 = vpack.c.b16 %v4740, %v4739
      %v4759 = vpack.c.b16 %v4742, %v4741
      %v4760 = vpack.c.b16 %v4744, %v4743
      %4777 = vst.msk [vmem:[#allocation3 + $0x8] sm:$0xff] %vm3023, %v4745
      %4778 = vst.msk [vmem:[#allocation3 + $0x30] sm:$0xff] %vm3023, %v4746
      %4779 = vst.msk [vmem:[#allocation3 + $0x58] sm:$0xff] %vm3023, %v4747
      %4780 = vst.msk [vmem:[#allocation3 + $0x80] sm:$0xff] %vm3023, %v4748
      %4781 = vst.msk [vmem:[#allocation3 + $0xa8] sm:$0xff] %vm3023, %v4749
      %4782 = vst.msk [vmem:[#allocation3 + $0xd0] sm:$0xff] %vm3023, %v4750
      %4783 = vst.msk [vmem:[#allocation3 + $0xf8] sm:$0xff] %vm3023, %v4751
      %4784 = vst.msk [vmem:[#allocation3 + $0x120] sm:$0xff] %vm3023, %v4752
      %4785 = vst.msk [vmem:[#allocation3 + $0x148] sm:$0xff] %vm3023, %v4753
      %4786 = vst.msk [vmem:[#allocation3 + $0x170] sm:$0xff] %vm3023, %v4754
      %4787 = vst.msk [vmem:[#allocation3 + $0x198] sm:$0xff] %vm3023, %v4755
      %4788 = vst.msk [vmem:[#allocation3 + $0x1c0] sm:$0xff] %vm3023, %v4756
      %4789 = vst.msk [vmem:[#allocation3 + $0x1e8] sm:$0xff] %vm3023, %v4757
      %4790 = vst.msk [vmem:[#allocation3 + $0x210] sm:$0xff] %vm3023, %v4758
      %4791 = vst.msk [vmem:[#allocation3 + $0x238] sm:$0xff] %vm3023, %v4759
      %4792 = vst.msk [vmem:[#allocation3 + $0x260] sm:$0xff] %vm3023, %v4760
      %v4793 = vld [vmem:[%s3106] sm:$0xf]
      %v4794 = vld [vmem:[%s3106 + $0x8] sm:$0xf]
      %v4795 = vld [vmem:[%s3106 + $0x10] sm:$0xf]
      %v4796 = vld [vmem:[%s3106 + $0x18] sm:$0xf]
      %v4797 = vld [vmem:[%s3106 + $0x20] sm:$0xf]
      %v4798 = vld [vmem:[%s3106 + $0x28] sm:$0xf]
      %v4799 = vld [vmem:[%s3106 + $0x30] sm:$0xf]
      %v4800 = vld [vmem:[%s3106 + $0x38] sm:$0xf]
      %v4801 = vld [vmem:[%s3106 + $0x120] sm:$0xf]
      %v4802 = vld [vmem:[%s3106 + $0x128] sm:$0xf]
      %v4803 = vld [vmem:[%s3106 + $0x130] sm:$0xf]
      %v4804 = vld [vmem:[%s3106 + $0x138] sm:$0xf]
      %v4805 = vld [vmem:[%s3106 + $0x140] sm:$0xf]
      %v4806 = vld [vmem:[%s3106 + $0x148] sm:$0xf]
      %v4807 = vld [vmem:[%s3106 + $0x150] sm:$0xf]
      %v4808 = vld [vmem:[%s3106 + $0x158] sm:$0xf]
      %v4809 = vld [vmem:[%s3106 + $0x240] sm:$0xf]
      %v4810 = vld [vmem:[%s3106 + $0x248] sm:$0xf]
      %v4811 = vld [vmem:[%s3106 + $0x250] sm:$0xf]
      %v4812 = vld [vmem:[%s3106 + $0x258] sm:$0xf]
      %v4813 = vld [vmem:[%s3106 + $0x260] sm:$0xf]
      %v4814 = vld [vmem:[%s3106 + $0x268] sm:$0xf]
      %v4815 = vld [vmem:[%s3106 + $0x270] sm:$0xf]
      %v4816 = vld [vmem:[%s3106 + $0x278] sm:$0xf]
      %v4817 = vld [vmem:[%s3106 + $0x360] sm:$0xf]
      %v4818 = vld [vmem:[%s3106 + $0x368] sm:$0xf]
      %v4819 = vld [vmem:[%s3106 + $0x370] sm:$0xf]
      %v4820 = vld [vmem:[%s3106 + $0x378] sm:$0xf]
      %v4821 = vld [vmem:[%s3106 + $0x380] sm:$0xf]
      %v4822 = vld [vmem:[%s3106 + $0x388] sm:$0xf]
      %v4823 = vld [vmem:[%s3106 + $0x390] sm:$0xf]
      %v4824 = vld [vmem:[%s3106 + $0x398] sm:$0xf]
      %v4857 = vunpack.c.l.b16 %v4793
      %v4858 = vunpack.c.l.b16 %v4794
      %v4859 = vunpack.c.l.b16 %v4795
      %v4860 = vunpack.c.l.b16 %v4796
      %v4861 = vunpack.c.l.b16 %v4797
      %v4862 = vunpack.c.l.b16 %v4798
      %v4863 = vunpack.c.l.b16 %v4799
      %v4864 = vunpack.c.l.b16 %v4800
      %v4865 = vunpack.c.l.b16 %v4801
      %v4866 = vunpack.c.l.b16 %v4802
      %v4867 = vunpack.c.l.b16 %v4803
      %v4868 = vunpack.c.l.b16 %v4804
      %v4869 = vunpack.c.l.b16 %v4805
      %v4870 = vunpack.c.l.b16 %v4806
      %v4871 = vunpack.c.l.b16 %v4807
      %v4872 = vunpack.c.l.b16 %v4808
      %v4873 = vunpack.c.l.b16 %v4809
      %v4874 = vunpack.c.l.b16 %v4810
      %v4875 = vunpack.c.l.b16 %v4811
      %v4876 = vunpack.c.l.b16 %v4812
      %v4877 = vunpack.c.l.b16 %v4813
      %v4878 = vunpack.c.l.b16 %v4814
      %v4879 = vunpack.c.l.b16 %v4815
      %v4880 = vunpack.c.l.b16 %v4816
      %v4881 = vunpack.c.l.b16 %v4817
      %v4882 = vunpack.c.l.b16 %v4818
      %v4883 = vunpack.c.l.b16 %v4819
      %v4884 = vunpack.c.l.b16 %v4820
      %v4885 = vunpack.c.l.b16 %v4821
      %v4886 = vunpack.c.l.b16 %v4822
      %v4887 = vunpack.c.l.b16 %v4823
      %v4888 = vunpack.c.l.b16 %v4824
      %v4889 = vpack.c.b16 %v4858, %v4857
      %v4890 = vpack.c.b16 %v4860, %v4859
      %v4891 = vpack.c.b16 %v4862, %v4861
      %v4892 = vpack.c.b16 %v4864, %v4863
      %v4893 = vpack.c.b16 %v4866, %v4865
      %v4894 = vpack.c.b16 %v4868, %v4867
      %v4895 = vpack.c.b16 %v4870, %v4869
      %v4896 = vpack.c.b16 %v4872, %v4871
      %v4897 = vpack.c.b16 %v4874, %v4873
      %v4898 = vpack.c.b16 %v4876, %v4875
      %v4899 = vpack.c.b16 %v4878, %v4877
      %v4900 = vpack.c.b16 %v4880, %v4879
      %v4901 = vpack.c.b16 %v4882, %v4881
      %v4902 = vpack.c.b16 %v4884, %v4883
      %v4903 = vpack.c.b16 %v4886, %v4885
      %v4904 = vpack.c.b16 %v4888, %v4887
      %4905 = vrot.lane.b32.xlu0 %v4889, 64
      %v4906 = vpop.permute.xlu0 %4905
      %4907 = vrot.lane.b32.xlu0 %v4890, 64
      %v4908 = vpop.permute.xlu0 %4907
      %4909 = vrot.lane.b32.xlu0 %v4891, 64
      %v4910 = vpop.permute.xlu0 %4909
      %4911 = vrot.lane.b32.xlu0 %v4892, 64
      %v4912 = vpop.permute.xlu0 %4911
      %4913 = vrot.lane.b32.xlu0 %v4893, 64
      %v4914 = vpop.permute.xlu0 %4913
      %4915 = vrot.lane.b32.xlu0 %v4894, 64
      %v4916 = vpop.permute.xlu0 %4915
      %4917 = vrot.lane.b32.xlu0 %v4895, 64
      %v4918 = vpop.permute.xlu0 %4917
      %4919 = vrot.lane.b32.xlu0 %v4896, 64
      %v4920 = vpop.permute.xlu0 %4919
      %4921 = vrot.lane.b32.xlu0 %v4897, 64
      %v4922 = vpop.permute.xlu0 %4921
      %4923 = vrot.lane.b32.xlu0 %v4898, 64
      %v4924 = vpop.permute.xlu0 %4923
      %4925 = vrot.lane.b32.xlu0 %v4899, 64
      %v4926 = vpop.permute.xlu0 %4925
      %4927 = vrot.lane.b32.xlu0 %v4900, 64
      %v4928 = vpop.permute.xlu0 %4927
      %4929 = vrot.lane.b32.xlu0 %v4901, 64
      %v4930 = vpop.permute.xlu0 %4929
      %4931 = vrot.lane.b32.xlu0 %v4902, 64
      %v4932 = vpop.permute.xlu0 %4931
      %4933 = vrot.lane.b32.xlu0 %v4903, 64
      %v4934 = vpop.permute.xlu0 %4933
      %4935 = vrot.lane.b32.xlu0 %v4904, 64
      %v4936 = vpop.permute.xlu0 %4935
      %4953 = vst.msk [vmem:[#allocation3 + $0x8] sm:$0xff] %vm4056, %v4906
      %4954 = vst.msk [vmem:[#allocation3 + $0x30] sm:$0xff] %vm4056, %v4908
      %4955 = vst.msk [vmem:[#allocation3 + $0x58] sm:$0xff] %vm4056, %v4910
      %4956 = vst.msk [vmem:[#allocation3 + $0x80] sm:$0xff] %vm4056, %v4912
      %4957 = vst.msk [vmem:[#allocation3 + $0xa8] sm:$0xff] %vm4056, %v4914
      %4958 = vst.msk [vmem:[#allocation3 + $0xd0] sm:$0xff] %vm4056, %v4916
      %4959 = vst.msk [vmem:[#allocation3 + $0xf8] sm:$0xff] %vm4056, %v4918
      %4960 = vst.msk [vmem:[#allocation3 + $0x120] sm:$0xff] %vm4056, %v4920
      %4961 = vst.msk [vmem:[#allocation3 + $0x148] sm:$0xff] %vm4056, %v4922
      %4962 = vst.msk [vmem:[#allocation3 + $0x170] sm:$0xff] %vm4056, %v4924
      %4963 = vst.msk [vmem:[#allocation3 + $0x198] sm:$0xff] %vm4056, %v4926
      %4964 = vst.msk [vmem:[#allocation3 + $0x1c0] sm:$0xff] %vm4056, %v4928
      %4965 = vst.msk [vmem:[#allocation3 + $0x1e8] sm:$0xff] %vm4056, %v4930
      %4966 = vst.msk [vmem:[#allocation3 + $0x210] sm:$0xff] %vm4056, %v4932
      %4967 = vst.msk [vmem:[#allocation3 + $0x238] sm:$0xff] %vm4056, %v4934
      %4968 = vst.msk [vmem:[#allocation3 + $0x260] sm:$0xff] %vm4056, %v4936
      %v4969 = vld [vmem:[%s3139] sm:$0x1f]
      %v4970 = vld [vmem:[%s3139 + $0x8] sm:$0x1f]
      %v4971 = vld [vmem:[%s3139 + $0x10] sm:$0x1f]
      %v4972 = vld [vmem:[%s3139 + $0x18] sm:$0x1f]
      %v4973 = vld [vmem:[%s3139 + $0x20] sm:$0x1f]
      %v4974 = vld [vmem:[%s3139 + $0x28] sm:$0x1f]
      %v4975 = vld [vmem:[%s3139 + $0x30] sm:$0x1f]
      %v4976 = vld [vmem:[%s3139 + $0x38] sm:$0x1f]
      %v4977 = vld [vmem:[%s3139 + $0x120] sm:$0x1f]
      %v4978 = vld [vmem:[%s3139 + $0x128] sm:$0x1f]
      %v4979 = vld [vmem:[%s3139 + $0x130] sm:$0x1f]
      %v4980 = vld [vmem:[%s3139 + $0x138] sm:$0x1f]
      %v4981 = vld [vmem:[%s3139 + $0x140] sm:$0x1f]
      %v4982 = vld [vmem:[%s3139 + $0x148] sm:$0x1f]
      %v4983 = vld [vmem:[%s3139 + $0x150] sm:$0x1f]
      %v4984 = vld [vmem:[%s3139 + $0x158] sm:$0x1f]
      %v4985 = vld [vmem:[%s3139 + $0x240] sm:$0x1f]
      %v4986 = vld [vmem:[%s3139 + $0x248] sm:$0x1f]
      %v4987 = vld [vmem:[%s3139 + $0x250] sm:$0x1f]
      %v4988 = vld [vmem:[%s3139 + $0x258] sm:$0x1f]
      %v4989 = vld [vmem:[%s3139 + $0x260] sm:$0x1f]
      %v4990 = vld [vmem:[%s3139 + $0x268] sm:$0x1f]
      %v4991 = vld [vmem:[%s3139 + $0x270] sm:$0x1f]
      %v4992 = vld [vmem:[%s3139 + $0x278] sm:$0x1f]
      %v4993 = vld [vmem:[%s3139 + $0x360] sm:$0x1f]
      %v4994 = vld [vmem:[%s3139 + $0x368] sm:$0x1f]
      %v4995 = vld [vmem:[%s3139 + $0x370] sm:$0x1f]
      %v4996 = vld [vmem:[%s3139 + $0x378] sm:$0x1f]
      %v4997 = vld [vmem:[%s3139 + $0x380] sm:$0x1f]
      %v4998 = vld [vmem:[%s3139 + $0x388] sm:$0x1f]
      %v4999 = vld [vmem:[%s3139 + $0x390] sm:$0x1f]
      %v5000 = vld [vmem:[%s3139 + $0x398] sm:$0x1f]
      %v5033 = vunpack.c.l.b16 %v4969
      %v5034 = vunpack.c.h.b16 %v4969
      %v5035 = vunpack.c.l.b16 %v4970
      %v5036 = vunpack.c.h.b16 %v4970
      %v5037 = vunpack.c.l.b16 %v4971
      %v5038 = vunpack.c.h.b16 %v4971
      %v5039 = vunpack.c.l.b16 %v4972
      %v5040 = vunpack.c.h.b16 %v4972
      %v5041 = vunpack.c.l.b16 %v4973
      %v5042 = vunpack.c.h.b16 %v4973
      %v5043 = vunpack.c.l.b16 %v4974
      %v5044 = vunpack.c.h.b16 %v4974
      %v5045 = vunpack.c.l.b16 %v4975
      %v5046 = vunpack.c.h.b16 %v4975
      %v5047 = vunpack.c.l.b16 %v4976
      %v5048 = vunpack.c.h.b16 %v4976
      %v5049 = vunpack.c.l.b16 %v4977
      %v5050 = vunpack.c.h.b16 %v4977
      %v5051 = vunpack.c.l.b16 %v4978
      %v5052 = vunpack.c.h.b16 %v4978
      %v5053 = vunpack.c.l.b16 %v4979
      %v5054 = vunpack.c.h.b16 %v4979
      %v5055 = vunpack.c.l.b16 %v4980
      %v5056 = vunpack.c.h.b16 %v4980
      %v5057 = vunpack.c.l.b16 %v4981
      %v5058 = vunpack.c.h.b16 %v4981
      %v5059 = vunpack.c.l.b16 %v4982
      %v5060 = vunpack.c.h.b16 %v4982
      %v5061 = vunpack.c.l.b16 %v4983
      %v5062 = vunpack.c.h.b16 %v4983
      %v5063 = vunpack.c.l.b16 %v4984
      %v5064 = vunpack.c.h.b16 %v4984
      %v5065 = vunpack.c.l.b16 %v4985
      %v5066 = vunpack.c.h.b16 %v4985
      %v5067 = vunpack.c.l.b16 %v4986
      %v5068 = vunpack.c.h.b16 %v4986
      %v5069 = vunpack.c.l.b16 %v4987
      %v5070 = vunpack.c.h.b16 %v4987
      %v5071 = vunpack.c.l.b16 %v4988
      %v5072 = vunpack.c.h.b16 %v4988
      %v5073 = vunpack.c.l.b16 %v4989
      %v5074 = vunpack.c.h.b16 %v4989
      %v5075 = vunpack.c.l.b16 %v4990
      %v5076 = vunpack.c.h.b16 %v4990
      %v5077 = vunpack.c.l.b16 %v4991
      %v5078 = vunpack.c.h.b16 %v4991
      %v5079 = vunpack.c.l.b16 %v4992
      %v5080 = vunpack.c.h.b16 %v4992
      %v5081 = vunpack.c.l.b16 %v4993
      %v5082 = vunpack.c.h.b16 %v4993
      %v5083 = vunpack.c.l.b16 %v4994
      %v5084 = vunpack.c.h.b16 %v4994
      %v5085 = vunpack.c.l.b16 %v4995
      %v5086 = vunpack.c.h.b16 %v4995
      %v5087 = vunpack.c.l.b16 %v4996
      %v5088 = vunpack.c.h.b16 %v4996
      %v5089 = vunpack.c.l.b16 %v4997
      %v5090 = vunpack.c.h.b16 %v4997
      %v5091 = vunpack.c.l.b16 %v4998
      %v5092 = vunpack.c.h.b16 %v4998
      %v5093 = vunpack.c.l.b16 %v4999
      %v5094 = vunpack.c.h.b16 %v4999
      %v5095 = vunpack.c.l.b16 %v5000
      %v5096 = vunpack.c.h.b16 %v5000
      %v5097 = vpack.c.b16 %v5033, %v5033
      %v5098 = vpack.c.b16 %v5034, %v5034
      %v5099 = vpack.c.b16 %v5035, %v5035
      %v5100 = vpack.c.b16 %v5036, %v5036
      %v5101 = vpack.c.b16 %v5037, %v5037
      %v5102 = vpack.c.b16 %v5038, %v5038
      %v5103 = vpack.c.b16 %v5039, %v5039
      %v5104 = vpack.c.b16 %v5040, %v5040
      %v5105 = vpack.c.b16 %v5041, %v5041
      %v5106 = vpack.c.b16 %v5042, %v5042
      %v5107 = vpack.c.b16 %v5043, %v5043
      %v5108 = vpack.c.b16 %v5044, %v5044
      %v5109 = vpack.c.b16 %v5045, %v5045
      %v5110 = vpack.c.b16 %v5046, %v5046
      %v5111 = vpack.c.b16 %v5047, %v5047
      %v5112 = vpack.c.b16 %v5048, %v5048
      %v5113 = vpack.c.b16 %v5049, %v5049
      %v5114 = vpack.c.b16 %v5050, %v5050
      %v5115 = vpack.c.b16 %v5051, %v5051
      %v5116 = vpack.c.b16 %v5052, %v5052
      %v5117 = vpack.c.b16 %v5053, %v5053
      %v5118 = vpack.c.b16 %v5054, %v5054
      %v5119 = vpack.c.b16 %v5055, %v5055
      %v5120 = vpack.c.b16 %v5056, %v5056
      %v5121 = vpack.c.b16 %v5057, %v5057
      %v5122 = vpack.c.b16 %v5058, %v5058
      %v5123 = vpack.c.b16 %v5059, %v5059
      %v5124 = vpack.c.b16 %v5060, %v5060
      %v5125 = vpack.c.b16 %v5061, %v5061
      %v5126 = vpack.c.b16 %v5062, %v5062
      %v5127 = vpack.c.b16 %v5063, %v5063
      %v5128 = vpack.c.b16 %v5064, %v5064
      %v5129 = vpack.c.b16 %v5065, %v5065
      %v5130 = vpack.c.b16 %v5066, %v5066
      %v5131 = vpack.c.b16 %v5067, %v5067
      %v5132 = vpack.c.b16 %v5068, %v5068
      %v5133 = vpack.c.b16 %v5069, %v5069
      %v5134 = vpack.c.b16 %v5070, %v5070
      %v5135 = vpack.c.b16 %v5071, %v5071
      %v5136 = vpack.c.b16 %v5072, %v5072
      %v5137 = vpack.c.b16 %v5073, %v5073
      %v5138 = vpack.c.b16 %v5074, %v5074
      %v5139 = vpack.c.b16 %v5075, %v5075
      %v5140 = vpack.c.b16 %v5076, %v5076
      %v5141 = vpack.c.b16 %v5077, %v5077
      %v5142 = vpack.c.b16 %v5078, %v5078
      %v5143 = vpack.c.b16 %v5079, %v5079
      %v5144 = vpack.c.b16 %v5080, %v5080
      %v5145 = vpack.c.b16 %v5081, %v5081
      %v5146 = vpack.c.b16 %v5082, %v5082
      %v5147 = vpack.c.b16 %v5083, %v5083
      %v5148 = vpack.c.b16 %v5084, %v5084
      %v5149 = vpack.c.b16 %v5085, %v5085
      %v5150 = vpack.c.b16 %v5086, %v5086
      %v5151 = vpack.c.b16 %v5087, %v5087
      %v5152 = vpack.c.b16 %v5088, %v5088
      %v5153 = vpack.c.b16 %v5089, %v5089
      %v5154 = vpack.c.b16 %v5090, %v5090
      %v5155 = vpack.c.b16 %v5091, %v5091
      %v5156 = vpack.c.b16 %v5092, %v5092
      %v5157 = vpack.c.b16 %v5093, %v5093
      %v5158 = vpack.c.b16 %v5094, %v5094
      %v5159 = vpack.c.b16 %v5095, %v5095
      %v5160 = vpack.c.b16 %v5096, %v5096
      %v5162 = vshrl.u32 %v5097, 16
      %v5164 = vrot.slane %v5162, 4
      %v5165 = vshll.u32 %v5097, 16
      %v5167 = vrot.slane %v5165, 5
      %v5168 = vor.u32 %v5164, %v5167
      %v5169 = vrot.slane %v5168, 4
      %v5171 = vshll.u32 %v5098, 16
      %v5173 = vrot.slane %v5171, 5
      %v5174 = vsel %vm3511, %v5169, %v5173
      %v5176 = vshrl.u32 %v5099, 16
      %v5178 = vrot.slane %v5176, 4
      %v5179 = vshll.u32 %v5099, 16
      %v5181 = vrot.slane %v5179, 5
      %v5182 = vor.u32 %v5178, %v5181
      %v5183 = vrot.slane %v5182, 4
      %v5185 = vshll.u32 %v5100, 16
      %v5187 = vrot.slane %v5185, 5
      %v5188 = vsel %vm3511, %v5183, %v5187
      %v5190 = vshrl.u32 %v5101, 16
      %v5192 = vrot.slane %v5190, 4
      %v5193 = vshll.u32 %v5101, 16
      %v5195 = vrot.slane %v5193, 5
      %v5196 = vor.u32 %v5192, %v5195
      %v5197 = vrot.slane %v5196, 4
      %v5199 = vshll.u32 %v5102, 16
      %v5201 = vrot.slane %v5199, 5
      %v5202 = vsel %vm3511, %v5197, %v5201
      %v5204 = vshrl.u32 %v5103, 16
      %v5206 = vrot.slane %v5204, 4
      %v5207 = vshll.u32 %v5103, 16
      %v5209 = vrot.slane %v5207, 5
      %v5210 = vor.u32 %v5206, %v5209
      %v5211 = vrot.slane %v5210, 4
      %v5213 = vshll.u32 %v5104, 16
      %v5215 = vrot.slane %v5213, 5
      %v5216 = vsel %vm3511, %v5211, %v5215
      %v5218 = vshrl.u32 %v5105, 16
      %v5220 = vrot.slane %v5218, 4
      %v5221 = vshll.u32 %v5105, 16
      %v5223 = vrot.slane %v5221, 5
      %v5224 = vor.u32 %v5220, %v5223
      %v5225 = vrot.slane %v5224, 4
      %v5227 = vshll.u32 %v5106, 16
      %v5229 = vrot.slane %v5227, 5
      %v5230 = vsel %vm3511, %v5225, %v5229
      %v5232 = vshrl.u32 %v5107, 16
      %v5234 = vrot.slane %v5232, 4
      %v5235 = vshll.u32 %v5107, 16
      %v5237 = vrot.slane %v5235, 5
      %v5238 = vor.u32 %v5234, %v5237
      %v5239 = vrot.slane %v5238, 4
      %v5241 = vshll.u32 %v5108, 16
      %v5243 = vrot.slane %v5241, 5
      %v5244 = vsel %vm3511, %v5239, %v5243
      %v5246 = vshrl.u32 %v5109, 16
      %v5248 = vrot.slane %v5246, 4
      %v5249 = vshll.u32 %v5109, 16
      %v5251 = vrot.slane %v5249, 5
      %v5252 = vor.u32 %v5248, %v5251
      %v5253 = vrot.slane %v5252, 4
      %v5255 = vshll.u32 %v5110, 16
      %v5257 = vrot.slane %v5255, 5
      %v5258 = vsel %vm3511, %v5253, %v5257
      %v5260 = vshrl.u32 %v5111, 16
      %v5262 = vrot.slane %v5260, 4
      %v5263 = vshll.u32 %v5111, 16
      %v5265 = vrot.slane %v5263, 5
      %v5266 = vor.u32 %v5262, %v5265
      %v5267 = vrot.slane %v5266, 4
      %v5269 = vshll.u32 %v5112, 16
      %v5271 = vrot.slane %v5269, 5
      %v5272 = vsel %vm3511, %v5267, %v5271
      %v5274 = vshrl.u32 %v5113, 16
      %v5276 = vrot.slane %v5274, 4
      %v5277 = vshll.u32 %v5113, 16
      %v5279 = vrot.slane %v5277, 5
      %v5280 = vor.u32 %v5276, %v5279
      %v5281 = vrot.slane %v5280, 4
      %v5283 = vshll.u32 %v5114, 16
      %v5285 = vrot.slane %v5283, 5
      %v5286 = vsel %vm3511, %v5281, %v5285
      %v5288 = vshrl.u32 %v5115, 16
      %v5290 = vrot.slane %v5288, 4
      %v5291 = vshll.u32 %v5115, 16
      %v5293 = vrot.slane %v5291, 5
      %v5294 = vor.u32 %v5290, %v5293
      %v5295 = vrot.slane %v5294, 4
      %v5297 = vshll.u32 %v5116, 16
      %v5299 = vrot.slane %v5297, 5
      %v5300 = vsel %vm3511, %v5295, %v5299
      %v5302 = vshrl.u32 %v5117, 16
      %v5304 = vrot.slane %v5302, 4
      %v5305 = vshll.u32 %v5117, 16
      %v5307 = vrot.slane %v5305, 5
      %v5308 = vor.u32 %v5304, %v5307
      %v5309 = vrot.slane %v5308, 4
      %v5311 = vshll.u32 %v5118, 16
      %v5313 = vrot.slane %v5311, 5
      %v5314 = vsel %vm3511, %v5309, %v5313
      %v5316 = vshrl.u32 %v5119, 16
      %v5318 = vrot.slane %v5316, 4
      %v5319 = vshll.u32 %v5119, 16
      %v5321 = vrot.slane %v5319, 5
      %v5322 = vor.u32 %v5318, %v5321
      %v5323 = vrot.slane %v5322, 4
      %v5325 = vshll.u32 %v5120, 16
      %v5327 = vrot.slane %v5325, 5
      %v5328 = vsel %vm3511, %v5323, %v5327
      %v5330 = vshrl.u32 %v5121, 16
      %v5332 = vrot.slane %v5330, 4
      %v5333 = vshll.u32 %v5121, 16
      %v5335 = vrot.slane %v5333, 5
      %v5336 = vor.u32 %v5332, %v5335
      %v5337 = vrot.slane %v5336, 4
      %v5339 = vshll.u32 %v5122, 16
      %v5341 = vrot.slane %v5339, 5
      %v5342 = vsel %vm3511, %v5337, %v5341
      %v5344 = vshrl.u32 %v5123, 16
      %v5346 = vrot.slane %v5344, 4
      %v5347 = vshll.u32 %v5123, 16
      %v5349 = vrot.slane %v5347, 5
      %v5350 = vor.u32 %v5346, %v5349
      %v5351 = vrot.slane %v5350, 4
      %v5353 = vshll.u32 %v5124, 16
      %v5355 = vrot.slane %v5353, 5
      %v5356 = vsel %vm3511, %v5351, %v5355
      %v5358 = vshrl.u32 %v5125, 16
      %v5360 = vrot.slane %v5358, 4
      %v5361 = vshll.u32 %v5125, 16
      %v5363 = vrot.slane %v5361, 5
      %v5364 = vor.u32 %v5360, %v5363
      %v5365 = vrot.slane %v5364, 4
      %v5367 = vshll.u32 %v5126, 16
      %v5369 = vrot.slane %v5367, 5
      %v5370 = vsel %vm3511, %v5365, %v5369
      %v5372 = vshrl.u32 %v5127, 16
      %v5374 = vrot.slane %v5372, 4
      %v5375 = vshll.u32 %v5127, 16
      %v5377 = vrot.slane %v5375, 5
      %v5378 = vor.u32 %v5374, %v5377
      %v5379 = vrot.slane %v5378, 4
      %v5381 = vshll.u32 %v5128, 16
      %v5383 = vrot.slane %v5381, 5
      %v5384 = vsel %vm3511, %v5379, %v5383
      %v5386 = vshrl.u32 %v5129, 16
      %v5388 = vrot.slane %v5386, 4
      %v5389 = vshll.u32 %v5129, 16
      %v5391 = vrot.slane %v5389, 5
      %v5392 = vor.u32 %v5388, %v5391
      %v5393 = vrot.slane %v5392, 4
      %v5395 = vshll.u32 %v5130, 16
      %v5397 = vrot.slane %v5395, 5
      %v5398 = vsel %vm3511, %v5393, %v5397
      %v5400 = vshrl.u32 %v5131, 16
      %v5402 = vrot.slane %v5400, 4
      %v5403 = vshll.u32 %v5131, 16
      %v5405 = vrot.slane %v5403, 5
      %v5406 = vor.u32 %v5402, %v5405
      %v5407 = vrot.slane %v5406, 4
      %v5409 = vshll.u32 %v5132, 16
      %v5411 = vrot.slane %v5409, 5
      %v5412 = vsel %vm3511, %v5407, %v5411
      %v5414 = vshrl.u32 %v5133, 16
      %v5416 = vrot.slane %v5414, 4
      %v5417 = vshll.u32 %v5133, 16
      %v5419 = vrot.slane %v5417, 5
      %v5420 = vor.u32 %v5416, %v5419
      %v5421 = vrot.slane %v5420, 4
      %v5423 = vshll.u32 %v5134, 16
      %v5425 = vrot.slane %v5423, 5
      %v5426 = vsel %vm3511, %v5421, %v5425
      %v5428 = vshrl.u32 %v5135, 16
      %v5430 = vrot.slane %v5428, 4
      %v5431 = vshll.u32 %v5135, 16
      %v5433 = vrot.slane %v5431, 5
      %v5434 = vor.u32 %v5430, %v5433
      %v5435 = vrot.slane %v5434, 4
      %v5437 = vshll.u32 %v5136, 16
      %v5439 = vrot.slane %v5437, 5
      %v5440 = vsel %vm3511, %v5435, %v5439
      %v5442 = vshrl.u32 %v5137, 16
      %v5444 = vrot.slane %v5442, 4
      %v5445 = vshll.u32 %v5137, 16
      %v5447 = vrot.slane %v5445, 5
      %v5448 = vor.u32 %v5444, %v5447
      %v5449 = vrot.slane %v5448, 4
      %v5451 = vshll.u32 %v5138, 16
      %v5453 = vrot.slane %v5451, 5
      %v5454 = vsel %vm3511, %v5449, %v5453
      %v5456 = vshrl.u32 %v5139, 16
      %v5458 = vrot.slane %v5456, 4
      %v5459 = vshll.u32 %v5139, 16
      %v5461 = vrot.slane %v5459, 5
      %v5462 = vor.u32 %v5458, %v5461
      %v5463 = vrot.slane %v5462, 4
      %v5465 = vshll.u32 %v5140, 16
      %v5467 = vrot.slane %v5465, 5
      %v5468 = vsel %vm3511, %v5463, %v5467
      %v5470 = vshrl.u32 %v5141, 16
      %v5472 = vrot.slane %v5470, 4
      %v5473 = vshll.u32 %v5141, 16
      %v5475 = vrot.slane %v5473, 5
      %v5476 = vor.u32 %v5472, %v5475
      %v5477 = vrot.slane %v5476, 4
      %v5479 = vshll.u32 %v5142, 16
      %v5481 = vrot.slane %v5479, 5
      %v5482 = vsel %vm3511, %v5477, %v5481
      %v5484 = vshrl.u32 %v5143, 16
      %v5486 = vrot.slane %v5484, 4
      %v5487 = vshll.u32 %v5143, 16
      %v5489 = vrot.slane %v5487, 5
      %v5490 = vor.u32 %v5486, %v5489
      %v5491 = vrot.slane %v5490, 4
      %v5493 = vshll.u32 %v5144, 16
      %v5495 = vrot.slane %v5493, 5
      %v5496 = vsel %vm3511, %v5491, %v5495
      %v5498 = vshrl.u32 %v5145, 16
      %v5500 = vrot.slane %v5498, 4
      %v5501 = vshll.u32 %v5145, 16
      %v5503 = vrot.slane %v5501, 5
      %v5504 = vor.u32 %v5500, %v5503
      %v5505 = vrot.slane %v5504, 4
      %v5507 = vshll.u32 %v5146, 16
      %v5509 = vrot.slane %v5507, 5
      %v5510 = vsel %vm3511, %v5505, %v5509
      %v5512 = vshrl.u32 %v5147, 16
      %v5514 = vrot.slane %v5512, 4
      %v5515 = vshll.u32 %v5147, 16
      %v5517 = vrot.slane %v5515, 5
      %v5518 = vor.u32 %v5514, %v5517
      %v5519 = vrot.slane %v5518, 4
      %v5521 = vshll.u32 %v5148, 16
      %v5523 = vrot.slane %v5521, 5
      %v5524 = vsel %vm3511, %v5519, %v5523
      %v5526 = vshrl.u32 %v5149, 16
      %v5528 = vrot.slane %v5526, 4
      %v5529 = vshll.u32 %v5149, 16
      %v5531 = vrot.slane %v5529, 5
      %v5532 = vor.u32 %v5528, %v5531
      %v5533 = vrot.slane %v5532, 4
      %v5535 = vshll.u32 %v5150, 16
      %v5537 = vrot.slane %v5535, 5
      %v5538 = vsel %vm3511, %v5533, %v5537
      %v5540 = vshrl.u32 %v5151, 16
      %v5542 = vrot.slane %v5540, 4
      %v5543 = vshll.u32 %v5151, 16
      %v5545 = vrot.slane %v5543, 5
      %v5546 = vor.u32 %v5542, %v5545
      %v5547 = vrot.slane %v5546, 4
      %v5549 = vshll.u32 %v5152, 16
      %v5551 = vrot.slane %v5549, 5
      %v5552 = vsel %vm3511, %v5547, %v5551
      %v5554 = vshrl.u32 %v5153, 16
      %v5556 = vrot.slane %v5554, 4
      %v5557 = vshll.u32 %v5153, 16
      %v5559 = vrot.slane %v5557, 5
      %v5560 = vor.u32 %v5556, %v5559
      %v5561 = vrot.slane %v5560, 4
      %v5563 = vshll.u32 %v5154, 16
      %v5565 = vrot.slane %v5563, 5
      %v5566 = vsel %vm3511, %v5561, %v5565
      %v5568 = vshrl.u32 %v5155, 16
      %v5570 = vrot.slane %v5568, 4
      %v5571 = vshll.u32 %v5155, 16
      %v5573 = vrot.slane %v5571, 5
      %v5574 = vor.u32 %v5570, %v5573
      %v5575 = vrot.slane %v5574, 4
      %v5577 = vshll.u32 %v5156, 16
      %v5579 = vrot.slane %v5577, 5
      %v5580 = vsel %vm3511, %v5575, %v5579
      %v5582 = vshrl.u32 %v5157, 16
      %v5584 = vrot.slane %v5582, 4
      %v5585 = vshll.u32 %v5157, 16
      %v5587 = vrot.slane %v5585, 5
      %v5588 = vor.u32 %v5584, %v5587
      %v5589 = vrot.slane %v5588, 4
      %v5591 = vshll.u32 %v5158, 16
      %v5593 = vrot.slane %v5591, 5
      %v5594 = vsel %vm3511, %v5589, %v5593
      %v5596 = vshrl.u32 %v5159, 16
      %v5598 = vrot.slane %v5596, 4
      %v5599 = vshll.u32 %v5159, 16
      %v5601 = vrot.slane %v5599, 5
      %v5602 = vor.u32 %v5598, %v5601
      %v5603 = vrot.slane %v5602, 4
      %v5605 = vshll.u32 %v5160, 16
      %v5607 = vrot.slane %v5605, 5
      %v5608 = vsel %vm3511, %v5603, %v5607
      %v5609 = vunpack.c.l.b16 %v5174
      %v5610 = vunpack.c.l.b16 %v5188
      %v5611 = vunpack.c.l.b16 %v5202
      %v5612 = vunpack.c.l.b16 %v5216
      %v5613 = vunpack.c.l.b16 %v5230
      %v5614 = vunpack.c.l.b16 %v5244
      %v5615 = vunpack.c.l.b16 %v5258
      %v5616 = vunpack.c.l.b16 %v5272
      %v5617 = vunpack.c.l.b16 %v5286
      %v5618 = vunpack.c.l.b16 %v5300
      %v5619 = vunpack.c.l.b16 %v5314
      %v5620 = vunpack.c.l.b16 %v5328
      %v5621 = vunpack.c.l.b16 %v5342
      %v5622 = vunpack.c.l.b16 %v5356
      %v5623 = vunpack.c.l.b16 %v5370
      %v5624 = vunpack.c.l.b16 %v5384
      %v5625 = vunpack.c.l.b16 %v5398
      %v5626 = vunpack.c.l.b16 %v5412
      %v5627 = vunpack.c.l.b16 %v5426
      %v5628 = vunpack.c.l.b16 %v5440
      %v5629 = vunpack.c.l.b16 %v5454
      %v5630 = vunpack.c.l.b16 %v5468
      %v5631 = vunpack.c.l.b16 %v5482
      %v5632 = vunpack.c.l.b16 %v5496
      %v5633 = vunpack.c.l.b16 %v5510
      %v5634 = vunpack.c.l.b16 %v5524
      %v5635 = vunpack.c.l.b16 %v5538
      %v5636 = vunpack.c.l.b16 %v5552
      %v5637 = vunpack.c.l.b16 %v5566
      %v5638 = vunpack.c.l.b16 %v5580
      %v5639 = vunpack.c.l.b16 %v5594
      %v5640 = vunpack.c.l.b16 %v5608
      %v5641 = vpack.c.b16 %v5610, %v5609
      %v5642 = vpack.c.b16 %v5612, %v5611
      %v5643 = vpack.c.b16 %v5614, %v5613
      %v5644 = vpack.c.b16 %v5616, %v5615
      %v5645 = vpack.c.b16 %v5618, %v5617
      %v5646 = vpack.c.b16 %v5620, %v5619
      %v5647 = vpack.c.b16 %v5622, %v5621
      %v5648 = vpack.c.b16 %v5624, %v5623
      %v5649 = vpack.c.b16 %v5626, %v5625
      %v5650 = vpack.c.b16 %v5628, %v5627
      %v5651 = vpack.c.b16 %v5630, %v5629
      %v5652 = vpack.c.b16 %v5632, %v5631
      %v5653 = vpack.c.b16 %v5634, %v5633
      %v5654 = vpack.c.b16 %v5636, %v5635
      %v5655 = vpack.c.b16 %v5638, %v5637
      %v5656 = vpack.c.b16 %v5640, %v5639
      %5673 = vst.msk [vmem:[#allocation3 + $0x10] sm:$0xff] %vm3023, %v5641
      %5674 = vst.msk [vmem:[#allocation3 + $0x38] sm:$0xff] %vm3023, %v5642
      %5675 = vst.msk [vmem:[#allocation3 + $0x60] sm:$0xff] %vm3023, %v5643
      %5676 = vst.msk [vmem:[#allocation3 + $0x88] sm:$0xff] %vm3023, %v5644
      %5677 = vst.msk [vmem:[#allocation3 + $0xb0] sm:$0xff] %vm3023, %v5645
      %5678 = vst.msk [vmem:[#allocation3 + $0xd8] sm:$0xff] %vm3023, %v5646
      %5679 = vst.msk [vmem:[#allocation3 + $0x100] sm:$0xff] %vm3023, %v5647
      %5680 = vst.msk [vmem:[#allocation3 + $0x128] sm:$0xff] %vm3023, %v5648
      %5681 = vst.msk [vmem:[#allocation3 + $0x150] sm:$0xff] %vm3023, %v5649
      %5682 = vst.msk [vmem:[#allocation3 + $0x178] sm:$0xff] %vm3023, %v5650
      %5683 = vst.msk [vmem:[#allocation3 + $0x1a0] sm:$0xff] %vm3023, %v5651
      %5684 = vst.msk [vmem:[#allocation3 + $0x1c8] sm:$0xff] %vm3023, %v5652
      %5685 = vst.msk [vmem:[#allocation3 + $0x1f0] sm:$0xff] %vm3023, %v5653
      %5686 = vst.msk [vmem:[#allocation3 + $0x218] sm:$0xff] %vm3023, %v5654
      %5687 = vst.msk [vmem:[#allocation3 + $0x240] sm:$0xff] %vm3023, %v5655
      %5688 = vst.msk [vmem:[#allocation3 + $0x268] sm:$0xff] %vm3023, %v5656
      %v5689 = vld [vmem:[%s3106] sm:$0x1f]
      %v5690 = vld [vmem:[%s3106 + $0x8] sm:$0x1f]
      %v5691 = vld [vmem:[%s3106 + $0x10] sm:$0x1f]
      %v5692 = vld [vmem:[%s3106 + $0x18] sm:$0x1f]
      %v5693 = vld [vmem:[%s3106 + $0x20] sm:$0x1f]
      %v5694 = vld [vmem:[%s3106 + $0x28] sm:$0x1f]
      %v5695 = vld [vmem:[%s3106 + $0x30] sm:$0x1f]
      %v5696 = vld [vmem:[%s3106 + $0x38] sm:$0x1f]
      %v5697 = vld [vmem:[%s3106 + $0x120] sm:$0x1f]
      %v5698 = vld [vmem:[%s3106 + $0x128] sm:$0x1f]
      %v5699 = vld [vmem:[%s3106 + $0x130] sm:$0x1f]
      %v5700 = vld [vmem:[%s3106 + $0x138] sm:$0x1f]
      %v5701 = vld [vmem:[%s3106 + $0x140] sm:$0x1f]
      %v5702 = vld [vmem:[%s3106 + $0x148] sm:$0x1f]
      %v5703 = vld [vmem:[%s3106 + $0x150] sm:$0x1f]
      %v5704 = vld [vmem:[%s3106 + $0x158] sm:$0x1f]
      %v5705 = vld [vmem:[%s3106 + $0x240] sm:$0x1f]
      %v5706 = vld [vmem:[%s3106 + $0x248] sm:$0x1f]
      %v5707 = vld [vmem:[%s3106 + $0x250] sm:$0x1f]
      %v5708 = vld [vmem:[%s3106 + $0x258] sm:$0x1f]
      %v5709 = vld [vmem:[%s3106 + $0x260] sm:$0x1f]
      %v5710 = vld [vmem:[%s3106 + $0x268] sm:$0x1f]
      %v5711 = vld [vmem:[%s3106 + $0x270] sm:$0x1f]
      %v5712 = vld [vmem:[%s3106 + $0x278] sm:$0x1f]
      %v5713 = vld [vmem:[%s3106 + $0x360] sm:$0x1f]
      %v5714 = vld [vmem:[%s3106 + $0x368] sm:$0x1f]
      %v5715 = vld [vmem:[%s3106 + $0x370] sm:$0x1f]
      %v5716 = vld [vmem:[%s3106 + $0x378] sm:$0x1f]
      %v5717 = vld [vmem:[%s3106 + $0x380] sm:$0x1f]
      %v5718 = vld [vmem:[%s3106 + $0x388] sm:$0x1f]
      %v5719 = vld [vmem:[%s3106 + $0x390] sm:$0x1f]
      %v5720 = vld [vmem:[%s3106 + $0x398] sm:$0x1f]
      %v5753 = vunpack.c.l.b16 %v5689
      %v5754 = vunpack.c.h.b16 %v5689
      %v5755 = vunpack.c.l.b16 %v5690
      %v5756 = vunpack.c.h.b16 %v5690
      %v5757 = vunpack.c.l.b16 %v5691
      %v5758 = vunpack.c.h.b16 %v5691
      %v5759 = vunpack.c.l.b16 %v5692
      %v5760 = vunpack.c.h.b16 %v5692
      %v5761 = vunpack.c.l.b16 %v5693
      %v5762 = vunpack.c.h.b16 %v5693
      %v5763 = vunpack.c.l.b16 %v5694
      %v5764 = vunpack.c.h.b16 %v5694
      %v5765 = vunpack.c.l.b16 %v5695
      %v5766 = vunpack.c.h.b16 %v5695
      %v5767 = vunpack.c.l.b16 %v5696
      %v5768 = vunpack.c.h.b16 %v5696
      %v5769 = vunpack.c.l.b16 %v5697
      %v5770 = vunpack.c.h.b16 %v5697
      %v5771 = vunpack.c.l.b16 %v5698
      %v5772 = vunpack.c.h.b16 %v5698
      %v5773 = vunpack.c.l.b16 %v5699
      %v5774 = vunpack.c.h.b16 %v5699
      %v5775 = vunpack.c.l.b16 %v5700
      %v5776 = vunpack.c.h.b16 %v5700
      %v5777 = vunpack.c.l.b16 %v5701
      %v5778 = vunpack.c.h.b16 %v5701
      %v5779 = vunpack.c.l.b16 %v5702
      %v5780 = vunpack.c.h.b16 %v5702
      %v5781 = vunpack.c.l.b16 %v5703
      %v5782 = vunpack.c.h.b16 %v5703
      %v5783 = vunpack.c.l.b16 %v5704
      %v5784 = vunpack.c.h.b16 %v5704
      %v5785 = vunpack.c.l.b16 %v5705
      %v5786 = vunpack.c.h.b16 %v5705
      %v5787 = vunpack.c.l.b16 %v5706
      %v5788 = vunpack.c.h.b16 %v5706
      %v5789 = vunpack.c.l.b16 %v5707
      %v5790 = vunpack.c.h.b16 %v5707
      %v5791 = vunpack.c.l.b16 %v5708
      %v5792 = vunpack.c.h.b16 %v5708
      %v5793 = vunpack.c.l.b16 %v5709
      %v5794 = vunpack.c.h.b16 %v5709
      %v5795 = vunpack.c.l.b16 %v5710
      %v5796 = vunpack.c.h.b16 %v5710
      %v5797 = vunpack.c.l.b16 %v5711
      %v5798 = vunpack.c.h.b16 %v5711
      %v5799 = vunpack.c.l.b16 %v5712
      %v5800 = vunpack.c.h.b16 %v5712
      %v5801 = vunpack.c.l.b16 %v5713
      %v5802 = vunpack.c.h.b16 %v5713
      %v5803 = vunpack.c.l.b16 %v5714
      %v5804 = vunpack.c.h.b16 %v5714
      %v5805 = vunpack.c.l.b16 %v5715
      %v5806 = vunpack.c.h.b16 %v5715
      %v5807 = vunpack.c.l.b16 %v5716
      %v5808 = vunpack.c.h.b16 %v5716
      %v5809 = vunpack.c.l.b16 %v5717
      %v5810 = vunpack.c.h.b16 %v5717
      %v5811 = vunpack.c.l.b16 %v5718
      %v5812 = vunpack.c.h.b16 %v5718
      %v5813 = vunpack.c.l.b16 %v5719
      %v5814 = vunpack.c.h.b16 %v5719
      %v5815 = vunpack.c.l.b16 %v5720
      %v5816 = vunpack.c.h.b16 %v5720
      %v5817 = vpack.c.b16 %v5753, %v5753
      %v5818 = vpack.c.b16 %v5754, %v5754
      %v5819 = vpack.c.b16 %v5755, %v5755
      %v5820 = vpack.c.b16 %v5756, %v5756
      %v5821 = vpack.c.b16 %v5757, %v5757
      %v5822 = vpack.c.b16 %v5758, %v5758
      %v5823 = vpack.c.b16 %v5759, %v5759
      %v5824 = vpack.c.b16 %v5760, %v5760
      %v5825 = vpack.c.b16 %v5761, %v5761
      %v5826 = vpack.c.b16 %v5762, %v5762
      %v5827 = vpack.c.b16 %v5763, %v5763
      %v5828 = vpack.c.b16 %v5764, %v5764
      %v5829 = vpack.c.b16 %v5765, %v5765
      %v5830 = vpack.c.b16 %v5766, %v5766
      %v5831 = vpack.c.b16 %v5767, %v5767
      %v5832 = vpack.c.b16 %v5768, %v5768
      %v5833 = vpack.c.b16 %v5769, %v5769
      %v5834 = vpack.c.b16 %v5770, %v5770
      %v5835 = vpack.c.b16 %v5771, %v5771
      %v5836 = vpack.c.b16 %v5772, %v5772
      %v5837 = vpack.c.b16 %v5773, %v5773
      %v5838 = vpack.c.b16 %v5774, %v5774
      %v5839 = vpack.c.b16 %v5775, %v5775
      %v5840 = vpack.c.b16 %v5776, %v5776
      %v5841 = vpack.c.b16 %v5777, %v5777
      %v5842 = vpack.c.b16 %v5778, %v5778
      %v5843 = vpack.c.b16 %v5779, %v5779
      %v5844 = vpack.c.b16 %v5780, %v5780
      %v5845 = vpack.c.b16 %v5781, %v5781
      %v5846 = vpack.c.b16 %v5782, %v5782
      %v5847 = vpack.c.b16 %v5783, %v5783
      %v5848 = vpack.c.b16 %v5784, %v5784
      %v5849 = vpack.c.b16 %v5785, %v5785
      %v5850 = vpack.c.b16 %v5786, %v5786
      %v5851 = vpack.c.b16 %v5787, %v5787
      %v5852 = vpack.c.b16 %v5788, %v5788
      %v5853 = vpack.c.b16 %v5789, %v5789
      %v5854 = vpack.c.b16 %v5790, %v5790
      %v5855 = vpack.c.b16 %v5791, %v5791
      %v5856 = vpack.c.b16 %v5792, %v5792
      %v5857 = vpack.c.b16 %v5793, %v5793
      %v5858 = vpack.c.b16 %v5794, %v5794
      %v5859 = vpack.c.b16 %v5795, %v5795
      %v5860 = vpack.c.b16 %v5796, %v5796
      %v5861 = vpack.c.b16 %v5797, %v5797
      %v5862 = vpack.c.b16 %v5798, %v5798
      %v5863 = vpack.c.b16 %v5799, %v5799
      %v5864 = vpack.c.b16 %v5800, %v5800
      %v5865 = vpack.c.b16 %v5801, %v5801
      %v5866 = vpack.c.b16 %v5802, %v5802
      %v5867 = vpack.c.b16 %v5803, %v5803
      %v5868 = vpack.c.b16 %v5804, %v5804
      %v5869 = vpack.c.b16 %v5805, %v5805
      %v5870 = vpack.c.b16 %v5806, %v5806
      %v5871 = vpack.c.b16 %v5807, %v5807
      %v5872 = vpack.c.b16 %v5808, %v5808
      %v5873 = vpack.c.b16 %v5809, %v5809
      %v5874 = vpack.c.b16 %v5810, %v5810
      %v5875 = vpack.c.b16 %v5811, %v5811
      %v5876 = vpack.c.b16 %v5812, %v5812
      %v5877 = vpack.c.b16 %v5813, %v5813
      %v5878 = vpack.c.b16 %v5814, %v5814
      %v5879 = vpack.c.b16 %v5815, %v5815
      %v5880 = vpack.c.b16 %v5816, %v5816
      %v5882 = vshrl.u32 %v5817, 16
      %v5884 = vrot.slane %v5882, 4
      %v5885 = vshll.u32 %v5817, 16
      %v5887 = vrot.slane %v5885, 5
      %v5888 = vor.u32 %v5884, %v5887
      %v5889 = vrot.slane %v5888, 4
      %v5891 = vshll.u32 %v5818, 16
      %v5893 = vrot.slane %v5891, 5
      %v5894 = vsel %vm3511, %v5889, %v5893
      %v5896 = vshrl.u32 %v5819, 16
      %v5898 = vrot.slane %v5896, 4
      %v5899 = vshll.u32 %v5819, 16
      %v5901 = vrot.slane %v5899, 5
      %v5902 = vor.u32 %v5898, %v5901
      %v5903 = vrot.slane %v5902, 4
      %v5905 = vshll.u32 %v5820, 16
      %v5907 = vrot.slane %v5905, 5
      %v5908 = vsel %vm3511, %v5903, %v5907
      %v5910 = vshrl.u32 %v5821, 16
      %v5912 = vrot.slane %v5910, 4
      %v5913 = vshll.u32 %v5821, 16
      %v5915 = vrot.slane %v5913, 5
      %v5916 = vor.u32 %v5912, %v5915
      %v5917 = vrot.slane %v5916, 4
      %v5919 = vshll.u32 %v5822, 16
      %v5921 = vrot.slane %v5919, 5
      %v5922 = vsel %vm3511, %v5917, %v5921
      %v5924 = vshrl.u32 %v5823, 16
      %v5926 = vrot.slane %v5924, 4
      %v5927 = vshll.u32 %v5823, 16
      %v5929 = vrot.slane %v5927, 5
      %v5930 = vor.u32 %v5926, %v5929
      %v5931 = vrot.slane %v5930, 4
      %v5933 = vshll.u32 %v5824, 16
      %v5935 = vrot.slane %v5933, 5
      %v5936 = vsel %vm3511, %v5931, %v5935
      %v5938 = vshrl.u32 %v5825, 16
      %v5940 = vrot.slane %v5938, 4
      %v5941 = vshll.u32 %v5825, 16
      %v5943 = vrot.slane %v5941, 5
      %v5944 = vor.u32 %v5940, %v5943
      %v5945 = vrot.slane %v5944, 4
      %v5947 = vshll.u32 %v5826, 16
      %v5949 = vrot.slane %v5947, 5
      %v5950 = vsel %vm3511, %v5945, %v5949
      %v5952 = vshrl.u32 %v5827, 16
      %v5954 = vrot.slane %v5952, 4
      %v5955 = vshll.u32 %v5827, 16
      %v5957 = vrot.slane %v5955, 5
      %v5958 = vor.u32 %v5954, %v5957
      %v5959 = vrot.slane %v5958, 4
      %v5961 = vshll.u32 %v5828, 16
      %v5963 = vrot.slane %v5961, 5
      %v5964 = vsel %vm3511, %v5959, %v5963
      %v5966 = vshrl.u32 %v5829, 16
      %v5968 = vrot.slane %v5966, 4
      %v5969 = vshll.u32 %v5829, 16
      %v5971 = vrot.slane %v5969, 5
      %v5972 = vor.u32 %v5968, %v5971
      %v5973 = vrot.slane %v5972, 4
      %v5975 = vshll.u32 %v5830, 16
      %v5977 = vrot.slane %v5975, 5
      %v5978 = vsel %vm3511, %v5973, %v5977
      %v5980 = vshrl.u32 %v5831, 16
      %v5982 = vrot.slane %v5980, 4
      %v5983 = vshll.u32 %v5831, 16
      %v5985 = vrot.slane %v5983, 5
      %v5986 = vor.u32 %v5982, %v5985
      %v5987 = vrot.slane %v5986, 4
      %v5989 = vshll.u32 %v5832, 16
      %v5991 = vrot.slane %v5989, 5
      %v5992 = vsel %vm3511, %v5987, %v5991
      %v5994 = vshrl.u32 %v5833, 16
      %v5996 = vrot.slane %v5994, 4
      %v5997 = vshll.u32 %v5833, 16
      %v5999 = vrot.slane %v5997, 5
      %v6000 = vor.u32 %v5996, %v5999
      %v6001 = vrot.slane %v6000, 4
      %v6003 = vshll.u32 %v5834, 16
      %v6005 = vrot.slane %v6003, 5
      %v6006 = vsel %vm3511, %v6001, %v6005
      %v6008 = vshrl.u32 %v5835, 16
      %v6010 = vrot.slane %v6008, 4
      %v6011 = vshll.u32 %v5835, 16
      %v6013 = vrot.slane %v6011, 5
      %v6014 = vor.u32 %v6010, %v6013
      %v6015 = vrot.slane %v6014, 4
      %v6017 = vshll.u32 %v5836, 16
      %v6019 = vrot.slane %v6017, 5
      %v6020 = vsel %vm3511, %v6015, %v6019
      %v6022 = vshrl.u32 %v5837, 16
      %v6024 = vrot.slane %v6022, 4
      %v6025 = vshll.u32 %v5837, 16
      %v6027 = vrot.slane %v6025, 5
      %v6028 = vor.u32 %v6024, %v6027
      %v6029 = vrot.slane %v6028, 4
      %v6031 = vshll.u32 %v5838, 16
      %v6033 = vrot.slane %v6031, 5
      %v6034 = vsel %vm3511, %v6029, %v6033
      %v6036 = vshrl.u32 %v5839, 16
      %v6038 = vrot.slane %v6036, 4
      %v6039 = vshll.u32 %v5839, 16
      %v6041 = vrot.slane %v6039, 5
      %v6042 = vor.u32 %v6038, %v6041
      %v6043 = vrot.slane %v6042, 4
      %v6045 = vshll.u32 %v5840, 16
      %v6047 = vrot.slane %v6045, 5
      %v6048 = vsel %vm3511, %v6043, %v6047
      %v6050 = vshrl.u32 %v5841, 16
      %v6052 = vrot.slane %v6050, 4
      %v6053 = vshll.u32 %v5841, 16
      %v6055 = vrot.slane %v6053, 5
      %v6056 = vor.u32 %v6052, %v6055
      %v6057 = vrot.slane %v6056, 4
      %v6059 = vshll.u32 %v5842, 16
      %v6061 = vrot.slane %v6059, 5
      %v6062 = vsel %vm3511, %v6057, %v6061
      %v6064 = vshrl.u32 %v5843, 16
      %v6066 = vrot.slane %v6064, 4
      %v6067 = vshll.u32 %v5843, 16
      %v6069 = vrot.slane %v6067, 5
      %v6070 = vor.u32 %v6066, %v6069
      %v6071 = vrot.slane %v6070, 4
      %v6073 = vshll.u32 %v5844, 16
      %v6075 = vrot.slane %v6073, 5
      %v6076 = vsel %vm3511, %v6071, %v6075
      %v6078 = vshrl.u32 %v5845, 16
      %v6080 = vrot.slane %v6078, 4
      %v6081 = vshll.u32 %v5845, 16
      %v6083 = vrot.slane %v6081, 5
      %v6084 = vor.u32 %v6080, %v6083
      %v6085 = vrot.slane %v6084, 4
      %v6087 = vshll.u32 %v5846, 16
      %v6089 = vrot.slane %v6087, 5
      %v6090 = vsel %vm3511, %v6085, %v6089
      %v6092 = vshrl.u32 %v5847, 16
      %v6094 = vrot.slane %v6092, 4
      %v6095 = vshll.u32 %v5847, 16
      %v6097 = vrot.slane %v6095, 5
      %v6098 = vor.u32 %v6094, %v6097
      %v6099 = vrot.slane %v6098, 4
      %v6101 = vshll.u32 %v5848, 16
      %v6103 = vrot.slane %v6101, 5
      %v6104 = vsel %vm3511, %v6099, %v6103
      %v6106 = vshrl.u32 %v5849, 16
      %v6108 = vrot.slane %v6106, 4
      %v6109 = vshll.u32 %v5849, 16
      %v6111 = vrot.slane %v6109, 5
      %v6112 = vor.u32 %v6108, %v6111
      %v6113 = vrot.slane %v6112, 4
      %v6115 = vshll.u32 %v5850, 16
      %v6117 = vrot.slane %v6115, 5
      %v6118 = vsel %vm3511, %v6113, %v6117
      %v6120 = vshrl.u32 %v5851, 16
      %v6122 = vrot.slane %v6120, 4
      %v6123 = vshll.u32 %v5851, 16
      %v6125 = vrot.slane %v6123, 5
      %v6126 = vor.u32 %v6122, %v6125
      %v6127 = vrot.slane %v6126, 4
      %v6129 = vshll.u32 %v5852, 16
      %v6131 = vrot.slane %v6129, 5
      %v6132 = vsel %vm3511, %v6127, %v6131
      %v6134 = vshrl.u32 %v5853, 16
      %v6136 = vrot.slane %v6134, 4
      %v6137 = vshll.u32 %v5853, 16
      %v6139 = vrot.slane %v6137, 5
      %v6140 = vor.u32 %v6136, %v6139
      %v6141 = vrot.slane %v6140, 4
      %v6143 = vshll.u32 %v5854, 16
      %v6145 = vrot.slane %v6143, 5
      %v6146 = vsel %vm3511, %v6141, %v6145
      %v6148 = vshrl.u32 %v5855, 16
      %v6150 = vrot.slane %v6148, 4
      %v6151 = vshll.u32 %v5855, 16
      %v6153 = vrot.slane %v6151, 5
      %v6154 = vor.u32 %v6150, %v6153
      %v6155 = vrot.slane %v6154, 4
      %v6157 = vshll.u32 %v5856, 16
      %v6159 = vrot.slane %v6157, 5
      %v6160 = vsel %vm3511, %v6155, %v6159
      %v6162 = vshrl.u32 %v5857, 16
      %v6164 = vrot.slane %v6162, 4
      %v6165 = vshll.u32 %v5857, 16
      %v6167 = vrot.slane %v6165, 5
      %v6168 = vor.u32 %v6164, %v6167
      %v6169 = vrot.slane %v6168, 4
      %v6171 = vshll.u32 %v5858, 16
      %v6173 = vrot.slane %v6171, 5
      %v6174 = vsel %vm3511, %v6169, %v6173
      %v6176 = vshrl.u32 %v5859, 16
      %v6178 = vrot.slane %v6176, 4
      %v6179 = vshll.u32 %v5859, 16
      %v6181 = vrot.slane %v6179, 5
      %v6182 = vor.u32 %v6178, %v6181
      %v6183 = vrot.slane %v6182, 4
      %v6185 = vshll.u32 %v5860, 16
      %v6187 = vrot.slane %v6185, 5
      %v6188 = vsel %vm3511, %v6183, %v6187
      %v6190 = vshrl.u32 %v5861, 16
      %v6192 = vrot.slane %v6190, 4
      %v6193 = vshll.u32 %v5861, 16
      %v6195 = vrot.slane %v6193, 5
      %v6196 = vor.u32 %v6192, %v6195
      %v6197 = vrot.slane %v6196, 4
      %v6199 = vshll.u32 %v5862, 16
      %v6201 = vrot.slane %v6199, 5
      %v6202 = vsel %vm3511, %v6197, %v6201
      %v6204 = vshrl.u32 %v5863, 16
      %v6206 = vrot.slane %v6204, 4
      %v6207 = vshll.u32 %v5863, 16
      %v6209 = vrot.slane %v6207, 5
      %v6210 = vor.u32 %v6206, %v6209
      %v6211 = vrot.slane %v6210, 4
      %v6213 = vshll.u32 %v5864, 16
      %v6215 = vrot.slane %v6213, 5
      %v6216 = vsel %vm3511, %v6211, %v6215
      %v6218 = vshrl.u32 %v5865, 16
      %v6220 = vrot.slane %v6218, 4
      %v6221 = vshll.u32 %v5865, 16
      %v6223 = vrot.slane %v6221, 5
      %v6224 = vor.u32 %v6220, %v6223
      %v6225 = vrot.slane %v6224, 4
      %v6227 = vshll.u32 %v5866, 16
      %v6229 = vrot.slane %v6227, 5
      %v6230 = vsel %vm3511, %v6225, %v6229
      %v6232 = vshrl.u32 %v5867, 16
      %v6234 = vrot.slane %v6232, 4
      %v6235 = vshll.u32 %v5867, 16
      %v6237 = vrot.slane %v6235, 5
      %v6238 = vor.u32 %v6234, %v6237
      %v6239 = vrot.slane %v6238, 4
      %v6241 = vshll.u32 %v5868, 16
      %v6243 = vrot.slane %v6241, 5
      %v6244 = vsel %vm3511, %v6239, %v6243
      %v6246 = vshrl.u32 %v5869, 16
      %v6248 = vrot.slane %v6246, 4
      %v6249 = vshll.u32 %v5869, 16
      %v6251 = vrot.slane %v6249, 5
      %v6252 = vor.u32 %v6248, %v6251
      %v6253 = vrot.slane %v6252, 4
      %v6255 = vshll.u32 %v5870, 16
      %v6257 = vrot.slane %v6255, 5
      %v6258 = vsel %vm3511, %v6253, %v6257
      %v6260 = vshrl.u32 %v5871, 16
      %v6262 = vrot.slane %v6260, 4
      %v6263 = vshll.u32 %v5871, 16
      %v6265 = vrot.slane %v6263, 5
      %v6266 = vor.u32 %v6262, %v6265
      %v6267 = vrot.slane %v6266, 4
      %v6269 = vshll.u32 %v5872, 16
      %v6271 = vrot.slane %v6269, 5
      %v6272 = vsel %vm3511, %v6267, %v6271
      %v6274 = vshrl.u32 %v5873, 16
      %v6276 = vrot.slane %v6274, 4
      %v6277 = vshll.u32 %v5873, 16
      %v6279 = vrot.slane %v6277, 5
      %v6280 = vor.u32 %v6276, %v6279
      %v6281 = vrot.slane %v6280, 4
      %v6283 = vshll.u32 %v5874, 16
      %v6285 = vrot.slane %v6283, 5
      %v6286 = vsel %vm3511, %v6281, %v6285
      %v6288 = vshrl.u32 %v5875, 16
      %v6290 = vrot.slane %v6288, 4
      %v6291 = vshll.u32 %v5875, 16
      %v6293 = vrot.slane %v6291, 5
      %v6294 = vor.u32 %v6290, %v6293
      %v6295 = vrot.slane %v6294, 4
      %v6297 = vshll.u32 %v5876, 16
      %v6299 = vrot.slane %v6297, 5
      %v6300 = vsel %vm3511, %v6295, %v6299
      %v6302 = vshrl.u32 %v5877, 16
      %v6304 = vrot.slane %v6302, 4
      %v6305 = vshll.u32 %v5877, 16
      %v6307 = vrot.slane %v6305, 5
      %v6308 = vor.u32 %v6304, %v6307
      %v6309 = vrot.slane %v6308, 4
      %v6311 = vshll.u32 %v5878, 16
      %v6313 = vrot.slane %v6311, 5
      %v6314 = vsel %vm3511, %v6309, %v6313
      %v6316 = vshrl.u32 %v5879, 16
      %v6318 = vrot.slane %v6316, 4
      %v6319 = vshll.u32 %v5879, 16
      %v6321 = vrot.slane %v6319, 5
      %v6322 = vor.u32 %v6318, %v6321
      %v6323 = vrot.slane %v6322, 4
      %v6325 = vshll.u32 %v5880, 16
      %v6327 = vrot.slane %v6325, 5
      %v6328 = vsel %vm3511, %v6323, %v6327
      %v6329 = vunpack.c.l.b16 %v5894
      %v6330 = vunpack.c.l.b16 %v5908
      %v6331 = vunpack.c.l.b16 %v5922
      %v6332 = vunpack.c.l.b16 %v5936
      %v6333 = vunpack.c.l.b16 %v5950
      %v6334 = vunpack.c.l.b16 %v5964
      %v6335 = vunpack.c.l.b16 %v5978
      %v6336 = vunpack.c.l.b16 %v5992
      %v6337 = vunpack.c.l.b16 %v6006
      %v6338 = vunpack.c.l.b16 %v6020
      %v6339 = vunpack.c.l.b16 %v6034
      %v6340 = vunpack.c.l.b16 %v6048
      %v6341 = vunpack.c.l.b16 %v6062
      %v6342 = vunpack.c.l.b16 %v6076
      %v6343 = vunpack.c.l.b16 %v6090
      %v6344 = vunpack.c.l.b16 %v6104
      %v6345 = vunpack.c.l.b16 %v6118
      %v6346 = vunpack.c.l.b16 %v6132
      %v6347 = vunpack.c.l.b16 %v6146
      %v6348 = vunpack.c.l.b16 %v6160
      %v6349 = vunpack.c.l.b16 %v6174
      %v6350 = vunpack.c.l.b16 %v6188
      %v6351 = vunpack.c.l.b16 %v6202
      %v6352 = vunpack.c.l.b16 %v6216
      %v6353 = vunpack.c.l.b16 %v6230
      %v6354 = vunpack.c.l.b16 %v6244
      %v6355 = vunpack.c.l.b16 %v6258
      %v6356 = vunpack.c.l.b16 %v6272
      %v6357 = vunpack.c.l.b16 %v6286
      %v6358 = vunpack.c.l.b16 %v6300
      %v6359 = vunpack.c.l.b16 %v6314
      %v6360 = vunpack.c.l.b16 %v6328
      %v6361 = vpack.c.b16 %v6330, %v6329
      %v6362 = vpack.c.b16 %v6332, %v6331
      %v6363 = vpack.c.b16 %v6334, %v6333
      %v6364 = vpack.c.b16 %v6336, %v6335
      %v6365 = vpack.c.b16 %v6338, %v6337
      %v6366 = vpack.c.b16 %v6340, %v6339
      %v6367 = vpack.c.b16 %v6342, %v6341
      %v6368 = vpack.c.b16 %v6344, %v6343
      %v6369 = vpack.c.b16 %v6346, %v6345
      %v6370 = vpack.c.b16 %v6348, %v6347
      %v6371 = vpack.c.b16 %v6350, %v6349
      %v6372 = vpack.c.b16 %v6352, %v6351
      %v6373 = vpack.c.b16 %v6354, %v6353
      %v6374 = vpack.c.b16 %v6356, %v6355
      %v6375 = vpack.c.b16 %v6358, %v6357
      %v6376 = vpack.c.b16 %v6360, %v6359
      %6377 = vrot.lane.b32.xlu0 %v6361, 64
      %v6378 = vpop.permute.xlu0 %6377
      %6379 = vrot.lane.b32.xlu0 %v6362, 64
      %v6380 = vpop.permute.xlu0 %6379
      %6381 = vrot.lane.b32.xlu0 %v6363, 64
      %v6382 = vpop.permute.xlu0 %6381
      %6383 = vrot.lane.b32.xlu0 %v6364, 64
      %v6384 = vpop.permute.xlu0 %6383
      %6385 = vrot.lane.b32.xlu0 %v6365, 64
      %v6386 = vpop.permute.xlu0 %6385
      %6387 = vrot.lane.b32.xlu0 %v6366, 64
      %v6388 = vpop.permute.xlu0 %6387
      %6389 = vrot.lane.b32.xlu0 %v6367, 64
      %v6390 = vpop.permute.xlu0 %6389
      %6391 = vrot.lane.b32.xlu0 %v6368, 64
      %v6392 = vpop.permute.xlu0 %6391
      %6393 = vrot.lane.b32.xlu0 %v6369, 64
      %v6394 = vpop.permute.xlu0 %6393
      %6395 = vrot.lane.b32.xlu0 %v6370, 64
      %v6396 = vpop.permute.xlu0 %6395
      %6397 = vrot.lane.b32.xlu0 %v6371, 64
      %v6398 = vpop.permute.xlu0 %6397
      %6399 = vrot.lane.b32.xlu0 %v6372, 64
      %v6400 = vpop.permute.xlu0 %6399
      %6401 = vrot.lane.b32.xlu0 %v6373, 64
      %v6402 = vpop.permute.xlu0 %6401
      %6403 = vrot.lane.b32.xlu0 %v6374, 64
      %v6404 = vpop.permute.xlu0 %6403
      %6405 = vrot.lane.b32.xlu0 %v6375, 64
      %v6406 = vpop.permute.xlu0 %6405
      %6407 = vrot.lane.b32.xlu0 %v6376, 64
      %v6408 = vpop.permute.xlu0 %6407
      %6425 = vst.msk [vmem:[#allocation3 + $0x10] sm:$0xff] %vm4056, %v6378
      %6426 = vst.msk [vmem:[#allocation3 + $0x38] sm:$0xff] %vm4056, %v6380
      %6427 = vst.msk [vmem:[#allocation3 + $0x60] sm:$0xff] %vm4056, %v6382
      %6428 = vst.msk [vmem:[#allocation3 + $0x88] sm:$0xff] %vm4056, %v6384
      %6429 = vst.msk [vmem:[#allocation3 + $0xb0] sm:$0xff] %vm4056, %v6386
      %6430 = vst.msk [vmem:[#allocation3 + $0xd8] sm:$0xff] %vm4056, %v6388
      %6431 = vst.msk [vmem:[#allocation3 + $0x100] sm:$0xff] %vm4056, %v6390
      %6432 = vst.msk [vmem:[#allocation3 + $0x128] sm:$0xff] %vm4056, %v6392
      %6433 = vst.msk [vmem:[#allocation3 + $0x150] sm:$0xff] %vm4056, %v6394
      %6434 = vst.msk [vmem:[#allocation3 + $0x178] sm:$0xff] %vm4056, %v6396
      %6435 = vst.msk [vmem:[#allocation3 + $0x1a0] sm:$0xff] %vm4056, %v6398
      %6436 = vst.msk [vmem:[#allocation3 + $0x1c8] sm:$0xff] %vm4056, %v6400
      %6437 = vst.msk [vmem:[#allocation3 + $0x1f0] sm:$0xff] %vm4056, %v6402
      %6438 = vst.msk [vmem:[#allocation3 + $0x218] sm:$0xff] %vm4056, %v6404
      %6439 = vst.msk [vmem:[#allocation3 + $0x240] sm:$0xff] %vm4056, %v6406
      %6440 = vst.msk [vmem:[#allocation3 + $0x268] sm:$0xff] %vm4056, %v6408
      %v6441 = vld [vmem:[%s3040] sm:$0xf]
      %v6442 = vld [vmem:[%s3040 + $0x8] sm:$0xf]
      %v6443 = vld [vmem:[%s3040 + $0x10] sm:$0xf]
      %v6444 = vld [vmem:[%s3040 + $0x18] sm:$0xf]
      %v6445 = vld [vmem:[%s3040 + $0x20] sm:$0xf]
      %v6446 = vld [vmem:[%s3040 + $0x28] sm:$0xf]
      %v6447 = vld [vmem:[%s3040 + $0x30] sm:$0xf]
      %v6448 = vld [vmem:[%s3040 + $0x38] sm:$0xf]
      %v6449 = vld [vmem:[%s3040 + $0x120] sm:$0xf]
      %v6450 = vld [vmem:[%s3040 + $0x128] sm:$0xf]
      %v6451 = vld [vmem:[%s3040 + $0x130] sm:$0xf]
      %v6452 = vld [vmem:[%s3040 + $0x138] sm:$0xf]
      %v6453 = vld [vmem:[%s3040 + $0x140] sm:$0xf]
      %v6454 = vld [vmem:[%s3040 + $0x148] sm:$0xf]
      %v6455 = vld [vmem:[%s3040 + $0x150] sm:$0xf]
      %v6456 = vld [vmem:[%s3040 + $0x158] sm:$0xf]
      %v6457 = vld [vmem:[%s3040 + $0x240] sm:$0xf]
      %v6458 = vld [vmem:[%s3040 + $0x248] sm:$0xf]
      %v6459 = vld [vmem:[%s3040 + $0x250] sm:$0xf]
      %v6460 = vld [vmem:[%s3040 + $0x258] sm:$0xf]
      %v6461 = vld [vmem:[%s3040 + $0x260] sm:$0xf]
      %v6462 = vld [vmem:[%s3040 + $0x268] sm:$0xf]
      %v6463 = vld [vmem:[%s3040 + $0x270] sm:$0xf]
      %v6464 = vld [vmem:[%s3040 + $0x278] sm:$0xf]
      %v6465 = vld [vmem:[%s3040 + $0x360] sm:$0xf]
      %v6466 = vld [vmem:[%s3040 + $0x368] sm:$0xf]
      %v6467 = vld [vmem:[%s3040 + $0x370] sm:$0xf]
      %v6468 = vld [vmem:[%s3040 + $0x378] sm:$0xf]
      %v6469 = vld [vmem:[%s3040 + $0x380] sm:$0xf]
      %v6470 = vld [vmem:[%s3040 + $0x388] sm:$0xf]
      %v6471 = vld [vmem:[%s3040 + $0x390] sm:$0xf]
      %v6472 = vld [vmem:[%s3040 + $0x398] sm:$0xf]
      %v6505 = vunpack.c.l.b16 %v6441
      %v6506 = vunpack.c.l.b16 %v6442
      %v6507 = vunpack.c.l.b16 %v6443
      %v6508 = vunpack.c.l.b16 %v6444
      %v6509 = vunpack.c.l.b16 %v6445
      %v6510 = vunpack.c.l.b16 %v6446
      %v6511 = vunpack.c.l.b16 %v6447
      %v6512 = vunpack.c.l.b16 %v6448
      %v6513 = vunpack.c.l.b16 %v6449
      %v6514 = vunpack.c.l.b16 %v6450
      %v6515 = vunpack.c.l.b16 %v6451
      %v6516 = vunpack.c.l.b16 %v6452
      %v6517 = vunpack.c.l.b16 %v6453
      %v6518 = vunpack.c.l.b16 %v6454
      %v6519 = vunpack.c.l.b16 %v6455
      %v6520 = vunpack.c.l.b16 %v6456
      %v6521 = vunpack.c.l.b16 %v6457
      %v6522 = vunpack.c.l.b16 %v6458
      %v6523 = vunpack.c.l.b16 %v6459
      %v6524 = vunpack.c.l.b16 %v6460
      %v6525 = vunpack.c.l.b16 %v6461
      %v6526 = vunpack.c.l.b16 %v6462
      %v6527 = vunpack.c.l.b16 %v6463
      %v6528 = vunpack.c.l.b16 %v6464
      %v6529 = vunpack.c.l.b16 %v6465
      %v6530 = vunpack.c.l.b16 %v6466
      %v6531 = vunpack.c.l.b16 %v6467
      %v6532 = vunpack.c.l.b16 %v6468
      %v6533 = vunpack.c.l.b16 %v6469
      %v6534 = vunpack.c.l.b16 %v6470
      %v6535 = vunpack.c.l.b16 %v6471
      %v6536 = vunpack.c.l.b16 %v6472
      %v6537 = vpack.c.b16 %v6506, %v6505
      %v6538 = vpack.c.b16 %v6508, %v6507
      %v6539 = vpack.c.b16 %v6510, %v6509
      %v6540 = vpack.c.b16 %v6512, %v6511
      %v6541 = vpack.c.b16 %v6514, %v6513
      %v6542 = vpack.c.b16 %v6516, %v6515
      %v6543 = vpack.c.b16 %v6518, %v6517
      %v6544 = vpack.c.b16 %v6520, %v6519
      %v6545 = vpack.c.b16 %v6522, %v6521
      %v6546 = vpack.c.b16 %v6524, %v6523
      %v6547 = vpack.c.b16 %v6526, %v6525
      %v6548 = vpack.c.b16 %v6528, %v6527
      %v6549 = vpack.c.b16 %v6530, %v6529
      %v6550 = vpack.c.b16 %v6532, %v6531
      %v6551 = vpack.c.b16 %v6534, %v6533
      %v6552 = vpack.c.b16 %v6536, %v6535
      %6569 = vst.msk [vmem:[#allocation3 + $0x18] sm:$0xff] %vm3023, %v6537
      %6570 = vst.msk [vmem:[#allocation3 + $0x40] sm:$0xff] %vm3023, %v6538
      %6571 = vst.msk [vmem:[#allocation3 + $0x68] sm:$0xff] %vm3023, %v6539
      %6572 = vst.msk [vmem:[#allocation3 + $0x90] sm:$0xff] %vm3023, %v6540
      %6573 = vst.msk [vmem:[#allocation3 + $0xb8] sm:$0xff] %vm3023, %v6541
      %6574 = vst.msk [vmem:[#allocation3 + $0xe0] sm:$0xff] %vm3023, %v6542
      %6575 = vst.msk [vmem:[#allocation3 + $0x108] sm:$0xff] %vm3023, %v6543
      %6576 = vst.msk [vmem:[#allocation3 + $0x130] sm:$0xff] %vm3023, %v6544
      %6577 = vst.msk [vmem:[#allocation3 + $0x158] sm:$0xff] %vm3023, %v6545
      %6578 = vst.msk [vmem:[#allocation3 + $0x180] sm:$0xff] %vm3023, %v6546
      %6579 = vst.msk [vmem:[#allocation3 + $0x1a8] sm:$0xff] %vm3023, %v6547
      %6580 = vst.msk [vmem:[#allocation3 + $0x1d0] sm:$0xff] %vm3023, %v6548
      %6581 = vst.msk [vmem:[#allocation3 + $0x1f8] sm:$0xff] %vm3023, %v6549
      %6582 = vst.msk [vmem:[#allocation3 + $0x220] sm:$0xff] %vm3023, %v6550
      %6583 = vst.msk [vmem:[#allocation3 + $0x248] sm:$0xff] %vm3023, %v6551
      %6584 = vst.msk [vmem:[#allocation3 + $0x270] sm:$0xff] %vm3023, %v6552
      %v6585 = vld [vmem:[%s3073] sm:$0x1f]
      %v6586 = vld [vmem:[%s3073 + $0x8] sm:$0x1f]
      %v6587 = vld [vmem:[%s3073 + $0x10] sm:$0x1f]
      %v6588 = vld [vmem:[%s3073 + $0x18] sm:$0x1f]
      %v6589 = vld [vmem:[%s3073 + $0x20] sm:$0x1f]
      %v6590 = vld [vmem:[%s3073 + $0x28] sm:$0x1f]
      %v6591 = vld [vmem:[%s3073 + $0x30] sm:$0x1f]
      %v6592 = vld [vmem:[%s3073 + $0x38] sm:$0x1f]
      %v6593 = vld [vmem:[%s3073 + $0x120] sm:$0x1f]
      %v6594 = vld [vmem:[%s3073 + $0x128] sm:$0x1f]
      %v6595 = vld [vmem:[%s3073 + $0x130] sm:$0x1f]
      %v6596 = vld [vmem:[%s3073 + $0x138] sm:$0x1f]
      %v6597 = vld [vmem:[%s3073 + $0x140] sm:$0x1f]
      %v6598 = vld [vmem:[%s3073 + $0x148] sm:$0x1f]
      %v6599 = vld [vmem:[%s3073 + $0x150] sm:$0x1f]
      %v6600 = vld [vmem:[%s3073 + $0x158] sm:$0x1f]
      %v6601 = vld [vmem:[%s3073 + $0x240] sm:$0x1f]
      %v6602 = vld [vmem:[%s3073 + $0x248] sm:$0x1f]
      %v6603 = vld [vmem:[%s3073 + $0x250] sm:$0x1f]
      %v6604 = vld [vmem:[%s3073 + $0x258] sm:$0x1f]
      %v6605 = vld [vmem:[%s3073 + $0x260] sm:$0x1f]
      %v6606 = vld [vmem:[%s3073 + $0x268] sm:$0x1f]
      %v6607 = vld [vmem:[%s3073 + $0x270] sm:$0x1f]
      %v6608 = vld [vmem:[%s3073 + $0x278] sm:$0x1f]
      %v6609 = vld [vmem:[%s3073 + $0x360] sm:$0x1f]
      %v6610 = vld [vmem:[%s3073 + $0x368] sm:$0x1f]
      %v6611 = vld [vmem:[%s3073 + $0x370] sm:$0x1f]
      %v6612 = vld [vmem:[%s3073 + $0x378] sm:$0x1f]
      %v6613 = vld [vmem:[%s3073 + $0x380] sm:$0x1f]
      %v6614 = vld [vmem:[%s3073 + $0x388] sm:$0x1f]
      %v6615 = vld [vmem:[%s3073 + $0x390] sm:$0x1f]
      %v6616 = vld [vmem:[%s3073 + $0x398] sm:$0x1f]
      %v6649 = vunpack.c.l.b16 %v6585
      %v6650 = vunpack.c.h.b16 %v6585
      %v6651 = vunpack.c.l.b16 %v6586
      %v6652 = vunpack.c.h.b16 %v6586
      %v6653 = vunpack.c.l.b16 %v6587
      %v6654 = vunpack.c.h.b16 %v6587
      %v6655 = vunpack.c.l.b16 %v6588
      %v6656 = vunpack.c.h.b16 %v6588
      %v6657 = vunpack.c.l.b16 %v6589
      %v6658 = vunpack.c.h.b16 %v6589
      %v6659 = vunpack.c.l.b16 %v6590
      %v6660 = vunpack.c.h.b16 %v6590
      %v6661 = vunpack.c.l.b16 %v6591
      %v6662 = vunpack.c.h.b16 %v6591
      %v6663 = vunpack.c.l.b16 %v6592
      %v6664 = vunpack.c.h.b16 %v6592
      %v6665 = vunpack.c.l.b16 %v6593
      %v6666 = vunpack.c.h.b16 %v6593
      %v6667 = vunpack.c.l.b16 %v6594
      %v6668 = vunpack.c.h.b16 %v6594
      %v6669 = vunpack.c.l.b16 %v6595
      %v6670 = vunpack.c.h.b16 %v6595
      %v6671 = vunpack.c.l.b16 %v6596
      %v6672 = vunpack.c.h.b16 %v6596
      %v6673 = vunpack.c.l.b16 %v6597
      %v6674 = vunpack.c.h.b16 %v6597
      %v6675 = vunpack.c.l.b16 %v6598
      %v6676 = vunpack.c.h.b16 %v6598
      %v6677 = vunpack.c.l.b16 %v6599
      %v6678 = vunpack.c.h.b16 %v6599
      %v6679 = vunpack.c.l.b16 %v6600
      %v6680 = vunpack.c.h.b16 %v6600
      %v6681 = vunpack.c.l.b16 %v6601
      %v6682 = vunpack.c.h.b16 %v6601
      %v6683 = vunpack.c.l.b16 %v6602
      %v6684 = vunpack.c.h.b16 %v6602
      %v6685 = vunpack.c.l.b16 %v6603
      %v6686 = vunpack.c.h.b16 %v6603
      %v6687 = vunpack.c.l.b16 %v6604
      %v6688 = vunpack.c.h.b16 %v6604
      %v6689 = vunpack.c.l.b16 %v6605
      %v6690 = vunpack.c.h.b16 %v6605
      %v6691 = vunpack.c.l.b16 %v6606
      %v6692 = vunpack.c.h.b16 %v6606
      %v6693 = vunpack.c.l.b16 %v6607
      %v6694 = vunpack.c.h.b16 %v6607
      %v6695 = vunpack.c.l.b16 %v6608
      %v6696 = vunpack.c.h.b16 %v6608
      %v6697 = vunpack.c.l.b16 %v6609
      %v6698 = vunpack.c.h.b16 %v6609
      %v6699 = vunpack.c.l.b16 %v6610
      %v6700 = vunpack.c.h.b16 %v6610
      %v6701 = vunpack.c.l.b16 %v6611
      %v6702 = vunpack.c.h.b16 %v6611
      %v6703 = vunpack.c.l.b16 %v6612
      %v6704 = vunpack.c.h.b16 %v6612
      %v6705 = vunpack.c.l.b16 %v6613
      %v6706 = vunpack.c.h.b16 %v6613
      %v6707 = vunpack.c.l.b16 %v6614
      %v6708 = vunpack.c.h.b16 %v6614
      %v6709 = vunpack.c.l.b16 %v6615
      %v6710 = vunpack.c.h.b16 %v6615
      %v6711 = vunpack.c.l.b16 %v6616
      %v6712 = vunpack.c.h.b16 %v6616
      %v6713 = vpack.c.b16 %v6649, %v6649
      %v6714 = vpack.c.b16 %v6650, %v6650
      %v6715 = vpack.c.b16 %v6651, %v6651
      %v6716 = vpack.c.b16 %v6652, %v6652
      %v6717 = vpack.c.b16 %v6653, %v6653
      %v6718 = vpack.c.b16 %v6654, %v6654
      %v6719 = vpack.c.b16 %v6655, %v6655
      %v6720 = vpack.c.b16 %v6656, %v6656
      %v6721 = vpack.c.b16 %v6657, %v6657
      %v6722 = vpack.c.b16 %v6658, %v6658
      %v6723 = vpack.c.b16 %v6659, %v6659
      %v6724 = vpack.c.b16 %v6660, %v6660
      %v6725 = vpack.c.b16 %v6661, %v6661
      %v6726 = vpack.c.b16 %v6662, %v6662
      %v6727 = vpack.c.b16 %v6663, %v6663
      %v6728 = vpack.c.b16 %v6664, %v6664
      %v6729 = vpack.c.b16 %v6665, %v6665
      %v6730 = vpack.c.b16 %v6666, %v6666
      %v6731 = vpack.c.b16 %v6667, %v6667
      %v6732 = vpack.c.b16 %v6668, %v6668
      %v6733 = vpack.c.b16 %v6669, %v6669
      %v6734 = vpack.c.b16 %v6670, %v6670
      %v6735 = vpack.c.b16 %v6671, %v6671
      %v6736 = vpack.c.b16 %v6672, %v6672
      %v6737 = vpack.c.b16 %v6673, %v6673
      %v6738 = vpack.c.b16 %v6674, %v6674
      %v6739 = vpack.c.b16 %v6675, %v6675
      %v6740 = vpack.c.b16 %v6676, %v6676
      %v6741 = vpack.c.b16 %v6677, %v6677
      %v6742 = vpack.c.b16 %v6678, %v6678
      %v6743 = vpack.c.b16 %v6679, %v6679
      %v6744 = vpack.c.b16 %v6680, %v6680
      %v6745 = vpack.c.b16 %v6681, %v6681
      %v6746 = vpack.c.b16 %v6682, %v6682
      %v6747 = vpack.c.b16 %v6683, %v6683
      %v6748 = vpack.c.b16 %v6684, %v6684
      %v6749 = vpack.c.b16 %v6685, %v6685
      %v6750 = vpack.c.b16 %v6686, %v6686
      %v6751 = vpack.c.b16 %v6687, %v6687
      %v6752 = vpack.c.b16 %v6688, %v6688
      %v6753 = vpack.c.b16 %v6689, %v6689
      %v6754 = vpack.c.b16 %v6690, %v6690
      %v6755 = vpack.c.b16 %v6691, %v6691
      %v6756 = vpack.c.b16 %v6692, %v6692
      %v6757 = vpack.c.b16 %v6693, %v6693
      %v6758 = vpack.c.b16 %v6694, %v6694
      %v6759 = vpack.c.b16 %v6695, %v6695
      %v6760 = vpack.c.b16 %v6696, %v6696
      %v6761 = vpack.c.b16 %v6697, %v6697
      %v6762 = vpack.c.b16 %v6698, %v6698
      %v6763 = vpack.c.b16 %v6699, %v6699
      %v6764 = vpack.c.b16 %v6700, %v6700
      %v6765 = vpack.c.b16 %v6701, %v6701
      %v6766 = vpack.c.b16 %v6702, %v6702
      %v6767 = vpack.c.b16 %v6703, %v6703
      %v6768 = vpack.c.b16 %v6704, %v6704
      %v6769 = vpack.c.b16 %v6705, %v6705
      %v6770 = vpack.c.b16 %v6706, %v6706
      %v6771 = vpack.c.b16 %v6707, %v6707
      %v6772 = vpack.c.b16 %v6708, %v6708
      %v6773 = vpack.c.b16 %v6709, %v6709
      %v6774 = vpack.c.b16 %v6710, %v6710
      %v6775 = vpack.c.b16 %v6711, %v6711
      %v6776 = vpack.c.b16 %v6712, %v6712
      %v6778 = vshrl.u32 %v6713, 16
      %v6780 = vrot.slane %v6778, 4
      %v6781 = vshll.u32 %v6713, 16
      %v6783 = vrot.slane %v6781, 5
      %v6784 = vor.u32 %v6780, %v6783
      %v6785 = vrot.slane %v6784, 4
      %v6787 = vshll.u32 %v6714, 16
      %v6789 = vrot.slane %v6787, 5
      %v6790 = vsel %vm3511, %v6785, %v6789
      %v6792 = vshrl.u32 %v6715, 16
      %v6794 = vrot.slane %v6792, 4
      %v6795 = vshll.u32 %v6715, 16
      %v6797 = vrot.slane %v6795, 5
      %v6798 = vor.u32 %v6794, %v6797
      %v6799 = vrot.slane %v6798, 4
      %v6801 = vshll.u32 %v6716, 16
      %v6803 = vrot.slane %v6801, 5
      %v6804 = vsel %vm3511, %v6799, %v6803
      %v6806 = vshrl.u32 %v6717, 16
      %v6808 = vrot.slane %v6806, 4
      %v6809 = vshll.u32 %v6717, 16
      %v6811 = vrot.slane %v6809, 5
      %v6812 = vor.u32 %v6808, %v6811
      %v6813 = vrot.slane %v6812, 4
      %v6815 = vshll.u32 %v6718, 16
      %v6817 = vrot.slane %v6815, 5
      %v6818 = vsel %vm3511, %v6813, %v6817
      %v6820 = vshrl.u32 %v6719, 16
      %v6822 = vrot.slane %v6820, 4
      %v6823 = vshll.u32 %v6719, 16
      %v6825 = vrot.slane %v6823, 5
      %v6826 = vor.u32 %v6822, %v6825
      %v6827 = vrot.slane %v6826, 4
      %v6829 = vshll.u32 %v6720, 16
      %v6831 = vrot.slane %v6829, 5
      %v6832 = vsel %vm3511, %v6827, %v6831
      %v6834 = vshrl.u32 %v6721, 16
      %v6836 = vrot.slane %v6834, 4
      %v6837 = vshll.u32 %v6721, 16
      %v6839 = vrot.slane %v6837, 5
      %v6840 = vor.u32 %v6836, %v6839
      %v6841 = vrot.slane %v6840, 4
      %v6843 = vshll.u32 %v6722, 16
      %v6845 = vrot.slane %v6843, 5
      %v6846 = vsel %vm3511, %v6841, %v6845
      %v6848 = vshrl.u32 %v6723, 16
      %v6850 = vrot.slane %v6848, 4
      %v6851 = vshll.u32 %v6723, 16
      %v6853 = vrot.slane %v6851, 5
      %v6854 = vor.u32 %v6850, %v6853
      %v6855 = vrot.slane %v6854, 4
      %v6857 = vshll.u32 %v6724, 16
      %v6859 = vrot.slane %v6857, 5
      %v6860 = vsel %vm3511, %v6855, %v6859
      %v6862 = vshrl.u32 %v6725, 16
      %v6864 = vrot.slane %v6862, 4
      %v6865 = vshll.u32 %v6725, 16
      %v6867 = vrot.slane %v6865, 5
      %v6868 = vor.u32 %v6864, %v6867
      %v6869 = vrot.slane %v6868, 4
      %v6871 = vshll.u32 %v6726, 16
      %v6873 = vrot.slane %v6871, 5
      %v6874 = vsel %vm3511, %v6869, %v6873
      %v6876 = vshrl.u32 %v6727, 16
      %v6878 = vrot.slane %v6876, 4
      %v6879 = vshll.u32 %v6727, 16
      %v6881 = vrot.slane %v6879, 5
      %v6882 = vor.u32 %v6878, %v6881
      %v6883 = vrot.slane %v6882, 4
      %v6885 = vshll.u32 %v6728, 16
      %v6887 = vrot.slane %v6885, 5
      %v6888 = vsel %vm3511, %v6883, %v6887
      %v6890 = vshrl.u32 %v6729, 16
      %v6892 = vrot.slane %v6890, 4
      %v6893 = vshll.u32 %v6729, 16
      %v6895 = vrot.slane %v6893, 5
      %v6896 = vor.u32 %v6892, %v6895
      %v6897 = vrot.slane %v6896, 4
      %v6899 = vshll.u32 %v6730, 16
      %v6901 = vrot.slane %v6899, 5
      %v6902 = vsel %vm3511, %v6897, %v6901
      %v6904 = vshrl.u32 %v6731, 16
      %v6906 = vrot.slane %v6904, 4
      %v6907 = vshll.u32 %v6731, 16
      %v6909 = vrot.slane %v6907, 5
      %v6910 = vor.u32 %v6906, %v6909
      %v6911 = vrot.slane %v6910, 4
      %v6913 = vshll.u32 %v6732, 16
      %v6915 = vrot.slane %v6913, 5
      %v6916 = vsel %vm3511, %v6911, %v6915
      %v6918 = vshrl.u32 %v6733, 16
      %v6920 = vrot.slane %v6918, 4
      %v6921 = vshll.u32 %v6733, 16
      %v6923 = vrot.slane %v6921, 5
      %v6924 = vor.u32 %v6920, %v6923
      %v6925 = vrot.slane %v6924, 4
      %v6927 = vshll.u32 %v6734, 16
      %v6929 = vrot.slane %v6927, 5
      %v6930 = vsel %vm3511, %v6925, %v6929
      %v6932 = vshrl.u32 %v6735, 16
      %v6934 = vrot.slane %v6932, 4
      %v6935 = vshll.u32 %v6735, 16
      %v6937 = vrot.slane %v6935, 5
      %v6938 = vor.u32 %v6934, %v6937
      %v6939 = vrot.slane %v6938, 4
      %v6941 = vshll.u32 %v6736, 16
      %v6943 = vrot.slane %v6941, 5
      %v6944 = vsel %vm3511, %v6939, %v6943
      %v6946 = vshrl.u32 %v6737, 16
      %v6948 = vrot.slane %v6946, 4
      %v6949 = vshll.u32 %v6737, 16
      %v6951 = vrot.slane %v6949, 5
      %v6952 = vor.u32 %v6948, %v6951
      %v6953 = vrot.slane %v6952, 4
      %v6955 = vshll.u32 %v6738, 16
      %v6957 = vrot.slane %v6955, 5
      %v6958 = vsel %vm3511, %v6953, %v6957
      %v6960 = vshrl.u32 %v6739, 16
      %v6962 = vrot.slane %v6960, 4
      %v6963 = vshll.u32 %v6739, 16
      %v6965 = vrot.slane %v6963, 5
      %v6966 = vor.u32 %v6962, %v6965
      %v6967 = vrot.slane %v6966, 4
      %v6969 = vshll.u32 %v6740, 16
      %v6971 = vrot.slane %v6969, 5
      %v6972 = vsel %vm3511, %v6967, %v6971
      %v6974 = vshrl.u32 %v6741, 16
      %v6976 = vrot.slane %v6974, 4
      %v6977 = vshll.u32 %v6741, 16
      %v6979 = vrot.slane %v6977, 5
      %v6980 = vor.u32 %v6976, %v6979
      %v6981 = vrot.slane %v6980, 4
      %v6983 = vshll.u32 %v6742, 16
      %v6985 = vrot.slane %v6983, 5
      %v6986 = vsel %vm3511, %v6981, %v6985
      %v6988 = vshrl.u32 %v6743, 16
      %v6990 = vrot.slane %v6988, 4
      %v6991 = vshll.u32 %v6743, 16
      %v6993 = vrot.slane %v6991, 5
      %v6994 = vor.u32 %v6990, %v6993
      %v6995 = vrot.slane %v6994, 4
      %v6997 = vshll.u32 %v6744, 16
      %v6999 = vrot.slane %v6997, 5
      %v7000 = vsel %vm3511, %v6995, %v6999
      %v7002 = vshrl.u32 %v6745, 16
      %v7004 = vrot.slane %v7002, 4
      %v7005 = vshll.u32 %v6745, 16
      %v7007 = vrot.slane %v7005, 5
      %v7008 = vor.u32 %v7004, %v7007
      %v7009 = vrot.slane %v7008, 4
      %v7011 = vshll.u32 %v6746, 16
      %v7013 = vrot.slane %v7011, 5
      %v7014 = vsel %vm3511, %v7009, %v7013
      %v7016 = vshrl.u32 %v6747, 16
      %v7018 = vrot.slane %v7016, 4
      %v7019 = vshll.u32 %v6747, 16
      %v7021 = vrot.slane %v7019, 5
      %v7022 = vor.u32 %v7018, %v7021
      %v7023 = vrot.slane %v7022, 4
      %v7025 = vshll.u32 %v6748, 16
      %v7027 = vrot.slane %v7025, 5
      %v7028 = vsel %vm3511, %v7023, %v7027
      %v7030 = vshrl.u32 %v6749, 16
      %v7032 = vrot.slane %v7030, 4
      %v7033 = vshll.u32 %v6749, 16
      %v7035 = vrot.slane %v7033, 5
      %v7036 = vor.u32 %v7032, %v7035
      %v7037 = vrot.slane %v7036, 4
      %v7039 = vshll.u32 %v6750, 16
      %v7041 = vrot.slane %v7039, 5
      %v7042 = vsel %vm3511, %v7037, %v7041
      %v7044 = vshrl.u32 %v6751, 16
      %v7046 = vrot.slane %v7044, 4
      %v7047 = vshll.u32 %v6751, 16
      %v7049 = vrot.slane %v7047, 5
      %v7050 = vor.u32 %v7046, %v7049
      %v7051 = vrot.slane %v7050, 4
      %v7053 = vshll.u32 %v6752, 16
      %v7055 = vrot.slane %v7053, 5
      %v7056 = vsel %vm3511, %v7051, %v7055
      %v7058 = vshrl.u32 %v6753, 16
      %v7060 = vrot.slane %v7058, 4
      %v7061 = vshll.u32 %v6753, 16
      %v7063 = vrot.slane %v7061, 5
      %v7064 = vor.u32 %v7060, %v7063
      %v7065 = vrot.slane %v7064, 4
      %v7067 = vshll.u32 %v6754, 16
      %v7069 = vrot.slane %v7067, 5
      %v7070 = vsel %vm3511, %v7065, %v7069
      %v7072 = vshrl.u32 %v6755, 16
      %v7074 = vrot.slane %v7072, 4
      %v7075 = vshll.u32 %v6755, 16
      %v7077 = vrot.slane %v7075, 5
      %v7078 = vor.u32 %v7074, %v7077
      %v7079 = vrot.slane %v7078, 4
      %v7081 = vshll.u32 %v6756, 16
      %v7083 = vrot.slane %v7081, 5
      %v7084 = vsel %vm3511, %v7079, %v7083
      %v7086 = vshrl.u32 %v6757, 16
      %v7088 = vrot.slane %v7086, 4
      %v7089 = vshll.u32 %v6757, 16
      %v7091 = vrot.slane %v7089, 5
      %v7092 = vor.u32 %v7088, %v7091
      %v7093 = vrot.slane %v7092, 4
      %v7095 = vshll.u32 %v6758, 16
      %v7097 = vrot.slane %v7095, 5
      %v7098 = vsel %vm3511, %v7093, %v7097
      %v7100 = vshrl.u32 %v6759, 16
      %v7102 = vrot.slane %v7100, 4
      %v7103 = vshll.u32 %v6759, 16
      %v7105 = vrot.slane %v7103, 5
      %v7106 = vor.u32 %v7102, %v7105
      %v7107 = vrot.slane %v7106, 4
      %v7109 = vshll.u32 %v6760, 16
      %v7111 = vrot.slane %v7109, 5
      %v7112 = vsel %vm3511, %v7107, %v7111
      %v7114 = vshrl.u32 %v6761, 16
      %v7116 = vrot.slane %v7114, 4
      %v7117 = vshll.u32 %v6761, 16
      %v7119 = vrot.slane %v7117, 5
      %v7120 = vor.u32 %v7116, %v7119
      %v7121 = vrot.slane %v7120, 4
      %v7123 = vshll.u32 %v6762, 16
      %v7125 = vrot.slane %v7123, 5
      %v7126 = vsel %vm3511, %v7121, %v7125
      %v7128 = vshrl.u32 %v6763, 16
      %v7130 = vrot.slane %v7128, 4
      %v7131 = vshll.u32 %v6763, 16
      %v7133 = vrot.slane %v7131, 5
      %v7134 = vor.u32 %v7130, %v7133
      %v7135 = vrot.slane %v7134, 4
      %v7137 = vshll.u32 %v6764, 16
      %v7139 = vrot.slane %v7137, 5
      %v7140 = vsel %vm3511, %v7135, %v7139
      %v7142 = vshrl.u32 %v6765, 16
      %v7144 = vrot.slane %v7142, 4
      %v7145 = vshll.u32 %v6765, 16
      %v7147 = vrot.slane %v7145, 5
      %v7148 = vor.u32 %v7144, %v7147
      %v7149 = vrot.slane %v7148, 4
      %v7151 = vshll.u32 %v6766, 16
      %v7153 = vrot.slane %v7151, 5
      %v7154 = vsel %vm3511, %v7149, %v7153
      %v7156 = vshrl.u32 %v6767, 16
      %v7158 = vrot.slane %v7156, 4
      %v7159 = vshll.u32 %v6767, 16
      %v7161 = vrot.slane %v7159, 5
      %v7162 = vor.u32 %v7158, %v7161
      %v7163 = vrot.slane %v7162, 4
      %v7165 = vshll.u32 %v6768, 16
      %v7167 = vrot.slane %v7165, 5
      %v7168 = vsel %vm3511, %v7163, %v7167
      %v7170 = vshrl.u32 %v6769, 16
      %v7172 = vrot.slane %v7170, 4
      %v7173 = vshll.u32 %v6769, 16
      %v7175 = vrot.slane %v7173, 5
      %v7176 = vor.u32 %v7172, %v7175
      %v7177 = vrot.slane %v7176, 4
      %v7179 = vshll.u32 %v6770, 16
      %v7181 = vrot.slane %v7179, 5
      %v7182 = vsel %vm3511, %v7177, %v7181
      %v7184 = vshrl.u32 %v6771, 16
      %v7186 = vrot.slane %v7184, 4
      %v7187 = vshll.u32 %v6771, 16
      %v7189 = vrot.slane %v7187, 5
      %v7190 = vor.u32 %v7186, %v7189
      %v7191 = vrot.slane %v7190, 4
      %v7193 = vshll.u32 %v6772, 16
      %v7195 = vrot.slane %v7193, 5
      %v7196 = vsel %vm3511, %v7191, %v7195
      %v7198 = vshrl.u32 %v6773, 16
      %v7200 = vrot.slane %v7198, 4
      %v7201 = vshll.u32 %v6773, 16
      %v7203 = vrot.slane %v7201, 5
      %v7204 = vor.u32 %v7200, %v7203
      %v7205 = vrot.slane %v7204, 4
      %v7207 = vshll.u32 %v6774, 16
      %v7209 = vrot.slane %v7207, 5
      %v7210 = vsel %vm3511, %v7205, %v7209
      %v7212 = vshrl.u32 %v6775, 16
      %v7214 = vrot.slane %v7212, 4
      %v7215 = vshll.u32 %v6775, 16
      %v7217 = vrot.slane %v7215, 5
      %v7218 = vor.u32 %v7214, %v7217
      %v7219 = vrot.slane %v7218, 4
      %v7221 = vshll.u32 %v6776, 16
      %v7223 = vrot.slane %v7221, 5
      %v7224 = vsel %vm3511, %v7219, %v7223
      %v7225 = vunpack.c.l.b16 %v6790
      %v7226 = vunpack.c.l.b16 %v6804
      %v7227 = vunpack.c.l.b16 %v6818
      %v7228 = vunpack.c.l.b16 %v6832
      %v7229 = vunpack.c.l.b16 %v6846
      %v7230 = vunpack.c.l.b16 %v6860
      %v7231 = vunpack.c.l.b16 %v6874
      %v7232 = vunpack.c.l.b16 %v6888
      %v7233 = vunpack.c.l.b16 %v6902
      %v7234 = vunpack.c.l.b16 %v6916
      %v7235 = vunpack.c.l.b16 %v6930
      %v7236 = vunpack.c.l.b16 %v6944
      %v7237 = vunpack.c.l.b16 %v6958
      %v7238 = vunpack.c.l.b16 %v6972
      %v7239 = vunpack.c.l.b16 %v6986
      %v7240 = vunpack.c.l.b16 %v7000
      %v7241 = vunpack.c.l.b16 %v7014
      %v7242 = vunpack.c.l.b16 %v7028
      %v7243 = vunpack.c.l.b16 %v7042
      %v7244 = vunpack.c.l.b16 %v7056
      %v7245 = vunpack.c.l.b16 %v7070
      %v7246 = vunpack.c.l.b16 %v7084
      %v7247 = vunpack.c.l.b16 %v7098
      %v7248 = vunpack.c.l.b16 %v7112
      %v7249 = vunpack.c.l.b16 %v7126
      %v7250 = vunpack.c.l.b16 %v7140
      %v7251 = vunpack.c.l.b16 %v7154
      %v7252 = vunpack.c.l.b16 %v7168
      %v7253 = vunpack.c.l.b16 %v7182
      %v7254 = vunpack.c.l.b16 %v7196
      %v7255 = vunpack.c.l.b16 %v7210
      %v7256 = vunpack.c.l.b16 %v7224
      %v7257 = vpack.c.b16 %v7226, %v7225
      %v7258 = vpack.c.b16 %v7228, %v7227
      %v7259 = vpack.c.b16 %v7230, %v7229
      %v7260 = vpack.c.b16 %v7232, %v7231
      %v7261 = vpack.c.b16 %v7234, %v7233
      %v7262 = vpack.c.b16 %v7236, %v7235
      %v7263 = vpack.c.b16 %v7238, %v7237
      %v7264 = vpack.c.b16 %v7240, %v7239
      %v7265 = vpack.c.b16 %v7242, %v7241
      %v7266 = vpack.c.b16 %v7244, %v7243
      %v7267 = vpack.c.b16 %v7246, %v7245
      %v7268 = vpack.c.b16 %v7248, %v7247
      %v7269 = vpack.c.b16 %v7250, %v7249
      %v7270 = vpack.c.b16 %v7252, %v7251
      %v7271 = vpack.c.b16 %v7254, %v7253
      %v7272 = vpack.c.b16 %v7256, %v7255
      %7273 = vrot.lane.b32.xlu0 %v7257, 64
      %v7274 = vpop.permute.xlu0 %7273
      %7275 = vrot.lane.b32.xlu0 %v7258, 64
      %v7276 = vpop.permute.xlu0 %7275
      %7277 = vrot.lane.b32.xlu0 %v7259, 64
      %v7278 = vpop.permute.xlu0 %7277
      %7279 = vrot.lane.b32.xlu0 %v7260, 64
      %v7280 = vpop.permute.xlu0 %7279
      %7281 = vrot.lane.b32.xlu0 %v7261, 64
      %v7282 = vpop.permute.xlu0 %7281
      %7283 = vrot.lane.b32.xlu0 %v7262, 64
      %v7284 = vpop.permute.xlu0 %7283
      %7285 = vrot.lane.b32.xlu0 %v7263, 64
      %v7286 = vpop.permute.xlu0 %7285
      %7287 = vrot.lane.b32.xlu0 %v7264, 64
      %v7288 = vpop.permute.xlu0 %7287
      %7289 = vrot.lane.b32.xlu0 %v7265, 64
      %v7290 = vpop.permute.xlu0 %7289
      %7291 = vrot.lane.b32.xlu0 %v7266, 64
      %v7292 = vpop.permute.xlu0 %7291
      %7293 = vrot.lane.b32.xlu0 %v7267, 64
      %v7294 = vpop.permute.xlu0 %7293
      %7295 = vrot.lane.b32.xlu0 %v7268, 64
      %v7296 = vpop.permute.xlu0 %7295
      %7297 = vrot.lane.b32.xlu0 %v7269, 64
      %v7298 = vpop.permute.xlu0 %7297
      %7299 = vrot.lane.b32.xlu0 %v7270, 64
      %v7300 = vpop.permute.xlu0 %7299
      %7301 = vrot.lane.b32.xlu0 %v7271, 64
      %v7302 = vpop.permute.xlu0 %7301
      %7303 = vrot.lane.b32.xlu0 %v7272, 64
      %v7304 = vpop.permute.xlu0 %7303
      %7321 = vst.msk [vmem:[#allocation3 + $0x18] sm:$0xff] %vm4056, %v7274
      %7322 = vst.msk [vmem:[#allocation3 + $0x40] sm:$0xff] %vm4056, %v7276
      %7323 = vst.msk [vmem:[#allocation3 + $0x68] sm:$0xff] %vm4056, %v7278
      %7324 = vst.msk [vmem:[#allocation3 + $0x90] sm:$0xff] %vm4056, %v7280
      %7325 = vst.msk [vmem:[#allocation3 + $0xb8] sm:$0xff] %vm4056, %v7282
      %7326 = vst.msk [vmem:[#allocation3 + $0xe0] sm:$0xff] %vm4056, %v7284
      %7327 = vst.msk [vmem:[#allocation3 + $0x108] sm:$0xff] %vm4056, %v7286
      %7328 = vst.msk [vmem:[#allocation3 + $0x130] sm:$0xff] %vm4056, %v7288
      %7329 = vst.msk [vmem:[#allocation3 + $0x158] sm:$0xff] %vm4056, %v7290
      %7330 = vst.msk [vmem:[#allocation3 + $0x180] sm:$0xff] %vm4056, %v7292
      %7331 = vst.msk [vmem:[#allocation3 + $0x1a8] sm:$0xff] %vm4056, %v7294
      %7332 = vst.msk [vmem:[#allocation3 + $0x1d0] sm:$0xff] %vm4056, %v7296
      %7333 = vst.msk [vmem:[#allocation3 + $0x1f8] sm:$0xff] %vm4056, %v7298
      %7334 = vst.msk [vmem:[#allocation3 + $0x220] sm:$0xff] %vm4056, %v7300
      %7335 = vst.msk [vmem:[#allocation3 + $0x248] sm:$0xff] %vm4056, %v7302
      %7336 = vst.msk [vmem:[#allocation3 + $0x270] sm:$0xff] %vm4056, %v7304
      %v7337 = vld [vmem:[%s3040] sm:$0x1f]
      %v7338 = vld [vmem:[%s3040 + $0x8] sm:$0x1f]
      %v7339 = vld [vmem:[%s3040 + $0x10] sm:$0x1f]
      %v7340 = vld [vmem:[%s3040 + $0x18] sm:$0x1f]
      %v7341 = vld [vmem:[%s3040 + $0x20] sm:$0x1f]
      %v7342 = vld [vmem:[%s3040 + $0x28] sm:$0x1f]
      %v7343 = vld [vmem:[%s3040 + $0x30] sm:$0x1f]
      %v7344 = vld [vmem:[%s3040 + $0x38] sm:$0x1f]
      %v7345 = vld [vmem:[%s3040 + $0x120] sm:$0x1f]
      %v7346 = vld [vmem:[%s3040 + $0x128] sm:$0x1f]
      %v7347 = vld [vmem:[%s3040 + $0x130] sm:$0x1f]
      %v7348 = vld [vmem:[%s3040 + $0x138] sm:$0x1f]
      %v7349 = vld [vmem:[%s3040 + $0x140] sm:$0x1f]
      %v7350 = vld [vmem:[%s3040 + $0x148] sm:$0x1f]
      %v7351 = vld [vmem:[%s3040 + $0x150] sm:$0x1f]
      %v7352 = vld [vmem:[%s3040 + $0x158] sm:$0x1f]
      %v7353 = vld [vmem:[%s3040 + $0x240] sm:$0x1f]
      %v7354 = vld [vmem:[%s3040 + $0x248] sm:$0x1f]
      %v7355 = vld [vmem:[%s3040 + $0x250] sm:$0x1f]
      %v7356 = vld [vmem:[%s3040 + $0x258] sm:$0x1f]
      %v7357 = vld [vmem:[%s3040 + $0x260] sm:$0x1f]
      %v7358 = vld [vmem:[%s3040 + $0x268] sm:$0x1f]
      %v7359 = vld [vmem:[%s3040 + $0x270] sm:$0x1f]
      %v7360 = vld [vmem:[%s3040 + $0x278] sm:$0x1f]
      %v7361 = vld [vmem:[%s3040 + $0x360] sm:$0x1f]
      %v7362 = vld [vmem:[%s3040 + $0x368] sm:$0x1f]
      %v7363 = vld [vmem:[%s3040 + $0x370] sm:$0x1f]
      %v7364 = vld [vmem:[%s3040 + $0x378] sm:$0x1f]
      %v7365 = vld [vmem:[%s3040 + $0x380] sm:$0x1f]
      %v7366 = vld [vmem:[%s3040 + $0x388] sm:$0x1f]
      %v7367 = vld [vmem:[%s3040 + $0x390] sm:$0x1f]
      %v7368 = vld [vmem:[%s3040 + $0x398] sm:$0x1f]
      %v7401 = vunpack.c.l.b16 %v7337
      %v7402 = vunpack.c.h.b16 %v7337
      %v7403 = vunpack.c.l.b16 %v7338
      %v7404 = vunpack.c.h.b16 %v7338
      %v7405 = vunpack.c.l.b16 %v7339
      %v7406 = vunpack.c.h.b16 %v7339
      %v7407 = vunpack.c.l.b16 %v7340
      %v7408 = vunpack.c.h.b16 %v7340
      %v7409 = vunpack.c.l.b16 %v7341
      %v7410 = vunpack.c.h.b16 %v7341
      %v7411 = vunpack.c.l.b16 %v7342
      %v7412 = vunpack.c.h.b16 %v7342
      %v7413 = vunpack.c.l.b16 %v7343
      %v7414 = vunpack.c.h.b16 %v7343
      %v7415 = vunpack.c.l.b16 %v7344
      %v7416 = vunpack.c.h.b16 %v7344
      %v7417 = vunpack.c.l.b16 %v7345
      %v7418 = vunpack.c.h.b16 %v7345
      %v7419 = vunpack.c.l.b16 %v7346
      %v7420 = vunpack.c.h.b16 %v7346
      %v7421 = vunpack.c.l.b16 %v7347
      %v7422 = vunpack.c.h.b16 %v7347
      %v7423 = vunpack.c.l.b16 %v7348
      %v7424 = vunpack.c.h.b16 %v7348
      %v7425 = vunpack.c.l.b16 %v7349
      %v7426 = vunpack.c.h.b16 %v7349
      %v7427 = vunpack.c.l.b16 %v7350
      %v7428 = vunpack.c.h.b16 %v7350
      %v7429 = vunpack.c.l.b16 %v7351
      %v7430 = vunpack.c.h.b16 %v7351
      %v7431 = vunpack.c.l.b16 %v7352
      %v7432 = vunpack.c.h.b16 %v7352
      %v7433 = vunpack.c.l.b16 %v7353
      %v7434 = vunpack.c.h.b16 %v7353
      %v7435 = vunpack.c.l.b16 %v7354
      %v7436 = vunpack.c.h.b16 %v7354
      %v7437 = vunpack.c.l.b16 %v7355
      %v7438 = vunpack.c.h.b16 %v7355
      %v7439 = vunpack.c.l.b16 %v7356
      %v7440 = vunpack.c.h.b16 %v7356
      %v7441 = vunpack.c.l.b16 %v7357
      %v7442 = vunpack.c.h.b16 %v7357
      %v7443 = vunpack.c.l.b16 %v7358
      %v7444 = vunpack.c.h.b16 %v7358
      %v7445 = vunpack.c.l.b16 %v7359
      %v7446 = vunpack.c.h.b16 %v7359
      %v7447 = vunpack.c.l.b16 %v7360
      %v7448 = vunpack.c.h.b16 %v7360
      %v7449 = vunpack.c.l.b16 %v7361
      %v7450 = vunpack.c.h.b16 %v7361
      %v7451 = vunpack.c.l.b16 %v7362
      %v7452 = vunpack.c.h.b16 %v7362
      %v7453 = vunpack.c.l.b16 %v7363
      %v7454 = vunpack.c.h.b16 %v7363
      %v7455 = vunpack.c.l.b16 %v7364
      %v7456 = vunpack.c.h.b16 %v7364
      %v7457 = vunpack.c.l.b16 %v7365
      %v7458 = vunpack.c.h.b16 %v7365
      %v7459 = vunpack.c.l.b16 %v7366
      %v7460 = vunpack.c.h.b16 %v7366
      %v7461 = vunpack.c.l.b16 %v7367
      %v7462 = vunpack.c.h.b16 %v7367
      %v7463 = vunpack.c.l.b16 %v7368
      %v7464 = vunpack.c.h.b16 %v7368
      %v7465 = vpack.c.b16 %v7401, %v7401
      %v7466 = vpack.c.b16 %v7402, %v7402
      %v7467 = vpack.c.b16 %v7403, %v7403
      %v7468 = vpack.c.b16 %v7404, %v7404
      %v7469 = vpack.c.b16 %v7405, %v7405
      %v7470 = vpack.c.b16 %v7406, %v7406
      %v7471 = vpack.c.b16 %v7407, %v7407
      %v7472 = vpack.c.b16 %v7408, %v7408
      %v7473 = vpack.c.b16 %v7409, %v7409
      %v7474 = vpack.c.b16 %v7410, %v7410
      %v7475 = vpack.c.b16 %v7411, %v7411
      %v7476 = vpack.c.b16 %v7412, %v7412
      %v7477 = vpack.c.b16 %v7413, %v7413
      %v7478 = vpack.c.b16 %v7414, %v7414
      %v7479 = vpack.c.b16 %v7415, %v7415
      %v7480 = vpack.c.b16 %v7416, %v7416
      %v7481 = vpack.c.b16 %v7417, %v7417
      %v7482 = vpack.c.b16 %v7418, %v7418
      %v7483 = vpack.c.b16 %v7419, %v7419
      %v7484 = vpack.c.b16 %v7420, %v7420
      %v7485 = vpack.c.b16 %v7421, %v7421
      %v7486 = vpack.c.b16 %v7422, %v7422
      %v7487 = vpack.c.b16 %v7423, %v7423
      %v7488 = vpack.c.b16 %v7424, %v7424
      %v7489 = vpack.c.b16 %v7425, %v7425
      %v7490 = vpack.c.b16 %v7426, %v7426
      %v7491 = vpack.c.b16 %v7427, %v7427
      %v7492 = vpack.c.b16 %v7428, %v7428
      %v7493 = vpack.c.b16 %v7429, %v7429
      %v7494 = vpack.c.b16 %v7430, %v7430
      %v7495 = vpack.c.b16 %v7431, %v7431
      %v7496 = vpack.c.b16 %v7432, %v7432
      %v7497 = vpack.c.b16 %v7433, %v7433
      %v7498 = vpack.c.b16 %v7434, %v7434
      %v7499 = vpack.c.b16 %v7435, %v7435
      %v7500 = vpack.c.b16 %v7436, %v7436
      %v7501 = vpack.c.b16 %v7437, %v7437
      %v7502 = vpack.c.b16 %v7438, %v7438
      %v7503 = vpack.c.b16 %v7439, %v7439
      %v7504 = vpack.c.b16 %v7440, %v7440
      %v7505 = vpack.c.b16 %v7441, %v7441
      %v7506 = vpack.c.b16 %v7442, %v7442
      %v7507 = vpack.c.b16 %v7443, %v7443
      %v7508 = vpack.c.b16 %v7444, %v7444
      %v7509 = vpack.c.b16 %v7445, %v7445
      %v7510 = vpack.c.b16 %v7446, %v7446
      %v7511 = vpack.c.b16 %v7447, %v7447
      %v7512 = vpack.c.b16 %v7448, %v7448
      %v7513 = vpack.c.b16 %v7449, %v7449
      %v7514 = vpack.c.b16 %v7450, %v7450
      %v7515 = vpack.c.b16 %v7451, %v7451
      %v7516 = vpack.c.b16 %v7452, %v7452
      %v7517 = vpack.c.b16 %v7453, %v7453
      %v7518 = vpack.c.b16 %v7454, %v7454
      %v7519 = vpack.c.b16 %v7455, %v7455
      %v7520 = vpack.c.b16 %v7456, %v7456
      %v7521 = vpack.c.b16 %v7457, %v7457
      %v7522 = vpack.c.b16 %v7458, %v7458
      %v7523 = vpack.c.b16 %v7459, %v7459
      %v7524 = vpack.c.b16 %v7460, %v7460
      %v7525 = vpack.c.b16 %v7461, %v7461
      %v7526 = vpack.c.b16 %v7462, %v7462
      %v7527 = vpack.c.b16 %v7463, %v7463
      %v7528 = vpack.c.b16 %v7464, %v7464
      %v7530 = vshrl.u32 %v7465, 16
      %v7532 = vrot.slane %v7530, 4
      %v7533 = vshll.u32 %v7465, 16
      %v7535 = vrot.slane %v7533, 5
      %v7536 = vor.u32 %v7532, %v7535
      %v7537 = vrot.slane %v7536, 4
      %v7539 = vshll.u32 %v7466, 16
      %v7541 = vrot.slane %v7539, 5
      %v7542 = vsel %vm3511, %v7537, %v7541
      %v7544 = vshrl.u32 %v7467, 16
      %v7546 = vrot.slane %v7544, 4
      %v7547 = vshll.u32 %v7467, 16
      %v7549 = vrot.slane %v7547, 5
      %v7550 = vor.u32 %v7546, %v7549
      %v7551 = vrot.slane %v7550, 4
      %v7553 = vshll.u32 %v7468, 16
      %v7555 = vrot.slane %v7553, 5
      %v7556 = vsel %vm3511, %v7551, %v7555
      %v7558 = vshrl.u32 %v7469, 16
      %v7560 = vrot.slane %v7558, 4
      %v7561 = vshll.u32 %v7469, 16
      %v7563 = vrot.slane %v7561, 5
      %v7564 = vor.u32 %v7560, %v7563
      %v7565 = vrot.slane %v7564, 4
      %v7567 = vshll.u32 %v7470, 16
      %v7569 = vrot.slane %v7567, 5
      %v7570 = vsel %vm3511, %v7565, %v7569
      %v7572 = vshrl.u32 %v7471, 16
      %v7574 = vrot.slane %v7572, 4
      %v7575 = vshll.u32 %v7471, 16
      %v7577 = vrot.slane %v7575, 5
      %v7578 = vor.u32 %v7574, %v7577
      %v7579 = vrot.slane %v7578, 4
      %v7581 = vshll.u32 %v7472, 16
      %v7583 = vrot.slane %v7581, 5
      %v7584 = vsel %vm3511, %v7579, %v7583
      %v7586 = vshrl.u32 %v7473, 16
      %v7588 = vrot.slane %v7586, 4
      %v7589 = vshll.u32 %v7473, 16
      %v7591 = vrot.slane %v7589, 5
      %v7592 = vor.u32 %v7588, %v7591
      %v7593 = vrot.slane %v7592, 4
      %v7595 = vshll.u32 %v7474, 16
      %v7597 = vrot.slane %v7595, 5
      %v7598 = vsel %vm3511, %v7593, %v7597
      %v7600 = vshrl.u32 %v7475, 16
      %v7602 = vrot.slane %v7600, 4
      %v7603 = vshll.u32 %v7475, 16
      %v7605 = vrot.slane %v7603, 5
      %v7606 = vor.u32 %v7602, %v7605
      %v7607 = vrot.slane %v7606, 4
      %v7609 = vshll.u32 %v7476, 16
      %v7611 = vrot.slane %v7609, 5
      %v7612 = vsel %vm3511, %v7607, %v7611
      %v7614 = vshrl.u32 %v7477, 16
      %v7616 = vrot.slane %v7614, 4
      %v7617 = vshll.u32 %v7477, 16
      %v7619 = vrot.slane %v7617, 5
      %v7620 = vor.u32 %v7616, %v7619
      %v7621 = vrot.slane %v7620, 4
      %v7623 = vshll.u32 %v7478, 16
      %v7625 = vrot.slane %v7623, 5
      %v7626 = vsel %vm3511, %v7621, %v7625
      %v7628 = vshrl.u32 %v7479, 16
      %v7630 = vrot.slane %v7628, 4
      %v7631 = vshll.u32 %v7479, 16
      %v7633 = vrot.slane %v7631, 5
      %v7634 = vor.u32 %v7630, %v7633
      %v7635 = vrot.slane %v7634, 4
      %v7637 = vshll.u32 %v7480, 16
      %v7639 = vrot.slane %v7637, 5
      %v7640 = vsel %vm3511, %v7635, %v7639
      %v7642 = vshrl.u32 %v7481, 16
      %v7644 = vrot.slane %v7642, 4
      %v7645 = vshll.u32 %v7481, 16
      %v7647 = vrot.slane %v7645, 5
      %v7648 = vor.u32 %v7644, %v7647
      %v7649 = vrot.slane %v7648, 4
      %v7651 = vshll.u32 %v7482, 16
      %v7653 = vrot.slane %v7651, 5
      %v7654 = vsel %vm3511, %v7649, %v7653
      %v7656 = vshrl.u32 %v7483, 16
      %v7658 = vrot.slane %v7656, 4
      %v7659 = vshll.u32 %v7483, 16
      %v7661 = vrot.slane %v7659, 5
      %v7662 = vor.u32 %v7658, %v7661
      %v7663 = vrot.slane %v7662, 4
      %v7665 = vshll.u32 %v7484, 16
      %v7667 = vrot.slane %v7665, 5
      %v7668 = vsel %vm3511, %v7663, %v7667
      %v7670 = vshrl.u32 %v7485, 16
      %v7672 = vrot.slane %v7670, 4
      %v7673 = vshll.u32 %v7485, 16
      %v7675 = vrot.slane %v7673, 5
      %v7676 = vor.u32 %v7672, %v7675
      %v7677 = vrot.slane %v7676, 4
      %v7679 = vshll.u32 %v7486, 16
      %v7681 = vrot.slane %v7679, 5
      %v7682 = vsel %vm3511, %v7677, %v7681
      %v7684 = vshrl.u32 %v7487, 16
      %v7686 = vrot.slane %v7684, 4
      %v7687 = vshll.u32 %v7487, 16
      %v7689 = vrot.slane %v7687, 5
      %v7690 = vor.u32 %v7686, %v7689
      %v7691 = vrot.slane %v7690, 4
      %v7693 = vshll.u32 %v7488, 16
      %v7695 = vrot.slane %v7693, 5
      %v7696 = vsel %vm3511, %v7691, %v7695
      %v7698 = vshrl.u32 %v7489, 16
      %v7700 = vrot.slane %v7698, 4
      %v7701 = vshll.u32 %v7489, 16
      %v7703 = vrot.slane %v7701, 5
      %v7704 = vor.u32 %v7700, %v7703
      %v7705 = vrot.slane %v7704, 4
      %v7707 = vshll.u32 %v7490, 16
      %v7709 = vrot.slane %v7707, 5
      %v7710 = vsel %vm3511, %v7705, %v7709
      %v7712 = vshrl.u32 %v7491, 16
      %v7714 = vrot.slane %v7712, 4
      %v7715 = vshll.u32 %v7491, 16
      %v7717 = vrot.slane %v7715, 5
      %v7718 = vor.u32 %v7714, %v7717
      %v7719 = vrot.slane %v7718, 4
      %v7721 = vshll.u32 %v7492, 16
      %v7723 = vrot.slane %v7721, 5
      %v7724 = vsel %vm3511, %v7719, %v7723
      %v7726 = vshrl.u32 %v7493, 16
      %v7728 = vrot.slane %v7726, 4
      %v7729 = vshll.u32 %v7493, 16
      %v7731 = vrot.slane %v7729, 5
      %v7732 = vor.u32 %v7728, %v7731
      %v7733 = vrot.slane %v7732, 4
      %v7735 = vshll.u32 %v7494, 16
      %v7737 = vrot.slane %v7735, 5
      %v7738 = vsel %vm3511, %v7733, %v7737
      %v7740 = vshrl.u32 %v7495, 16
      %v7742 = vrot.slane %v7740, 4
      %v7743 = vshll.u32 %v7495, 16
      %v7745 = vrot.slane %v7743, 5
      %v7746 = vor.u32 %v7742, %v7745
      %v7747 = vrot.slane %v7746, 4
      %v7749 = vshll.u32 %v7496, 16
      %v7751 = vrot.slane %v7749, 5
      %v7752 = vsel %vm3511, %v7747, %v7751
      %v7754 = vshrl.u32 %v7497, 16
      %v7756 = vrot.slane %v7754, 4
      %v7757 = vshll.u32 %v7497, 16
      %v7759 = vrot.slane %v7757, 5
      %v7760 = vor.u32 %v7756, %v7759
      %v7761 = vrot.slane %v7760, 4
      %v7763 = vshll.u32 %v7498, 16
      %v7765 = vrot.slane %v7763, 5
      %v7766 = vsel %vm3511, %v7761, %v7765
      %v7768 = vshrl.u32 %v7499, 16
      %v7770 = vrot.slane %v7768, 4
      %v7771 = vshll.u32 %v7499, 16
      %v7773 = vrot.slane %v7771, 5
      %v7774 = vor.u32 %v7770, %v7773
      %v7775 = vrot.slane %v7774, 4
      %v7777 = vshll.u32 %v7500, 16
      %v7779 = vrot.slane %v7777, 5
      %v7780 = vsel %vm3511, %v7775, %v7779
      %v7782 = vshrl.u32 %v7501, 16
      %v7784 = vrot.slane %v7782, 4
      %v7785 = vshll.u32 %v7501, 16
      %v7787 = vrot.slane %v7785, 5
      %v7788 = vor.u32 %v7784, %v7787
      %v7789 = vrot.slane %v7788, 4
      %v7791 = vshll.u32 %v7502, 16
      %v7793 = vrot.slane %v7791, 5
      %v7794 = vsel %vm3511, %v7789, %v7793
      %v7796 = vshrl.u32 %v7503, 16
      %v7798 = vrot.slane %v7796, 4
      %v7799 = vshll.u32 %v7503, 16
      %v7801 = vrot.slane %v7799, 5
      %v7802 = vor.u32 %v7798, %v7801
      %v7803 = vrot.slane %v7802, 4
      %v7805 = vshll.u32 %v7504, 16
      %v7807 = vrot.slane %v7805, 5
      %v7808 = vsel %vm3511, %v7803, %v7807
      %v7810 = vshrl.u32 %v7505, 16
      %v7812 = vrot.slane %v7810, 4
      %v7813 = vshll.u32 %v7505, 16
      %v7815 = vrot.slane %v7813, 5
      %v7816 = vor.u32 %v7812, %v7815
      %v7817 = vrot.slane %v7816, 4
      %v7819 = vshll.u32 %v7506, 16
      %v7821 = vrot.slane %v7819, 5
      %v7822 = vsel %vm3511, %v7817, %v7821
      %v7824 = vshrl.u32 %v7507, 16
      %v7826 = vrot.slane %v7824, 4
      %v7827 = vshll.u32 %v7507, 16
      %v7829 = vrot.slane %v7827, 5
      %v7830 = vor.u32 %v7826, %v7829
      %v7831 = vrot.slane %v7830, 4
      %v7833 = vshll.u32 %v7508, 16
      %v7835 = vrot.slane %v7833, 5
      %v7836 = vsel %vm3511, %v7831, %v7835
      %v7838 = vshrl.u32 %v7509, 16
      %v7840 = vrot.slane %v7838, 4
      %v7841 = vshll.u32 %v7509, 16
      %v7843 = vrot.slane %v7841, 5
      %v7844 = vor.u32 %v7840, %v7843
      %v7845 = vrot.slane %v7844, 4
      %v7847 = vshll.u32 %v7510, 16
      %v7849 = vrot.slane %v7847, 5
      %v7850 = vsel %vm3511, %v7845, %v7849
      %v7852 = vshrl.u32 %v7511, 16
      %v7854 = vrot.slane %v7852, 4
      %v7855 = vshll.u32 %v7511, 16
      %v7857 = vrot.slane %v7855, 5
      %v7858 = vor.u32 %v7854, %v7857
      %v7859 = vrot.slane %v7858, 4
      %v7861 = vshll.u32 %v7512, 16
      %v7863 = vrot.slane %v7861, 5
      %v7864 = vsel %vm3511, %v7859, %v7863
      %v7866 = vshrl.u32 %v7513, 16
      %v7868 = vrot.slane %v7866, 4
      %v7869 = vshll.u32 %v7513, 16
      %v7871 = vrot.slane %v7869, 5
      %v7872 = vor.u32 %v7868, %v7871
      %v7873 = vrot.slane %v7872, 4
      %v7875 = vshll.u32 %v7514, 16
      %v7877 = vrot.slane %v7875, 5
      %v7878 = vsel %vm3511, %v7873, %v7877
      %v7880 = vshrl.u32 %v7515, 16
      %v7882 = vrot.slane %v7880, 4
      %v7883 = vshll.u32 %v7515, 16
      %v7885 = vrot.slane %v7883, 5
      %v7886 = vor.u32 %v7882, %v7885
      %v7887 = vrot.slane %v7886, 4
      %v7889 = vshll.u32 %v7516, 16
      %v7891 = vrot.slane %v7889, 5
      %v7892 = vsel %vm3511, %v7887, %v7891
      %v7894 = vshrl.u32 %v7517, 16
      %v7896 = vrot.slane %v7894, 4
      %v7897 = vshll.u32 %v7517, 16
      %v7899 = vrot.slane %v7897, 5
      %v7900 = vor.u32 %v7896, %v7899
      %v7901 = vrot.slane %v7900, 4
      %v7903 = vshll.u32 %v7518, 16
      %v7905 = vrot.slane %v7903, 5
      %v7906 = vsel %vm3511, %v7901, %v7905
      %v7908 = vshrl.u32 %v7519, 16
      %v7910 = vrot.slane %v7908, 4
      %v7911 = vshll.u32 %v7519, 16
      %v7913 = vrot.slane %v7911, 5
      %v7914 = vor.u32 %v7910, %v7913
      %v7915 = vrot.slane %v7914, 4
      %v7917 = vshll.u32 %v7520, 16
      %v7919 = vrot.slane %v7917, 5
      %v7920 = vsel %vm3511, %v7915, %v7919
      %v7922 = vshrl.u32 %v7521, 16
      %v7924 = vrot.slane %v7922, 4
      %v7925 = vshll.u32 %v7521, 16
      %v7927 = vrot.slane %v7925, 5
      %v7928 = vor.u32 %v7924, %v7927
      %v7929 = vrot.slane %v7928, 4
      %v7931 = vshll.u32 %v7522, 16
      %v7933 = vrot.slane %v7931, 5
      %v7934 = vsel %vm3511, %v7929, %v7933
      %v7936 = vshrl.u32 %v7523, 16
      %v7938 = vrot.slane %v7936, 4
      %v7939 = vshll.u32 %v7523, 16
      %v7941 = vrot.slane %v7939, 5
      %v7942 = vor.u32 %v7938, %v7941
      %v7943 = vrot.slane %v7942, 4
      %v7945 = vshll.u32 %v7524, 16
      %v7947 = vrot.slane %v7945, 5
      %v7948 = vsel %vm3511, %v7943, %v7947
      %v7950 = vshrl.u32 %v7525, 16
      %v7952 = vrot.slane %v7950, 4
      %v7953 = vshll.u32 %v7525, 16
      %v7955 = vrot.slane %v7953, 5
      %v7956 = vor.u32 %v7952, %v7955
      %v7957 = vrot.slane %v7956, 4
      %v7959 = vshll.u32 %v7526, 16
      %v7961 = vrot.slane %v7959, 5
      %v7962 = vsel %vm3511, %v7957, %v7961
      %v7964 = vshrl.u32 %v7527, 16
      %v7966 = vrot.slane %v7964, 4
      %v7967 = vshll.u32 %v7527, 16
      %v7969 = vrot.slane %v7967, 5
      %v7970 = vor.u32 %v7966, %v7969
      %v7971 = vrot.slane %v7970, 4
      %v7973 = vshll.u32 %v7528, 16
      %v7975 = vrot.slane %v7973, 5
      %v7976 = vsel %vm3511, %v7971, %v7975
      %v7977 = vunpack.c.l.b16 %v7542
      %v7978 = vunpack.c.l.b16 %v7556
      %v7979 = vunpack.c.l.b16 %v7570
      %v7980 = vunpack.c.l.b16 %v7584
      %v7981 = vunpack.c.l.b16 %v7598
      %v7982 = vunpack.c.l.b16 %v7612
      %v7983 = vunpack.c.l.b16 %v7626
      %v7984 = vunpack.c.l.b16 %v7640
      %v7985 = vunpack.c.l.b16 %v7654
      %v7986 = vunpack.c.l.b16 %v7668
      %v7987 = vunpack.c.l.b16 %v7682
      %v7988 = vunpack.c.l.b16 %v7696
      %v7989 = vunpack.c.l.b16 %v7710
      %v7990 = vunpack.c.l.b16 %v7724
      %v7991 = vunpack.c.l.b16 %v7738
      %v7992 = vunpack.c.l.b16 %v7752
      %v7993 = vunpack.c.l.b16 %v7766
      %v7994 = vunpack.c.l.b16 %v7780
      %v7995 = vunpack.c.l.b16 %v7794
      %v7996 = vunpack.c.l.b16 %v7808
      %v7997 = vunpack.c.l.b16 %v7822
      %v7998 = vunpack.c.l.b16 %v7836
      %v7999 = vunpack.c.l.b16 %v7850
      %v8000 = vunpack.c.l.b16 %v7864
      %v8001 = vunpack.c.l.b16 %v7878
      %v8002 = vunpack.c.l.b16 %v7892
      %v8003 = vunpack.c.l.b16 %v7906
      %v8004 = vunpack.c.l.b16 %v7920
      %v8005 = vunpack.c.l.b16 %v7934
      %v8006 = vunpack.c.l.b16 %v7948
      %v8007 = vunpack.c.l.b16 %v7962
      %v8008 = vunpack.c.l.b16 %v7976
      %v8009 = vpack.c.b16 %v7978, %v7977
      %v8010 = vpack.c.b16 %v7980, %v7979
      %v8011 = vpack.c.b16 %v7982, %v7981
      %v8012 = vpack.c.b16 %v7984, %v7983
      %v8013 = vpack.c.b16 %v7986, %v7985
      %v8014 = vpack.c.b16 %v7988, %v7987
      %v8015 = vpack.c.b16 %v7990, %v7989
      %v8016 = vpack.c.b16 %v7992, %v7991
      %v8017 = vpack.c.b16 %v7994, %v7993
      %v8018 = vpack.c.b16 %v7996, %v7995
      %v8019 = vpack.c.b16 %v7998, %v7997
      %v8020 = vpack.c.b16 %v8000, %v7999
      %v8021 = vpack.c.b16 %v8002, %v8001
      %v8022 = vpack.c.b16 %v8004, %v8003
      %v8023 = vpack.c.b16 %v8006, %v8005
      %v8024 = vpack.c.b16 %v8008, %v8007
      %8041 = vst.msk [vmem:[#allocation3 + $0x20] sm:$0xff] %vm3023, %v8009
      %8042 = vst.msk [vmem:[#allocation3 + $0x48] sm:$0xff] %vm3023, %v8010
      %8043 = vst.msk [vmem:[#allocation3 + $0x70] sm:$0xff] %vm3023, %v8011
      %8044 = vst.msk [vmem:[#allocation3 + $0x98] sm:$0xff] %vm3023, %v8012
      %8045 = vst.msk [vmem:[#allocation3 + $0xc0] sm:$0xff] %vm3023, %v8013
      %8046 = vst.msk [vmem:[#allocation3 + $0xe8] sm:$0xff] %vm3023, %v8014
      %8047 = vst.msk [vmem:[#allocation3 + $0x110] sm:$0xff] %vm3023, %v8015
      %8048 = vst.msk [vmem:[#allocation3 + $0x138] sm:$0xff] %vm3023, %v8016
      %8049 = vst.msk [vmem:[#allocation3 + $0x160] sm:$0xff] %vm3023, %v8017
      %8050 = vst.msk [vmem:[#allocation3 + $0x188] sm:$0xff] %vm3023, %v8018
      %8051 = vst.msk [vmem:[#allocation3 + $0x1b0] sm:$0xff] %vm3023, %v8019
      %8052 = vst.msk [vmem:[#allocation3 + $0x1d8] sm:$0xff] %vm3023, %v8020
      %8053 = vst.msk [vmem:[#allocation3 + $0x200] sm:$0xff] %vm3023, %v8021
      %8054 = vst.msk [vmem:[#allocation3 + $0x228] sm:$0xff] %vm3023, %v8022
      %8055 = vst.msk [vmem:[#allocation3 + $0x250] sm:$0xff] %vm3023, %v8023
      %8056 = vst.msk [vmem:[#allocation3 + $0x278] sm:$0xff] %vm3023, %v8024
      %v8057 = vld [vmem:[#allocation3] sm:$0xff]
      %v8058 = vld [vmem:[#allocation3 + $0x8] sm:$0xff]
      %v8059 = vld [vmem:[#allocation3 + $0x10] sm:$0xff]
      %v8060 = vld [vmem:[#allocation3 + $0x18] sm:$0xff]
      %v8061 = vld [vmem:[#allocation3 + $0x20] sm:$0xff]
      %v8062 = vld [vmem:[#allocation3 + $0x28] sm:$0xff]
      %v8063 = vld [vmem:[#allocation3 + $0x30] sm:$0xff]
      %v8064 = vld [vmem:[#allocation3 + $0x38] sm:$0xff]
      %v8065 = vld [vmem:[#allocation3 + $0x40] sm:$0xff]
      %v8066 = vld [vmem:[#allocation3 + $0x48] sm:$0xff]
      %v8067 = vld [vmem:[#allocation3 + $0x50] sm:$0xff]
      %v8068 = vld [vmem:[#allocation3 + $0x58] sm:$0xff]
      %v8069 = vld [vmem:[#allocation3 + $0x60] sm:$0xff]
      %v8070 = vld [vmem:[#allocation3 + $0x68] sm:$0xff]
      %v8071 = vld [vmem:[#allocation3 + $0x70] sm:$0xff]
      %v8072 = vld [vmem:[#allocation3 + $0x78] sm:$0xff]
      %v8073 = vld [vmem:[#allocation3 + $0x80] sm:$0xff]
      %v8074 = vld [vmem:[#allocation3 + $0x88] sm:$0xff]
      %v8075 = vld [vmem:[#allocation3 + $0x90] sm:$0xff]
      %v8076 = vld [vmem:[#allocation3 + $0x98] sm:$0xff]
      %v8077 = vld [vmem:[#allocation3 + $0xa0] sm:$0xff]
      %v8078 = vld [vmem:[#allocation3 + $0xa8] sm:$0xff]
      %v8079 = vld [vmem:[#allocation3 + $0xb0] sm:$0xff]
      %v8080 = vld [vmem:[#allocation3 + $0xb8] sm:$0xff]
      %v8081 = vld [vmem:[#allocation3 + $0xc0] sm:$0xff]
      %v8082 = vld [vmem:[#allocation3 + $0xc8] sm:$0xff]
      %v8083 = vld [vmem:[#allocation3 + $0xd0] sm:$0xff]
      %v8084 = vld [vmem:[#allocation3 + $0xd8] sm:$0xff]
      %v8085 = vld [vmem:[#allocation3 + $0xe0] sm:$0xff]
      %v8086 = vld [vmem:[#allocation3 + $0xe8] sm:$0xff]
      %v8087 = vld [vmem:[#allocation3 + $0xf0] sm:$0xff]
      %v8088 = vld [vmem:[#allocation3 + $0xf8] sm:$0xff]
      %v8089 = vld [vmem:[#allocation3 + $0x100] sm:$0xff]
      %v8090 = vld [vmem:[#allocation3 + $0x108] sm:$0xff]
      %v8091 = vld [vmem:[#allocation3 + $0x110] sm:$0xff]
      %v8092 = vld [vmem:[#allocation3 + $0x118] sm:$0xff]
      %v8093 = vld [vmem:[#allocation3 + $0x120] sm:$0xff]
      %v8094 = vld [vmem:[#allocation3 + $0x128] sm:$0xff]
      %v8095 = vld [vmem:[#allocation3 + $0x130] sm:$0xff]
      %v8096 = vld [vmem:[#allocation3 + $0x138] sm:$0xff]
      %v8097 = vld [vmem:[#allocation3 + $0x140] sm:$0xff]
      %v8098 = vld [vmem:[#allocation3 + $0x148] sm:$0xff]
      %v8099 = vld [vmem:[#allocation3 + $0x150] sm:$0xff]
      %v8100 = vld [vmem:[#allocation3 + $0x158] sm:$0xff]
      %v8101 = vld [vmem:[#allocation3 + $0x160] sm:$0xff]
      %v8102 = vld [vmem:[#allocation3 + $0x168] sm:$0xff]
      %v8103 = vld [vmem:[#allocation3 + $0x170] sm:$0xff]
      %v8104 = vld [vmem:[#allocation3 + $0x178] sm:$0xff]
      %v8105 = vld [vmem:[#allocation3 + $0x180] sm:$0xff]
      %v8106 = vld [vmem:[#allocation3 + $0x188] sm:$0xff]
      %v8107 = vld [vmem:[#allocation3 + $0x190] sm:$0xff]
      %v8108 = vld [vmem:[#allocation3 + $0x198] sm:$0xff]
      %v8109 = vld [vmem:[#allocation3 + $0x1a0] sm:$0xff]
      %v8110 = vld [vmem:[#allocation3 + $0x1a8] sm:$0xff]
      %v8111 = vld [vmem:[#allocation3 + $0x1b0] sm:$0xff]
      %v8112 = vld [vmem:[#allocation3 + $0x1b8] sm:$0xff]
      %v8113 = vld [vmem:[#allocation3 + $0x1c0] sm:$0xff]
      %v8114 = vld [vmem:[#allocation3 + $0x1c8] sm:$0xff]
      %v8115 = vld [vmem:[#allocation3 + $0x1d0] sm:$0xff]
      %v8116 = vld [vmem:[#allocation3 + $0x1d8] sm:$0xff]
      %v8117 = vld [vmem:[#allocation3 + $0x1e0] sm:$0xff]
      %v8118 = vld [vmem:[#allocation3 + $0x1e8] sm:$0xff]
      %v8119 = vld [vmem:[#allocation3 + $0x1f0] sm:$0xff]
      %v8120 = vld [vmem:[#allocation3 + $0x1f8] sm:$0xff]
      %v8121 = vld [vmem:[#allocation3 + $0x200] sm:$0xff]
      %v8122 = vld [vmem:[#allocation3 + $0x208] sm:$0xff]
      %v8123 = vld [vmem:[#allocation3 + $0x210] sm:$0xff]
      %v8124 = vld [vmem:[#allocation3 + $0x218] sm:$0xff]
      %v8125 = vld [vmem:[#allocation3 + $0x220] sm:$0xff]
      %v8126 = vld [vmem:[#allocation3 + $0x228] sm:$0xff]
      %v8127 = vld [vmem:[#allocation3 + $0x230] sm:$0xff]
      %v8128 = vld [vmem:[#allocation3 + $0x238] sm:$0xff]
      %v8129 = vld [vmem:[#allocation3 + $0x240] sm:$0xff]
      %v8130 = vld [vmem:[#allocation3 + $0x248] sm:$0xff]
      %v8131 = vld [vmem:[#allocation3 + $0x250] sm:$0xff]
      %v8132 = vld [vmem:[#allocation3 + $0x258] sm:$0xff]
      %v8133 = vld [vmem:[#allocation3 + $0x260] sm:$0xff]
      %v8134 = vld [vmem:[#allocation3 + $0x268] sm:$0xff]
      %v8135 = vld [vmem:[#allocation3 + $0x270] sm:$0xff]
      %v8136 = vld [vmem:[#allocation3 + $0x278] sm:$0xff]
      %v8137 = vld [vmem:[%s2] sm:$0xf]
      %v8138 = vld [vmem:[%s2 + $0x4] sm:$0xf]
      %v8139 = vld [vmem:[%s2 + $0x8] sm:$0xf]
      %v8140 = vld [vmem:[%s2 + $0xc] sm:$0xf]
      %v8141 = vld [vmem:[%s2 + $0x10] sm:$0xf]
      %v8142 = vld [vmem:[%s2 + $0x14] sm:$0xf]
      %v8143 = vld [vmem:[%s2 + $0x18] sm:$0xf]
      %v8144 = vld [vmem:[%s2 + $0x1c] sm:$0xf]
      %v8145 = vld [vmem:[%s2 + $0x20] sm:$0xf]
      %v8146 = vld [vmem:[%s2 + $0x24] sm:$0xf]
      %v8147 = vld [vmem:[%s2 + $0x28] sm:$0xf]
      %v8148 = vld [vmem:[%s2 + $0x2c] sm:$0xf]
      %v8149 = vld [vmem:[%s2 + $0x30] sm:$0xf]
      %v8150 = vld [vmem:[%s2 + $0x34] sm:$0xf]
      %v8151 = vld [vmem:[%s2 + $0x38] sm:$0xf]
      %v8152 = vld [vmem:[%s2 + $0x3c] sm:$0xf]
      %v8153 = vld [vmem:[%s2 + $0x40] sm:$0xf]
      %v8154 = vld [vmem:[%s2 + $0x44] sm:$0xf]
      %v8155 = vld [vmem:[%s2 + $0x48] sm:$0xf]
      %v8156 = vld [vmem:[%s2 + $0x4c] sm:$0xf]
      %v8157 = vld [vmem:[%s2 + $0x50] sm:$0xf]
      %v8158 = vld [vmem:[%s2 + $0x54] sm:$0xf]
      %v8159 = vld [vmem:[%s2 + $0x58] sm:$0xf]
      %v8160 = vld [vmem:[%s2 + $0x5c] sm:$0xf]
      %v8161 = vld [vmem:[%s2 + $0x60] sm:$0xf]
      %v8162 = vld [vmem:[%s2 + $0x64] sm:$0xf]
      %v8163 = vld [vmem:[%s2 + $0x68] sm:$0xf]
      %v8164 = vld [vmem:[%s2 + $0x6c] sm:$0xf]
      %v8165 = vld [vmem:[%s2 + $0x70] sm:$0xf]
      %v8166 = vld [vmem:[%s2 + $0x74] sm:$0xf]
      %v8167 = vld [vmem:[%s2 + $0x78] sm:$0xf]
      %v8168 = vld [vmem:[%s2 + $0x7c] sm:$0xf]
      %v8169 = vld [vmem:[%s2 + $0x80] sm:$0xf]
      %v8170 = vld [vmem:[%s2 + $0x84] sm:$0xf]
      %v8171 = vld [vmem:[%s2 + $0x88] sm:$0xf]
      %v8172 = vld [vmem:[%s2 + $0x8c] sm:$0xf]
      %v8173 = vld [vmem:[%s2 + $0x90] sm:$0xf]
      %v8174 = vld [vmem:[%s2 + $0x94] sm:$0xf]
      %v8175 = vld [vmem:[%s2 + $0x98] sm:$0xf]
      %v8176 = vld [vmem:[%s2 + $0x9c] sm:$0xf]
      %v8177 = vld [vmem:[%s2 + $0xa0] sm:$0xf]
      %v8178 = vld [vmem:[%s2 + $0xa4] sm:$0xf]
      %v8179 = vld [vmem:[%s2 + $0xa8] sm:$0xf]
      %v8180 = vld [vmem:[%s2 + $0xac] sm:$0xf]
      %v8181 = vld [vmem:[%s2 + $0xb0] sm:$0xf]
      %v8182 = vld [vmem:[%s2 + $0xb4] sm:$0xf]
      %v8183 = vld [vmem:[%s2 + $0xb8] sm:$0xf]
      %v8184 = vld [vmem:[%s2 + $0xbc] sm:$0xf]
      %v8185 = vld [vmem:[%s2 + $0xc0] sm:$0xf]
      %v8186 = vld [vmem:[%s2 + $0xc4] sm:$0xf]
      %v8187 = vld [vmem:[%s2 + $0xc8] sm:$0xf]
      %v8188 = vld [vmem:[%s2 + $0xcc] sm:$0xf]
      %v8189 = vld [vmem:[%s2 + $0xd0] sm:$0xf]
      %v8190 = vld [vmem:[%s2 + $0xd4] sm:$0xf]
      %v8191 = vld [vmem:[%s2 + $0xd8] sm:$0xf]
      %v8192 = vld [vmem:[%s2 + $0xdc] sm:$0xf]
      %v8193 = vld [vmem:[%s2 + $0xe0] sm:$0xf]
      %v8194 = vld [vmem:[%s2 + $0xe4] sm:$0xf]
      %v8195 = vld [vmem:[%s2 + $0xe8] sm:$0xf]
      %v8196 = vld [vmem:[%s2 + $0xec] sm:$0xf]
      %v8197 = vld [vmem:[%s2 + $0xf0] sm:$0xf]
      %v8198 = vld [vmem:[%s2 + $0xf4] sm:$0xf]
      %v8199 = vld [vmem:[%s2 + $0xf8] sm:$0xf]
      %v8200 = vld [vmem:[%s2 + $0xfc] sm:$0xf]
      %v8201 = vld [vmem:[%s2 + $0x100] sm:$0xf]
      %v8202 = vld [vmem:[%s2 + $0x104] sm:$0xf]
      %v8203 = vld [vmem:[%s2 + $0x108] sm:$0xf]
      %v8204 = vld [vmem:[%s2 + $0x10c] sm:$0xf]
      %v8205 = vld [vmem:[%s2 + $0x110] sm:$0xf]
      %v8206 = vld [vmem:[%s2 + $0x114] sm:$0xf]
      %v8207 = vld [vmem:[%s2 + $0x118] sm:$0xf]
      %v8208 = vld [vmem:[%s2 + $0x11c] sm:$0xf]
      %v8209 = vld [vmem:[%s3] sm:$0x1]
      %v8211 = vlaneseq
      %v8212 = vshrl.u32 %v8211, 7
      %v8213 = vsub.s32 0, %v8212
      %v8214 = vrot.slane %v8209, %v8213
      %v8288 = vunpack.c.l.b16 %v8137
      %v8289 = vunpack.c.l.b16 %v8138
      %v8290 = vunpack.c.l.b16 %v8139
      %v8291 = vunpack.c.l.b16 %v8140
      %v8292 = vunpack.c.l.b16 %v8141
      %v8293 = vunpack.c.l.b16 %v8142
      %v8294 = vunpack.c.l.b16 %v8143
      %v8295 = vunpack.c.l.b16 %v8144
      %v8296 = vunpack.c.l.b16 %v8145
      %v8297 = vunpack.c.l.b16 %v8146
      %v8298 = vunpack.c.l.b16 %v8147
      %v8299 = vunpack.c.l.b16 %v8148
      %v8300 = vunpack.c.l.b16 %v8149
      %v8301 = vunpack.c.l.b16 %v8150
      %v8302 = vunpack.c.l.b16 %v8151
      %v8303 = vunpack.c.l.b16 %v8152
      %v8304 = vunpack.c.l.b16 %v8153
      %v8305 = vunpack.c.l.b16 %v8154
      %v8306 = vunpack.c.l.b16 %v8155
      %v8307 = vunpack.c.l.b16 %v8156
      %v8308 = vunpack.c.l.b16 %v8157
      %v8309 = vunpack.c.l.b16 %v8158
      %v8310 = vunpack.c.l.b16 %v8159
      %v8311 = vunpack.c.l.b16 %v8160
      %v8312 = vunpack.c.l.b16 %v8161
      %v8313 = vunpack.c.l.b16 %v8162
      %v8314 = vunpack.c.l.b16 %v8163
      %v8315 = vunpack.c.l.b16 %v8164
      %v8316 = vunpack.c.l.b16 %v8165
      %v8317 = vunpack.c.l.b16 %v8166
      %v8318 = vunpack.c.l.b16 %v8167
      %v8319 = vunpack.c.l.b16 %v8168
      %v8320 = vunpack.c.l.b16 %v8169
      %v8321 = vunpack.c.l.b16 %v8170
      %v8322 = vunpack.c.l.b16 %v8171
      %v8323 = vunpack.c.l.b16 %v8172
      %v8324 = vunpack.c.l.b16 %v8173
      %v8325 = vunpack.c.l.b16 %v8174
      %v8326 = vunpack.c.l.b16 %v8175
      %v8327 = vunpack.c.l.b16 %v8176
      %v8328 = vunpack.c.l.b16 %v8177
      %v8329 = vunpack.c.l.b16 %v8178
      %v8330 = vunpack.c.l.b16 %v8179
      %v8331 = vunpack.c.l.b16 %v8180
      %v8332 = vunpack.c.l.b16 %v8181
      %v8333 = vunpack.c.l.b16 %v8182
      %v8334 = vunpack.c.l.b16 %v8183
      %v8335 = vunpack.c.l.b16 %v8184
      %v8336 = vunpack.c.l.b16 %v8185
      %v8337 = vunpack.c.l.b16 %v8186
      %v8338 = vunpack.c.l.b16 %v8187
      %v8339 = vunpack.c.l.b16 %v8188
      %v8340 = vunpack.c.l.b16 %v8189
      %v8341 = vunpack.c.l.b16 %v8190
      %v8342 = vunpack.c.l.b16 %v8191
      %v8343 = vunpack.c.l.b16 %v8192
      %v8344 = vunpack.c.l.b16 %v8193
      %v8345 = vunpack.c.l.b16 %v8194
      %v8346 = vunpack.c.l.b16 %v8195
      %v8347 = vunpack.c.l.b16 %v8196
      %v8348 = vunpack.c.l.b16 %v8197
      %v8349 = vunpack.c.l.b16 %v8198
      %v8350 = vunpack.c.l.b16 %v8199
      %v8351 = vunpack.c.l.b16 %v8200
      %v8352 = vunpack.c.l.b16 %v8201
      %v8353 = vunpack.c.l.b16 %v8202
      %v8354 = vunpack.c.l.b16 %v8203
      %v8355 = vunpack.c.l.b16 %v8204
      %v8356 = vunpack.c.l.b16 %v8205
      %v8357 = vunpack.c.l.b16 %v8206
      %v8358 = vunpack.c.l.b16 %v8207
      %v8359 = vunpack.c.l.b16 %v8208
      %v8360 = vpack.c.b16 %v8289, %v8288
      %v8361 = vpack.c.b16 %v8291, %v8290
      %v8362 = vpack.c.b16 %v8293, %v8292
      %v8363 = vpack.c.b16 %v8295, %v8294
      %v8364 = vpack.c.b16 %v8297, %v8296
      %v8365 = vpack.c.b16 %v8299, %v8298
      %v8366 = vpack.c.b16 %v8301, %v8300
      %v8367 = vpack.c.b16 %v8303, %v8302
      %v8368 = vpack.c.b16 %v8305, %v8304
      %v8369 = vpack.c.b16 %v8307, %v8306
      %v8370 = vpack.c.b16 %v8309, %v8308
      %v8371 = vpack.c.b16 %v8311, %v8310
      %v8372 = vpack.c.b16 %v8313, %v8312
      %v8373 = vpack.c.b16 %v8315, %v8314
      %v8374 = vpack.c.b16 %v8317, %v8316
      %v8375 = vpack.c.b16 %v8319, %v8318
      %v8376 = vpack.c.b16 %v8321, %v8320
      %v8377 = vpack.c.b16 %v8323, %v8322
      %v8378 = vpack.c.b16 %v8325, %v8324
      %v8379 = vpack.c.b16 %v8327, %v8326
      %v8380 = vpack.c.b16 %v8329, %v8328
      %v8381 = vpack.c.b16 %v8331, %v8330
      %v8382 = vpack.c.b16 %v8333, %v8332
      %v8383 = vpack.c.b16 %v8335, %v8334
      %v8384 = vpack.c.b16 %v8337, %v8336
      %v8385 = vpack.c.b16 %v8339, %v8338
      %v8386 = vpack.c.b16 %v8341, %v8340
      %v8387 = vpack.c.b16 %v8343, %v8342
      %v8388 = vpack.c.b16 %v8345, %v8344
      %v8389 = vpack.c.b16 %v8347, %v8346
      %v8390 = vpack.c.b16 %v8349, %v8348
      %v8391 = vpack.c.b16 %v8351, %v8350
      %v8392 = vpack.c.b16 %v8353, %v8352
      %v8393 = vpack.c.b16 %v8355, %v8354
      %v8394 = vpack.c.b16 %v8357, %v8356
      %v8395 = vpack.c.b16 %v8359, %v8358
      %v8433 = vsel %vm3023, %v8061, 0
      %v8436 = vsel %vm3023, %v8066, 0
      %v8439 = vsel %vm3023, %v8071, 0
      %v8442 = vsel %vm3023, %v8076, 0
      %v8445 = vsel %vm3023, %v8081, 0
      %v8448 = vsel %vm3023, %v8086, 0
      %v8451 = vsel %vm3023, %v8091, 0
      %v8454 = vsel %vm3023, %v8096, 0
      %v8457 = vsel %vm3023, %v8101, 0
      %v8460 = vsel %vm3023, %v8106, 0
      %v8463 = vsel %vm3023, %v8111, 0
      %v8466 = vsel %vm3023, %v8116, 0
      %v8469 = vsel %vm3023, %v8121, 0
      %v8472 = vsel %vm3023, %v8126, 0
      %v8475 = vsel %vm3023, %v8131, 0
      %v8478 = vsel %vm3023, %v8136, 0
      %8480 = vmatprep.subr.bf16.mxu0 0
      %8481 = vmatpush1.bf16.msra.mxu0 %v8360
      %8482 = vmatprep.subr.bf16.mxu0 0
      %8483 = vmatpush1.bf16.msra.mxu0 %v8361
      %8484 = vmatprep.subr.bf16.mxu0 0
      %8485 = vmatpush1.bf16.msra.mxu0 %v8362
      %8486 = vmatprep.subr.bf16.mxu0 0
      %8487 = vmatpush1.bf16.msra.mxu0 %v8363
      %8488 = vmatprep.subr.bf16.mxu0 0
      %8489 = vmatpush1.bf16.msra.mxu0 %v8364
      %8490 = vmatprep.subr.bf16.mxu0 0
      %8491 = vmatpush1.bf16.msra.mxu0 %v8365
      %8492 = vmatprep.subr.bf16.mxu0 0
      %8493 = vmatpush1.bf16.msra.mxu0 %v8366
      %8494 = vmatprep.subr.bf16.mxu0 0
      %8495 = vmatpush1.bf16.msra.mxu0 %v8367
      %8496 = vmatprep.subr.bf16.mxu0 0
      %8497 = vmatpush1.bf16.msra.mxu0 %v8368
      %8498 = vmatprep.subr.bf16.mxu0 0
      %8499 = vmatpush1.bf16.msra.mxu0 %v8369
      %8500 = vmatprep.subr.bf16.mxu0 0
      %8501 = vmatpush1.bf16.msra.mxu0 %v8370
      %8502 = vmatprep.subr.bf16.mxu0 0
      %8503 = vmatpush1.bf16.msra.mxu0 %v8371
      %8504 = vmatprep.subr.bf16.mxu0 0
      %8505 = vmatpush1.bf16.msra.mxu0 %v8372
      %8506 = vmatprep.subr.bf16.mxu0 0
      %8507 = vmatpush1.bf16.msra.mxu0 %v8373
      %8508 = vmatprep.subr.bf16.mxu0 0
      %8509 = vmatpush1.bf16.msra.mxu0 %v8374
      %8510 = vmatprep.subr.bf16.mxu0 0
      %8511 = vmatpush1.bf16.msra.mxu0 %v8375
      %8512 = vmatprep.mubr.bf16.mxu0 %v8058
      %8513 = vmatmul.mubr.bf16.gmra.mrb[0].mxu0 %v8057
      %v8514 = vpop.f32.mrb[0].mxu0
      %v8515 = vadd.f32 %v8214, %v8514
      %v8516 = vpop.f32.mrb[0].mxu0
      %v8517 = vpop.f32.mrb[0].mxu0
      %v8518 = vadd.f32 %v8214, %v8517
      %v8519 = vpop.f32.mrb[0].mxu0
      %8520 = vmatprep.mubr.bf16.mxu0 %v8063
      %8521 = vmatmul.mubr.bf16.gmra.mrb[0].mxu0 %v8062
      %v8522 = vpop.f32.mrb[0].mxu0
      %v8523 = vadd.f32 %v8214, %v8522
      %v8524 = vpop.f32.mrb[0].mxu0
      %v8525 = vpop.f32.mrb[0].mxu0
      %v8526 = vadd.f32 %v8214, %v8525
      %v8527 = vpop.f32.mrb[0].mxu0
      %8528 = vmatprep.mubr.bf16.mxu0 %v8068
      %8529 = vmatmul.mubr.bf16.gmra.mrb[0].mxu0 %v8067
      %v8530 = vpop.f32.mrb[0].mxu0
      %v8531 = vadd.f32 %v8214, %v8530
      %v8532 = vpop.f32.mrb[0].mxu0
      %v8533 = vpop.f32.mrb[0].mxu0
      %v8534 = vadd.f32 %v8214, %v8533
      %v8535 = vpop.f32.mrb[0].mxu0
      %8536 = vmatprep.mubr.bf16.mxu0 %v8073
      %8537 = vmatmul.mubr.bf16.gmra.mrb[0].mxu0 %v8072
      %v8538 = vpop.f32.mrb[0].mxu0
      %v8539 = vadd.f32 %v8214, %v8538
      %v8540 = vpop.f32.mrb[0].mxu0
      %v8541 = vpop.f32.mrb[0].mxu0
      %v8542 = vadd.f32 %v8214, %v8541
      %v8543 = vpop.f32.mrb[0].mxu0
      %8544 = vmatprep.mubr.bf16.mxu0 %v8078
      %8545 = vmatmul.mubr.bf16.gmra.mrb[0].mxu0 %v8077
      %v8546 = vpop.f32.mrb[0].mxu0
      %v8547 = vadd.f32 %v8214, %v8546
      %v8548 = vpop.f32.mrb[0].mxu0
      %v8549 = vpop.f32.mrb[0].mxu0
      %v8550 = vadd.f32 %v8214, %v8549
      %v8551 = vpop.f32.mrb[0].mxu0
      %8552 = vmatprep.mubr.bf16.mxu0 %v8083
      %8553 = vmatmul.mubr.bf16.gmra.mrb[0].mxu0 %v8082
      %v8554 = vpop.f32.mrb[0].mxu0
      %v8555 = vadd.f32 %v8214, %v8554
      %v8556 = vpop.f32.mrb[0].mxu0
      %v8557 = vpop.f32.mrb[0].mxu0
      %v8558 = vadd.f32 %v8214, %v8557
      %v8559 = vpop.f32.mrb[0].mxu0
      %8560 = vmatprep.mubr.bf16.mxu0 %v8088
      %8561 = vmatmul.mubr.bf16.gmra.mrb[0].mxu0 %v8087
      %v8562 = vpop.f32.mrb[0].mxu0
      %v8563 = vadd.f32 %v8214, %v8562
      %v8564 = vpop.f32.mrb[0].mxu0
      %v8565 = vpop.f32.mrb[0].mxu0
      %v8566 = vadd.f32 %v8214, %v8565
      %v8567 = vpop.f32.mrb[0].mxu0
      %8568 = vmatprep.mubr.bf16.mxu0 %v8093
      %8569 = vmatmul.mubr.bf16.gmra.mrb[0].mxu0 %v8092
      %v8570 = vpop.f32.mrb[0].mxu0
      %v8571 = vadd.f32 %v8214, %v8570
      %v8572 = vpop.f32.mrb[0].mxu0
      %v8573 = vpop.f32.mrb[0].mxu0
      %v8574 = vadd.f32 %v8214, %v8573
      %v8575 = vpop.f32.mrb[0].mxu0
      %8576 = vmatprep.mubr.bf16.mxu0 %v8098
      %8577 = vmatmul.mubr.bf16.gmra.mrb[0].mxu0 %v8097
      %v8578 = vpop.f32.mrb[0].mxu0
      %v8579 = vadd.f32 %v8214, %v8578
      %v8580 = vpop.f32.mrb[0].mxu0
      %v8581 = vpop.f32.mrb[0].mxu0
      %v8582 = vadd.f32 %v8214, %v8581
      %v8583 = vpop.f32.mrb[0].mxu0
      %8584 = vmatprep.mubr.bf16.mxu0 %v8103
      %8585 = vmatmul.mubr.bf16.gmra.mrb[0].mxu0 %v8102
      %v8586 = vpop.f32.mrb[0].mxu0
      %v8587 = vadd.f32 %v8214, %v8586
      %v8588 = vpop.f32.mrb[0].mxu0
      %v8589 = vpop.f32.mrb[0].mxu0
      %v8590 = vadd.f32 %v8214, %v8589
      %v8591 = vpop.f32.mrb[0].mxu0
      %8592 = vmatprep.mubr.bf16.mxu0 %v8108
      %8593 = vmatmul.mubr.bf16.gmra.mrb[0].mxu0 %v8107
      %v8594 = vpop.f32.mrb[0].mxu0
      %v8595 = vadd.f32 %v8214, %v8594
      %v8596 = vpop.f32.mrb[0].mxu0
      %v8597 = vpop.f32.mrb[0].mxu0
      %v8598 = vadd.f32 %v8214, %v8597
      %v8599 = vpop.f32.mrb[0].mxu0
      %8600 = vmatprep.mubr.bf16.mxu0 %v8113
      %8601 = vmatmul.mubr.bf16.gmra.mrb[0].mxu0 %v8112
      %v8602 = vpop.f32.mrb[0].mxu0
      %v8603 = vadd.f32 %v8214, %v8602
      %v8604 = vpop.f32.mrb[0].mxu0
      %v8605 = vpop.f32.mrb[0].mxu0
      %v8606 = vadd.f32 %v8214, %v8605
      %v8607 = vpop.f32.mrb[0].mxu0
      %8608 = vmatprep.mubr.bf16.mxu0 %v8118
      %8609 = vmatmul.mubr.bf16.gmra.mrb[0].mxu0 %v8117
      %v8610 = vpop.f32.mrb[0].mxu0
      %v8611 = vadd.f32 %v8214, %v8610
      %v8612 = vpop.f32.mrb[0].mxu0
      %v8613 = vpop.f32.mrb[0].mxu0
      %v8614 = vadd.f32 %v8214, %v8613
      %v8615 = vpop.f32.mrb[0].mxu0
      %8616 = vmatprep.mubr.bf16.mxu0 %v8123
      %8617 = vmatmul.mubr.bf16.gmra.mrb[0].mxu0 %v8122
      %v8618 = vpop.f32.mrb[0].mxu0
      %v8619 = vadd.f32 %v8214, %v8618
      %v8620 = vpop.f32.mrb[0].mxu0
      %v8621 = vpop.f32.mrb[0].mxu0
      %v8622 = vadd.f32 %v8214, %v8621
      %v8623 = vpop.f32.mrb[0].mxu0
      %8624 = vmatprep.mubr.bf16.mxu0 %v8128
      %8625 = vmatmul.mubr.bf16.gmra.mrb[0].mxu0 %v8127
      %v8626 = vpop.f32.mrb[0].mxu0
      %v8627 = vadd.f32 %v8214, %v8626
      %v8628 = vpop.f32.mrb[0].mxu0
      %v8629 = vpop.f32.mrb[0].mxu0
      %v8630 = vadd.f32 %v8214, %v8629
      %v8631 = vpop.f32.mrb[0].mxu0
      %8632 = vmatprep.mubr.bf16.mxu0 %v8133
      %8633 = vmatmul.mubr.bf16.gmra.mrb[0].mxu0 %v8132
      %v8634 = vpop.f32.mrb[0].mxu0
      %v8635 = vadd.f32 %v8214, %v8634
      %v8636 = vpop.f32.mrb[0].mxu0
      %v8637 = vpop.f32.mrb[0].mxu0
      %v8638 = vadd.f32 %v8214, %v8637
      %v8639 = vpop.f32.mrb[0].mxu0
      %8640 = vdwg.mxu0
      %8641 = vmatprep.subr.bf16.mxu0 0
      %8642 = vmatpush1.bf16.msra.mxu0 %v8376
      %8643 = vmatprep.subr.bf16.mxu0 0
      %8644 = vmatpush1.bf16.msra.mxu0 %v8377
      %8645 = vmatprep.subr.bf16.mxu0 0
      %8646 = vmatpush1.bf16.msra.mxu0 %v8378
      %8647 = vmatprep.subr.bf16.mxu0 0
      %8648 = vmatpush1.bf16.msra.mxu0 %v8379
      %8649 = vmatprep.subr.bf16.mxu0 0
      %8650 = vmatpush1.bf16.msra.mxu0 %v8380
      %8651 = vmatprep.subr.bf16.mxu0 0
      %8652 = vmatpush1.bf16.msra.mxu0 %v8381
      %8653 = vmatprep.subr.bf16.mxu0 0
      %8654 = vmatpush1.bf16.msra.mxu0 %v8382
      %8655 = vmatprep.subr.bf16.mxu0 0
      %8656 = vmatpush1.bf16.msra.mxu0 %v8383
      %8657 = vmatprep.subr.bf16.mxu0 0
      %8658 = vmatpush1.bf16.msra.mxu0 %v8384
      %8659 = vmatprep.subr.bf16.mxu0 0
      %8660 = vmatpush1.bf16.msra.mxu0 %v8385
      %8661 = vmatprep.subr.bf16.mxu0 0
      %8662 = vmatpush1.bf16.msra.mxu0 %v8386
      %8663 = vmatprep.subr.bf16.mxu0 0
      %8664 = vmatpush1.bf16.msra.mxu0 %v8387
      %8665 = vmatprep.subr.bf16.mxu0 0
      %8666 = vmatpush1.bf16.msra.mxu0 %v8388
      %8667 = vmatprep.subr.bf16.mxu0 0
      %8668 = vmatpush1.bf16.msra.mxu0 %v8389
      %8669 = vmatprep.subr.bf16.mxu0 0
      %8670 = vmatpush1.bf16.msra.mxu0 %v8390
      %8671 = vmatprep.subr.bf16.mxu0 0
      %8672 = vmatpush1.bf16.msra.mxu0 %v8391
      %8673 = vmatprep.mubr.bf16.mxu0 %v8060
      %8674 = vmatmul.mubr.bf16.gmra.mrb[0].mxu0 %v8059
      %v8675 = vpop.f32.mrb[0].mxu0
      %v8676 = vadd.f32 %v8515, %v8675
      %v8677 = vpop.f32.mrb[0].mxu0
      %v8678 = vpop.f32.mrb[0].mxu0
      %v8679 = vadd.f32 %v8518, %v8678
      %v8680 = vpop.f32.mrb[0].mxu0
      %8681 = vmatprep.mubr.bf16.mxu0 %v8065
      %8682 = vmatmul.mubr.bf16.gmra.mrb[0].mxu0 %v8064
      %v8683 = vpop.f32.mrb[0].mxu0
      %v8684 = vadd.f32 %v8523, %v8683
      %v8685 = vpop.f32.mrb[0].mxu0
      %v8686 = vpop.f32.mrb[0].mxu0
      %v8687 = vadd.f32 %v8526, %v8686
      %v8688 = vpop.f32.mrb[0].mxu0
      %8689 = vmatprep.mubr.bf16.mxu0 %v8070
      %8690 = vmatmul.mubr.bf16.gmra.mrb[0].mxu0 %v8069
      %v8691 = vpop.f32.mrb[0].mxu0
      %v8692 = vadd.f32 %v8531, %v8691
      %v8693 = vpop.f32.mrb[0].mxu0
      %v8694 = vpop.f32.mrb[0].mxu0
      %v8695 = vadd.f32 %v8534, %v8694
      %v8696 = vpop.f32.mrb[0].mxu0
      %8697 = vmatprep.mubr.bf16.mxu0 %v8075
      %8698 = vmatmul.mubr.bf16.gmra.mrb[0].mxu0 %v8074
      %v8699 = vpop.f32.mrb[0].mxu0
      %v8700 = vadd.f32 %v8539, %v8699
      %v8701 = vpop.f32.mrb[0].mxu0
      %v8702 = vpop.f32.mrb[0].mxu0
      %v8703 = vadd.f32 %v8542, %v8702
      %v8704 = vpop.f32.mrb[0].mxu0
      %8705 = vmatprep.mubr.bf16.mxu0 %v8080
      %8706 = vmatmul.mubr.bf16.gmra.mrb[0].mxu0 %v8079
      %v8707 = vpop.f32.mrb[0].mxu0
      %v8708 = vadd.f32 %v8547, %v8707
      %v8709 = vpop.f32.mrb[0].mxu0
      %v8710 = vpop.f32.mrb[0].mxu0
      %v8711 = vadd.f32 %v8550, %v8710
      %v8712 = vpop.f32.mrb[0].mxu0
      %8713 = vmatprep.mubr.bf16.mxu0 %v8085
      %8714 = vmatmul.mubr.bf16.gmra.mrb[0].mxu0 %v8084
      %v8715 = vpop.f32.mrb[0].mxu0
      %v8716 = vadd.f32 %v8555, %v8715
      %v8717 = vpop.f32.mrb[0].mxu0
      %v8718 = vpop.f32.mrb[0].mxu0
      %v8719 = vadd.f32 %v8558, %v8718
      %v8720 = vpop.f32.mrb[0].mxu0
      %8721 = vmatprep.mubr.bf16.mxu0 %v8090
      %8722 = vmatmul.mubr.bf16.gmra.mrb[0].mxu0 %v8089
      %v8723 = vpop.f32.mrb[0].mxu0
      %v8724 = vadd.f32 %v8563, %v8723
      %v8725 = vpop.f32.mrb[0].mxu0
      %v8726 = vpop.f32.mrb[0].mxu0
      %v8727 = vadd.f32 %v8566, %v8726
      %v8728 = vpop.f32.mrb[0].mxu0
      %8729 = vmatprep.mubr.bf16.mxu0 %v8095
      %8730 = vmatmul.mubr.bf16.gmra.mrb[0].mxu0 %v8094
      %v8731 = vpop.f32.mrb[0].mxu0
      %v8732 = vadd.f32 %v8571, %v8731
      %v8733 = vpop.f32.mrb[0].mxu0
      %v8734 = vpop.f32.mrb[0].mxu0
      %v8735 = vadd.f32 %v8574, %v8734
      %v8736 = vpop.f32.mrb[0].mxu0
      %8737 = vmatprep.mubr.bf16.mxu0 %v8100
      %8738 = vmatmul.mubr.bf16.gmra.mrb[0].mxu0 %v8099
      %v8739 = vpop.f32.mrb[0].mxu0
      %v8740 = vadd.f32 %v8579, %v8739
      %v8741 = vpop.f32.mrb[0].mxu0
      %v8742 = vpop.f32.mrb[0].mxu0
      %v8743 = vadd.f32 %v8582, %v8742
      %v8744 = vpop.f32.mrb[0].mxu0
      %8745 = vmatprep.mubr.bf16.mxu0 %v8105
      %8746 = vmatmul.mubr.bf16.gmra.mrb[0].mxu0 %v8104
      %v8747 = vpop.f32.mrb[0].mxu0
      %v8748 = vadd.f32 %v8587, %v8747
      %v8749 = vpop.f32.mrb[0].mxu0
      %v8750 = vpop.f32.mrb[0].mxu0
      %v8751 = vadd.f32 %v8590, %v8750
      %v8752 = vpop.f32.mrb[0].mxu0
      %8753 = vmatprep.mubr.bf16.mxu0 %v8110
      %8754 = vmatmul.mubr.bf16.gmra.mrb[0].mxu0 %v8109
      %v8755 = vpop.f32.mrb[0].mxu0
      %v8756 = vadd.f32 %v8595, %v8755
      %v8757 = vpop.f32.mrb[0].mxu0
      %v8758 = vpop.f32.mrb[0].mxu0
      %v8759 = vadd.f32 %v8598, %v8758
      %v8760 = vpop.f32.mrb[0].mxu0
      %8761 = vmatprep.mubr.bf16.mxu0 %v8115
      %8762 = vmatmul.mubr.bf16.gmra.mrb[0].mxu0 %v8114
      %v8763 = vpop.f32.mrb[0].mxu0
      %v8764 = vadd.f32 %v8603, %v8763
      %v8765 = vpop.f32.mrb[0].mxu0
      %v8766 = vpop.f32.mrb[0].mxu0
      %v8767 = vadd.f32 %v8606, %v8766
      %v8768 = vpop.f32.mrb[0].mxu0
      %8769 = vmatprep.mubr.bf16.mxu0 %v8120
      %8770 = vmatmul.mubr.bf16.gmra.mrb[0].mxu0 %v8119
      %v8771 = vpop.f32.mrb[0].mxu0
      %v8772 = vadd.f32 %v8611, %v8771
      %v8773 = vpop.f32.mrb[0].mxu0
      %v8774 = vpop.f32.mrb[0].mxu0
      %v8775 = vadd.f32 %v8614, %v8774
      %v8776 = vpop.f32.mrb[0].mxu0
      %8777 = vmatprep.mubr.bf16.mxu0 %v8125
      %8778 = vmatmul.mubr.bf16.gmra.mrb[0].mxu0 %v8124
      %v8779 = vpop.f32.mrb[0].mxu0
      %v8780 = vadd.f32 %v8619, %v8779
      %v8781 = vpop.f32.mrb[0].mxu0
      %v8782 = vpop.f32.mrb[0].mxu0
      %v8783 = vadd.f32 %v8622, %v8782
      %v8784 = vpop.f32.mrb[0].mxu0
      %8785 = vmatprep.mubr.bf16.mxu0 %v8130
      %8786 = vmatmul.mubr.bf16.gmra.mrb[0].mxu0 %v8129
      %v8787 = vpop.f32.mrb[0].mxu0
      %v8788 = vadd.f32 %v8627, %v8787
      %v8789 = vpop.f32.mrb[0].mxu0
      %v8790 = vpop.f32.mrb[0].mxu0
      %v8791 = vadd.f32 %v8630, %v8790
      %v8792 = vpop.f32.mrb[0].mxu0
      %8793 = vmatprep.mubr.bf16.mxu0 %v8135
      %8794 = vmatmul.mubr.bf16.gmra.mrb[0].mxu0 %v8134
      %v8795 = vpop.f32.mrb[0].mxu0
      %v8796 = vadd.f32 %v8635, %v8795
      %v8797 = vpop.f32.mrb[0].mxu0
      %v8798 = vpop.f32.mrb[0].mxu0
      %v8799 = vadd.f32 %v8638, %v8798
      %v8800 = vpop.f32.mrb[0].mxu0
      %8801 = vdwg.mxu0
      %8802 = vmatprep.subr.bf16.mxu0 0
      %8803 = vmatpush1.bf16.msra.mxu0 %v8392
      %8804 = vmatprep.subr.bf16.mxu0 0
      %8805 = vmatpush1.bf16.msra.mxu0 %v8393
      %8806 = vmatprep.subr.bf16.mxu0 0
      %8807 = vmatpush1.bf16.msra.mxu0 %v8394
      %8808 = vmatprep.subr.bf16.mxu0 0
      %8809 = vmatpush1.bf16.msra.mxu0 %v8395
      %8810 = vmatprep.subr.bf16.mxu0 0
      %8811 = vmatpush1.bf16.msra.mxu0 0
      %8812 = vmatprep.subr.bf16.mxu0 0
      %8813 = vmatpush1.bf16.msra.mxu0 0
      %8814 = vmatprep.subr.bf16.mxu0 0
      %8815 = vmatpush1.bf16.msra.mxu0 0
      %8816 = vmatprep.subr.bf16.mxu0 0
      %8817 = vmatpush1.bf16.msra.mxu0 0
      %8818 = vmatprep.subr.bf16.mxu0 0
      %8819 = vmatpush1.bf16.msra.mxu0 0
      %8820 = vmatprep.subr.bf16.mxu0 0
      %8821 = vmatpush1.bf16.msra.mxu0 0
      %8822 = vmatprep.subr.bf16.mxu0 0
      %8823 = vmatpush1.bf16.msra.mxu0 0
      %8824 = vmatprep.subr.bf16.mxu0 0
      %8825 = vmatpush1.bf16.msra.mxu0 0
      %8826 = vmatprep.subr.bf16.mxu0 0
      %8827 = vmatpush1.bf16.msra.mxu0 0
      %8828 = vmatprep.subr.bf16.mxu0 0
      %8829 = vmatpush1.bf16.msra.mxu0 0
      %8830 = vmatprep.subr.bf16.mxu0 0
      %8831 = vmatpush1.bf16.msra.mxu0 0
      %8832 = vmatprep.subr.bf16.mxu0 0
      %8833 = vmatpush1.bf16.msra.mxu0 0
      %8834 = vmatprep.mubr.bf16.mxu0 0
      %8835 = vmatmul.mubr.bf16.gmra.mrb[0].mxu0 %v8433
      %v8836 = vpop.f32.mrb[0].mxu0
      %v8837 = vadd.f32 %v8676, %v8836
      %v8838 = vpop.f32.mrb[0].mxu0
      %v8839 = vpop.f32.mrb[0].mxu0
      %v8840 = vadd.f32 %v8679, %v8839
      %v8841 = vpop.f32.mrb[0].mxu0
      %8842 = vmatprep.mubr.bf16.mxu0 0
      %8843 = vmatmul.mubr.bf16.gmra.mrb[0].mxu0 %v8436
      %v8844 = vpop.f32.mrb[0].mxu0
      %v8845 = vadd.f32 %v8684, %v8844
      %v8846 = vpop.f32.mrb[0].mxu0
      %v8847 = vpop.f32.mrb[0].mxu0
      %v8848 = vadd.f32 %v8687, %v8847
      %v8849 = vpop.f32.mrb[0].mxu0
      %8850 = vmatprep.mubr.bf16.mxu0 0
      %8851 = vmatmul.mubr.bf16.gmra.mrb[0].mxu0 %v8439
      %v8852 = vpop.f32.mrb[0].mxu0
      %v8853 = vadd.f32 %v8692, %v8852
      %v8854 = vpop.f32.mrb[0].mxu0
      %v8855 = vpop.f32.mrb[0].mxu0
      %v8856 = vadd.f32 %v8695, %v8855
      %v8857 = vpop.f32.mrb[0].mxu0
      %8858 = vmatprep.mubr.bf16.mxu0 0
      %8859 = vmatmul.mubr.bf16.gmra.mrb[0].mxu0 %v8442
      %v8860 = vpop.f32.mrb[0].mxu0
      %v8861 = vadd.f32 %v8700, %v8860
      %v8862 = vpop.f32.mrb[0].mxu0
      %v8863 = vpop.f32.mrb[0].mxu0
      %v8864 = vadd.f32 %v8703, %v8863
      %v8865 = vpop.f32.mrb[0].mxu0
      %8866 = vmatprep.mubr.bf16.mxu0 0
      %8867 = vmatmul.mubr.bf16.gmra.mrb[0].mxu0 %v8445
      %v8868 = vpop.f32.mrb[0].mxu0
      %v8869 = vadd.f32 %v8708, %v8868
      %v8870 = vpop.f32.mrb[0].mxu0
      %v8871 = vpop.f32.mrb[0].mxu0
      %v8872 = vadd.f32 %v8711, %v8871
      %v8873 = vpop.f32.mrb[0].mxu0
      %8874 = vmatprep.mubr.bf16.mxu0 0
      %8875 = vmatmul.mubr.bf16.gmra.mrb[0].mxu0 %v8448
      %v8876 = vpop.f32.mrb[0].mxu0
      %v8877 = vadd.f32 %v8716, %v8876
      %v8878 = vpop.f32.mrb[0].mxu0
      %v8879 = vpop.f32.mrb[0].mxu0
      %v8880 = vadd.f32 %v8719, %v8879
      %v8881 = vpop.f32.mrb[0].mxu0
      %8882 = vmatprep.mubr.bf16.mxu0 0
      %8883 = vmatmul.mubr.bf16.gmra.mrb[0].mxu0 %v8451
      %v8884 = vpop.f32.mrb[0].mxu0
      %v8885 = vadd.f32 %v8724, %v8884
      %v8886 = vpop.f32.mrb[0].mxu0
      %v8887 = vpop.f32.mrb[0].mxu0
      %v8888 = vadd.f32 %v8727, %v8887
      %v8889 = vpop.f32.mrb[0].mxu0
      %8890 = vmatprep.mubr.bf16.mxu0 0
      %8891 = vmatmul.mubr.bf16.gmra.mrb[0].mxu0 %v8454
      %v8892 = vpop.f32.mrb[0].mxu0
      %v8893 = vadd.f32 %v8732, %v8892
      %v8894 = vpop.f32.mrb[0].mxu0
      %v8895 = vpop.f32.mrb[0].mxu0
      %v8896 = vadd.f32 %v8735, %v8895
      %v8897 = vpop.f32.mrb[0].mxu0
      %8898 = vmatprep.mubr.bf16.mxu0 0
      %8899 = vmatmul.mubr.bf16.gmra.mrb[0].mxu0 %v8457
      %v8900 = vpop.f32.mrb[0].mxu0
      %v8901 = vadd.f32 %v8740, %v8900
      %v8902 = vpop.f32.mrb[0].mxu0
      %v8903 = vpop.f32.mrb[0].mxu0
      %v8904 = vadd.f32 %v8743, %v8903
      %v8905 = vpop.f32.mrb[0].mxu0
      %8906 = vmatprep.mubr.bf16.mxu0 0
      %8907 = vmatmul.mubr.bf16.gmra.mrb[0].mxu0 %v8460
      %v8908 = vpop.f32.mrb[0].mxu0
      %v8909 = vadd.f32 %v8748, %v8908
      %v8910 = vpop.f32.mrb[0].mxu0
      %v8911 = vpop.f32.mrb[0].mxu0
      %v8912 = vadd.f32 %v8751, %v8911
      %v8913 = vpop.f32.mrb[0].mxu0
      %8914 = vmatprep.mubr.bf16.mxu0 0
      %8915 = vmatmul.mubr.bf16.gmra.mrb[0].mxu0 %v8463
      %v8916 = vpop.f32.mrb[0].mxu0
      %v8917 = vadd.f32 %v8756, %v8916
      %v8918 = vpop.f32.mrb[0].mxu0
      %v8919 = vpop.f32.mrb[0].mxu0
      %v8920 = vadd.f32 %v8759, %v8919
      %v8921 = vpop.f32.mrb[0].mxu0
      %8922 = vmatprep.mubr.bf16.mxu0 0
      %8923 = vmatmul.mubr.bf16.gmra.mrb[0].mxu0 %v8466
      %v8924 = vpop.f32.mrb[0].mxu0
      %v8925 = vadd.f32 %v8764, %v8924
      %v8926 = vpop.f32.mrb[0].mxu0
      %v8927 = vpop.f32.mrb[0].mxu0
      %v8928 = vadd.f32 %v8767, %v8927
      %v8929 = vpop.f32.mrb[0].mxu0
      %8930 = vmatprep.mubr.bf16.mxu0 0
      %8931 = vmatmul.mubr.bf16.gmra.mrb[0].mxu0 %v8469
      %v8932 = vpop.f32.mrb[0].mxu0
      %v8933 = vadd.f32 %v8772, %v8932
      %v8934 = vpop.f32.mrb[0].mxu0
      %v8935 = vpop.f32.mrb[0].mxu0
      %v8936 = vadd.f32 %v8775, %v8935
      %v8937 = vpop.f32.mrb[0].mxu0
      %8938 = vmatprep.mubr.bf16.mxu0 0
      %8939 = vmatmul.mubr.bf16.gmra.mrb[0].mxu0 %v8472
      %v8940 = vpop.f32.mrb[0].mxu0
      %v8941 = vadd.f32 %v8780, %v8940
      %v8942 = vpop.f32.mrb[0].mxu0
      %v8943 = vpop.f32.mrb[0].mxu0
      %v8944 = vadd.f32 %v8783, %v8943
      %v8945 = vpop.f32.mrb[0].mxu0
      %8946 = vmatprep.mubr.bf16.mxu0 0
      %8947 = vmatmul.mubr.bf16.gmra.mrb[0].mxu0 %v8475
      %v8948 = vpop.f32.mrb[0].mxu0
      %v8949 = vadd.f32 %v8788, %v8948
      %v8950 = vpop.f32.mrb[0].mxu0
      %v8951 = vpop.f32.mrb[0].mxu0
      %v8952 = vadd.f32 %v8791, %v8951
      %v8953 = vpop.f32.mrb[0].mxu0
      %8954 = vmatprep.mubr.bf16.mxu0 0
      %8955 = vmatmul.mubr.bf16.gmra.mrb[0].mxu0 %v8478
      %v8956 = vpop.f32.mrb[0].mxu0
      %v8957 = vadd.f32 %v8796, %v8956
      %v8958 = vpop.f32.mrb[0].mxu0
      %v8959 = vpop.f32.mrb[0].mxu0
      %v8960 = vadd.f32 %v8799, %v8959
      %v8961 = vpop.f32.mrb[0].mxu0
      %8962 = vdwg.mxu0
      %v8963 = vmax.f32 %v8837, 0.0
      %v8964 = vmax.f32 %v8840, 0.0
      %v8965 = vmax.f32 %v8845, 0.0
      %v8966 = vmax.f32 %v8848, 0.0
      %v8967 = vmax.f32 %v8853, 0.0
      %v8968 = vmax.f32 %v8856, 0.0
      %v8969 = vmax.f32 %v8861, 0.0
      %v8970 = vmax.f32 %v8864, 0.0
      %v8971 = vmax.f32 %v8869, 0.0
      %v8972 = vmax.f32 %v8872, 0.0
      %v8973 = vmax.f32 %v8877, 0.0
      %v8974 = vmax.f32 %v8880, 0.0
      %v8975 = vmax.f32 %v8885, 0.0
      %v8976 = vmax.f32 %v8888, 0.0
      %v8977 = vmax.f32 %v8893, 0.0
      %v8978 = vmax.f32 %v8896, 0.0
      %v8979 = vmax.f32 %v8901, 0.0
      %v8980 = vmax.f32 %v8904, 0.0
      %v8981 = vmax.f32 %v8909, 0.0
      %v8982 = vmax.f32 %v8912, 0.0
      %v8983 = vmax.f32 %v8917, 0.0
      %v8984 = vmax.f32 %v8920, 0.0
      %v8985 = vmax.f32 %v8925, 0.0
      %v8986 = vmax.f32 %v8928, 0.0
      %v8987 = vmax.f32 %v8933, 0.0
      %v8988 = vmax.f32 %v8936, 0.0
      %v8989 = vmax.f32 %v8941, 0.0
      %v8990 = vmax.f32 %v8944, 0.0
      %v8991 = vmax.f32 %v8949, 0.0
      %v8992 = vmax.f32 %v8952, 0.0
      %v8993 = vmax.f32 %v8957, 0.0
      %v8994 = vmax.f32 %v8960, 0.0
      %v8995 = vpack.c.bf16 %v8964, %v8963
      %v8996 = vpack.c.bf16 %v8966, %v8965
      %v8997 = vpack.c.bf16 %v8968, %v8967
      %v8998 = vpack.c.bf16 %v8970, %v8969
      %v8999 = vpack.c.bf16 %v8972, %v8971
      %v9000 = vpack.c.bf16 %v8974, %v8973
      %v9001 = vpack.c.bf16 %v8976, %v8975
      %v9002 = vpack.c.bf16 %v8978, %v8977
      %v9003 = vpack.c.bf16 %v8980, %v8979
      %v9004 = vpack.c.bf16 %v8982, %v8981
      %v9005 = vpack.c.bf16 %v8984, %v8983
      %v9006 = vpack.c.bf16 %v8986, %v8985
      %v9007 = vpack.c.bf16 %v8988, %v8987
      %v9008 = vpack.c.bf16 %v8990, %v8989
      %v9009 = vpack.c.bf16 %v8992, %v8991
      %v9010 = vpack.c.bf16 %v8994, %v8993
      %v9011 = vld [vmem:[%s6] sm:$0xf]
      %v9012 = vld [vmem:[%s6 + $0x4] sm:$0xf]
      %v9013 = vld [vmem:[%s6 + $0x8] sm:$0xf]
      %v9014 = vld [vmem:[%s6 + $0xc] sm:$0xf]
      %v9015 = vld [vmem:[%s6 + $0x10] sm:$0xf]
      %v9016 = vld [vmem:[%s6 + $0x14] sm:$0xf]
      %v9017 = vld [vmem:[%s6 + $0x18] sm:$0xf]
      %v9018 = vld [vmem:[%s6 + $0x1c] sm:$0xf]
      %v9019 = vld [vmem:[%s6 + $0x20] sm:$0xf]
      %v9020 = vld [vmem:[%s6 + $0x24] sm:$0xf]
      %v9021 = vld [vmem:[%s6 + $0x28] sm:$0xf]
      %v9022 = vld [vmem:[%s6 + $0x2c] sm:$0xf]
      %v9023 = vld [vmem:[%s6 + $0x30] sm:$0xf]
      %v9024 = vld [vmem:[%s6 + $0x34] sm:$0xf]
      %v9025 = vld [vmem:[%s6 + $0x38] sm:$0xf]
      %v9026 = vld [vmem:[%s6 + $0x3c] sm:$0xf]
      %v9027 = vld [vmem:[%s6 + $0x40] sm:$0xf]
      %v9028 = vld [vmem:[%s6 + $0x44] sm:$0xf]
      %v9047 = vunpack.c.l.b16 %v9011
      %v9048 = vunpack.c.l.b16 %v9012
      %v9049 = vunpack.c.l.b16 %v9013
      %v9050 = vunpack.c.l.b16 %v9014
      %v9051 = vunpack.c.l.b16 %v9015
      %v9052 = vunpack.c.l.b16 %v9016
      %v9053 = vunpack.c.l.b16 %v9017
      %v9054 = vunpack.c.l.b16 %v9018
      %v9055 = vunpack.c.l.b16 %v9019
      %v9056 = vunpack.c.l.b16 %v9020
      %v9057 = vunpack.c.l.b16 %v9021
      %v9058 = vunpack.c.l.b16 %v9022
      %v9059 = vunpack.c.l.b16 %v9023
      %v9060 = vunpack.c.l.b16 %v9024
      %v9061 = vunpack.c.l.b16 %v9025
      %v9062 = vunpack.c.l.b16 %v9026
      %v9063 = vunpack.c.l.b16 %v9027
      %v9064 = vunpack.c.l.b16 %v9028
      %v9065 = vpack.c.b16 %v9048, %v9047
      %v9066 = vpack.c.b16 %v9050, %v9049
      %v9067 = vpack.c.b16 %v9052, %v9051
      %v9068 = vpack.c.b16 %v9054, %v9053
      %v9069 = vpack.c.b16 %v9056, %v9055
      %v9070 = vpack.c.b16 %v9058, %v9057
      %v9071 = vpack.c.b16 %v9060, %v9059
      %v9072 = vpack.c.b16 %v9062, %v9061
      %v9073 = vpack.c.b16 %v9064, %v9063
      %v9075 = vsel %vm3023, %v9065, 0
      %v9078 = vsel %vm3023, %v9066, 0
      %v9081 = vsel %vm3023, %v9067, 0
      %v9084 = vsel %vm3023, %v9068, 0
      %v9087 = vsel %vm3023, %v9069, 0
      %v9090 = vsel %vm3023, %v9070, 0
      %v9093 = vsel %vm3023, %v9071, 0
      %v9096 = vsel %vm3023, %v9072, 0
      %v9099 = vsel %vm3023, %v9073, 0
      %9101 = vmatprep.subr.bf16.mxu0 0
      %9102 = vmatpush1.bf16.msra.mxu0 %v8995
      %9103 = vmatprep.subr.bf16.mxu0 0
      %9104 = vmatpush1.bf16.msra.mxu0 %v8996
      %9105 = vmatprep.subr.bf16.mxu0 0
      %9106 = vmatpush1.bf16.msra.mxu0 %v8997
      %9107 = vmatprep.subr.bf16.mxu0 0
      %9108 = vmatpush1.bf16.msra.mxu0 %v8998
      %9109 = vmatprep.subr.bf16.mxu0 0
      %9110 = vmatpush1.bf16.msra.mxu0 0
      %9111 = vmatprep.subr.bf16.mxu0 0
      %9112 = vmatpush1.bf16.msra.mxu0 0
      %9113 = vmatprep.subr.bf16.mxu0 0
      %9114 = vmatpush1.bf16.msra.mxu0 0
      %9115 = vmatprep.subr.bf16.mxu0 0
      %9116 = vmatpush1.bf16.msra.mxu0 0
      %9117 = vmatprep.subr.bf16.mxu0 0
      %9118 = vmatpush1.bf16.msra.mxu0 0
      %9119 = vmatprep.subr.bf16.mxu0 0
      %9120 = vmatpush1.bf16.msra.mxu0 0
      %9121 = vmatprep.subr.bf16.mxu0 0
      %9122 = vmatpush1.bf16.msra.mxu0 0
      %9123 = vmatprep.subr.bf16.mxu0 0
      %9124 = vmatpush1.bf16.msra.mxu0 0
      %9125 = vmatprep.subr.bf16.mxu0 0
      %9126 = vmatpush1.bf16.msra.mxu0 0
      %9127 = vmatprep.subr.bf16.mxu0 0
      %9128 = vmatpush1.bf16.msra.mxu0 0
      %9129 = vmatprep.subr.bf16.mxu0 0
      %9130 = vmatpush1.bf16.msra.mxu0 0
      %9131 = vmatprep.subr.bf16.mxu0 0
      %9132 = vmatpush1.bf16.msra.mxu0 0
      %9133 = vmatprep.mubr.bf16.mxu0 0
      %9134 = vmatmul.mubr.bf16.gmra.mrb[0].mxu0 %v9075
      %v9135 = vpop.f32.mrb[0].mxu0
      %v9136 = vadd.f32 0.0, %v9135
      %v9137 = vpop.f32.mrb[0].mxu0
      %v9138 = vpop.f32.mrb[0].mxu0
      %v9139 = vadd.f32 0.0, %v9138
      %v9140 = vpop.f32.mrb[0].mxu0
      %9141 = vmatprep.mubr.bf16.mxu0 0
      %9142 = vmatmul.mubr.bf16.gmra.mrb[0].mxu0 %v9078
      %v9143 = vpop.f32.mrb[0].mxu0
      %v9144 = vadd.f32 0.0, %v9143
      %v9145 = vpop.f32.mrb[0].mxu0
      %v9146 = vpop.f32.mrb[0].mxu0
      %v9147 = vadd.f32 0.0, %v9146
      %v9148 = vpop.f32.mrb[0].mxu0
      %9149 = vmatprep.mubr.bf16.mxu0 0
      %9150 = vmatmul.mubr.bf16.gmra.mrb[0].mxu0 %v9081
      %v9151 = vpop.f32.mrb[0].mxu0
      %v9152 = vadd.f32 0.0, %v9151
      %v9153 = vpop.f32.mrb[0].mxu0
      %v9154 = vpop.f32.mrb[0].mxu0
      %v9155 = vadd.f32 0.0, %v9154
      %v9156 = vpop.f32.mrb[0].mxu0
      %9157 = vmatprep.mubr.bf16.mxu0 0
      %9158 = vmatmul.mubr.bf16.gmra.mrb[0].mxu0 %v9084
      %v9159 = vpop.f32.mrb[0].mxu0
      %v9160 = vadd.f32 0.0, %v9159
      %v9161 = vpop.f32.mrb[0].mxu0
      %v9162 = vpop.f32.mrb[0].mxu0
      %v9163 = vadd.f32 0.0, %v9162
      %v9164 = vpop.f32.mrb[0].mxu0
      %9165 = vmatprep.mubr.bf16.mxu0 0
      %9166 = vmatmul.mubr.bf16.gmra.mrb[0].mxu0 %v9087
      %v9167 = vpop.f32.mrb[0].mxu0
      %v9168 = vadd.f32 0.0, %v9167
      %v9169 = vpop.f32.mrb[0].mxu0
      %v9170 = vpop.f32.mrb[0].mxu0
      %v9171 = vadd.f32 0.0, %v9170
      %v9172 = vpop.f32.mrb[0].mxu0
      %9173 = vmatprep.mubr.bf16.mxu0 0
      %9174 = vmatmul.mubr.bf16.gmra.mrb[0].mxu0 %v9090
      %v9175 = vpop.f32.mrb[0].mxu0
      %v9176 = vadd.f32 0.0, %v9175
      %v9177 = vpop.f32.mrb[0].mxu0
      %v9178 = vpop.f32.mrb[0].mxu0
      %v9179 = vadd.f32 0.0, %v9178
      %v9180 = vpop.f32.mrb[0].mxu0
      %9181 = vmatprep.mubr.bf16.mxu0 0
      %9182 = vmatmul.mubr.bf16.gmra.mrb[0].mxu0 %v9093
      %v9183 = vpop.f32.mrb[0].mxu0
      %v9184 = vadd.f32 0.0, %v9183
      %v9185 = vpop.f32.mrb[0].mxu0
      %v9186 = vpop.f32.mrb[0].mxu0
      %v9187 = vadd.f32 0.0, %v9186
      %v9188 = vpop.f32.mrb[0].mxu0
      %9189 = vmatprep.mubr.bf16.mxu0 0
      %9190 = vmatmul.mubr.bf16.gmra.mrb[0].mxu0 %v9096
      %v9191 = vpop.f32.mrb[0].mxu0
      %v9192 = vadd.f32 0.0, %v9191
      %v9193 = vpop.f32.mrb[0].mxu0
      %v9194 = vpop.f32.mrb[0].mxu0
      %v9195 = vadd.f32 0.0, %v9194
      %v9196 = vpop.f32.mrb[0].mxu0
      %9197 = vmatprep.mubr.bf16.mxu0 0
      %9198 = vmatmul.mubr.bf16.gmra.mrb[0].mxu0 %v9099
      %v9199 = vpop.f32.mrb[0].mxu0
      %v9200 = vadd.f32 0.0, %v9199
      %v9201 = vpop.f32.mrb[0].mxu0
      %v9202 = vpop.f32.mrb[0].mxu0
      %v9203 = vadd.f32 0.0, %v9202
      %v9204 = vpop.f32.mrb[0].mxu0
      %9205 = vdwg.mxu0
      %9206 = vmatprep.subr.bf16.mxu0 0
      %9207 = vmatpush1.bf16.msra.mxu0 %v8999
      %9208 = vmatprep.subr.bf16.mxu0 0
      %9209 = vmatpush1.bf16.msra.mxu0 %v9000
      %9210 = vmatprep.subr.bf16.mxu0 0
      %9211 = vmatpush1.bf16.msra.mxu0 %v9001
      %9212 = vmatprep.subr.bf16.mxu0 0
      %9213 = vmatpush1.bf16.msra.mxu0 %v9002
      %9214 = vmatprep.subr.bf16.mxu0 0
      %9215 = vmatpush1.bf16.msra.mxu0 0
      %9216 = vmatprep.subr.bf16.mxu0 0
      %9217 = vmatpush1.bf16.msra.mxu0 0
      %9218 = vmatprep.subr.bf16.mxu0 0
      %9219 = vmatpush1.bf16.msra.mxu0 0
      %9220 = vmatprep.subr.bf16.mxu0 0
      %9221 = vmatpush1.bf16.msra.mxu0 0
      %9222 = vmatprep.subr.bf16.mxu0 0
      %9223 = vmatpush1.bf16.msra.mxu0 0
      %9224 = vmatprep.subr.bf16.mxu0 0
      %9225 = vmatpush1.bf16.msra.mxu0 0
      %9226 = vmatprep.subr.bf16.mxu0 0
      %9227 = vmatpush1.bf16.msra.mxu0 0
      %9228 = vmatprep.subr.bf16.mxu0 0
      %9229 = vmatpush1.bf16.msra.mxu0 0
      %9230 = vmatprep.subr.bf16.mxu0 0
      %9231 = vmatpush1.bf16.msra.mxu0 0
      %9232 = vmatprep.subr.bf16.mxu0 0
      %9233 = vmatpush1.bf16.msra.mxu0 0
      %9234 = vmatprep.subr.bf16.mxu0 0
      %9235 = vmatpush1.bf16.msra.mxu0 0
      %9236 = vmatprep.subr.bf16.mxu0 0
      %9237 = vmatpush1.bf16.msra.mxu0 0
      %9238 = vmatprep.mubr.bf16.mxu0 0
      %9239 = vmatmul.mubr.bf16.gmra.mrb[0].mxu0 %v9075
      %v9240 = vpop.f32.mrb[0].mxu0
      %v9241 = vadd.f32 0.0, %v9240
      %v9242 = vpop.f32.mrb[0].mxu0
      %v9243 = vpop.f32.mrb[0].mxu0
      %v9244 = vadd.f32 0.0, %v9243
      %v9245 = vpop.f32.mrb[0].mxu0
      %9246 = vmatprep.mubr.bf16.mxu0 0
      %9247 = vmatmul.mubr.bf16.gmra.mrb[0].mxu0 %v9078
      %v9248 = vpop.f32.mrb[0].mxu0
      %v9249 = vadd.f32 0.0, %v9248
      %v9250 = vpop.f32.mrb[0].mxu0
      %v9251 = vpop.f32.mrb[0].mxu0
      %v9252 = vadd.f32 0.0, %v9251
      %v9253 = vpop.f32.mrb[0].mxu0
      %9254 = vmatprep.mubr.bf16.mxu0 0
      %9255 = vmatmul.mubr.bf16.gmra.mrb[0].mxu0 %v9081
      %v9256 = vpop.f32.mrb[0].mxu0
      %v9257 = vadd.f32 0.0, %v9256
      %v9258 = vpop.f32.mrb[0].mxu0
      %v9259 = vpop.f32.mrb[0].mxu0
      %v9260 = vadd.f32 0.0, %v9259
      %v9261 = vpop.f32.mrb[0].mxu0
      %9262 = vmatprep.mubr.bf16.mxu0 0
      %9263 = vmatmul.mubr.bf16.gmra.mrb[0].mxu0 %v9084
      %v9264 = vpop.f32.mrb[0].mxu0
      %v9265 = vadd.f32 0.0, %v9264
      %v9266 = vpop.f32.mrb[0].mxu0
      %v9267 = vpop.f32.mrb[0].mxu0
      %v9268 = vadd.f32 0.0, %v9267
      %v9269 = vpop.f32.mrb[0].mxu0
      %9270 = vmatprep.mubr.bf16.mxu0 0
      %9271 = vmatmul.mubr.bf16.gmra.mrb[0].mxu0 %v9087
      %v9272 = vpop.f32.mrb[0].mxu0
      %v9273 = vadd.f32 0.0, %v9272
      %v9274 = vpop.f32.mrb[0].mxu0
      %v9275 = vpop.f32.mrb[0].mxu0
      %v9276 = vadd.f32 0.0, %v9275
      %v9277 = vpop.f32.mrb[0].mxu0
      %9278 = vmatprep.mubr.bf16.mxu0 0
      %9279 = vmatmul.mubr.bf16.gmra.mrb[0].mxu0 %v9090
      %v9280 = vpop.f32.mrb[0].mxu0
      %v9281 = vadd.f32 0.0, %v9280
      %v9282 = vpop.f32.mrb[0].mxu0
      %v9283 = vpop.f32.mrb[0].mxu0
      %v9284 = vadd.f32 0.0, %v9283
      %v9285 = vpop.f32.mrb[0].mxu0
      %9286 = vmatprep.mubr.bf16.mxu0 0
      %9287 = vmatmul.mubr.bf16.gmra.mrb[0].mxu0 %v9093
      %v9288 = vpop.f32.mrb[0].mxu0
      %v9289 = vadd.f32 0.0, %v9288
      %v9290 = vpop.f32.mrb[0].mxu0
      %v9291 = vpop.f32.mrb[0].mxu0
      %v9292 = vadd.f32 0.0, %v9291
      %v9293 = vpop.f32.mrb[0].mxu0
      %9294 = vmatprep.mubr.bf16.mxu0 0
      %9295 = vmatmul.mubr.bf16.gmra.mrb[0].mxu0 %v9096
      %v9296 = vpop.f32.mrb[0].mxu0
      %v9297 = vadd.f32 0.0, %v9296
      %v9298 = vpop.f32.mrb[0].mxu0
      %v9299 = vpop.f32.mrb[0].mxu0
      %v9300 = vadd.f32 0.0, %v9299
      %v9301 = vpop.f32.mrb[0].mxu0
      %9302 = vmatprep.mubr.bf16.mxu0 0
      %9303 = vmatmul.mubr.bf16.gmra.mrb[0].mxu0 %v9099
      %v9304 = vpop.f32.mrb[0].mxu0
      %v9305 = vadd.f32 0.0, %v9304
      %v9306 = vpop.f32.mrb[0].mxu0
      %v9307 = vpop.f32.mrb[0].mxu0
      %v9308 = vadd.f32 0.0, %v9307
      %v9309 = vpop.f32.mrb[0].mxu0
      %9310 = vdwg.mxu0
      %9311 = vmatprep.subr.bf16.mxu0 0
      %9312 = vmatpush1.bf16.msra.mxu0 %v9003
      %9313 = vmatprep.subr.bf16.mxu0 0
      %9314 = vmatpush1.bf16.msra.mxu0 %v9004
      %9315 = vmatprep.subr.bf16.mxu0 0
      %9316 = vmatpush1.bf16.msra.mxu0 %v9005
      %9317 = vmatprep.subr.bf16.mxu0 0
      %9318 = vmatpush1.bf16.msra.mxu0 %v9006
      %9319 = vmatprep.subr.bf16.mxu0 0
      %9320 = vmatpush1.bf16.msra.mxu0 0
      %9321 = vmatprep.subr.bf16.mxu0 0
      %9322 = vmatpush1.bf16.msra.mxu0 0
      %9323 = vmatprep.subr.bf16.mxu0 0
      %9324 = vmatpush1.bf16.msra.mxu0 0
      %9325 = vmatprep.subr.bf16.mxu0 0
      %9326 = vmatpush1.bf16.msra.mxu0 0
      %9327 = vmatprep.subr.bf16.mxu0 0
      %9328 = vmatpush1.bf16.msra.mxu0 0
      %9329 = vmatprep.subr.bf16.mxu0 0
      %9330 = vmatpush1.bf16.msra.mxu0 0
      %9331 = vmatprep.subr.bf16.mxu0 0
      %9332 = vmatpush1.bf16.msra.mxu0 0
      %9333 = vmatprep.subr.bf16.mxu0 0
      %9334 = vmatpush1.bf16.msra.mxu0 0
      %9335 = vmatprep.subr.bf16.mxu0 0
      %9336 = vmatpush1.bf16.msra.mxu0 0
      %9337 = vmatprep.subr.bf16.mxu0 0
      %9338 = vmatpush1.bf16.msra.mxu0 0
      %9339 = vmatprep.subr.bf16.mxu0 0
      %9340 = vmatpush1.bf16.msra.mxu0 0
      %9341 = vmatprep.subr.bf16.mxu0 0
      %9342 = vmatpush1.bf16.msra.mxu0 0
      %9343 = vmatprep.mubr.bf16.mxu0 0
      %9344 = vmatmul.mubr.bf16.gmra.mrb[0].mxu0 %v9075
      %v9345 = vpop.f32.mrb[0].mxu0
      %v9346 = vadd.f32 0.0, %v9345
      %v9347 = vpop.f32.mrb[0].mxu0
      %v9348 = vpop.f32.mrb[0].mxu0
      %v9349 = vadd.f32 0.0, %v9348
      %v9350 = vpop.f32.mrb[0].mxu0
      %9351 = vmatprep.mubr.bf16.mxu0 0
      %9352 = vmatmul.mubr.bf16.gmra.mrb[0].mxu0 %v9078
      %v9353 = vpop.f32.mrb[0].mxu0
      %v9354 = vadd.f32 0.0, %v9353
      %v9355 = vpop.f32.mrb[0].mxu0
      %v9356 = vpop.f32.mrb[0].mxu0
      %v9357 = vadd.f32 0.0, %v9356
      %v9358 = vpop.f32.mrb[0].mxu0
      %9359 = vmatprep.mubr.bf16.mxu0 0
      %9360 = vmatmul.mubr.bf16.gmra.mrb[0].mxu0 %v9081
      %v9361 = vpop.f32.mrb[0].mxu0
      %v9362 = vadd.f32 0.0, %v9361
      %v9363 = vpop.f32.mrb[0].mxu0
      %v9364 = vpop.f32.mrb[0].mxu0
      %v9365 = vadd.f32 0.0, %v9364
      %v9366 = vpop.f32.mrb[0].mxu0
      %9367 = vmatprep.mubr.bf16.mxu0 0
      %9368 = vmatmul.mubr.bf16.gmra.mrb[0].mxu0 %v9084
      %v9369 = vpop.f32.mrb[0].mxu0
      %v9370 = vadd.f32 0.0, %v9369
      %v9371 = vpop.f32.mrb[0].mxu0
      %v9372 = vpop.f32.mrb[0].mxu0
      %v9373 = vadd.f32 0.0, %v9372
      %v9374 = vpop.f32.mrb[0].mxu0
      %9375 = vmatprep.mubr.bf16.mxu0 0
      %9376 = vmatmul.mubr.bf16.gmra.mrb[0].mxu0 %v9087
      %v9377 = vpop.f32.mrb[0].mxu0
      %v9378 = vadd.f32 0.0, %v9377
      %v9379 = vpop.f32.mrb[0].mxu0
      %v9380 = vpop.f32.mrb[0].mxu0
      %v9381 = vadd.f32 0.0, %v9380
      %v9382 = vpop.f32.mrb[0].mxu0
      %9383 = vmatprep.mubr.bf16.mxu0 0
      %9384 = vmatmul.mubr.bf16.gmra.mrb[0].mxu0 %v9090
      %v9385 = vpop.f32.mrb[0].mxu0
      %v9386 = vadd.f32 0.0, %v9385
      %v9387 = vpop.f32.mrb[0].mxu0
      %v9388 = vpop.f32.mrb[0].mxu0
      %v9389 = vadd.f32 0.0, %v9388
      %v9390 = vpop.f32.mrb[0].mxu0
      %9391 = vmatprep.mubr.bf16.mxu0 0
      %9392 = vmatmul.mubr.bf16.gmra.mrb[0].mxu0 %v9093
      %v9393 = vpop.f32.mrb[0].mxu0
      %v9394 = vadd.f32 0.0, %v9393
      %v9395 = vpop.f32.mrb[0].mxu0
      %v9396 = vpop.f32.mrb[0].mxu0
      %v9397 = vadd.f32 0.0, %v9396
      %v9398 = vpop.f32.mrb[0].mxu0
      %9399 = vmatprep.mubr.bf16.mxu0 0
      %9400 = vmatmul.mubr.bf16.gmra.mrb[0].mxu0 %v9096
      %v9401 = vpop.f32.mrb[0].mxu0
      %v9402 = vadd.f32 0.0, %v9401
      %v9403 = vpop.f32.mrb[0].mxu0
      %v9404 = vpop.f32.mrb[0].mxu0
      %v9405 = vadd.f32 0.0, %v9404
      %v9406 = vpop.f32.mrb[0].mxu0
      %9407 = vmatprep.mubr.bf16.mxu0 0
      %9408 = vmatmul.mubr.bf16.gmra.mrb[0].mxu0 %v9099
      %v9409 = vpop.f32.mrb[0].mxu0
      %v9410 = vadd.f32 0.0, %v9409
      %v9411 = vpop.f32.mrb[0].mxu0
      %v9412 = vpop.f32.mrb[0].mxu0
      %v9413 = vadd.f32 0.0, %v9412
      %v9414 = vpop.f32.mrb[0].mxu0
      %9415 = vdwg.mxu0
      %9416 = vmatprep.subr.bf16.mxu0 0
      %9417 = vmatpush1.bf16.msra.mxu0 %v9007
      %9418 = vmatprep.subr.bf16.mxu0 0
      %9419 = vmatpush1.bf16.msra.mxu0 %v9008
      %9420 = vmatprep.subr.bf16.mxu0 0
      %9421 = vmatpush1.bf16.msra.mxu0 %v9009
      %9422 = vmatprep.subr.bf16.mxu0 0
      %9423 = vmatpush1.bf16.msra.mxu0 %v9010
      %9424 = vmatprep.subr.bf16.mxu0 0
      %9425 = vmatpush1.bf16.msra.mxu0 0
      %9426 = vmatprep.subr.bf16.mxu0 0
      %9427 = vmatpush1.bf16.msra.mxu0 0
      %9428 = vmatprep.subr.bf16.mxu0 0
      %9429 = vmatpush1.bf16.msra.mxu0 0
      %9430 = vmatprep.subr.bf16.mxu0 0
      %9431 = vmatpush1.bf16.msra.mxu0 0
      %9432 = vmatprep.subr.bf16.mxu0 0
      %9433 = vmatpush1.bf16.msra.mxu0 0
      %9434 = vmatprep.subr.bf16.mxu0 0
      %9435 = vmatpush1.bf16.msra.mxu0 0
      %9436 = vmatprep.subr.bf16.mxu0 0
      %9437 = vmatpush1.bf16.msra.mxu0 0
      %9438 = vmatprep.subr.bf16.mxu0 0
      %9439 = vmatpush1.bf16.msra.mxu0 0
      %9440 = vmatprep.subr.bf16.mxu0 0
      %9441 = vmatpush1.bf16.msra.mxu0 0
      %9442 = vmatprep.subr.bf16.mxu0 0
      %9443 = vmatpush1.bf16.msra.mxu0 0
      %9444 = vmatprep.subr.bf16.mxu0 0
      %9445 = vmatpush1.bf16.msra.mxu0 0
      %9446 = vmatprep.subr.bf16.mxu0 0
      %9447 = vmatpush1.bf16.msra.mxu0 0
      %9448 = vmatprep.mubr.bf16.mxu0 0
      %9449 = vmatmul.mubr.bf16.gmra.mrb[0].mxu0 %v9075
      %v9450 = vpop.f32.mrb[0].mxu0
      %v9451 = vadd.f32 0.0, %v9450
      %v9452 = vpop.f32.mrb[0].mxu0
      %v9453 = vpop.f32.mrb[0].mxu0
      %v9454 = vadd.f32 0.0, %v9453
      %v9455 = vpop.f32.mrb[0].mxu0
      %9456 = vmatprep.mubr.bf16.mxu0 0
      %9457 = vmatmul.mubr.bf16.gmra.mrb[0].mxu0 %v9078
      %v9458 = vpop.f32.mrb[0].mxu0
      %v9459 = vadd.f32 0.0, %v9458
      %v9460 = vpop.f32.mrb[0].mxu0
      %v9461 = vpop.f32.mrb[0].mxu0
      %v9462 = vadd.f32 0.0, %v9461
      %v9463 = vpop.f32.mrb[0].mxu0
      %9464 = vmatprep.mubr.bf16.mxu0 0
      %9465 = vmatmul.mubr.bf16.gmra.mrb[0].mxu0 %v9081
      %v9466 = vpop.f32.mrb[0].mxu0
      %v9467 = vadd.f32 0.0, %v9466
      %v9468 = vpop.f32.mrb[0].mxu0
      %v9469 = vpop.f32.mrb[0].mxu0
      %v9470 = vadd.f32 0.0, %v9469
      %v9471 = vpop.f32.mrb[0].mxu0
      %9472 = vmatprep.mubr.bf16.mxu0 0
      %9473 = vmatmul.mubr.bf16.gmra.mrb[0].mxu0 %v9084
      %v9474 = vpop.f32.mrb[0].mxu0
      %v9475 = vadd.f32 0.0, %v9474
      %v9476 = vpop.f32.mrb[0].mxu0
      %v9477 = vpop.f32.mrb[0].mxu0
      %v9478 = vadd.f32 0.0, %v9477
      %v9479 = vpop.f32.mrb[0].mxu0
      %9480 = vmatprep.mubr.bf16.mxu0 0
      %9481 = vmatmul.mubr.bf16.gmra.mrb[0].mxu0 %v9087
      %v9482 = vpop.f32.mrb[0].mxu0
      %v9483 = vadd.f32 0.0, %v9482
      %v9484 = vpop.f32.mrb[0].mxu0
      %v9485 = vpop.f32.mrb[0].mxu0
      %v9486 = vadd.f32 0.0, %v9485
      %v9487 = vpop.f32.mrb[0].mxu0
      %9488 = vmatprep.mubr.bf16.mxu0 0
      %9489 = vmatmul.mubr.bf16.gmra.mrb[0].mxu0 %v9090
      %v9490 = vpop.f32.mrb[0].mxu0
      %v9491 = vadd.f32 0.0, %v9490
      %v9492 = vpop.f32.mrb[0].mxu0
      %v9493 = vpop.f32.mrb[0].mxu0
      %v9494 = vadd.f32 0.0, %v9493
      %v9495 = vpop.f32.mrb[0].mxu0
      %9496 = vmatprep.mubr.bf16.mxu0 0
      %9497 = vmatmul.mubr.bf16.gmra.mrb[0].mxu0 %v9093
      %v9498 = vpop.f32.mrb[0].mxu0
      %v9499 = vadd.f32 0.0, %v9498
      %v9500 = vpop.f32.mrb[0].mxu0
      %v9501 = vpop.f32.mrb[0].mxu0
      %v9502 = vadd.f32 0.0, %v9501
      %v9503 = vpop.f32.mrb[0].mxu0
      %9504 = vmatprep.mubr.bf16.mxu0 0
      %9505 = vmatmul.mubr.bf16.gmra.mrb[0].mxu0 %v9096
      %v9506 = vpop.f32.mrb[0].mxu0
      %v9507 = vadd.f32 0.0, %v9506
      %v9508 = vpop.f32.mrb[0].mxu0
      %v9509 = vpop.f32.mrb[0].mxu0
      %v9510 = vadd.f32 0.0, %v9509
      %v9511 = vpop.f32.mrb[0].mxu0
      %9512 = vmatprep.mubr.bf16.mxu0 0
      %9513 = vmatmul.mubr.bf16.gmra.mrb[0].mxu0 %v9099
      %v9514 = vpop.f32.mrb[0].mxu0
      %v9515 = vadd.f32 0.0, %v9514
      %v9516 = vpop.f32.mrb[0].mxu0
      %v9517 = vpop.f32.mrb[0].mxu0
      %v9518 = vadd.f32 0.0, %v9517
      %v9519 = vpop.f32.mrb[0].mxu0
      %9520 = vdwg.mxu0
      %v9521 = vpack.c.bf16 %v9139, %v9136
      %v9522 = vpack.c.bf16 %v9147, %v9144
      %v9523 = vpack.c.bf16 %v9155, %v9152
      %v9524 = vpack.c.bf16 %v9163, %v9160
      %v9525 = vpack.c.bf16 %v9171, %v9168
      %v9526 = vpack.c.bf16 %v9179, %v9176
      %v9527 = vpack.c.bf16 %v9187, %v9184
      %v9528 = vpack.c.bf16 %v9195, %v9192
      %v9529 = vpack.c.bf16 %v9203, %v9200
      %v9530 = vpack.c.bf16 %v9244, %v9241
      %v9531 = vpack.c.bf16 %v9252, %v9249
      %v9532 = vpack.c.bf16 %v9260, %v9257
      %v9533 = vpack.c.bf16 %v9268, %v9265
      %v9534 = vpack.c.bf16 %v9276, %v9273
      %v9535 = vpack.c.bf16 %v9284, %v9281
      %v9536 = vpack.c.bf16 %v9292, %v9289
      %v9537 = vpack.c.bf16 %v9300, %v9297
      %v9538 = vpack.c.bf16 %v9308, %v9305
      %v9539 = vpack.c.bf16 %v9349, %v9346
      %v9540 = vpack.c.bf16 %v9357, %v9354
      %v9541 = vpack.c.bf16 %v9365, %v9362
      %v9542 = vpack.c.bf16 %v9373, %v9370
      %v9543 = vpack.c.bf16 %v9381, %v9378
      %v9544 = vpack.c.bf16 %v9389, %v9386
      %v9545 = vpack.c.bf16 %v9397, %v9394
      %v9546 = vpack.c.bf16 %v9405, %v9402
      %v9547 = vpack.c.bf16 %v9413, %v9410
      %v9548 = vpack.c.bf16 %v9454, %v9451
      %v9549 = vpack.c.bf16 %v9462, %v9459
      %v9550 = vpack.c.bf16 %v9470, %v9467
      %v9551 = vpack.c.bf16 %v9478, %v9475
      %v9552 = vpack.c.bf16 %v9486, %v9483
      %v9553 = vpack.c.bf16 %v9494, %v9491
      %v9554 = vpack.c.bf16 %v9502, %v9499
      %v9555 = vpack.c.bf16 %v9510, %v9507
      %v9556 = vpack.c.bf16 %v9518, %v9515
      %9557 = vst [vmem:[#allocation4] sm:$0xff] %v9521
      %9558 = vst [vmem:[#allocation4 + $0x48] sm:$0xff] %v9530
      %9559 = vst [vmem:[#allocation4 + $0x90] sm:$0xff] %v9539
      %9560 = vst [vmem:[#allocation4 + $0xd8] sm:$0xff] %v9548
      %9561 = vst [vmem:[#allocation4 + $0x8] sm:$0xff] %v9522
      %9562 = vst [vmem:[#allocation4 + $0x50] sm:$0xff] %v9531
      %9563 = vst [vmem:[#allocation4 + $0x98] sm:$0xff] %v9540
      %9564 = vst [vmem:[#allocation4 + $0xe0] sm:$0xff] %v9549
      %9565 = vst [vmem:[#allocation4 + $0x10] sm:$0xff] %v9523
      %9566 = vst [vmem:[#allocation4 + $0x58] sm:$0xff] %v9532
      %9567 = vst [vmem:[#allocation4 + $0xa0] sm:$0xff] %v9541
      %9568 = vst [vmem:[#allocation4 + $0xe8] sm:$0xff] %v9550
      %9569 = vst [vmem:[#allocation4 + $0x18] sm:$0xff] %v9524
      %9570 = vst [vmem:[#allocation4 + $0x60] sm:$0xff] %v9533
      %9571 = vst [vmem:[#allocation4 + $0xa8] sm:$0xff] %v9542
      %9572 = vst [vmem:[#allocation4 + $0xf0] sm:$0xff] %v9551
      %9573 = vst [vmem:[#allocation4 + $0x20] sm:$0xff] %v9525
      %9574 = vst [vmem:[#allocation4 + $0x68] sm:$0xff] %v9534
      %9575 = vst [vmem:[#allocation4 + $0xb0] sm:$0xff] %v9543
      %9576 = vst [vmem:[#allocation4 + $0xf8] sm:$0xff] %v9552
      %9577 = vst [vmem:[#allocation4 + $0x28] sm:$0xff] %v9526
      %9578 = vst [vmem:[#allocation4 + $0x70] sm:$0xff] %v9535
      %9579 = vst [vmem:[#allocation4 + $0xb8] sm:$0xff] %v9544
      %9580 = vst [vmem:[#allocation4 + $0x100] sm:$0xff] %v9553
      %9581 = vst [vmem:[#allocation4 + $0x30] sm:$0xff] %v9527
      %9582 = vst [vmem:[#allocation4 + $0x78] sm:$0xff] %v9536
      %9583 = vst [vmem:[#allocation4 + $0xc0] sm:$0xff] %v9545
      %9584 = vst [vmem:[#allocation4 + $0x108] sm:$0xff] %v9554
      %9585 = vst [vmem:[#allocation4 + $0x38] sm:$0xff] %v9528
      %9586 = vst [vmem:[#allocation4 + $0x80] sm:$0xff] %v9537
      %9587 = vst [vmem:[#allocation4 + $0xc8] sm:$0xff] %v9546
      %9588 = vst [vmem:[#allocation4 + $0x110] sm:$0xff] %v9555
      %9589 = vst [vmem:[#allocation4 + $0x40] sm:$0xff] %v9529
      %9590 = vst [vmem:[#allocation4 + $0x88] sm:$0xff] %v9538
      %9591 = vst [vmem:[#allocation4 + $0xd0] sm:$0xff] %v9547
      %9592 = vst [vmem:[#allocation4 + $0x118] sm:$0xff] %v9556
      %v9593 = vld [vmem:[#allocation4] sm:$0xff]
      %v9594 = vld [vmem:[#allocation4 + $0x8] sm:$0xff]
      %v9595 = vld [vmem:[#allocation4 + $0x10] sm:$0xff]
      %v9596 = vld [vmem:[#allocation4 + $0x18] sm:$0xff]
      %v9597 = vld [vmem:[#allocation4 + $0x20] sm:$0xff]
      %v9598 = vld [vmem:[#allocation4 + $0x28] sm:$0xff]
      %v9599 = vld [vmem:[#allocation4 + $0x30] sm:$0xff]
      %v9600 = vld [vmem:[#allocation4 + $0x38] sm:$0xff]
      %v9601 = vld [vmem:[#allocation4 + $0x40] sm:$0xff]
      %v9602 = vld [vmem:[#allocation4 + $0x48] sm:$0xff]
      %v9603 = vld [vmem:[#allocation4 + $0x50] sm:$0xff]
      %v9604 = vld [vmem:[#allocation4 + $0x58] sm:$0xff]
      %v9605 = vld [vmem:[#allocation4 + $0x60] sm:$0xff]
      %v9606 = vld [vmem:[#allocation4 + $0x68] sm:$0xff]
      %v9607 = vld [vmem:[#allocation4 + $0x70] sm:$0xff]
      %v9608 = vld [vmem:[#allocation4 + $0x78] sm:$0xff]
      %v9609 = vld [vmem:[#allocation4 + $0x80] sm:$0xff]
      %v9610 = vld [vmem:[#allocation4 + $0x88] sm:$0xff]
      %v9611 = vld [vmem:[#allocation4 + $0x90] sm:$0xff]
      %v9612 = vld [vmem:[#allocation4 + $0x98] sm:$0xff]
      %v9613 = vld [vmem:[#allocation4 + $0xa0] sm:$0xff]
      %v9614 = vld [vmem:[#allocation4 + $0xa8] sm:$0xff]
      %v9615 = vld [vmem:[#allocation4 + $0xb0] sm:$0xff]
      %v9616 = vld [vmem:[#allocation4 + $0xb8] sm:$0xff]
      %v9617 = vld [vmem:[#allocation4 + $0xc0] sm:$0xff]
      %v9618 = vld [vmem:[#allocation4 + $0xc8] sm:$0xff]
      %v9619 = vld [vmem:[#allocation4 + $0xd0] sm:$0xff]
      %v9620 = vld [vmem:[#allocation4 + $0xd8] sm:$0xff]
      %v9621 = vld [vmem:[#allocation4 + $0xe0] sm:$0xff]
      %v9622 = vld [vmem:[#allocation4 + $0xe8] sm:$0xff]
      %v9623 = vld [vmem:[#allocation4 + $0xf0] sm:$0xff]
      %v9624 = vld [vmem:[#allocation4 + $0xf8] sm:$0xff]
      %v9625 = vld [vmem:[#allocation4 + $0x100] sm:$0xff]
      %v9626 = vld [vmem:[#allocation4 + $0x108] sm:$0xff]
      %v9627 = vld [vmem:[#allocation4 + $0x110] sm:$0xff]
      %v9628 = vld [vmem:[#allocation4 + $0x118] sm:$0xff]
      %v9629 = vld [vmem:[%s4] sm:$0xff]
      %v9630 = vld [vmem:[%s4 + $0x8] sm:$0xff]
      %v9631 = vld [vmem:[%s4 + $0x10] sm:$0xff]
      %v9632 = vld [vmem:[%s4 + $0x18] sm:$0xff]
      %v9633 = vld [vmem:[%s4 + $0x20] sm:$0xff]
      %v9634 = vld [vmem:[%s4 + $0x28] sm:$0xff]
      %v9635 = vld [vmem:[%s4 + $0x30] sm:$0xff]
      %v9636 = vld [vmem:[%s4 + $0x38] sm:$0xff]
      %v9637 = vld [vmem:[%s4 + $0x40] sm:$0xff]
      %v9638 = vld [vmem:[%s4 + $0x48] sm:$0xff]
      %v9639 = vld [vmem:[%s4 + $0x50] sm:$0xff]
      %v9640 = vld [vmem:[%s4 + $0x58] sm:$0xff]
      %v9641 = vld [vmem:[%s4 + $0x60] sm:$0xff]
      %v9642 = vld [vmem:[%s4 + $0x68] sm:$0xff]
      %v9643 = vld [vmem:[%s4 + $0x70] sm:$0xff]
      %v9644 = vld [vmem:[%s4 + $0x78] sm:$0xff]
      %v9645 = vld [vmem:[%s4 + $0x80] sm:$0xff]
      %v9646 = vld [vmem:[%s4 + $0x88] sm:$0xff]
      %v9647 = vld [vmem:[%s4 + $0x90] sm:$0xff]
      %v9648 = vld [vmem:[%s4 + $0x98] sm:$0xff]
      %v9649 = vld [vmem:[%s4 + $0xa0] sm:$0xff]
      %v9650 = vld [vmem:[%s4 + $0xa8] sm:$0xff]
      %v9651 = vld [vmem:[%s4 + $0xb0] sm:$0xff]
      %v9652 = vld [vmem:[%s4 + $0xb8] sm:$0xff]
      %v9653 = vld [vmem:[%s4 + $0xc0] sm:$0xff]
      %v9654 = vld [vmem:[%s4 + $0xc8] sm:$0xff]
      %v9655 = vld [vmem:[%s4 + $0xd0] sm:$0xff]
      %v9656 = vld [vmem:[%s4 + $0xd8] sm:$0xff]
      %v9657 = vld [vmem:[%s4 + $0xe0] sm:$0xff]
      %v9658 = vld [vmem:[%s4 + $0xe8] sm:$0xff]
      %v9659 = vld [vmem:[%s4 + $0xf0] sm:$0xff]
      %v9660 = vld [vmem:[%s4 + $0xf8] sm:$0xff]
      %v9661 = vld [vmem:[%s4 + $0x100] sm:$0xff]
      %v9662 = vld [vmem:[%s4 + $0x108] sm:$0xff]
      %v9663 = vld [vmem:[%s4 + $0x110] sm:$0xff]
      %v9664 = vld [vmem:[%s4 + $0x118] sm:$0xff]
      %v9665 = vld [vmem:[%s4 + $0x120] sm:$0xff]
      %v9666 = vld [vmem:[%s4 + $0x128] sm:$0xff]
      %v9667 = vld [vmem:[%s4 + $0x130] sm:$0xff]
      %v9668 = vld [vmem:[%s4 + $0x138] sm:$0xff]
      %v9669 = vld [vmem:[%s4 + $0x140] sm:$0xff]
      %v9670 = vld [vmem:[%s4 + $0x148] sm:$0xff]
      %v9671 = vld [vmem:[%s4 + $0x150] sm:$0xff]
      %v9672 = vld [vmem:[%s4 + $0x158] sm:$0xff]
      %v9673 = vld [vmem:[%s4 + $0x160] sm:$0xff]
      %v9674 = vld [vmem:[%s4 + $0x168] sm:$0xff]
      %v9675 = vld [vmem:[%s4 + $0x170] sm:$0xff]
      %v9676 = vld [vmem:[%s4 + $0x178] sm:$0xff]
      %v9677 = vld [vmem:[%s4 + $0x180] sm:$0xff]
      %v9678 = vld [vmem:[%s4 + $0x188] sm:$0xff]
      %v9679 = vld [vmem:[%s4 + $0x190] sm:$0xff]
      %v9680 = vld [vmem:[%s4 + $0x198] sm:$0xff]
      %v9681 = vld [vmem:[%s4 + $0x1a0] sm:$0xff]
      %v9682 = vld [vmem:[%s4 + $0x1a8] sm:$0xff]
      %v9683 = vld [vmem:[%s4 + $0x1b0] sm:$0xff]
      %v9684 = vld [vmem:[%s4 + $0x1b8] sm:$0xff]
      %v9685 = vld [vmem:[%s4 + $0x1c0] sm:$0xff]
      %v9686 = vld [vmem:[%s4 + $0x1c8] sm:$0xff]
      %v9687 = vld [vmem:[%s4 + $0x1d0] sm:$0xff]
      %v9688 = vld [vmem:[%s4 + $0x1d8] sm:$0xff]
      %v9689 = vld [vmem:[%s4 + $0x1e0] sm:$0xff]
      %v9690 = vld [vmem:[%s4 + $0x1e8] sm:$0xff]
      %v9691 = vld [vmem:[%s4 + $0x1f0] sm:$0xff]
      %v9692 = vld [vmem:[%s4 + $0x1f8] sm:$0xff]
      %v9693 = vld [vmem:[%s4 + $0x200] sm:$0xff]
      %v9694 = vld [vmem:[%s4 + $0x208] sm:$0xff]
      %v9695 = vld [vmem:[%s4 + $0x210] sm:$0xff]
      %v9696 = vld [vmem:[%s4 + $0x218] sm:$0xff]
      %v9697 = vld [vmem:[%s4 + $0x220] sm:$0xff]
      %v9698 = vld [vmem:[%s4 + $0x228] sm:$0xff]
      %v9699 = vld [vmem:[%s4 + $0x230] sm:$0xff]
      %v9700 = vld [vmem:[%s4 + $0x238] sm:$0xff]
      %v9701 = vld [vmem:[%s4 + $0x240] sm:$0xff]
      %v9702 = vld [vmem:[%s4 + $0x248] sm:$0xff]
      %v9703 = vld [vmem:[%s4 + $0x250] sm:$0xff]
      %v9704 = vld [vmem:[%s4 + $0x258] sm:$0xff]
      %v9705 = vld [vmem:[%s4 + $0x260] sm:$0xff]
      %v9706 = vld [vmem:[%s4 + $0x268] sm:$0xff]
      %v9707 = vld [vmem:[%s4 + $0x270] sm:$0xff]
      %v9708 = vld [vmem:[%s4 + $0x278] sm:$0xff]
      %v9709 = vld [vmem:[%s4 + $0x280] sm:$0xff]
      %v9710 = vld [vmem:[%s4 + $0x288] sm:$0xff]
      %v9711 = vld [vmem:[%s4 + $0x290] sm:$0xff]
      %v9712 = vld [vmem:[%s4 + $0x298] sm:$0xff]
      %v9713 = vld [vmem:[%s4 + $0x2a0] sm:$0xff]
      %v9714 = vld [vmem:[%s4 + $0x2a8] sm:$0xff]
      %v9715 = vld [vmem:[%s4 + $0x2b0] sm:$0xff]
      %v9716 = vld [vmem:[%s4 + $0x2b8] sm:$0xff]
      %v9717 = vld [vmem:[%s4 + $0x2c0] sm:$0xff]
      %v9718 = vld [vmem:[%s4 + $0x2c8] sm:$0xff]
      %v9719 = vld [vmem:[%s4 + $0x2d0] sm:$0xff]
      %v9720 = vld [vmem:[%s4 + $0x2d8] sm:$0xff]
      %v9721 = vld [vmem:[%s4 + $0x2e0] sm:$0xff]
      %v9722 = vld [vmem:[%s4 + $0x2e8] sm:$0xff]
      %v9723 = vld [vmem:[%s4 + $0x2f0] sm:$0xff]
      %v9724 = vld [vmem:[%s4 + $0x2f8] sm:$0xff]
      %v9725 = vld [vmem:[%s4 + $0x300] sm:$0xff]
      %v9726 = vld [vmem:[%s4 + $0x308] sm:$0xff]
      %v9727 = vld [vmem:[%s4 + $0x310] sm:$0xff]
      %v9728 = vld [vmem:[%s4 + $0x318] sm:$0xff]
      %v9729 = vld [vmem:[%s4 + $0x320] sm:$0xff]
      %v9730 = vld [vmem:[%s4 + $0x328] sm:$0xff]
      %v9731 = vld [vmem:[%s4 + $0x330] sm:$0xff]
      %v9732 = vld [vmem:[%s4 + $0x338] sm:$0xff]
      %v9733 = vld [vmem:[%s4 + $0x340] sm:$0xff]
      %v9734 = vld [vmem:[%s4 + $0x348] sm:$0xff]
      %v9735 = vld [vmem:[%s4 + $0x350] sm:$0xff]
      %v9736 = vld [vmem:[%s4 + $0x358] sm:$0xff]
      %v9737 = vld [vmem:[%s4 + $0x360] sm:$0xff]
      %v9738 = vld [vmem:[%s4 + $0x368] sm:$0xff]
      %v9739 = vld [vmem:[%s4 + $0x370] sm:$0xff]
      %v9740 = vld [vmem:[%s4 + $0x378] sm:$0xff]
      %v9741 = vld [vmem:[%s4 + $0x380] sm:$0xff]
      %v9742 = vld [vmem:[%s4 + $0x388] sm:$0xff]
      %v9743 = vld [vmem:[%s4 + $0x390] sm:$0xff]
      %v9744 = vld [vmem:[%s4 + $0x398] sm:$0xff]
      %v9745 = vld [vmem:[%s4 + $0x3a0] sm:$0xff]
      %v9746 = vld [vmem:[%s4 + $0x3a8] sm:$0xff]
      %v9747 = vld [vmem:[%s4 + $0x3b0] sm:$0xff]
      %v9748 = vld [vmem:[%s4 + $0x3b8] sm:$0xff]
      %v9749 = vld [vmem:[%s4 + $0x3c0] sm:$0xff]
      %v9750 = vld [vmem:[%s4 + $0x3c8] sm:$0xff]
      %v9751 = vld [vmem:[%s4 + $0x3d0] sm:$0xff]
      %v9752 = vld [vmem:[%s4 + $0x3d8] sm:$0xff]
      %v9753 = vld [vmem:[%s4 + $0x3e0] sm:$0xff]
      %v9754 = vld [vmem:[%s4 + $0x3e8] sm:$0xff]
      %v9755 = vld [vmem:[%s4 + $0x3f0] sm:$0xff]
      %v9756 = vld [vmem:[%s4 + $0x3f8] sm:$0xff]
      %v9757 = vld [vmem:[%s4 + $0x400] sm:$0xff]
      %v9758 = vld [vmem:[%s4 + $0x408] sm:$0xff]
      %v9759 = vld [vmem:[%s4 + $0x410] sm:$0xff]
      %v9760 = vld [vmem:[%s4 + $0x418] sm:$0xff]
      %v9761 = vld [vmem:[%s4 + $0x420] sm:$0xff]
      %v9762 = vld [vmem:[%s4 + $0x428] sm:$0xff]
      %v9763 = vld [vmem:[%s4 + $0x430] sm:$0xff]
      %v9764 = vld [vmem:[%s4 + $0x438] sm:$0xff]
      %v9765 = vld [vmem:[%s4 + $0x440] sm:$0xff]
      %v9766 = vld [vmem:[%s4 + $0x448] sm:$0xff]
      %v9767 = vld [vmem:[%s4 + $0x450] sm:$0xff]
      %v9768 = vld [vmem:[%s4 + $0x458] sm:$0xff]
      %v9769 = vld [vmem:[%s4 + $0x460] sm:$0xff]
      %v9770 = vld [vmem:[%s4 + $0x468] sm:$0xff]
      %v9771 = vld [vmem:[%s4 + $0x470] sm:$0xff]
      %v9772 = vld [vmem:[%s4 + $0x478] sm:$0xff]
      %v9773 = vld [vmem:[%s5] sm:$0x3]
      %v9775 = vlaneseq
      %v9776 = vshrl.u32 %v9775, 7
      %v9777 = vsub.s32 0, %v9776
      %v9778 = vrot.slane %v9773, %v9777
      %v9779 = vlaneseq
      %v9780 = vshrl.u32 %v9779, 7
      %v9781 = vsub.s32 1, %v9780
      %v9782 = vrot.slane %v9773, %v9781
      %v9929 = vunpack.c.l.b16 %v9629
      %v9930 = vunpack.c.h.b16 %v9629
      %v9931 = vunpack.c.l.b16 %v9630
      %v9932 = vunpack.c.h.b16 %v9630
      %v9933 = vunpack.c.l.b16 %v9631
      %v9934 = vunpack.c.h.b16 %v9631
      %v9935 = vunpack.c.l.b16 %v9632
      %v9936 = vunpack.c.h.b16 %v9632
      %v9937 = vunpack.c.l.b16 %v9633
      %v9938 = vunpack.c.h.b16 %v9633
      %v9939 = vunpack.c.l.b16 %v9634
      %v9940 = vunpack.c.h.b16 %v9634
      %v9941 = vunpack.c.l.b16 %v9635
      %v9942 = vunpack.c.h.b16 %v9635
      %v9943 = vunpack.c.l.b16 %v9636
      %v9944 = vunpack.c.h.b16 %v9636
      %v9945 = vunpack.c.l.b16 %v9637
      %v9946 = vunpack.c.h.b16 %v9637
      %v9947 = vunpack.c.l.b16 %v9638
      %v9948 = vunpack.c.h.b16 %v9638
      %v9949 = vunpack.c.l.b16 %v9639
      %v9950 = vunpack.c.h.b16 %v9639
      %v9951 = vunpack.c.l.b16 %v9640
      %v9952 = vunpack.c.h.b16 %v9640
      %v9953 = vunpack.c.l.b16 %v9641
      %v9954 = vunpack.c.h.b16 %v9641
      %v9955 = vunpack.c.l.b16 %v9642
      %v9956 = vunpack.c.h.b16 %v9642
      %v9957 = vunpack.c.l.b16 %v9643
      %v9958 = vunpack.c.h.b16 %v9643
      %v9959 = vunpack.c.l.b16 %v9644
      %v9960 = vunpack.c.h.b16 %v9644
      %v9961 = vunpack.c.l.b16 %v9645
      %v9962 = vunpack.c.h.b16 %v9645
      %v9963 = vunpack.c.l.b16 %v9646
      %v9964 = vunpack.c.h.b16 %v9646
      %v9965 = vunpack.c.l.b16 %v9647
      %v9966 = vunpack.c.h.b16 %v9647
      %v9967 = vunpack.c.l.b16 %v9648
      %v9968 = vunpack.c.h.b16 %v9648
      %v9969 = vunpack.c.l.b16 %v9649
      %v9970 = vunpack.c.h.b16 %v9649
      %v9971 = vunpack.c.l.b16 %v9650
      %v9972 = vunpack.c.h.b16 %v9650
      %v9973 = vunpack.c.l.b16 %v9651
      %v9974 = vunpack.c.h.b16 %v9651
      %v9975 = vunpack.c.l.b16 %v9652
      %v9976 = vunpack.c.h.b16 %v9652
      %v9977 = vunpack.c.l.b16 %v9653
      %v9978 = vunpack.c.h.b16 %v9653
      %v9979 = vunpack.c.l.b16 %v9654
      %v9980 = vunpack.c.h.b16 %v9654
      %v9981 = vunpack.c.l.b16 %v9655
      %v9982 = vunpack.c.h.b16 %v9655
      %v9983 = vunpack.c.l.b16 %v9656
      %v9984 = vunpack.c.h.b16 %v9656
      %v9985 = vunpack.c.l.b16 %v9657
      %v9986 = vunpack.c.h.b16 %v9657
      %v9987 = vunpack.c.l.b16 %v9658
      %v9988 = vunpack.c.h.b16 %v9658
      %v9989 = vunpack.c.l.b16 %v9659
      %v9990 = vunpack.c.h.b16 %v9659
      %v9991 = vunpack.c.l.b16 %v9660
      %v9992 = vunpack.c.h.b16 %v9660
      %v9993 = vunpack.c.l.b16 %v9661
      %v9994 = vunpack.c.h.b16 %v9661
      %v9995 = vunpack.c.l.b16 %v9662
      %v9996 = vunpack.c.h.b16 %v9662
      %v9997 = vunpack.c.l.b16 %v9663
      %v9998 = vunpack.c.h.b16 %v9663
      %v9999 = vunpack.c.l.b16 %v9664
      %v10000 = vunpack.c.h.b16 %v9664
      %v10001 = vunpack.c.l.b16 %v9665
      %v10002 = vunpack.c.h.b16 %v9665
      %v10003 = vunpack.c.l.b16 %v9666
      %v10004 = vunpack.c.h.b16 %v9666
      %v10005 = vunpack.c.l.b16 %v9667
      %v10006 = vunpack.c.h.b16 %v9667
      %v10007 = vunpack.c.l.b16 %v9668
      %v10008 = vunpack.c.h.b16 %v9668
      %v10009 = vunpack.c.l.b16 %v9669
      %v10010 = vunpack.c.h.b16 %v9669
      %v10011 = vunpack.c.l.b16 %v9670
      %v10012 = vunpack.c.h.b16 %v9670
      %v10013 = vunpack.c.l.b16 %v9671
      %v10014 = vunpack.c.h.b16 %v9671
      %v10015 = vunpack.c.l.b16 %v9672
      %v10016 = vunpack.c.h.b16 %v9672
      %v10017 = vunpack.c.l.b16 %v9673
      %v10018 = vunpack.c.h.b16 %v9673
      %v10019 = vunpack.c.l.b16 %v9674
      %v10020 = vunpack.c.h.b16 %v9674
      %v10021 = vunpack.c.l.b16 %v9675
      %v10022 = vunpack.c.h.b16 %v9675
      %v10023 = vunpack.c.l.b16 %v9676
      %v10024 = vunpack.c.h.b16 %v9676
      %v10025 = vunpack.c.l.b16 %v9677
      %v10026 = vunpack.c.h.b16 %v9677
      %v10027 = vunpack.c.l.b16 %v9678
      %v10028 = vunpack.c.h.b16 %v9678
      %v10029 = vunpack.c.l.b16 %v9679
      %v10030 = vunpack.c.h.b16 %v9679
      %v10031 = vunpack.c.l.b16 %v9680
      %v10032 = vunpack.c.h.b16 %v9680
      %v10033 = vunpack.c.l.b16 %v9681
      %v10034 = vunpack.c.h.b16 %v9681
      %v10035 = vunpack.c.l.b16 %v9682
      %v10036 = vunpack.c.h.b16 %v9682
      %v10037 = vunpack.c.l.b16 %v9683
      %v10038 = vunpack.c.h.b16 %v9683
      %v10039 = vunpack.c.l.b16 %v9684
      %v10040 = vunpack.c.h.b16 %v9684
      %v10041 = vunpack.c.l.b16 %v9685
      %v10042 = vunpack.c.h.b16 %v9685
      %v10043 = vunpack.c.l.b16 %v9686
      %v10044 = vunpack.c.h.b16 %v9686
      %v10045 = vunpack.c.l.b16 %v9687
      %v10046 = vunpack.c.h.b16 %v9687
      %v10047 = vunpack.c.l.b16 %v9688
      %v10048 = vunpack.c.h.b16 %v9688
      %v10049 = vunpack.c.l.b16 %v9689
      %v10050 = vunpack.c.h.b16 %v9689
      %v10051 = vunpack.c.l.b16 %v9690
      %v10052 = vunpack.c.h.b16 %v9690
      %v10053 = vunpack.c.l.b16 %v9691
      %v10054 = vunpack.c.h.b16 %v9691
      %v10055 = vunpack.c.l.b16 %v9692
      %v10056 = vunpack.c.h.b16 %v9692
      %v10057 = vunpack.c.l.b16 %v9693
      %v10058 = vunpack.c.h.b16 %v9693
      %v10059 = vunpack.c.l.b16 %v9694
      %v10060 = vunpack.c.h.b16 %v9694
      %v10061 = vunpack.c.l.b16 %v9695
      %v10062 = vunpack.c.h.b16 %v9695
      %v10063 = vunpack.c.l.b16 %v9696
      %v10064 = vunpack.c.h.b16 %v9696
      %v10065 = vunpack.c.l.b16 %v9697
      %v10066 = vunpack.c.h.b16 %v9697
      %v10067 = vunpack.c.l.b16 %v9698
      %v10068 = vunpack.c.h.b16 %v9698
      %v10069 = vunpack.c.l.b16 %v9699
      %v10070 = vunpack.c.h.b16 %v9699
      %v10071 = vunpack.c.l.b16 %v9700
      %v10072 = vunpack.c.h.b16 %v9700
      %v10073 = vunpack.c.l.b16 %v9701
      %v10074 = vunpack.c.h.b16 %v9701
      %v10075 = vunpack.c.l.b16 %v9702
      %v10076 = vunpack.c.h.b16 %v9702
      %v10077 = vunpack.c.l.b16 %v9703
      %v10078 = vunpack.c.h.b16 %v9703
      %v10079 = vunpack.c.l.b16 %v9704
      %v10080 = vunpack.c.h.b16 %v9704
      %v10081 = vunpack.c.l.b16 %v9705
      %v10082 = vunpack.c.h.b16 %v9705
      %v10083 = vunpack.c.l.b16 %v9706
      %v10084 = vunpack.c.h.b16 %v9706
      %v10085 = vunpack.c.l.b16 %v9707
      %v10086 = vunpack.c.h.b16 %v9707
      %v10087 = vunpack.c.l.b16 %v9708
      %v10088 = vunpack.c.h.b16 %v9708
      %v10089 = vunpack.c.l.b16 %v9709
      %v10090 = vunpack.c.h.b16 %v9709
      %v10091 = vunpack.c.l.b16 %v9710
      %v10092 = vunpack.c.h.b16 %v9710
      %v10093 = vunpack.c.l.b16 %v9711
      %v10094 = vunpack.c.h.b16 %v9711
      %v10095 = vunpack.c.l.b16 %v9712
      %v10096 = vunpack.c.h.b16 %v9712
      %v10097 = vunpack.c.l.b16 %v9713
      %v10098 = vunpack.c.h.b16 %v9713
      %v10099 = vunpack.c.l.b16 %v9714
      %v10100 = vunpack.c.h.b16 %v9714
      %v10101 = vunpack.c.l.b16 %v9715
      %v10102 = vunpack.c.h.b16 %v9715
      %v10103 = vunpack.c.l.b16 %v9716
      %v10104 = vunpack.c.h.b16 %v9716
      %v10105 = vunpack.c.l.b16 %v9717
      %v10106 = vunpack.c.h.b16 %v9717
      %v10107 = vunpack.c.l.b16 %v9718
      %v10108 = vunpack.c.h.b16 %v9718
      %v10109 = vunpack.c.l.b16 %v9719
      %v10110 = vunpack.c.h.b16 %v9719
      %v10111 = vunpack.c.l.b16 %v9720
      %v10112 = vunpack.c.h.b16 %v9720
      %v10113 = vunpack.c.l.b16 %v9721
      %v10114 = vunpack.c.h.b16 %v9721
      %v10115 = vunpack.c.l.b16 %v9722
      %v10116 = vunpack.c.h.b16 %v9722
      %v10117 = vunpack.c.l.b16 %v9723
      %v10118 = vunpack.c.h.b16 %v9723
      %v10119 = vunpack.c.l.b16 %v9724
      %v10120 = vunpack.c.h.b16 %v9724
      %v10121 = vunpack.c.l.b16 %v9725
      %v10122 = vunpack.c.h.b16 %v9725
      %v10123 = vunpack.c.l.b16 %v9726
      %v10124 = vunpack.c.h.b16 %v9726
      %v10125 = vunpack.c.l.b16 %v9727
      %v10126 = vunpack.c.h.b16 %v9727
      %v10127 = vunpack.c.l.b16 %v9728
      %v10128 = vunpack.c.h.b16 %v9728
      %v10129 = vunpack.c.l.b16 %v9729
      %v10130 = vunpack.c.h.b16 %v9729
      %v10131 = vunpack.c.l.b16 %v9730
      %v10132 = vunpack.c.h.b16 %v9730
      %v10133 = vunpack.c.l.b16 %v9731
      %v10134 = vunpack.c.h.b16 %v9731
      %v10135 = vunpack.c.l.b16 %v9732
      %v10136 = vunpack.c.h.b16 %v9732
      %v10137 = vunpack.c.l.b16 %v9733
      %v10138 = vunpack.c.h.b16 %v9733
      %v10139 = vunpack.c.l.b16 %v9734
      %v10140 = vunpack.c.h.b16 %v9734
      %v10141 = vunpack.c.l.b16 %v9735
      %v10142 = vunpack.c.h.b16 %v9735
      %v10143 = vunpack.c.l.b16 %v9736
      %v10144 = vunpack.c.h.b16 %v9736
      %v10145 = vunpack.c.l.b16 %v9737
      %v10146 = vunpack.c.h.b16 %v9737
      %v10147 = vunpack.c.l.b16 %v9738
      %v10148 = vunpack.c.h.b16 %v9738
      %v10149 = vunpack.c.l.b16 %v9739
      %v10150 = vunpack.c.h.b16 %v9739
      %v10151 = vunpack.c.l.b16 %v9740
      %v10152 = vunpack.c.h.b16 %v9740
      %v10153 = vunpack.c.l.b16 %v9741
      %v10154 = vunpack.c.h.b16 %v9741
      %v10155 = vunpack.c.l.b16 %v9742
      %v10156 = vunpack.c.h.b16 %v9742
      %v10157 = vunpack.c.l.b16 %v9743
      %v10158 = vunpack.c.h.b16 %v9743
      %v10159 = vunpack.c.l.b16 %v9744
      %v10160 = vunpack.c.h.b16 %v9744
      %v10161 = vunpack.c.l.b16 %v9745
      %v10162 = vunpack.c.h.b16 %v9745
      %v10163 = vunpack.c.l.b16 %v9746
      %v10164 = vunpack.c.h.b16 %v9746
      %v10165 = vunpack.c.l.b16 %v9747
      %v10166 = vunpack.c.h.b16 %v9747
      %v10167 = vunpack.c.l.b16 %v9748
      %v10168 = vunpack.c.h.b16 %v9748
      %v10169 = vunpack.c.l.b16 %v9749
      %v10170 = vunpack.c.h.b16 %v9749
      %v10171 = vunpack.c.l.b16 %v9750
      %v10172 = vunpack.c.h.b16 %v9750
      %v10173 = vunpack.c.l.b16 %v9751
      %v10174 = vunpack.c.h.b16 %v9751
      %v10175 = vunpack.c.l.b16 %v9752
      %v10176 = vunpack.c.h.b16 %v9752
      %v10177 = vunpack.c.l.b16 %v9753
      %v10178 = vunpack.c.h.b16 %v9753
      %v10179 = vunpack.c.l.b16 %v9754
      %v10180 = vunpack.c.h.b16 %v9754
      %v10181 = vunpack.c.l.b16 %v9755
      %v10182 = vunpack.c.h.b16 %v9755
      %v10183 = vunpack.c.l.b16 %v9756
      %v10184 = vunpack.c.h.b16 %v9756
      %v10185 = vunpack.c.l.b16 %v9757
      %v10186 = vunpack.c.h.b16 %v9757
      %v10187 = vunpack.c.l.b16 %v9758
      %v10188 = vunpack.c.h.b16 %v9758
      %v10189 = vunpack.c.l.b16 %v9759
      %v10190 = vunpack.c.h.b16 %v9759
      %v10191 = vunpack.c.l.b16 %v9760
      %v10192 = vunpack.c.h.b16 %v9760
      %v10193 = vunpack.c.l.b16 %v9761
      %v10194 = vunpack.c.h.b16 %v9761
      %v10195 = vunpack.c.l.b16 %v9762
      %v10196 = vunpack.c.h.b16 %v9762
      %v10197 = vunpack.c.l.b16 %v9763
      %v10198 = vunpack.c.h.b16 %v9763
      %v10199 = vunpack.c.l.b16 %v9764
      %v10200 = vunpack.c.h.b16 %v9764
      %v10201 = vunpack.c.l.b16 %v9765
      %v10202 = vunpack.c.h.b16 %v9765
      %v10203 = vunpack.c.l.b16 %v9766
      %v10204 = vunpack.c.h.b16 %v9766
      %v10205 = vunpack.c.l.b16 %v9767
      %v10206 = vunpack.c.h.b16 %v9767
      %v10207 = vunpack.c.l.b16 %v9768
      %v10208 = vunpack.c.h.b16 %v9768
      %v10209 = vunpack.c.l.b16 %v9769
      %v10210 = vunpack.c.h.b16 %v9769
      %v10211 = vunpack.c.l.b16 %v9770
      %v10212 = vunpack.c.h.b16 %v9770
      %v10213 = vunpack.c.l.b16 %v9771
      %v10214 = vunpack.c.h.b16 %v9771
      %v10215 = vunpack.c.l.b16 %v9772
      %v10216 = vunpack.c.h.b16 %v9772
      %v10217 = vpack.c.b16 %v9931, %v9929
      %v10218 = vpack.c.b16 %v9932, %v9930
      %v10219 = vpack.c.b16 %v9935, %v9933
      %v10220 = vpack.c.b16 %v9936, %v9934
      %v10221 = vpack.c.b16 %v9939, %v9937
      %v10222 = vpack.c.b16 %v9940, %v9938
      %v10223 = vpack.c.b16 %v9943, %v9941
      %v10224 = vpack.c.b16 %v9944, %v9942
      %v10225 = vpack.c.b16 %v9947, %v9945
      %v10226 = vpack.c.b16 %v9948, %v9946
      %v10227 = vpack.c.b16 %v9951, %v9949
      %v10228 = vpack.c.b16 %v9952, %v9950
      %v10229 = vpack.c.b16 %v9955, %v9953
      %v10230 = vpack.c.b16 %v9956, %v9954
      %v10231 = vpack.c.b16 %v9959, %v9957
      %v10232 = vpack.c.b16 %v9960, %v9958
      %v10233 = vpack.c.b16 %v9963, %v9961
      %v10234 = vpack.c.b16 %v9964, %v9962
      %v10235 = vpack.c.b16 %v9967, %v9965
      %v10236 = vpack.c.b16 %v9968, %v9966
      %v10237 = vpack.c.b16 %v9971, %v9969
      %v10238 = vpack.c.b16 %v9972, %v9970
      %v10239 = vpack.c.b16 %v9975, %v9973
      %v10240 = vpack.c.b16 %v9976, %v9974
      %v10241 = vpack.c.b16 %v9979, %v9977
      %v10242 = vpack.c.b16 %v9980, %v9978
      %v10243 = vpack.c.b16 %v9983, %v9981
      %v10244 = vpack.c.b16 %v9984, %v9982
      %v10245 = vpack.c.b16 %v9987, %v9985
      %v10246 = vpack.c.b16 %v9988, %v9986
      %v10247 = vpack.c.b16 %v9991, %v9989
      %v10248 = vpack.c.b16 %v9992, %v9990
      %v10249 = vpack.c.b16 %v9995, %v9993
      %v10250 = vpack.c.b16 %v9996, %v9994
      %v10251 = vpack.c.b16 %v9999, %v9997
      %v10252 = vpack.c.b16 %v10000, %v9998
      %v10253 = vpack.c.b16 %v10003, %v10001
      %v10254 = vpack.c.b16 %v10004, %v10002
      %v10255 = vpack.c.b16 %v10007, %v10005
      %v10256 = vpack.c.b16 %v10008, %v10006
      %v10257 = vpack.c.b16 %v10011, %v10009
      %v10258 = vpack.c.b16 %v10012, %v10010
      %v10259 = vpack.c.b16 %v10015, %v10013
      %v10260 = vpack.c.b16 %v10016, %v10014
      %v10261 = vpack.c.b16 %v10019, %v10017
      %v10262 = vpack.c.b16 %v10020, %v10018
      %v10263 = vpack.c.b16 %v10023, %v10021
      %v10264 = vpack.c.b16 %v10024, %v10022
      %v10265 = vpack.c.b16 %v10027, %v10025
      %v10266 = vpack.c.b16 %v10028, %v10026
      %v10267 = vpack.c.b16 %v10031, %v10029
      %v10268 = vpack.c.b16 %v10032, %v10030
      %v10269 = vpack.c.b16 %v10035, %v10033
      %v10270 = vpack.c.b16 %v10036, %v10034
      %v10271 = vpack.c.b16 %v10039, %v10037
      %v10272 = vpack.c.b16 %v10040, %v10038
      %v10273 = vpack.c.b16 %v10043, %v10041
      %v10274 = vpack.c.b16 %v10044, %v10042
      %v10275 = vpack.c.b16 %v10047, %v10045
      %v10276 = vpack.c.b16 %v10048, %v10046
      %v10277 = vpack.c.b16 %v10051, %v10049
      %v10278 = vpack.c.b16 %v10052, %v10050
      %v10279 = vpack.c.b16 %v10055, %v10053
      %v10280 = vpack.c.b16 %v10056, %v10054
      %v10281 = vpack.c.b16 %v10059, %v10057
      %v10282 = vpack.c.b16 %v10060, %v10058
      %v10283 = vpack.c.b16 %v10063, %v10061
      %v10284 = vpack.c.b16 %v10064, %v10062
      %v10285 = vpack.c.b16 %v10067, %v10065
      %v10286 = vpack.c.b16 %v10068, %v10066
      %v10287 = vpack.c.b16 %v10071, %v10069
      %v10288 = vpack.c.b16 %v10072, %v10070
      %v10289 = vpack.c.b16 %v10075, %v10073
      %v10290 = vpack.c.b16 %v10076, %v10074
      %v10291 = vpack.c.b16 %v10079, %v10077
      %v10292 = vpack.c.b16 %v10080, %v10078
      %v10293 = vpack.c.b16 %v10083, %v10081
      %v10294 = vpack.c.b16 %v10084, %v10082
      %v10295 = vpack.c.b16 %v10087, %v10085
      %v10296 = vpack.c.b16 %v10088, %v10086
      %v10297 = vpack.c.b16 %v10091, %v10089
      %v10298 = vpack.c.b16 %v10092, %v10090
      %v10299 = vpack.c.b16 %v10095, %v10093
      %v10300 = vpack.c.b16 %v10096, %v10094
      %v10301 = vpack.c.b16 %v10099, %v10097
      %v10302 = vpack.c.b16 %v10100, %v10098
      %v10303 = vpack.c.b16 %v10103, %v10101
      %v10304 = vpack.c.b16 %v10104, %v10102
      %v10305 = vpack.c.b16 %v10107, %v10105
      %v10306 = vpack.c.b16 %v10108, %v10106
      %v10307 = vpack.c.b16 %v10111, %v10109
      %v10308 = vpack.c.b16 %v10112, %v10110
      %v10309 = vpack.c.b16 %v10115, %v10113
      %v10310 = vpack.c.b16 %v10116, %v10114
      %v10311 = vpack.c.b16 %v10119, %v10117
      %v10312 = vpack.c.b16 %v10120, %v10118
      %v10313 = vpack.c.b16 %v10123, %v10121
      %v10314 = vpack.c.b16 %v10124, %v10122
      %v10315 = vpack.c.b16 %v10127, %v10125
      %v10316 = vpack.c.b16 %v10128, %v10126
      %v10317 = vpack.c.b16 %v10131, %v10129
      %v10318 = vpack.c.b16 %v10132, %v10130
      %v10319 = vpack.c.b16 %v10135, %v10133
      %v10320 = vpack.c.b16 %v10136, %v10134
      %v10321 = vpack.c.b16 %v10139, %v10137
      %v10322 = vpack.c.b16 %v10140, %v10138
      %v10323 = vpack.c.b16 %v10143, %v10141
      %v10324 = vpack.c.b16 %v10144, %v10142
      %v10325 = vpack.c.b16 %v10147, %v10145
      %v10326 = vpack.c.b16 %v10148, %v10146
      %v10327 = vpack.c.b16 %v10151, %v10149
      %v10328 = vpack.c.b16 %v10152, %v10150
      %v10329 = vpack.c.b16 %v10155, %v10153
      %v10330 = vpack.c.b16 %v10156, %v10154
      %v10331 = vpack.c.b16 %v10159, %v10157
      %v10332 = vpack.c.b16 %v10160, %v10158
      %v10333 = vpack.c.b16 %v10163, %v10161
      %v10334 = vpack.c.b16 %v10164, %v10162
      %v10335 = vpack.c.b16 %v10167, %v10165
      %v10336 = vpack.c.b16 %v10168, %v10166
      %v10337 = vpack.c.b16 %v10171, %v10169
      %v10338 = vpack.c.b16 %v10172, %v10170
      %v10339 = vpack.c.b16 %v10175, %v10173
      %v10340 = vpack.c.b16 %v10176, %v10174
      %v10341 = vpack.c.b16 %v10179, %v10177
      %v10342 = vpack.c.b16 %v10180, %v10178
      %v10343 = vpack.c.b16 %v10183, %v10181
      %v10344 = vpack.c.b16 %v10184, %v10182
      %v10345 = vpack.c.b16 %v10187, %v10185
      %v10346 = vpack.c.b16 %v10188, %v10186
      %v10347 = vpack.c.b16 %v10191, %v10189
      %v10348 = vpack.c.b16 %v10192, %v10190
      %v10349 = vpack.c.b16 %v10195, %v10193
      %v10350 = vpack.c.b16 %v10196, %v10194
      %v10351 = vpack.c.b16 %v10199, %v10197
      %v10352 = vpack.c.b16 %v10200, %v10198
      %v10353 = vpack.c.b16 %v10203, %v10201
      %v10354 = vpack.c.b16 %v10204, %v10202
      %v10355 = vpack.c.b16 %v10207, %v10205
      %v10356 = vpack.c.b16 %v10208, %v10206
      %v10357 = vpack.c.b16 %v10211, %v10209
      %v10358 = vpack.c.b16 %v10212, %v10210
      %v10359 = vpack.c.b16 %v10215, %v10213
      %v10360 = vpack.c.b16 %v10216, %v10214
      %10505 = vmatprep.subr.bf16.mxu0 %v10218
      %10506 = vmatpush1.bf16.msra.mxu0 %v10217
      %10507 = vmatprep.subr.bf16.mxu0 %v10220
      %10508 = vmatpush1.bf16.msra.mxu0 %v10219
      %10509 = vmatprep.subr.bf16.mxu0 %v10222
      %10510 = vmatpush1.bf16.msra.mxu0 %v10221
      %10511 = vmatprep.subr.bf16.mxu0 %v10224
      %10512 = vmatpush1.bf16.msra.mxu0 %v10223
      %10513 = vmatprep.subr.bf16.mxu0 %v10226
      %10514 = vmatpush1.bf16.msra.mxu0 %v10225
      %10515 = vmatprep.subr.bf16.mxu0 %v10228
      %10516 = vmatpush1.bf16.msra.mxu0 %v10227
      %10517 = vmatprep.subr.bf16.mxu0 %v10230
      %10518 = vmatpush1.bf16.msra.mxu0 %v10229
      %10519 = vmatprep.subr.bf16.mxu0 %v10232
      %10520 = vmatpush1.bf16.msra.mxu0 %v10231
      %10521 = vmatprep.subr.bf16.mxu0 %v10234
      %10522 = vmatpush1.bf16.msra.mxu0 %v10233
      %10523 = vmatprep.subr.bf16.mxu0 %v10236
      %10524 = vmatpush1.bf16.msra.mxu0 %v10235
      %10525 = vmatprep.subr.bf16.mxu0 %v10238
      %10526 = vmatpush1.bf16.msra.mxu0 %v10237
      %10527 = vmatprep.subr.bf16.mxu0 %v10240
      %10528 = vmatpush1.bf16.msra.mxu0 %v10239
      %10529 = vmatprep.subr.bf16.mxu0 %v10242
      %10530 = vmatpush1.bf16.msra.mxu0 %v10241
      %10531 = vmatprep.subr.bf16.mxu0 %v10244
      %10532 = vmatpush1.bf16.msra.mxu0 %v10243
      %10533 = vmatprep.subr.bf16.mxu0 %v10246
      %10534 = vmatpush1.bf16.msra.mxu0 %v10245
      %10535 = vmatprep.subr.bf16.mxu0 %v10248
      %10536 = vmatpush1.bf16.msra.mxu0 %v10247
      %10537 = vmatprep.mubr.bf16.mxu0 %v9594
      %10538 = vmatmul.mubr.bf16.gmra.mrb[0].mxu0 %v9593
      %v10539 = vpop.f32.mrb[0].mxu0
      %v10540 = vadd.f32 %v9778, %v10539
      %v10541 = vpop.f32.mrb[0].mxu0
      %v10542 = vadd.f32 %v9782, %v10541
      %v10543 = vpop.f32.mrb[0].mxu0
      %v10544 = vadd.f32 %v9778, %v10543
      %v10545 = vpop.f32.mrb[0].mxu0
      %v10546 = vadd.f32 %v9782, %v10545
      %10547 = vmatprep.mubr.bf16.mxu0 %v9603
      %10548 = vmatmul.mubr.bf16.gmra.mrb[0].mxu0 %v9602
      %v10549 = vpop.f32.mrb[0].mxu0
      %v10550 = vadd.f32 %v9778, %v10549
      %v10551 = vpop.f32.mrb[0].mxu0
      %v10552 = vadd.f32 %v9782, %v10551
      %v10553 = vpop.f32.mrb[0].mxu0
      %v10554 = vadd.f32 %v9778, %v10553
      %v10555 = vpop.f32.mrb[0].mxu0
      %v10556 = vadd.f32 %v9782, %v10555
      %10557 = vmatprep.mubr.bf16.mxu0 %v9612
      %10558 = vmatmul.mubr.bf16.gmra.mrb[0].mxu0 %v9611
      %v10559 = vpop.f32.mrb[0].mxu0
      %v10560 = vadd.f32 %v9778, %v10559
      %v10561 = vpop.f32.mrb[0].mxu0
      %v10562 = vadd.f32 %v9782, %v10561
      %v10563 = vpop.f32.mrb[0].mxu0
      %v10564 = vadd.f32 %v9778, %v10563
      %v10565 = vpop.f32.mrb[0].mxu0
      %v10566 = vadd.f32 %v9782, %v10565
      %10567 = vmatprep.mubr.bf16.mxu0 %v9621
      %10568 = vmatmul.mubr.bf16.gmra.mrb[0].mxu0 %v9620
      %v10569 = vpop.f32.mrb[0].mxu0
      %v10570 = vadd.f32 %v9778, %v10569
      %v10571 = vpop.f32.mrb[0].mxu0
      %v10572 = vadd.f32 %v9782, %v10571
      %v10573 = vpop.f32.mrb[0].mxu0
      %v10574 = vadd.f32 %v9778, %v10573
      %v10575 = vpop.f32.mrb[0].mxu0
      %v10576 = vadd.f32 %v9782, %v10575
      %10577 = vdwg.mxu0
      %10578 = vmatprep.subr.bf16.mxu0 %v10250
      %10579 = vmatpush1.bf16.msra.mxu0 %v10249
      %10580 = vmatprep.subr.bf16.mxu0 %v10252
      %10581 = vmatpush1.bf16.msra.mxu0 %v10251
      %10582 = vmatprep.subr.bf16.mxu0 %v10254
      %10583 = vmatpush1.bf16.msra.mxu0 %v10253
      %10584 = vmatprep.subr.bf16.mxu0 %v10256
      %10585 = vmatpush1.bf16.msra.mxu0 %v10255
      %10586 = vmatprep.subr.bf16.mxu0 %v10258
      %10587 = vmatpush1.bf16.msra.mxu0 %v10257
      %10588 = vmatprep.subr.bf16.mxu0 %v10260
      %10589 = vmatpush1.bf16.msra.mxu0 %v10259
      %10590 = vmatprep.subr.bf16.mxu0 %v10262
      %10591 = vmatpush1.bf16.msra.mxu0 %v10261
      %10592 = vmatprep.subr.bf16.mxu0 %v10264
      %10593 = vmatpush1.bf16.msra.mxu0 %v10263
      %10594 = vmatprep.subr.bf16.mxu0 %v10266
      %10595 = vmatpush1.bf16.msra.mxu0 %v10265
      %10596 = vmatprep.subr.bf16.mxu0 %v10268
      %10597 = vmatpush1.bf16.msra.mxu0 %v10267
      %10598 = vmatprep.subr.bf16.mxu0 %v10270
      %10599 = vmatpush1.bf16.msra.mxu0 %v10269
      %10600 = vmatprep.subr.bf16.mxu0 %v10272
      %10601 = vmatpush1.bf16.msra.mxu0 %v10271
      %10602 = vmatprep.subr.bf16.mxu0 %v10274
      %10603 = vmatpush1.bf16.msra.mxu0 %v10273
      %10604 = vmatprep.subr.bf16.mxu0 %v10276
      %10605 = vmatpush1.bf16.msra.mxu0 %v10275
      %10606 = vmatprep.subr.bf16.mxu0 %v10278
      %10607 = vmatpush1.bf16.msra.mxu0 %v10277
      %10608 = vmatprep.subr.bf16.mxu0 %v10280
      %10609 = vmatpush1.bf16.msra.mxu0 %v10279
      %10610 = vmatprep.mubr.bf16.mxu0 %v9596
      %10611 = vmatmul.mubr.bf16.gmra.mrb[0].mxu0 %v9595
      %v10612 = vpop.f32.mrb[0].mxu0
      %v10613 = vadd.f32 %v10540, %v10612
      %v10614 = vpop.f32.mrb[0].mxu0
      %v10615 = vadd.f32 %v10542, %v10614
      %v10616 = vpop.f32.mrb[0].mxu0
      %v10617 = vadd.f32 %v10544, %v10616
      %v10618 = vpop.f32.mrb[0].mxu0
      %v10619 = vadd.f32 %v10546, %v10618
      %10620 = vmatprep.mubr.bf16.mxu0 %v9605
      %10621 = vmatmul.mubr.bf16.gmra.mrb[0].mxu0 %v9604
      %v10622 = vpop.f32.mrb[0].mxu0
      %v10623 = vadd.f32 %v10550, %v10622
      %v10624 = vpop.f32.mrb[0].mxu0
      %v10625 = vadd.f32 %v10552, %v10624
      %v10626 = vpop.f32.mrb[0].mxu0
      %v10627 = vadd.f32 %v10554, %v10626
      %v10628 = vpop.f32.mrb[0].mxu0
      %v10629 = vadd.f32 %v10556, %v10628
      %10630 = vmatprep.mubr.bf16.mxu0 %v9614
      %10631 = vmatmul.mubr.bf16.gmra.mrb[0].mxu0 %v9613
      %v10632 = vpop.f32.mrb[0].mxu0
      %v10633 = vadd.f32 %v10560, %v10632
      %v10634 = vpop.f32.mrb[0].mxu0
      %v10635 = vadd.f32 %v10562, %v10634
      %v10636 = vpop.f32.mrb[0].mxu0
      %v10637 = vadd.f32 %v10564, %v10636
      %v10638 = vpop.f32.mrb[0].mxu0
      %v10639 = vadd.f32 %v10566, %v10638
      %10640 = vmatprep.mubr.bf16.mxu0 %v9623
      %10641 = vmatmul.mubr.bf16.gmra.mrb[0].mxu0 %v9622
      %v10642 = vpop.f32.mrb[0].mxu0
      %v10643 = vadd.f32 %v10570, %v10642
      %v10644 = vpop.f32.mrb[0].mxu0
      %v10645 = vadd.f32 %v10572, %v10644
      %v10646 = vpop.f32.mrb[0].mxu0
      %v10647 = vadd.f32 %v10574, %v10646
      %v10648 = vpop.f32.mrb[0].mxu0
      %v10649 = vadd.f32 %v10576, %v10648
      %10650 = vdwg.mxu0
      %10651 = vmatprep.subr.bf16.mxu0 %v10282
      %10652 = vmatpush1.bf16.msra.mxu0 %v10281
      %10653 = vmatprep.subr.bf16.mxu0 %v10284
      %10654 = vmatpush1.bf16.msra.mxu0 %v10283
      %10655 = vmatprep.subr.bf16.mxu0 %v10286
      %10656 = vmatpush1.bf16.msra.mxu0 %v10285
      %10657 = vmatprep.subr.bf16.mxu0 %v10288
      %10658 = vmatpush1.bf16.msra.mxu0 %v10287
      %10659 = vmatprep.subr.bf16.mxu0 %v10290
      %10660 = vmatpush1.bf16.msra.mxu0 %v10289
      %10661 = vmatprep.subr.bf16.mxu0 %v10292
      %10662 = vmatpush1.bf16.msra.mxu0 %v10291
      %10663 = vmatprep.subr.bf16.mxu0 %v10294
      %10664 = vmatpush1.bf16.msra.mxu0 %v10293
      %10665 = vmatprep.subr.bf16.mxu0 %v10296
      %10666 = vmatpush1.bf16.msra.mxu0 %v10295
      %10667 = vmatprep.subr.bf16.mxu0 %v10298
      %10668 = vmatpush1.bf16.msra.mxu0 %v10297
      %10669 = vmatprep.subr.bf16.mxu0 %v10300
      %10670 = vmatpush1.bf16.msra.mxu0 %v10299
      %10671 = vmatprep.subr.bf16.mxu0 %v10302
      %10672 = vmatpush1.bf16.msra.mxu0 %v10301
      %10673 = vmatprep.subr.bf16.mxu0 %v10304
      %10674 = vmatpush1.bf16.msra.mxu0 %v10303
      %10675 = vmatprep.subr.bf16.mxu0 %v10306
      %10676 = vmatpush1.bf16.msra.mxu0 %v10305
      %10677 = vmatprep.subr.bf16.mxu0 %v10308
      %10678 = vmatpush1.bf16.msra.mxu0 %v10307
      %10679 = vmatprep.subr.bf16.mxu0 %v10310
      %10680 = vmatpush1.bf16.msra.mxu0 %v10309
      %10681 = vmatprep.subr.bf16.mxu0 %v10312
      %10682 = vmatpush1.bf16.msra.mxu0 %v10311
      %10683 = vmatprep.mubr.bf16.mxu0 %v9598
      %10684 = vmatmul.mubr.bf16.gmra.mrb[0].mxu0 %v9597
      %v10685 = vpop.f32.mrb[0].mxu0
      %v10686 = vadd.f32 %v10613, %v10685
      %v10687 = vpop.f32.mrb[0].mxu0
      %v10688 = vadd.f32 %v10615, %v10687
      %v10689 = vpop.f32.mrb[0].mxu0
      %v10690 = vadd.f32 %v10617, %v10689
      %v10691 = vpop.f32.mrb[0].mxu0
      %v10692 = vadd.f32 %v10619, %v10691
      %10693 = vmatprep.mubr.bf16.mxu0 %v9607
      %10694 = vmatmul.mubr.bf16.gmra.mrb[0].mxu0 %v9606
      %v10695 = vpop.f32.mrb[0].mxu0
      %v10696 = vadd.f32 %v10623, %v10695
      %v10697 = vpop.f32.mrb[0].mxu0
      %v10698 = vadd.f32 %v10625, %v10697
      %v10699 = vpop.f32.mrb[0].mxu0
      %v10700 = vadd.f32 %v10627, %v10699
      %v10701 = vpop.f32.mrb[0].mxu0
      %v10702 = vadd.f32 %v10629, %v10701
      %10703 = vmatprep.mubr.bf16.mxu0 %v9616
      %10704 = vmatmul.mubr.bf16.gmra.mrb[0].mxu0 %v9615
      %v10705 = vpop.f32.mrb[0].mxu0
      %v10706 = vadd.f32 %v10633, %v10705
      %v10707 = vpop.f32.mrb[0].mxu0
      %v10708 = vadd.f32 %v10635, %v10707
      %v10709 = vpop.f32.mrb[0].mxu0
      %v10710 = vadd.f32 %v10637, %v10709
      %v10711 = vpop.f32.mrb[0].mxu0
      %v10712 = vadd.f32 %v10639, %v10711
      %10713 = vmatprep.mubr.bf16.mxu0 %v9625
      %10714 = vmatmul.mubr.bf16.gmra.mrb[0].mxu0 %v9624
      %v10715 = vpop.f32.mrb[0].mxu0
      %v10716 = vadd.f32 %v10643, %v10715
      %v10717 = vpop.f32.mrb[0].mxu0
      %v10718 = vadd.f32 %v10645, %v10717
      %v10719 = vpop.f32.mrb[0].mxu0
      %v10720 = vadd.f32 %v10647, %v10719
      %v10721 = vpop.f32.mrb[0].mxu0
      %v10722 = vadd.f32 %v10649, %v10721
      %10723 = vdwg.mxu0
      %10724 = vmatprep.subr.bf16.mxu0 %v10314
      %10725 = vmatpush1.bf16.msra.mxu0 %v10313
      %10726 = vmatprep.subr.bf16.mxu0 %v10316
      %10727 = vmatpush1.bf16.msra.mxu0 %v10315
      %10728 = vmatprep.subr.bf16.mxu0 %v10318
      %10729 = vmatpush1.bf16.msra.mxu0 %v10317
      %10730 = vmatprep.subr.bf16.mxu0 %v10320
      %10731 = vmatpush1.bf16.msra.mxu0 %v10319
      %10732 = vmatprep.subr.bf16.mxu0 %v10322
      %10733 = vmatpush1.bf16.msra.mxu0 %v10321
      %10734 = vmatprep.subr.bf16.mxu0 %v10324
      %10735 = vmatpush1.bf16.msra.mxu0 %v10323
      %10736 = vmatprep.subr.bf16.mxu0 %v10326
      %10737 = vmatpush1.bf16.msra.mxu0 %v10325
      %10738 = vmatprep.subr.bf16.mxu0 %v10328
      %10739 = vmatpush1.bf16.msra.mxu0 %v10327
      %10740 = vmatprep.subr.bf16.mxu0 %v10330
      %10741 = vmatpush1.bf16.msra.mxu0 %v10329
      %10742 = vmatprep.subr.bf16.mxu0 %v10332
      %10743 = vmatpush1.bf16.msra.mxu0 %v10331
      %10744 = vmatprep.subr.bf16.mxu0 %v10334
      %10745 = vmatpush1.bf16.msra.mxu0 %v10333
      %10746 = vmatprep.subr.bf16.mxu0 %v10336
      %10747 = vmatpush1.bf16.msra.mxu0 %v10335
      %10748 = vmatprep.subr.bf16.mxu0 %v10338
      %10749 = vmatpush1.bf16.msra.mxu0 %v10337
      %10750 = vmatprep.subr.bf16.mxu0 %v10340
      %10751 = vmatpush1.bf16.msra.mxu0 %v10339
      %10752 = vmatprep.subr.bf16.mxu0 %v10342
      %10753 = vmatpush1.bf16.msra.mxu0 %v10341
      %10754 = vmatprep.subr.bf16.mxu0 %v10344
      %10755 = vmatpush1.bf16.msra.mxu0 %v10343
      %10756 = vmatprep.mubr.bf16.mxu0 %v9600
      %10757 = vmatmul.mubr.bf16.gmra.mrb[0].mxu0 %v9599
      %v10758 = vpop.f32.mrb[0].mxu0
      %v10759 = vadd.f32 %v10686, %v10758
      %v10760 = vpop.f32.mrb[0].mxu0
      %v10761 = vadd.f32 %v10688, %v10760
      %v10762 = vpop.f32.mrb[0].mxu0
      %v10763 = vadd.f32 %v10690, %v10762
      %v10764 = vpop.f32.mrb[0].mxu0
      %v10765 = vadd.f32 %v10692, %v10764
      %10766 = vmatprep.mubr.bf16.mxu0 %v9609
      %10767 = vmatmul.mubr.bf16.gmra.mrb[0].mxu0 %v9608
      %v10768 = vpop.f32.mrb[0].mxu0
      %v10769 = vadd.f32 %v10696, %v10768
      %v10770 = vpop.f32.mrb[0].mxu0
      %v10771 = vadd.f32 %v10698, %v10770
      %v10772 = vpop.f32.mrb[0].mxu0
      %v10773 = vadd.f32 %v10700, %v10772
      %v10774 = vpop.f32.mrb[0].mxu0
      %v10775 = vadd.f32 %v10702, %v10774
      %10776 = vmatprep.mubr.bf16.mxu0 %v9618
      %10777 = vmatmul.mubr.bf16.gmra.mrb[0].mxu0 %v9617
      %v10778 = vpop.f32.mrb[0].mxu0
      %v10779 = vadd.f32 %v10706, %v10778
      %v10780 = vpop.f32.mrb[0].mxu0
      %v10781 = vadd.f32 %v10708, %v10780
      %v10782 = vpop.f32.mrb[0].mxu0
      %v10783 = vadd.f32 %v10710, %v10782
      %v10784 = vpop.f32.mrb[0].mxu0
      %v10785 = vadd.f32 %v10712, %v10784
      %10786 = vmatprep.mubr.bf16.mxu0 %v9627
      %10787 = vmatmul.mubr.bf16.gmra.mrb[0].mxu0 %v9626
      %v10788 = vpop.f32.mrb[0].mxu0
      %v10789 = vadd.f32 %v10716, %v10788
      %v10790 = vpop.f32.mrb[0].mxu0
      %v10791 = vadd.f32 %v10718, %v10790
      %v10792 = vpop.f32.mrb[0].mxu0
      %v10793 = vadd.f32 %v10720, %v10792
      %v10794 = vpop.f32.mrb[0].mxu0
      %v10795 = vadd.f32 %v10722, %v10794
      %10796 = vdwg.mxu0
      %10797 = vmatprep.subr.bf16.mxu0 %v10346
      %10798 = vmatpush1.bf16.msra.mxu0 %v10345
      %10799 = vmatprep.subr.bf16.mxu0 %v10348
      %10800 = vmatpush1.bf16.msra.mxu0 %v10347
      %10801 = vmatprep.subr.bf16.mxu0 %v10350
      %10802 = vmatpush1.bf16.msra.mxu0 %v10349
      %10803 = vmatprep.subr.bf16.mxu0 %v10352
      %10804 = vmatpush1.bf16.msra.mxu0 %v10351
      %10805 = vmatprep.subr.bf16.mxu0 %v10354
      %10806 = vmatpush1.bf16.msra.mxu0 %v10353
      %10807 = vmatprep.subr.bf16.mxu0 %v10356
      %10808 = vmatpush1.bf16.msra.mxu0 %v10355
      %10809 = vmatprep.subr.bf16.mxu0 %v10358
      %10810 = vmatpush1.bf16.msra.mxu0 %v10357
      %10811 = vmatprep.subr.bf16.mxu0 %v10360
      %10812 = vmatpush1.bf16.msra.mxu0 %v10359
      %10813 = vmatprep.subr.bf16.mxu0 0
      %10814 = vmatpush1.bf16.msra.mxu0 0
      %10815 = vmatprep.subr.bf16.mxu0 0
      %10816 = vmatpush1.bf16.msra.mxu0 0
      %10817 = vmatprep.subr.bf16.mxu0 0
      %10818 = vmatpush1.bf16.msra.mxu0 0
      %10819 = vmatprep.subr.bf16.mxu0 0
      %10820 = vmatpush1.bf16.msra.mxu0 0
      %10821 = vmatprep.subr.bf16.mxu0 0
      %10822 = vmatpush1.bf16.msra.mxu0 0
      %10823 = vmatprep.subr.bf16.mxu0 0
      %10824 = vmatpush1.bf16.msra.mxu0 0
      %10825 = vmatprep.subr.bf16.mxu0 0
      %10826 = vmatpush1.bf16.msra.mxu0 0
      %10827 = vmatprep.subr.bf16.mxu0 0
      %10828 = vmatpush1.bf16.msra.mxu0 0
      %10829 = vmatprep.mubr.bf16.mxu0 0
      %10830 = vmatmul.mubr.bf16.gmra.mrb[0].mxu0 %v9601
      %v10831 = vpop.f32.mrb[0].mxu0
      %v10832 = vadd.f32 %v10759, %v10831
      %v10833 = vpop.f32.mrb[0].mxu0
      %v10834 = vadd.f32 %v10761, %v10833
      %v10835 = vpop.f32.mrb[0].mxu0
      %v10836 = vadd.f32 %v10763, %v10835
      %v10837 = vpop.f32.mrb[0].mxu0
      %v10838 = vadd.f32 %v10765, %v10837
      %10839 = vmatprep.mubr.bf16.mxu0 0
      %10840 = vmatmul.mubr.bf16.gmra.mrb[0].mxu0 %v9610
      %v10841 = vpop.f32.mrb[0].mxu0
      %v10842 = vadd.f32 %v10769, %v10841
      %v10843 = vpop.f32.mrb[0].mxu0
      %v10844 = vadd.f32 %v10771, %v10843
      %v10845 = vpop.f32.mrb[0].mxu0
      %v10846 = vadd.f32 %v10773, %v10845
      %v10847 = vpop.f32.mrb[0].mxu0
      %v10848 = vadd.f32 %v10775, %v10847
      %10849 = vmatprep.mubr.bf16.mxu0 0
      %10850 = vmatmul.mubr.bf16.gmra.mrb[0].mxu0 %v9619
      %v10851 = vpop.f32.mrb[0].mxu0
      %v10852 = vadd.f32 %v10779, %v10851
      %v10853 = vpop.f32.mrb[0].mxu0
      %v10854 = vadd.f32 %v10781, %v10853
      %v10855 = vpop.f32.mrb[0].mxu0
      %v10856 = vadd.f32 %v10783, %v10855
      %v10857 = vpop.f32.mrb[0].mxu0
      %v10858 = vadd.f32 %v10785, %v10857
      %10859 = vmatprep.mubr.bf16.mxu0 0
      %10860 = vmatmul.mubr.bf16.gmra.mrb[0].mxu0 %v9628
      %v10861 = vpop.f32.mrb[0].mxu0
      %v10862 = vadd.f32 %v10789, %v10861
      %v10863 = vpop.f32.mrb[0].mxu0
      %v10864 = vadd.f32 %v10791, %v10863
      %v10865 = vpop.f32.mrb[0].mxu0
      %v10866 = vadd.f32 %v10793, %v10865
      %v10867 = vpop.f32.mrb[0].mxu0
      %v10868 = vadd.f32 %v10795, %v10867
      %10869 = vdwg.mxu0
      %v10870 = vmax.f32 %v10832, 0.0
      %v10871 = vmax.f32 %v10834, 0.0
      %v10872 = vmax.f32 %v10836, 0.0
      %v10873 = vmax.f32 %v10838, 0.0
      %v10874 = vmax.f32 %v10842, 0.0
      %v10875 = vmax.f32 %v10844, 0.0
      %v10876 = vmax.f32 %v10846, 0.0
      %v10877 = vmax.f32 %v10848, 0.0
      %v10878 = vmax.f32 %v10852, 0.0
      %v10879 = vmax.f32 %v10854, 0.0
      %v10880 = vmax.f32 %v10856, 0.0
      %v10881 = vmax.f32 %v10858, 0.0
      %v10882 = vmax.f32 %v10862, 0.0
      %v10883 = vmax.f32 %v10864, 0.0
      %v10884 = vmax.f32 %v10866, 0.0
      %v10885 = vmax.f32 %v10868, 0.0
      %10886 = vst [vmem:[%s282] sm:$0xff] %v10870
      %10887 = vst [vmem:[%s282 + $0x8] sm:$0xff] %v10871
      %10888 = vst [vmem:[%s282 + $0x10] sm:$0xff] %v10872
      %10889 = vst [vmem:[%s282 + $0x18] sm:$0xff] %v10873
      %10890 = vst [vmem:[%s282 + $0x20] sm:$0xff] %v10874
      %10891 = vst [vmem:[%s282 + $0x28] sm:$0xff] %v10875
      %10892 = vst [vmem:[%s282 + $0x30] sm:$0xff] %v10876
      %10893 = vst [vmem:[%s282 + $0x38] sm:$0xff] %v10877
      %10894 = vst [vmem:[%s282 + $0x40] sm:$0xff] %v10878
      %10895 = vst [vmem:[%s282 + $0x48] sm:$0xff] %v10879
      %10896 = vst [vmem:[%s282 + $0x50] sm:$0xff] %v10880
      %10897 = vst [vmem:[%s282 + $0x58] sm:$0xff] %v10881
      %10898 = vst [vmem:[%s282 + $0x60] sm:$0xff] %v10882
      %10899 = vst [vmem:[%s282 + $0x68] sm:$0xff] %v10883
      %10900 = vst [vmem:[%s282 + $0x70] sm:$0xff] %v10884
      %10901 = vst [vmem:[%s282 + $0x78] sm:$0xff] %v10885
      %s10902 = smul.u32 8, %s18
      %p10903 = scmp.lt.s32.totalorder %s10902, 15
      %s10904 = scalar_select %p10903, %s10902, 15
      %s10905 = smul.addr %s10904, 2
      %s10906 = smul.addr %s10905, 8
      %s10907 = scalar_lea.vmem %s7, %s10906
      // Predicated region
      $region49: #{_lambda_.1} parent=47 // pred_check
        %p10908 = pneg %p188
      $region50: #{_lambda_.1} parent=47 // pred_check_branch
        %10910 = sbr.rel (%p10908) target = $region52
      $region51: #{_lambda_.1} parent=47 // pred_region
        %s10911 = smul.u32 8, %s18
      $region52: #{_lambda_.1} parent=47 // pred_fallthru
        _
    $region48: #{_lambda_.1} parent=5 // pred_fallthru
      _
    %p10912 = scmp.le.s32.totalorder 2, %s13
    // Predicated region
    $region53: #{_lambda_.1} parent=5 // pred_check
      %p10913 = pneg %p10912
    $region54: #{_lambda_.1} parent=5 // pred_check_branch
      %10915 = sbr.rel (%p10913) target = $region56
    $region55: #{_lambda_.1} parent=5 // pred_region
      %s10916 = ssub.s32 %s13, 2
      // Predicated region
      $region57: #{_lambda_.1} parent=55 // pred_check
        %p10917 = pneg %p194
      $region58: #{_lambda_.1} parent=55 // pred_check_branch
        %10919 = sbr.rel (%p10917) target = $region60
      $region59: #{_lambda_.1} parent=55 // pred_region
        %s10920 = smul.u32 8, %s19
        %p10921 = scmp.lt.s32.totalorder %s10920, 15
        %s10922 = scalar_select %p10921, %s10920, 15
        %s10923 = smul.addr %s10922, 2
        %s10924 = smul.addr %s10923, 8
        %s10925 = scalar_lea.vmem %s7, %s10924
      $region60: #{_lambda_.1} parent=55 // pred_fallthru
        _
    $region56: #{_lambda_.1} parent=5 // pred_fallthru
      _
  $region6: #{_lambda_.1} parent=0 // loop_footer
    %s17 = sadd.s32 1, %s13
  $region7: #{_lambda_.1} parent=0 // loop_footer_branch
    %12 = sbr.rel target = $region3
  $region8: #{_lambda_.1} parent=0 // loop_exit
    _

</llo_original>
